<compile_context>
chip_gen: v6e
topology: v6e:2x2x1
jax: 0.10.0
libtpu: 0.0.40
codegen_flags: <defaults>
</compile_context>

<pallas_src>
import itertools

import numpy as np
import jax
import jax.numpy as jnp
from jax.experimental import pallas as pl
from jax.experimental.pallas import tpu as pltpu


# ----------------------------------------------------------------------------------
# helpers mirroring the PyTorch module
# ----------------------------------------------------------------------------------
def get_num_groups(num_channels, default_num_groups=32):
    num_groups = min(default_num_groups, num_channels)
    while num_groups > 0:
        if num_channels % num_groups == 0:
            return num_groups
        num_groups -= 1
    return 1


# ----------------------------------------------------------------------------------
# host-side dense-operator construction
# ----------------------------------------------------------------------------------
def conv_dense_matrix(w, spatial):
    """Torch Conv2d/Conv3d weight (Co, Ci, *K), stride 1, padding K//2, no bias ->
    dense matrix of shape (Ci*P, Co*P) acting on channel-major flattened activations:
    y_flat = x_flat @ M  with x_flat = x.reshape(B, -1) of an NC(D)HW tensor."""
    w = np.asarray(w, np.float32)
    Co, Ci = w.shape[:2]
    K = w.shape[2:]
    nd = len(spatial)
    P = int(np.prod(spatial))
    strides = [int(np.prod(spatial[d + 1:])) for d in range(nd)]
    M = np.zeros((Ci, P, Co, P), np.float32)
    for out_pos in itertools.product(*[range(s) for s in spatial]):
        po = sum(out_pos[d] * strides[d] for d in range(nd))
        for k in itertools.product(*[range(kk) for kk in K]):
            in_pos = [out_pos[d] + k[d] - K[d] // 2 for d in range(nd)]
            if all(0 <= in_pos[d] < spatial[d] for d in range(nd)):
                pi = sum(in_pos[d] * strides[d] for d in range(nd))
                M[:, pi, :, po] = w[(slice(None), slice(None)) + k].T
    return M.reshape(Ci * P, Co * P)


def conv1x1_dense_matrix(w, P):
    """1x1(x1) conv weight (Co, Ci, 1, ...) -> (Ci*P, Co*P) dense matrix."""
    w2 = np.asarray(w, np.float32).reshape(w.shape[0], w.shape[1])   # (Co, Ci)
    return np.kron(w2.T, np.eye(P, dtype=np.float32))                # (Ci*P, Co*P)


# ----------------------------------------------------------------------------------
# parameter construction (deterministic, torch conventions)
# ----------------------------------------------------------------------------------
def init_params(key, in_ch, out_ch, spatial):
    nd = len(spatial)
    kshape = (3,) * nd
    keys = jax.random.split(key, 10)

    def nrm(k, shape, scale=0.1):
        return np.asarray(jax.random.normal(k, shape, dtype=jnp.float32)) * np.float32(scale)

    p = {
        "conv1_w": nrm(keys[0], (out_ch, in_ch) + kshape),
        "conv2_w": nrm(keys[1], (out_ch, out_ch) + kshape),
        "gn1_g": np.float32(1.0) + nrm(keys[2], (out_ch,)),
        "gn1_b": nrm(keys[3], (out_ch,)),
        "gn2_g": np.float32(1.0) + nrm(keys[4], (out_ch,)),
        "gn2_b": nrm(keys[5], (out_ch,)),
    }
    if in_ch != out_ch:   # downsample branch: 1x1 conv (no bias) + GroupNorm
        p["down_w"] = nrm(keys[6], (out_ch, in_ch) + (1,) * nd)
        p["down_gn_g"] = np.float32(1.0) + nrm(keys[7], (out_ch,))
        p["down_gn_b"] = nrm(keys[8], (out_ch,))
    return p


def prepare_kernel_params(raw, in_ch, out_ch, spatial):
    """Build kernel-ready arrays: bf16 dense conv matrices + one packed f32 row vector."""
    P = int(np.prod(spatial))
    G = get_num_groups(out_ch)
    gs_feat = (out_ch // G) * P
    has_down = in_ch != out_ch

    mats = {
        "w1": jnp.asarray(conv_dense_matrix(raw["conv1_w"], spatial), jnp.bfloat16),
        "w2": jnp.asarray(conv_dense_matrix(raw["conv2_w"], spatial), jnp.bfloat16),
    }
    if has_down:
        mats["wd"] = jnp.asarray(conv1x1_dense_matrix(raw["down_w"], P), jnp.bfloat16)

    # pack every per-feature gamma/beta row into a single (1, total) f32 array
    names = ["gn1_g", "gn1_b", "gn2_g", "gn2_b"]
    if has_down:
        names += ["down_gn_g", "down_gn_b"]
    offsets, rows, off = {}, [], 0
    for n in names:
        r = np.repeat(np.asarray(raw[n], np.float32), P)   # channel-major per-feature
        offsets[n] = (off, r.size)
        off += r.size
        rows.append(r)
    vec = jnp.asarray(np.concatenate(rows)[None, :], jnp.float32)

    meta = dict(G=G, gs_feat=gs_feat, has_down=has_down, P=P,
                out_ch=out_ch, out_feats=out_ch * P, offsets=offsets)
    return mats, vec, meta


# ----------------------------------------------------------------------------------
# Pallas kernel
# ----------------------------------------------------------------------------------
def make_residual_block_kernel(meta):
    G = meta["G"]
    gs = meta["gs_feat"]
    offsets = meta["offsets"]
    has_down = meta["has_down"]

    def sigmoid(v):
        # exp on the EUP, approx reciprocal on the EUP (no VPU divide)
        return pl.reciprocal(1.0 + jnp.exp(-v), approx=True)

    def swish(v):
        return v * sigmoid(v)

    def dot(a, w):
        # bf16 operands on the MXU, f32 accumulation
        return jnp.dot(a.astype(jnp.bfloat16), w, preferred_element_type=jnp.float32)

    def group_norm(h, gamma, beta, eps=1e-5):
        # Per-group statistics via lane reductions (VPU/XLU), two-pass mean/variance.
        # Feature layout is channel-major, so each group is a contiguous lane chunk.
        parts = []
        for g in range(G):
            c = h[:, g * gs:(g + 1) * gs]
            m = jnp.mean(c, axis=-1, keepdims=True)
            d = c - m
            var = jnp.mean(d * d, axis=-1, keepdims=True)
            parts.append(d * jax.lax.rsqrt(var + eps))
        hn = parts[0] if G == 1 else jnp.concatenate(parts, axis=-1)
        return hn * gamma + beta

    def body(x, w1, w2, wd, vec, o_ref):
        def row(name):
            s, n = offsets[name]
            return vec[:, s:s + n]

        h = dot(x, w1)                                                 # conv1 (3x3, pad 1)
        h = swish(group_norm(h, row("gn1_g"), row("gn1_b")))           # gn1 + swish (+dropout=id)
        h = dot(h, w2)                                                 # conv2
        h = swish(group_norm(h, row("gn2_g"), row("gn2_b")))           # gn2 + swish (+dropout=id)
        if wd is None:
            identity = x
        else:                                                          # 1x1 conv + GN downsample
            identity = group_norm(dot(x, wd), row("down_gn_g"), row("down_gn_b"))
        o_ref[...] = swish(h + identity)

    if has_down:
        def kernel(x_ref, w1_ref, w2_ref, wd_ref, vec_ref, o_ref):
            body(x_ref[...], w1_ref[...], w2_ref[...], wd_ref[...], vec_ref[...], o_ref)
    else:
        def kernel(x_ref, w1_ref, w2_ref, vec_ref, o_ref):
            body(x_ref[...], w1_ref[...], w2_ref[...], None, vec_ref[...], o_ref)
    return kernel


# ----------------------------------------------------------------------------------
# wrapper
# ----------------------------------------------------------------------------------
def residual_block_forward(x, mats, vec, meta):
    B = x.shape[0]
    spatial = tuple(x.shape[2:])
    x2d = x.reshape(B, -1).astype(jnp.float32)     # channel-major flatten (free view)

    inputs = [x2d, mats["w1"], mats["w2"]]
    if meta["has_down"]:
        inputs.append(mats["wd"])
    inputs.append(vec)

    kernel = make_residual_block_kernel(meta)
    out2d = pl.pallas_call(
        kernel,
        out_shape=jax.ShapeDtypeStruct((B, meta["out_feats"]), jnp.float32),
        in_specs=[pl.BlockSpec(memory_space=pltpu.MemorySpace.VMEM)] * len(inputs),
        out_specs=pl.BlockSpec(memory_space=pltpu.MemorySpace.VMEM),
        compiler_params=pltpu.CompilerParams(vmem_limit_bytes=32 * 1024 * 1024),
    )(*inputs)
    return out2d.reshape((B, meta["out_ch"]) + spatial)


# ----------------------------------------------------------------------------------
# pure numpy reference (float64) for validation
# ----------------------------------------------------------------------------------
def _sigmoid_np(v):
    return 1.0 / (1.0 + np.exp(-v))


def _swish_np(v):
    return v * _sigmoid_np(v)


def conv_ref_np(x, w):
    """Direct N-D conv, stride 1, padding K//2, no bias."""
    B = x.shape[0]
    Co = w.shape[0]
    S = x.shape[2:]
    K = w.shape[2:]
    pads = [(0, 0), (0, 0)] + [(k // 2, k // 2) for k in K]
    xp = np.pad(x, pads)
    out = np.zeros((B, Co) + S, x.dtype)
    wf = w.reshape(Co, -1)
    for pos in itertools.product(*[range(s) for s in S]):
        win = xp[(slice(None), slice(None)) +
                 tuple(slice(p, p + k) for p, k in zip(pos, K))]
        out[(slice(None), slice(None)) + pos] = win.reshape(B, -1) @ wf.T
    return out


def gn_ref_np(v, gamma, beta, groups, eps=1e-5):
    shp = v.shape
    vg = v.reshape(shp[0], groups, -1)
    m = vg.mean(-1, keepdims=True)
    var = vg.var(-1, keepdims=True)
    vn = ((vg - m) / np.sqrt(var + eps)).reshape(shp)
    bshape = (1, shp[1]) + (1,) * (len(shp) - 2)
    return vn * gamma.reshape(bshape) + beta.reshape(bshape)


def residual_block_ref_np(x, raw, in_ch, out_ch):
    x = np.asarray(x, np.float64)
    rp = {k: np.asarray(v, np.float64) for k, v in raw.items()}
    G = get_num_groups(out_ch)
    h = conv_ref_np(x, rp["conv1_w"])
    h = _swish_np(gn_ref_np(h, rp["gn1_g"], rp["gn1_b"], G))
    h = conv_ref_np(h, rp["conv2_w"])
    h = _swish_np(gn_ref_np(h, rp["gn2_g"], rp["gn2_b"], G))
    identity = x
    if in_ch != out_ch:
        identity = gn_ref_np(conv_ref_np(x, rp["down_w"]),
                             rp["down_gn_g"], rp["down_gn_b"], G)
    return _swish_np(h + identity)


# ----------------------------------------------------------------------------------
if __name__ == "__main__":
    B = 2
    # (in_ch, out_ch, spatial): 2D default path, 2D with downsample branch, 3D path
    configs = [
        (4, 4, (16, 16)),
        (8, 4, (16, 16)),
        (4, 4, (4, 8, 8)),
    ]

    key = jax.random.PRNGKey(0)
    for in_ch, out_ch, spatial in configs:
        kx, kp, key = jax.random.split(key, 3)
        x = jax.random.normal(kx, (B, in_ch) + spatial, dtype=jnp.float32)
        raw = init_params(kp, in_ch, out_ch, spatial)
        mats, vec, meta = prepare_kernel_params(raw, in_ch, out_ch, spatial)

        out = residual_block_forward(x, mats, vec, meta)
        out = jax.block_until_ready(out)

        ref = residual_block_ref_np(np.asarray(x), raw, in_ch, out_ch)
        np.testing.assert_allclose(np.asarray(out), ref, rtol=3e-2, atol=3e-2)

    print("KERNEL_OK")
</pallas_src>

<mosaic_0001>
module attributes {stable_mosaic.version = 11 : i64} {
  func.func @kernel(%arg0: memref<2x1024xf32, #tpu.memory_space<vmem>>, %arg1: memref<1024x1024xbf16, #tpu.memory_space<vmem>>, %arg2: memref<1024x1024xbf16, #tpu.memory_space<vmem>>, %arg3: memref<1x4096xf32, #tpu.memory_space<vmem>>, %arg4: memref<2x1024xf32, #tpu.memory_space<vmem>>) attributes {dimension_semantics = [], scalar_prefetch = 0 : i64, scratch_operands = 0 : i64, tpu.core_type = #tpu.core_type<tc>} {
    %c0 = arith.constant 0 : index
    %c0_0 = arith.constant 0 : index
    %0 = vector.load %arg0[%c0, %c0_0] : memref<2x1024xf32, #tpu.memory_space<vmem>>, vector<2x1024xf32>
    %c0_1 = arith.constant 0 : index
    %c0_2 = arith.constant 0 : index
    %1 = vector.load %arg1[%c0_1, %c0_2] : memref<1024x1024xbf16, #tpu.memory_space<vmem>>, vector<1024x1024xbf16>
    %c0_3 = arith.constant 0 : index
    %c0_4 = arith.constant 0 : index
    %2 = vector.load %arg2[%c0_3, %c0_4] : memref<1024x1024xbf16, #tpu.memory_space<vmem>>, vector<1024x1024xbf16>
    %c0_5 = arith.constant 0 : index
    %c0_6 = arith.constant 0 : index
    %3 = vector.load %arg3[%c0_5, %c0_6] : memref<1x4096xf32, #tpu.memory_space<vmem>>, vector<1x4096xf32>
    %4 = arith.truncf %0 : vector<2x1024xf32> to vector<2x1024xbf16>
    %cst = arith.constant dense<0.000000e+00> : vector<2x1024xf32>
    %5 = tpu.matmul %4, %1, %cst {dimension_numbers = #tpu.dot_dimension_numbers<[1], [0], [0], [1], [0, 0, 1, 1], [], []>} : vector<2x1024xbf16>, vector<1024x1024xbf16>, vector<2x1024xf32> -> vector<2x1024xf32>
    %6 = vector.extract_strided_slice %3 {offsets = [0, 0], sizes = [1, 1024], strides = [1, 1]} : vector<1x4096xf32> to vector<1x1024xf32>
    %7 = vector.extract_strided_slice %3 {offsets = [0, 1024], sizes = [1, 1024], strides = [1, 1]} : vector<1x4096xf32> to vector<1x1024xf32>
    %8 = vector.extract_strided_slice %5 {offsets = [0, 0], sizes = [2, 256], strides = [1, 1]} : vector<2x1024xf32> to vector<2x256xf32>
    %cst_7 = arith.constant dense<0.000000e+00> : vector<2xf32>
    %9 = vector.multi_reduction <add>, %8, %cst_7 [1] : vector<2x256xf32> to vector<2xf32>
    %10 = vector.shape_cast %9 : vector<2xf32> to vector<2x1xf32>
    %cst_8 = arith.constant 2.560000e+02 : f32
    %11 = vector.broadcast %cst_8 : f32 to vector<2x1xf32>
    %12 = arith.divf %10, %11 : vector<2x1xf32>
    %13 = vector.broadcast %12 : vector<2x1xf32> to vector<2x256xf32>
    %14 = arith.subf %8, %13 : vector<2x256xf32>
    %15 = arith.mulf %14, %14 : vector<2x256xf32>
    %cst_9 = arith.constant dense<0.000000e+00> : vector<2xf32>
    %16 = vector.multi_reduction <add>, %15, %cst_9 [1] : vector<2x256xf32> to vector<2xf32>
    %17 = vector.shape_cast %16 : vector<2xf32> to vector<2x1xf32>
    %cst_10 = arith.constant 2.560000e+02 : f32
    %18 = vector.broadcast %cst_10 : f32 to vector<2x1xf32>
    %19 = arith.divf %17, %18 : vector<2x1xf32>
    %cst_11 = arith.constant 9.99999974E-6 : f32
    %20 = vector.broadcast %cst_11 : f32 to vector<2x1xf32>
    %21 = arith.addf %19, %20 : vector<2x1xf32>
    %22 = math.rsqrt %21 : vector<2x1xf32>
    %23 = vector.broadcast %22 : vector<2x1xf32> to vector<2x256xf32>
    %24 = arith.mulf %14, %23 : vector<2x256xf32>
    %25 = vector.extract_strided_slice %5 {offsets = [0, 256], sizes = [2, 256], strides = [1, 1]} : vector<2x1024xf32> to vector<2x256xf32>
    %cst_12 = arith.constant dense<0.000000e+00> : vector<2xf32>
    %26 = vector.multi_reduction <add>, %25, %cst_12 [1] : vector<2x256xf32> to vector<2xf32>
    %27 = vector.shape_cast %26 : vector<2xf32> to vector<2x1xf32>
    %cst_13 = arith.constant 2.560000e+02 : f32
    %28 = vector.broadcast %cst_13 : f32 to vector<2x1xf32>
    %29 = arith.divf %27, %28 : vector<2x1xf32>
    %30 = vector.broadcast %29 : vector<2x1xf32> to vector<2x256xf32>
    %31 = arith.subf %25, %30 : vector<2x256xf32>
    %32 = arith.mulf %31, %31 : vector<2x256xf32>
    %cst_14 = arith.constant dense<0.000000e+00> : vector<2xf32>
    %33 = vector.multi_reduction <add>, %32, %cst_14 [1] : vector<2x256xf32> to vector<2xf32>
    %34 = vector.shape_cast %33 : vector<2xf32> to vector<2x1xf32>
    %cst_15 = arith.constant 2.560000e+02 : f32
    %35 = vector.broadcast %cst_15 : f32 to vector<2x1xf32>
    %36 = arith.divf %34, %35 : vector<2x1xf32>
    %cst_16 = arith.constant 9.99999974E-6 : f32
    %37 = vector.broadcast %cst_16 : f32 to vector<2x1xf32>
    %38 = arith.addf %36, %37 : vector<2x1xf32>
    %39 = math.rsqrt %38 : vector<2x1xf32>
    %40 = vector.broadcast %39 : vector<2x1xf32> to vector<2x256xf32>
    %41 = arith.mulf %31, %40 : vector<2x256xf32>
    %42 = vector.extract_strided_slice %5 {offsets = [0, 512], sizes = [2, 256], strides = [1, 1]} : vector<2x1024xf32> to vector<2x256xf32>
    %cst_17 = arith.constant dense<0.000000e+00> : vector<2xf32>
    %43 = vector.multi_reduction <add>, %42, %cst_17 [1] : vector<2x256xf32> to vector<2xf32>
    %44 = vector.shape_cast %43 : vector<2xf32> to vector<2x1xf32>
    %cst_18 = arith.constant 2.560000e+02 : f32
    %45 = vector.broadcast %cst_18 : f32 to vector<2x1xf32>
    %46 = arith.divf %44, %45 : vector<2x1xf32>
    %47 = vector.broadcast %46 : vector<2x1xf32> to vector<2x256xf32>
    %48 = arith.subf %42, %47 : vector<2x256xf32>
    %49 = arith.mulf %48, %48 : vector<2x256xf32>
    %cst_19 = arith.constant dense<0.000000e+00> : vector<2xf32>
    %50 = vector.multi_reduction <add>, %49, %cst_19 [1] : vector<2x256xf32> to vector<2xf32>
    %51 = vector.shape_cast %50 : vector<2xf32> to vector<2x1xf32>
    %cst_20 = arith.constant 2.560000e+02 : f32
    %52 = vector.broadcast %cst_20 : f32 to vector<2x1xf32>
    %53 = arith.divf %51, %52 : vector<2x1xf32>
    %cst_21 = arith.constant 9.99999974E-6 : f32
    %54 = vector.broadcast %cst_21 : f32 to vector<2x1xf32>
    %55 = arith.addf %53, %54 : vector<2x1xf32>
    %56 = math.rsqrt %55 : vector<2x1xf32>
    %57 = vector.broadcast %56 : vector<2x1xf32> to vector<2x256xf32>
    %58 = arith.mulf %48, %57 : vector<2x256xf32>
    %59 = vector.extract_strided_slice %5 {offsets = [0, 768], sizes = [2, 256], strides = [1, 1]} : vector<2x1024xf32> to vector<2x256xf32>
    %cst_22 = arith.constant dense<0.000000e+00> : vector<2xf32>
    %60 = vector.multi_reduction <add>, %59, %cst_22 [1] : vector<2x256xf32> to vector<2xf32>
    %61 = vector.shape_cast %60 : vector<2xf32> to vector<2x1xf32>
    %cst_23 = arith.constant 2.560000e+02 : f32
    %62 = vector.broadcast %cst_23 : f32 to vector<2x1xf32>
    %63 = arith.divf %61, %62 : vector<2x1xf32>
    %64 = vector.broadcast %63 : vector<2x1xf32> to vector<2x256xf32>
    %65 = arith.subf %59, %64 : vector<2x256xf32>
    %66 = arith.mulf %65, %65 : vector<2x256xf32>
    %cst_24 = arith.constant dense<0.000000e+00> : vector<2xf32>
    %67 = vector.multi_reduction <add>, %66, %cst_24 [1] : vector<2x256xf32> to vector<2xf32>
    %68 = vector.shape_cast %67 : vector<2xf32> to vector<2x1xf32>
    %cst_25 = arith.constant 2.560000e+02 : f32
    %69 = vector.broadcast %cst_25 : f32 to vector<2x1xf32>
    %70 = arith.divf %68, %69 : vector<2x1xf32>
    %cst_26 = arith.constant 9.99999974E-6 : f32
    %71 = vector.broadcast %cst_26 : f32 to vector<2x1xf32>
    %72 = arith.addf %70, %71 : vector<2x1xf32>
    %73 = math.rsqrt %72 : vector<2x1xf32>
    %74 = vector.broadcast %73 : vector<2x1xf32> to vector<2x256xf32>
    %75 = arith.mulf %65, %74 : vector<2x256xf32>
    %76 = tpu.concatenate %24, %41, %58, %75 in 1 : vector<2x256xf32>, vector<2x256xf32>, vector<2x256xf32>, vector<2x256xf32> -> vector<2x1024xf32>
    %77 = vector.broadcast %6 : vector<1x1024xf32> to vector<2x1024xf32>
    %78 = arith.mulf %76, %77 : vector<2x1024xf32>
    %79 = vector.broadcast %7 : vector<1x1024xf32> to vector<2x1024xf32>
    %80 = arith.addf %78, %79 : vector<2x1024xf32>
    %cst_27 = arith.constant 0.000000e+00 : f32
    %81 = vector.broadcast %cst_27 : f32 to vector<2x1024xf32>
    %82 = arith.subf %81, %80 : vector<2x1024xf32>
    %83 = math.exp %82 : vector<2x1024xf32>
    %cst_28 = arith.constant 1.000000e+00 : f32
    %84 = vector.broadcast %cst_28 : f32 to vector<2x1024xf32>
    %85 = arith.addf %84, %83 : vector<2x1024xf32>
    %86 = tpu.reciprocal %85 {approx = true} : vector<2x1024xf32> -> vector<2x1024xf32>
    %87 = arith.mulf %80, %86 : vector<2x1024xf32>
    %88 = arith.truncf %87 : vector<2x1024xf32> to vector<2x1024xbf16>
    %cst_29 = arith.constant dense<0.000000e+00> : vector<2x1024xf32>
    %89 = tpu.matmul %88, %2, %cst_29 {dimension_numbers = #tpu.dot_dimension_numbers<[1], [0], [0], [1], [0, 0, 1, 1], [], []>} : vector<2x1024xbf16>, vector<1024x1024xbf16>, vector<2x1024xf32> -> vector<2x1024xf32>
    %90 = vector.extract_strided_slice %3 {offsets = [0, 2048], sizes = [1, 1024], strides = [1, 1]} : vector<1x4096xf32> to vector<1x1024xf32>
    %91 = vector.extract_strided_slice %3 {offsets = [0, 3072], sizes = [1, 1024], strides = [1, 1]} : vector<1x4096xf32> to vector<1x1024xf32>
    %92 = vector.extract_strided_slice %89 {offsets = [0, 0], sizes = [2, 256], strides = [1, 1]} : vector<2x1024xf32> to vector<2x256xf32>
    %cst_30 = arith.constant dense<0.000000e+00> : vector<2xf32>
    %93 = vector.multi_reduction <add>, %92, %cst_30 [1] : vector<2x256xf32> to vector<2xf32>
    %94 = vector.shape_cast %93 : vector<2xf32> to vector<2x1xf32>
    %cst_31 = arith.constant 2.560000e+02 : f32
    %95 = vector.broadcast %cst_31 : f32 to vector<2x1xf32>
    %96 = arith.divf %94, %95 : vector<2x1xf32>
    %97 = vector.broadcast %96 : vector<2x1xf32> to vector<2x256xf32>
    %98 = arith.subf %92, %97 : vector<2x256xf32>
    %99 = arith.mulf %98, %98 : vector<2x256xf32>
    %cst_32 = arith.constant dense<0.000000e+00> : vector<2xf32>
    %100 = vector.multi_reduction <add>, %99, %cst_32 [1] : vector<2x256xf32> to vector<2xf32>
    %101 = vector.shape_cast %100 : vector<2xf32> to vector<2x1xf32>
    %cst_33 = arith.constant 2.560000e+02 : f32
    %102 = vector.broadcast %cst_33 : f32 to vector<2x1xf32>
    %103 = arith.divf %101, %102 : vector<2x1xf32>
    %cst_34 = arith.constant 9.99999974E-6 : f32
    %104 = vector.broadcast %cst_34 : f32 to vector<2x1xf32>
    %105 = arith.addf %103, %104 : vector<2x1xf32>
    %106 = math.rsqrt %105 : vector<2x1xf32>
    %107 = vector.broadcast %106 : vector<2x1xf32> to vector<2x256xf32>
    %108 = arith.mulf %98, %107 : vector<2x256xf32>
    %109 = vector.extract_strided_slice %89 {offsets = [0, 256], sizes = [2, 256], strides = [1, 1]} : vector<2x1024xf32> to vector<2x256xf32>
    %cst_35 = arith.constant dense<0.000000e+00> : vector<2xf32>
    %110 = vector.multi_reduction <add>, %109, %cst_35 [1] : vector<2x256xf32> to vector<2xf32>
    %111 = vector.shape_cast %110 : vector<2xf32> to vector<2x1xf32>
    %cst_36 = arith.constant 2.560000e+02 : f32
    %112 = vector.broadcast %cst_36 : f32 to vector<2x1xf32>
    %113 = arith.divf %111, %112 : vector<2x1xf32>
    %114 = vector.broadcast %113 : vector<2x1xf32> to vector<2x256xf32>
    %115 = arith.subf %109, %114 : vector<2x256xf32>
    %116 = arith.mulf %115, %115 : vector<2x256xf32>
    %cst_37 = arith.constant dense<0.000000e+00> : vector<2xf32>
    %117 = vector.multi_reduction <add>, %116, %cst_37 [1] : vector<2x256xf32> to vector<2xf32>
    %118 = vector.shape_cast %117 : vector<2xf32> to vector<2x1xf32>
    %cst_38 = arith.constant 2.560000e+02 : f32
    %119 = vector.broadcast %cst_38 : f32 to vector<2x1xf32>
    %120 = arith.divf %118, %119 : vector<2x1xf32>
    %cst_39 = arith.constant 9.99999974E-6 : f32
    %121 = vector.broadcast %cst_39 : f32 to vector<2x1xf32>
    %122 = arith.addf %120, %121 : vector<2x1xf32>
    %123 = math.rsqrt %122 : vector<2x1xf32>
    %124 = vector.broadcast %123 : vector<2x1xf32> to vector<2x256xf32>
    %125 = arith.mulf %115, %124 : vector<2x256xf32>
    %126 = vector.extract_strided_slice %89 {offsets = [0, 512], sizes = [2, 256], strides = [1, 1]} : vector<2x1024xf32> to vector<2x256xf32>
    %cst_40 = arith.constant dense<0.000000e+00> : vector<2xf32>
    %127 = vector.multi_reduction <add>, %126, %cst_40 [1] : vector<2x256xf32> to vector<2xf32>
    %128 = vector.shape_cast %127 : vector<2xf32> to vector<2x1xf32>
    %cst_41 = arith.constant 2.560000e+02 : f32
    %129 = vector.broadcast %cst_41 : f32 to vector<2x1xf32>
    %130 = arith.divf %128, %129 : vector<2x1xf32>
    %131 = vector.broadcast %130 : vector<2x1xf32> to vector<2x256xf32>
    %132 = arith.subf %126, %131 : vector<2x256xf32>
    %133 = arith.mulf %132, %132 : vector<2x256xf32>
    %cst_42 = arith.constant dense<0.000000e+00> : vector<2xf32>
    %134 = vector.multi_reduction <add>, %133, %cst_42 [1] : vector<2x256xf32> to vector<2xf32>
    %135 = vector.shape_cast %134 : vector<2xf32> to vector<2x1xf32>
    %cst_43 = arith.constant 2.560000e+02 : f32
    %136 = vector.broadcast %cst_43 : f32 to vector<2x1xf32>
    %137 = arith.divf %135, %136 : vector<2x1xf32>
    %cst_44 = arith.constant 9.99999974E-6 : f32
    %138 = vector.broadcast %cst_44 : f32 to vector<2x1xf32>
    %139 = arith.addf %137, %138 : vector<2x1xf32>
    %140 = math.rsqrt %139 : vector<2x1xf32>
    %141 = vector.broadcast %140 : vector<2x1xf32> to vector<2x256xf32>
    %142 = arith.mulf %132, %141 : vector<2x256xf32>
    %143 = vector.extract_strided_slice %89 {offsets = [0, 768], sizes = [2, 256], strides = [1, 1]} : vector<2x1024xf32> to vector<2x256xf32>
    %cst_45 = arith.constant dense<0.000000e+00> : vector<2xf32>
    %144 = vector.multi_reduction <add>, %143, %cst_45 [1] : vector<2x256xf32> to vector<2xf32>
    %145 = vector.shape_cast %144 : vector<2xf32> to vector<2x1xf32>
    %cst_46 = arith.constant 2.560000e+02 : f32
    %146 = vector.broadcast %cst_46 : f32 to vector<2x1xf32>
    %147 = arith.divf %145, %146 : vector<2x1xf32>
    %148 = vector.broadcast %147 : vector<2x1xf32> to vector<2x256xf32>
    %149 = arith.subf %143, %148 : vector<2x256xf32>
    %150 = arith.mulf %149, %149 : vector<2x256xf32>
    %cst_47 = arith.constant dense<0.000000e+00> : vector<2xf32>
    %151 = vector.multi_reduction <add>, %150, %cst_47 [1] : vector<2x256xf32> to vector<2xf32>
    %152 = vector.shape_cast %151 : vector<2xf32> to vector<2x1xf32>
    %cst_48 = arith.constant 2.560000e+02 : f32
    %153 = vector.broadcast %cst_48 : f32 to vector<2x1xf32>
    %154 = arith.divf %152, %153 : vector<2x1xf32>
    %cst_49 = arith.constant 9.99999974E-6 : f32
    %155 = vector.broadcast %cst_49 : f32 to vector<2x1xf32>
    %156 = arith.addf %154, %155 : vector<2x1xf32>
    %157 = math.rsqrt %156 : vector<2x1xf32>
    %158 = vector.broadcast %157 : vector<2x1xf32> to vector<2x256xf32>
    %159 = arith.mulf %149, %158 : vector<2x256xf32>
    %160 = tpu.concatenate %108, %125, %142, %159 in 1 : vector<2x256xf32>, vector<2x256xf32>, vector<2x256xf32>, vector<2x256xf32> -> vector<2x1024xf32>
    %161 = vector.broadcast %90 : vector<1x1024xf32> to vector<2x1024xf32>
    %162 = arith.mulf %160, %161 : vector<2x1024xf32>
    %163 = vector.broadcast %91 : vector<1x1024xf32> to vector<2x1024xf32>
    %164 = arith.addf %162, %163 : vector<2x1024xf32>
    %cst_50 = arith.constant 0.000000e+00 : f32
    %165 = vector.broadcast %cst_50 : f32 to vector<2x1024xf32>
    %166 = arith.subf %165, %164 : vector<2x1024xf32>
    %167 = math.exp %166 : vector<2x1024xf32>
    %cst_51 = arith.constant 1.000000e+00 : f32
    %168 = vector.broadcast %cst_51 : f32 to vector<2x1024xf32>
    %169 = arith.addf %168, %167 : vector<2x1024xf32>
    %170 = tpu.reciprocal %169 {approx = true} : vector<2x1024xf32> -> vector<2x1024xf32>
    %171 = arith.mulf %164, %170 : vector<2x1024xf32>
    %172 = arith.addf %171, %0 : vector<2x1024xf32>
    %cst_52 = arith.constant 0.000000e+00 : f32
    %173 = vector.broadcast %cst_52 : f32 to vector<2x1024xf32>
    %174 = arith.subf %173, %172 : vector<2x1024xf32>
    %175 = math.exp %174 : vector<2x1024xf32>
    %cst_53 = arith.constant 1.000000e+00 : f32
    %176 = vector.broadcast %cst_53 : f32 to vector<2x1024xf32>
    %177 = arith.addf %176, %175 : vector<2x1024xf32>
    %178 = tpu.reciprocal %177 {approx = true} : vector<2x1024xf32> -> vector<2x1024xf32>
    %179 = arith.mulf %172, %178 : vector<2x1024xf32>
    %c0_54 = arith.constant 0 : index
    %c0_55 = arith.constant 0 : index
    %180 = vector.load %arg4[%c0_54, %c0_55] : memref<2x1024xf32, #tpu.memory_space<vmem>>, vector<2x1024xf32>
    tpu.vector_store %arg4[%c0_54, %c0_55], %179 {strides = array<i32>} : memref<2x1024xf32, #tpu.memory_space<vmem>>, vector<2x1024xf32>,
    return
  }
}

</mosaic_0001>

<llo_original>
// kernel: tpu_custom_call.1
$region0: #{tpu_custom_call.1}
  #allocation0 [shape = 'u32[]', space=smem, size = 0x4, offset = 0x4, fixed_abs, tag = 'smem constant byte address 0x4 - core index']
  #allocation1 [shape = 'u32[144,128]{1,0:T(1,128)}', space=vmem, size = 0x12000, scoped, tag = 'internal scratch']
  %s0 = inlined_call_operand.hbm [shape: f32[2,1024], index: 0, kind: input, shape index: {}]
  %s1 = inlined_call_operand.hbm [shape: bf16[1024,1024], index: 1, kind: input, shape index: {}]
  %s2 = inlined_call_operand.hbm [shape: bf16[1024,1024], index: 2, kind: input, shape index: {}]
  %s3 = inlined_call_operand.hbm [shape: f32[1,4096], index: 3, kind: input, shape index: {}]
  %s4 = inlined_call_operand.hbm [shape: f32[2,1024], index: 4, kind: output, shape index: {}]
  %s5 = sld [smem:[#allocation0]]
  $region42: #{tpu_custom_call.1} parent=0
    _
  %s7 = ssub.s32 1, %s5
  %s8 = scalar_select 0, %s7, %s5
  $region1: #{tpu_custom_call.1} parent=0
    #allocation2 [shape = 'u8[8192]{0}', space=vmem, size = 0x2000, scoped, tag = 'input window, operand 0, single buffered']
    #allocation3 [shape = 's32[1]{0}', space=sflag, size = 0x4, scoped, tag = 'scoped memory for tpu_custom_call.1']
    #allocation4 [shape = 's32[1]{0}', space=sflag, size = 0x4, scoped, tag = 'scoped memory for tpu_custom_call.1']
    #allocation5 [shape = 'u8[2097152]{0}', space=vmem, size = 0x200000, scoped, tag = 'input window, operand 1, single buffered']
    #allocation6 [shape = 's32[1]{0}', space=sflag, size = 0x4, scoped, tag = 'scoped memory for tpu_custom_call.1']
    #allocation7 [shape = 'u8[2097152]{0}', space=vmem, size = 0x200000, scoped, tag = 'input window, operand 2, single buffered']
    #allocation8 [shape = 'u8[16384]{0}', space=vmem, size = 0x4000, scoped, tag = 'input window, operand 3, single buffered']
    #allocation9 [shape = 's32[1]{0}', space=sflag, size = 0x4, scoped, tag = 'scoped memory for tpu_custom_call.1']
    #allocation10 [shape = 'u8[8192]{0}', space=vmem, size = 0x2000, scoped, tag = 'output window, operand 0, single buffered']
    %9 = vsyncpa [#allocation3], 0
    %10 = vsyncpa [#allocation6], 0
    %11 = vsyncpa [#allocation9], 0
    %12 = vsyncpa [#allocation4], 0
    // Predicated region
    $region2: #{tpu_custom_call.1} parent=1 // pred_check
      _
    $region3: #{tpu_custom_call.1} parent=1 // pred_check_branch
      %14 = sbr.rel (0) target = $region5
    $region4: #{tpu_custom_call.1} parent=1 // pred_region
      %s16 = ssub.s32 256, 256
      %17 = vsyncadd [#allocation3], %s16
      %s19 = sshll.u32 [#allocation2], 4
      %s20 = int_to_ptr.vmem [resolvable:$true] %s19
      %22 = dma.hbm_to_vmem [thread:$0]  %s0, 256, %s20, [#allocation3]
    $region5: #{tpu_custom_call.1} parent=1 // pred_fallthru
      _
    // Predicated region
    $region6: #{tpu_custom_call.1} parent=1 // pred_check
      _
    $region7: #{tpu_custom_call.1} parent=1 // pred_check_branch
      %24 = sbr.rel (0) target = $region9
    $region8: #{tpu_custom_call.1} parent=1 // pred_region
      %s26 = ssub.s32 65536, 65536
      %27 = vsyncadd [#allocation6], %s26
      %s28 = sshll.u32 [#allocation5], 4
      %s29 = int_to_ptr.vmem [resolvable:$true] %s28
      %34 = dma.hbm_to_vmem [thread:$0]  %s1, 65536, %s29, [#allocation6], 512, 512, 32
    $region9: #{tpu_custom_call.1} parent=1 // pred_fallthru
      _
    // Predicated region
    $region10: #{tpu_custom_call.1} parent=1 // pred_check
      _
    $region11: #{tpu_custom_call.1} parent=1 // pred_check_branch
      %36 = sbr.rel (0) target = $region13
    $region12: #{tpu_custom_call.1} parent=1 // pred_region
      %s38 = ssub.s32 65536, 65536
      %39 = vsyncadd [#allocation6], %s38
      %s40 = sshll.u32 [#allocation7], 4
      %s41 = int_to_ptr.vmem [resolvable:$true] %s40
      %46 = dma.hbm_to_vmem [thread:$0]  %s2, 65536, %s41, [#allocation6], 512, 512, 32
    $region13: #{tpu_custom_call.1} parent=1 // pred_fallthru
      _
    // Predicated region
    $region14: #{tpu_custom_call.1} parent=1 // pred_check
      _
    $region15: #{tpu_custom_call.1} parent=1 // pred_check_branch
      %48 = sbr.rel (0) target = $region17
    $region16: #{tpu_custom_call.1} parent=1 // pred_region
      %s50 = ssub.s32 512, 512
      %51 = vsyncadd [#allocation9], %s50
      %s53 = sshll.u32 [#allocation8], 4
      %s54 = int_to_ptr.vmem [resolvable:$true] %s53
      %56 = dma.hbm_to_vmem [thread:$0]  %s3, 512, %s54, [#allocation9]
    $region17: #{tpu_custom_call.1} parent=1 // pred_fallthru
      _
    // Predicated region
    $region18: #{tpu_custom_call.1} parent=1 // pred_check
      _
    $region19: #{tpu_custom_call.1} parent=1 // pred_check_branch
      %58 = sbr.rel (0) target = $region21
    $region20: #{tpu_custom_call.1} parent=1 // pred_region
      %59 = dma.done [#allocation3], 256
    $region21: #{tpu_custom_call.1} parent=1 // pred_fallthru
      _
    // Predicated region
    $region22: #{tpu_custom_call.1} parent=1 // pred_check
      _
    $region23: #{tpu_custom_call.1} parent=1 // pred_check_branch
      %61 = sbr.rel (0) target = $region25
    $region24: #{tpu_custom_call.1} parent=1 // pred_region
      %62 = dma.done [#allocation6], 65536
    $region25: #{tpu_custom_call.1} parent=1 // pred_fallthru
      _
    // Predicated region
    $region26: #{tpu_custom_call.1} parent=1 // pred_check
      _
    $region27: #{tpu_custom_call.1} parent=1 // pred_check_branch
      %64 = sbr.rel (0) target = $region29
    $region28: #{tpu_custom_call.1} parent=1 // pred_region
      %65 = dma.done [#allocation6], 65536
    $region29: #{tpu_custom_call.1} parent=1 // pred_fallthru
      _
    // Predicated region
    $region30: #{tpu_custom_call.1} parent=1 // pred_check
      _
    $region31: #{tpu_custom_call.1} parent=1 // pred_check_branch
      %67 = sbr.rel (0) target = $region33
    $region32: #{tpu_custom_call.1} parent=1 // pred_region
      %68 = dma.done [#allocation9], 512
    $region33: #{tpu_custom_call.1} parent=1 // pred_fallthru
      _
    %v69 = vld [vmem:[#allocation2] sm:$0xff]
    %v70 = vld [vmem:[#allocation2 + $0x8] sm:$0xff]
    %v71 = vld [vmem:[#allocation5] sm:$0xff]
    %v72 = vld [vmem:[#allocation5 + $0x8] sm:$0xff]
    %v73 = vld [vmem:[#allocation5 + $0x10] sm:$0xff]
    %v74 = vld [vmem:[#allocation5 + $0x18] sm:$0xff]
    %v75 = vld [vmem:[#allocation5 + $0x20] sm:$0xff]
    %v76 = vld [vmem:[#allocation5 + $0x28] sm:$0xff]
    %v77 = vld [vmem:[#allocation5 + $0x30] sm:$0xff]
    %v78 = vld [vmem:[#allocation5 + $0x38] sm:$0xff]
    %v79 = vld [vmem:[#allocation5 + $0x40] sm:$0xff]
    %v80 = vld [vmem:[#allocation5 + $0x48] sm:$0xff]
    %v81 = vld [vmem:[#allocation5 + $0x50] sm:$0xff]
    %v82 = vld [vmem:[#allocation5 + $0x58] sm:$0xff]
    %v83 = vld [vmem:[#allocation5 + $0x60] sm:$0xff]
    %v84 = vld [vmem:[#allocation5 + $0x68] sm:$0xff]
    %v85 = vld [vmem:[#allocation5 + $0x70] sm:$0xff]
    %v86 = vld [vmem:[#allocation5 + $0x78] sm:$0xff]
    %v87 = vld [vmem:[#allocation5 + $0x80] sm:$0xff]
    %v88 = vld [vmem:[#allocation5 + $0x88] sm:$0xff]
    %v89 = vld [vmem:[#allocation5 + $0x90] sm:$0xff]
    %v90 = vld [vmem:[#allocation5 + $0x98] sm:$0xff]
    %v91 = vld [vmem:[#allocation5 + $0xa0] sm:$0xff]
    %v92 = vld [vmem:[#allocation5 + $0xa8] sm:$0xff]
    %v93 = vld [vmem:[#allocation5 + $0xb0] sm:$0xff]
    %v94 = vld [vmem:[#allocation5 + $0xb8] sm:$0xff]
    %v95 = vld [vmem:[#allocation5 + $0xc0] sm:$0xff]
    %v96 = vld [vmem:[#allocation5 + $0xc8] sm:$0xff]
    %v97 = vld [vmem:[#allocation5 + $0xd0] sm:$0xff]
    %v98 = vld [vmem:[#allocation5 + $0xd8] sm:$0xff]
    %v99 = vld [vmem:[#allocation5 + $0xe0] sm:$0xff]
    %v100 = vld [vmem:[#allocation5 + $0xe8] sm:$0xff]
    %v101 = vld [vmem:[#allocation5 + $0xf0] sm:$0xff]
    %v102 = vld [vmem:[#allocation5 + $0xf8] sm:$0xff]
    %v103 = vld [vmem:[#allocation5 + $0x100] sm:$0xff]
    %v104 = vld [vmem:[#allocation5 + $0x108] sm:$0xff]
    %v105 = vld [vmem:[#allocation5 + $0x110] sm:$0xff]
    %v106 = vld [vmem:[#allocation5 + $0x118] sm:$0xff]
    %v107 = vld [vmem:[#allocation5 + $0x120] sm:$0xff]
    %v108 = vld [vmem:[#allocation5 + $0x128] sm:$0xff]
    %v109 = vld [vmem:[#allocation5 + $0x130] sm:$0xff]
    %v110 = vld [vmem:[#allocation5 + $0x138] sm:$0xff]
    %v111 = vld [vmem:[#allocation5 + $0x140] sm:$0xff]
    %v112 = vld [vmem:[#allocation5 + $0x148] sm:$0xff]
    %v113 = vld [vmem:[#allocation5 + $0x150] sm:$0xff]
    %v114 = vld [vmem:[#allocation5 + $0x158] sm:$0xff]
    %v115 = vld [vmem:[#allocation5 + $0x160] sm:$0xff]
    %v116 = vld [vmem:[#allocation5 + $0x168] sm:$0xff]
    %v117 = vld [vmem:[#allocation5 + $0x170] sm:$0xff]
    %v118 = vld [vmem:[#allocation5 + $0x178] sm:$0xff]
    %v119 = vld [vmem:[#allocation5 + $0x180] sm:$0xff]
    %v120 = vld [vmem:[#allocation5 + $0x188] sm:$0xff]
    %v121 = vld [vmem:[#allocation5 + $0x190] sm:$0xff]
    %v122 = vld [vmem:[#allocation5 + $0x198] sm:$0xff]
    %v123 = vld [vmem:[#allocation5 + $0x1a0] sm:$0xff]
    %v124 = vld [vmem:[#allocation5 + $0x1a8] sm:$0xff]
    %v125 = vld [vmem:[#allocation5 + $0x1b0] sm:$0xff]
    %v126 = vld [vmem:[#allocation5 + $0x1b8] sm:$0xff]
    %v127 = vld [vmem:[#allocation5 + $0x1c0] sm:$0xff]
    %v128 = vld [vmem:[#allocation5 + $0x1c8] sm:$0xff]
    %v129 = vld [vmem:[#allocation5 + $0x1d0] sm:$0xff]
    %v130 = vld [vmem:[#allocation5 + $0x1d8] sm:$0xff]
    %v131 = vld [vmem:[#allocation5 + $0x1e0] sm:$0xff]
    %v132 = vld [vmem:[#allocation5 + $0x1e8] sm:$0xff]
    %v133 = vld [vmem:[#allocation5 + $0x1f0] sm:$0xff]
    %v134 = vld [vmem:[#allocation5 + $0x1f8] sm:$0xff]
    %v135 = vld [vmem:[#allocation5 + $0x200] sm:$0xff]
    %v136 = vld [vmem:[#allocation5 + $0x208] sm:$0xff]
    %v137 = vld [vmem:[#allocation5 + $0x210] sm:$0xff]
    %v138 = vld [vmem:[#allocation5 + $0x218] sm:$0xff]
    %v139 = vld [vmem:[#allocation5 + $0x220] sm:$0xff]
    %v140 = vld [vmem:[#allocation5 + $0x228] sm:$0xff]
    %v141 = vld [vmem:[#allocation5 + $0x230] sm:$0xff]
    %v142 = vld [vmem:[#allocation5 + $0x238] sm:$0xff]
    %v143 = vld [vmem:[#allocation5 + $0x240] sm:$0xff]
    %v144 = vld [vmem:[#allocation5 + $0x248] sm:$0xff]
    %v145 = vld [vmem:[#allocation5 + $0x250] sm:$0xff]
    %v146 = vld [vmem:[#allocation5 + $0x258] sm:$0xff]
    %v147 = vld [vmem:[#allocation5 + $0x260] sm:$0xff]
    %v148 = vld [vmem:[#allocation5 + $0x268] sm:$0xff]
    %v149 = vld [vmem:[#allocation5 + $0x270] sm:$0xff]
    %v150 = vld [vmem:[#allocation5 + $0x278] sm:$0xff]
    %v151 = vld [vmem:[#allocation5 + $0x280] sm:$0xff]
    %v152 = vld [vmem:[#allocation5 + $0x288] sm:$0xff]
    %v153 = vld [vmem:[#allocation5 + $0x290] sm:$0xff]
    %v154 = vld [vmem:[#allocation5 + $0x298] sm:$0xff]
    %v155 = vld [vmem:[#allocation5 + $0x2a0] sm:$0xff]
    %v156 = vld [vmem:[#allocation5 + $0x2a8] sm:$0xff]
    %v157 = vld [vmem:[#allocation5 + $0x2b0] sm:$0xff]
    %v158 = vld [vmem:[#allocation5 + $0x2b8] sm:$0xff]
    %v159 = vld [vmem:[#allocation5 + $0x2c0] sm:$0xff]
    %v160 = vld [vmem:[#allocation5 + $0x2c8] sm:$0xff]
    %v161 = vld [vmem:[#allocation5 + $0x2d0] sm:$0xff]
    %v162 = vld [vmem:[#allocation5 + $0x2d8] sm:$0xff]
    %v163 = vld [vmem:[#allocation5 + $0x2e0] sm:$0xff]
    %v164 = vld [vmem:[#allocation5 + $0x2e8] sm:$0xff]
    %v165 = vld [vmem:[#allocation5 + $0x2f0] sm:$0xff]
    %v166 = vld [vmem:[#allocation5 + $0x2f8] sm:$0xff]
    %v167 = vld [vmem:[#allocation5 + $0x300] sm:$0xff]
    %v168 = vld [vmem:[#allocation5 + $0x308] sm:$0xff]
    %v169 = vld [vmem:[#allocation5 + $0x310] sm:$0xff]
    %v170 = vld [vmem:[#allocation5 + $0x318] sm:$0xff]
    %v171 = vld [vmem:[#allocation5 + $0x320] sm:$0xff]
    %v172 = vld [vmem:[#allocation5 + $0x328] sm:$0xff]
    %v173 = vld [vmem:[#allocation5 + $0x330] sm:$0xff]
    %v174 = vld [vmem:[#allocation5 + $0x338] sm:$0xff]
    %v175 = vld [vmem:[#allocation5 + $0x340] sm:$0xff]
    %v176 = vld [vmem:[#allocation5 + $0x348] sm:$0xff]
    %v177 = vld [vmem:[#allocation5 + $0x350] sm:$0xff]
    %v178 = vld [vmem:[#allocation5 + $0x358] sm:$0xff]
    %v179 = vld [vmem:[#allocation5 + $0x360] sm:$0xff]
    %v180 = vld [vmem:[#allocation5 + $0x368] sm:$0xff]
    %v181 = vld [vmem:[#allocation5 + $0x370] sm:$0xff]
    %v182 = vld [vmem:[#allocation5 + $0x378] sm:$0xff]
    %v183 = vld [vmem:[#allocation5 + $0x380] sm:$0xff]
    %v184 = vld [vmem:[#allocation5 + $0x388] sm:$0xff]
    %v185 = vld [vmem:[#allocation5 + $0x390] sm:$0xff]
    %v186 = vld [vmem:[#allocation5 + $0x398] sm:$0xff]
    %v187 = vld [vmem:[#allocation5 + $0x3a0] sm:$0xff]
    %v188 = vld [vmem:[#allocation5 + $0x3a8] sm:$0xff]
    %v189 = vld [vmem:[#allocation5 + $0x3b0] sm:$0xff]
    %v190 = vld [vmem:[#allocation5 + $0x3b8] sm:$0xff]
    %v191 = vld [vmem:[#allocation5 + $0x3c0] sm:$0xff]
    %v192 = vld [vmem:[#allocation5 + $0x3c8] sm:$0xff]
    %v193 = vld [vmem:[#allocation5 + $0x3d0] sm:$0xff]
    %v194 = vld [vmem:[#allocation5 + $0x3d8] sm:$0xff]
    %v195 = vld [vmem:[#allocation5 + $0x3e0] sm:$0xff]
    %v196 = vld [vmem:[#allocation5 + $0x3e8] sm:$0xff]
    %v197 = vld [vmem:[#allocation5 + $0x3f0] sm:$0xff]
    %v198 = vld [vmem:[#allocation5 + $0x3f8] sm:$0xff]
    %v199 = vld [vmem:[#allocation5 + $0x400] sm:$0xff]
    %v200 = vld [vmem:[#allocation5 + $0x408] sm:$0xff]
    %v201 = vld [vmem:[#allocation5 + $0x410] sm:$0xff]
    %v202 = vld [vmem:[#allocation5 + $0x418] sm:$0xff]
    %v203 = vld [vmem:[#allocation5 + $0x420] sm:$0xff]
    %v204 = vld [vmem:[#allocation5 + $0x428] sm:$0xff]
    %v205 = vld [vmem:[#allocation5 + $0x430] sm:$0xff]
    %v206 = vld [vmem:[#allocation5 + $0x438] sm:$0xff]
    %v207 = vld [vmem:[#allocation5 + $0x440] sm:$0xff]
    %v208 = vld [vmem:[#allocation5 + $0x448] sm:$0xff]
    %v209 = vld [vmem:[#allocation5 + $0x450] sm:$0xff]
    %v210 = vld [vmem:[#allocation5 + $0x458] sm:$0xff]
    %v211 = vld [vmem:[#allocation5 + $0x460] sm:$0xff]
    %v212 = vld [vmem:[#allocation5 + $0x468] sm:$0xff]
    %v213 = vld [vmem:[#allocation5 + $0x470] sm:$0xff]
    %v214 = vld [vmem:[#allocation5 + $0x478] sm:$0xff]
    %v215 = vld [vmem:[#allocation5 + $0x480] sm:$0xff]
    %v216 = vld [vmem:[#allocation5 + $0x488] sm:$0xff]
    %v217 = vld [vmem:[#allocation5 + $0x490] sm:$0xff]
    %v218 = vld [vmem:[#allocation5 + $0x498] sm:$0xff]
    %v219 = vld [vmem:[#allocation5 + $0x4a0] sm:$0xff]
    %v220 = vld [vmem:[#allocation5 + $0x4a8] sm:$0xff]
    %v221 = vld [vmem:[#allocation5 + $0x4b0] sm:$0xff]
    %v222 = vld [vmem:[#allocation5 + $0x4b8] sm:$0xff]
    %v223 = vld [vmem:[#allocation5 + $0x4c0] sm:$0xff]
    %v224 = vld [vmem:[#allocation5 + $0x4c8] sm:$0xff]
    %v225 = vld [vmem:[#allocation5 + $0x4d0] sm:$0xff]
    %v226 = vld [vmem:[#allocation5 + $0x4d8] sm:$0xff]
    %v227 = vld [vmem:[#allocation5 + $0x4e0] sm:$0xff]
    %v228 = vld [vmem:[#allocation5 + $0x4e8] sm:$0xff]
    %v229 = vld [vmem:[#allocation5 + $0x4f0] sm:$0xff]
    %v230 = vld [vmem:[#allocation5 + $0x4f8] sm:$0xff]
    %v231 = vld [vmem:[#allocation5 + $0x500] sm:$0xff]
    %v232 = vld [vmem:[#allocation5 + $0x508] sm:$0xff]
    %v233 = vld [vmem:[#allocation5 + $0x510] sm:$0xff]
    %v234 = vld [vmem:[#allocation5 + $0x518] sm:$0xff]
    %v235 = vld [vmem:[#allocation5 + $0x520] sm:$0xff]
    %v236 = vld [vmem:[#allocation5 + $0x528] sm:$0xff]
    %v237 = vld [vmem:[#allocation5 + $0x530] sm:$0xff]
    %v238 = vld [vmem:[#allocation5 + $0x538] sm:$0xff]
    %v239 = vld [vmem:[#allocation5 + $0x540] sm:$0xff]
    %v240 = vld [vmem:[#allocation5 + $0x548] sm:$0xff]
    %v241 = vld [vmem:[#allocation5 + $0x550] sm:$0xff]
    %v242 = vld [vmem:[#allocation5 + $0x558] sm:$0xff]
    %v243 = vld [vmem:[#allocation5 + $0x560] sm:$0xff]
    %v244 = vld [vmem:[#allocation5 + $0x568] sm:$0xff]
    %v245 = vld [vmem:[#allocation5 + $0x570] sm:$0xff]
    %v246 = vld [vmem:[#allocation5 + $0x578] sm:$0xff]
    %v247 = vld [vmem:[#allocation5 + $0x580] sm:$0xff]
    %v248 = vld [vmem:[#allocation5 + $0x588] sm:$0xff]
    %v249 = vld [vmem:[#allocation5 + $0x590] sm:$0xff]
    %v250 = vld [vmem:[#allocation5 + $0x598] sm:$0xff]
    %v251 = vld [vmem:[#allocation5 + $0x5a0] sm:$0xff]
    %v252 = vld [vmem:[#allocation5 + $0x5a8] sm:$0xff]
    %v253 = vld [vmem:[#allocation5 + $0x5b0] sm:$0xff]
    %v254 = vld [vmem:[#allocation5 + $0x5b8] sm:$0xff]
    %v255 = vld [vmem:[#allocation5 + $0x5c0] sm:$0xff]
    %v256 = vld [vmem:[#allocation5 + $0x5c8] sm:$0xff]
    %v257 = vld [vmem:[#allocation5 + $0x5d0] sm:$0xff]
    %v258 = vld [vmem:[#allocation5 + $0x5d8] sm:$0xff]
    %v259 = vld [vmem:[#allocation5 + $0x5e0] sm:$0xff]
    %v260 = vld [vmem:[#allocation5 + $0x5e8] sm:$0xff]
    %v261 = vld [vmem:[#allocation5 + $0x5f0] sm:$0xff]
    %v262 = vld [vmem:[#allocation5 + $0x5f8] sm:$0xff]
    %v263 = vld [vmem:[#allocation5 + $0x600] sm:$0xff]
    %v264 = vld [vmem:[#allocation5 + $0x608] sm:$0xff]
    %v265 = vld [vmem:[#allocation5 + $0x610] sm:$0xff]
    %v266 = vld [vmem:[#allocation5 + $0x618] sm:$0xff]
    %v267 = vld [vmem:[#allocation5 + $0x620] sm:$0xff]
    %v268 = vld [vmem:[#allocation5 + $0x628] sm:$0xff]
    %v269 = vld [vmem:[#allocation5 + $0x630] sm:$0xff]
    %v270 = vld [vmem:[#allocation5 + $0x638] sm:$0xff]
    %v271 = vld [vmem:[#allocation5 + $0x640] sm:$0xff]
    %v272 = vld [vmem:[#allocation5 + $0x648] sm:$0xff]
    %v273 = vld [vmem:[#allocation5 + $0x650] sm:$0xff]
    %v274 = vld [vmem:[#allocation5 + $0x658] sm:$0xff]
    %v275 = vld [vmem:[#allocation5 + $0x660] sm:$0xff]
    %v276 = vld [vmem:[#allocation5 + $0x668] sm:$0xff]
    %v277 = vld [vmem:[#allocation5 + $0x670] sm:$0xff]
    %v278 = vld [vmem:[#allocation5 + $0x678] sm:$0xff]
    %v279 = vld [vmem:[#allocation5 + $0x680] sm:$0xff]
    %v280 = vld [vmem:[#allocation5 + $0x688] sm:$0xff]
    %v281 = vld [vmem:[#allocation5 + $0x690] sm:$0xff]
    %v282 = vld [vmem:[#allocation5 + $0x698] sm:$0xff]
    %v283 = vld [vmem:[#allocation5 + $0x6a0] sm:$0xff]
    %v284 = vld [vmem:[#allocation5 + $0x6a8] sm:$0xff]
    %v285 = vld [vmem:[#allocation5 + $0x6b0] sm:$0xff]
    %v286 = vld [vmem:[#allocation5 + $0x6b8] sm:$0xff]
    %v287 = vld [vmem:[#allocation5 + $0x6c0] sm:$0xff]
    %v288 = vld [vmem:[#allocation5 + $0x6c8] sm:$0xff]
    %v289 = vld [vmem:[#allocation5 + $0x6d0] sm:$0xff]
    %v290 = vld [vmem:[#allocation5 + $0x6d8] sm:$0xff]
    %v291 = vld [vmem:[#allocation5 + $0x6e0] sm:$0xff]
    %v292 = vld [vmem:[#allocation5 + $0x6e8] sm:$0xff]
    %v293 = vld [vmem:[#allocation5 + $0x6f0] sm:$0xff]
    %v294 = vld [vmem:[#allocation5 + $0x6f8] sm:$0xff]
    %v295 = vld [vmem:[#allocation5 + $0x700] sm:$0xff]
    %v296 = vld [vmem:[#allocation5 + $0x708] sm:$0xff]
    %v297 = vld [vmem:[#allocation5 + $0x710] sm:$0xff]
    %v298 = vld [vmem:[#allocation5 + $0x718] sm:$0xff]
    %v299 = vld [vmem:[#allocation5 + $0x720] sm:$0xff]
    %v300 = vld [vmem:[#allocation5 + $0x728] sm:$0xff]
    %v301 = vld [vmem:[#allocation5 + $0x730] sm:$0xff]
    %v302 = vld [vmem:[#allocation5 + $0x738] sm:$0xff]
    %v303 = vld [vmem:[#allocation5 + $0x740] sm:$0xff]
    %v304 = vld [vmem:[#allocation5 + $0x748] sm:$0xff]
    %v305 = vld [vmem:[#allocation5 + $0x750] sm:$0xff]
    %v306 = vld [vmem:[#allocation5 + $0x758] sm:$0xff]
    %v307 = vld [vmem:[#allocation5 + $0x760] sm:$0xff]
    %v308 = vld [vmem:[#allocation5 + $0x768] sm:$0xff]
    %v309 = vld [vmem:[#allocation5 + $0x770] sm:$0xff]
    %v310 = vld [vmem:[#allocation5 + $0x778] sm:$0xff]
    %v311 = vld [vmem:[#allocation5 + $0x780] sm:$0xff]
    %v312 = vld [vmem:[#allocation5 + $0x788] sm:$0xff]
    %v313 = vld [vmem:[#allocation5 + $0x790] sm:$0xff]
    %v314 = vld [vmem:[#allocation5 + $0x798] sm:$0xff]
    %v315 = vld [vmem:[#allocation5 + $0x7a0] sm:$0xff]
    %v316 = vld [vmem:[#allocation5 + $0x7a8] sm:$0xff]
    %v317 = vld [vmem:[#allocation5 + $0x7b0] sm:$0xff]
    %v318 = vld [vmem:[#allocation5 + $0x7b8] sm:$0xff]
    %v319 = vld [vmem:[#allocation5 + $0x7c0] sm:$0xff]
    %v320 = vld [vmem:[#allocation5 + $0x7c8] sm:$0xff]
    %v321 = vld [vmem:[#allocation5 + $0x7d0] sm:$0xff]
    %v322 = vld [vmem:[#allocation5 + $0x7d8] sm:$0xff]
    %v323 = vld [vmem:[#allocation5 + $0x7e0] sm:$0xff]
    %v324 = vld [vmem:[#allocation5 + $0x7e8] sm:$0xff]
    %v325 = vld [vmem:[#allocation5 + $0x7f0] sm:$0xff]
    %v326 = vld [vmem:[#allocation5 + $0x7f8] sm:$0xff]
    %v327 = vld [vmem:[#allocation5 + $0x800] sm:$0xff]
    %v328 = vld [vmem:[#allocation5 + $0x808] sm:$0xff]
    %v329 = vld [vmem:[#allocation5 + $0x810] sm:$0xff]
    %v330 = vld [vmem:[#allocation5 + $0x818] sm:$0xff]
    %v331 = vld [vmem:[#allocation5 + $0x820] sm:$0xff]
    %v332 = vld [vmem:[#allocation5 + $0x828] sm:$0xff]
    %v333 = vld [vmem:[#allocation5 + $0x830] sm:$0xff]
    %v334 = vld [vmem:[#allocation5 + $0x838] sm:$0xff]
    %v335 = vld [vmem:[#allocation5 + $0x840] sm:$0xff]
    %v336 = vld [vmem:[#allocation5 + $0x848] sm:$0xff]
    %v337 = vld [vmem:[#allocation5 + $0x850] sm:$0xff]
    %v338 = vld [vmem:[#allocation5 + $0x858] sm:$0xff]
    %v339 = vld [vmem:[#allocation5 + $0x860] sm:$0xff]
    %v340 = vld [vmem:[#allocation5 + $0x868] sm:$0xff]
    %v341 = vld [vmem:[#allocation5 + $0x870] sm:$0xff]
    %v342 = vld [vmem:[#allocation5 + $0x878] sm:$0xff]
    %v343 = vld [vmem:[#allocation5 + $0x880] sm:$0xff]
    %v344 = vld [vmem:[#allocation5 + $0x888] sm:$0xff]
    %v345 = vld [vmem:[#allocation5 + $0x890] sm:$0xff]
    %v346 = vld [vmem:[#allocation5 + $0x898] sm:$0xff]
    %v347 = vld [vmem:[#allocation5 + $0x8a0] sm:$0xff]
    %v348 = vld [vmem:[#allocation5 + $0x8a8] sm:$0xff]
    %v349 = vld [vmem:[#allocation5 + $0x8b0] sm:$0xff]
    %v350 = vld [vmem:[#allocation5 + $0x8b8] sm:$0xff]
    %v351 = vld [vmem:[#allocation5 + $0x8c0] sm:$0xff]
    %v352 = vld [vmem:[#allocation5 + $0x8c8] sm:$0xff]
    %v353 = vld [vmem:[#allocation5 + $0x8d0] sm:$0xff]
    %v354 = vld [vmem:[#allocation5 + $0x8d8] sm:$0xff]
    %v355 = vld [vmem:[#allocation5 + $0x8e0] sm:$0xff]
    %v356 = vld [vmem:[#allocation5 + $0x8e8] sm:$0xff]
    %v357 = vld [vmem:[#allocation5 + $0x8f0] sm:$0xff]
    %v358 = vld [vmem:[#allocation5 + $0x8f8] sm:$0xff]
    %v359 = vld [vmem:[#allocation5 + $0x900] sm:$0xff]
    %v360 = vld [vmem:[#allocation5 + $0x908] sm:$0xff]
    %v361 = vld [vmem:[#allocation5 + $0x910] sm:$0xff]
    %v362 = vld [vmem:[#allocation5 + $0x918] sm:$0xff]
    %v363 = vld [vmem:[#allocation5 + $0x920] sm:$0xff]
    %v364 = vld [vmem:[#allocation5 + $0x928] sm:$0xff]
    %v365 = vld [vmem:[#allocation5 + $0x930] sm:$0xff]
    %v366 = vld [vmem:[#allocation5 + $0x938] sm:$0xff]
    %v367 = vld [vmem:[#allocation5 + $0x940] sm:$0xff]
    %v368 = vld [vmem:[#allocation5 + $0x948] sm:$0xff]
    %v369 = vld [vmem:[#allocation5 + $0x950] sm:$0xff]
    %v370 = vld [vmem:[#allocation5 + $0x958] sm:$0xff]
    %v371 = vld [vmem:[#allocation5 + $0x960] sm:$0xff]
    %v372 = vld [vmem:[#allocation5 + $0x968] sm:$0xff]
    %v373 = vld [vmem:[#allocation5 + $0x970] sm:$0xff]
    %v374 = vld [vmem:[#allocation5 + $0x978] sm:$0xff]
    %v375 = vld [vmem:[#allocation5 + $0x980] sm:$0xff]
    %v376 = vld [vmem:[#allocation5 + $0x988] sm:$0xff]
    %v377 = vld [vmem:[#allocation5 + $0x990] sm:$0xff]
    %v378 = vld [vmem:[#allocation5 + $0x998] sm:$0xff]
    %v379 = vld [vmem:[#allocation5 + $0x9a0] sm:$0xff]
    %v380 = vld [vmem:[#allocation5 + $0x9a8] sm:$0xff]
    %v381 = vld [vmem:[#allocation5 + $0x9b0] sm:$0xff]
    %v382 = vld [vmem:[#allocation5 + $0x9b8] sm:$0xff]
    %v383 = vld [vmem:[#allocation5 + $0x9c0] sm:$0xff]
    %v384 = vld [vmem:[#allocation5 + $0x9c8] sm:$0xff]
    %v385 = vld [vmem:[#allocation5 + $0x9d0] sm:$0xff]
    %v386 = vld [vmem:[#allocation5 + $0x9d8] sm:$0xff]
    %v387 = vld [vmem:[#allocation5 + $0x9e0] sm:$0xff]
    %v388 = vld [vmem:[#allocation5 + $0x9e8] sm:$0xff]
    %v389 = vld [vmem:[#allocation5 + $0x9f0] sm:$0xff]
    %v390 = vld [vmem:[#allocation5 + $0x9f8] sm:$0xff]
    %v391 = vld [vmem:[#allocation5 + $0xa00] sm:$0xff]
    %v392 = vld [vmem:[#allocation5 + $0xa08] sm:$0xff]
    %v393 = vld [vmem:[#allocation5 + $0xa10] sm:$0xff]
    %v394 = vld [vmem:[#allocation5 + $0xa18] sm:$0xff]
    %v395 = vld [vmem:[#allocation5 + $0xa20] sm:$0xff]
    %v396 = vld [vmem:[#allocation5 + $0xa28] sm:$0xff]
    %v397 = vld [vmem:[#allocation5 + $0xa30] sm:$0xff]
    %v398 = vld [vmem:[#allocation5 + $0xa38] sm:$0xff]
    %v399 = vld [vmem:[#allocation5 + $0xa40] sm:$0xff]
    %v400 = vld [vmem:[#allocation5 + $0xa48] sm:$0xff]
    %v401 = vld [vmem:[#allocation5 + $0xa50] sm:$0xff]
    %v402 = vld [vmem:[#allocation5 + $0xa58] sm:$0xff]
    %v403 = vld [vmem:[#allocation5 + $0xa60] sm:$0xff]
    %v404 = vld [vmem:[#allocation5 + $0xa68] sm:$0xff]
    %v405 = vld [vmem:[#allocation5 + $0xa70] sm:$0xff]
    %v406 = vld [vmem:[#allocation5 + $0xa78] sm:$0xff]
    %v407 = vld [vmem:[#allocation5 + $0xa80] sm:$0xff]
    %v408 = vld [vmem:[#allocation5 + $0xa88] sm:$0xff]
    %v409 = vld [vmem:[#allocation5 + $0xa90] sm:$0xff]
    %v410 = vld [vmem:[#allocation5 + $0xa98] sm:$0xff]
    %v411 = vld [vmem:[#allocation5 + $0xaa0] sm:$0xff]
    %v412 = vld [vmem:[#allocation5 + $0xaa8] sm:$0xff]
    %v413 = vld [vmem:[#allocation5 + $0xab0] sm:$0xff]
    %v414 = vld [vmem:[#allocation5 + $0xab8] sm:$0xff]
    %v415 = vld [vmem:[#allocation5 + $0xac0] sm:$0xff]
    %v416 = vld [vmem:[#allocation5 + $0xac8] sm:$0xff]
    %v417 = vld [vmem:[#allocation5 + $0xad0] sm:$0xff]
    %v418 = vld [vmem:[#allocation5 + $0xad8] sm:$0xff]
    %v419 = vld [vmem:[#allocation5 + $0xae0] sm:$0xff]
    %v420 = vld [vmem:[#allocation5 + $0xae8] sm:$0xff]
    %v421 = vld [vmem:[#allocation5 + $0xaf0] sm:$0xff]
    %v422 = vld [vmem:[#allocation5 + $0xaf8] sm:$0xff]
    %v423 = vld [vmem:[#allocation5 + $0xb00] sm:$0xff]
    %v424 = vld [vmem:[#allocation5 + $0xb08] sm:$0xff]
    %v425 = vld [vmem:[#allocation5 + $0xb10] sm:$0xff]
    %v426 = vld [vmem:[#allocation5 + $0xb18] sm:$0xff]
    %v427 = vld [vmem:[#allocation5 + $0xb20] sm:$0xff]
    %v428 = vld [vmem:[#allocation5 + $0xb28] sm:$0xff]
    %v429 = vld [vmem:[#allocation5 + $0xb30] sm:$0xff]
    %v430 = vld [vmem:[#allocation5 + $0xb38] sm:$0xff]
    %v431 = vld [vmem:[#allocation5 + $0xb40] sm:$0xff]
    %v432 = vld [vmem:[#allocation5 + $0xb48] sm:$0xff]
    %v433 = vld [vmem:[#allocation5 + $0xb50] sm:$0xff]
    %v434 = vld [vmem:[#allocation5 + $0xb58] sm:$0xff]
    %v435 = vld [vmem:[#allocation5 + $0xb60] sm:$0xff]
    %v436 = vld [vmem:[#allocation5 + $0xb68] sm:$0xff]
    %v437 = vld [vmem:[#allocation5 + $0xb70] sm:$0xff]
    %v438 = vld [vmem:[#allocation5 + $0xb78] sm:$0xff]
    %v439 = vld [vmem:[#allocation5 + $0xb80] sm:$0xff]
    %v440 = vld [vmem:[#allocation5 + $0xb88] sm:$0xff]
    %v441 = vld [vmem:[#allocation5 + $0xb90] sm:$0xff]
    %v442 = vld [vmem:[#allocation5 + $0xb98] sm:$0xff]
    %v443 = vld [vmem:[#allocation5 + $0xba0] sm:$0xff]
    %v444 = vld [vmem:[#allocation5 + $0xba8] sm:$0xff]
    %v445 = vld [vmem:[#allocation5 + $0xbb0] sm:$0xff]
    %v446 = vld [vmem:[#allocation5 + $0xbb8] sm:$0xff]
    %v447 = vld [vmem:[#allocation5 + $0xbc0] sm:$0xff]
    %v448 = vld [vmem:[#allocation5 + $0xbc8] sm:$0xff]
    %v449 = vld [vmem:[#allocation5 + $0xbd0] sm:$0xff]
    %v450 = vld [vmem:[#allocation5 + $0xbd8] sm:$0xff]
    %v451 = vld [vmem:[#allocation5 + $0xbe0] sm:$0xff]
    %v452 = vld [vmem:[#allocation5 + $0xbe8] sm:$0xff]
    %v453 = vld [vmem:[#allocation5 + $0xbf0] sm:$0xff]
    %v454 = vld [vmem:[#allocation5 + $0xbf8] sm:$0xff]
    %v455 = vld [vmem:[#allocation5 + $0xc00] sm:$0xff]
    %v456 = vld [vmem:[#allocation5 + $0xc08] sm:$0xff]
    %v457 = vld [vmem:[#allocation5 + $0xc10] sm:$0xff]
    %v458 = vld [vmem:[#allocation5 + $0xc18] sm:$0xff]
    %v459 = vld [vmem:[#allocation5 + $0xc20] sm:$0xff]
    %v460 = vld [vmem:[#allocation5 + $0xc28] sm:$0xff]
    %v461 = vld [vmem:[#allocation5 + $0xc30] sm:$0xff]
    %v462 = vld [vmem:[#allocation5 + $0xc38] sm:$0xff]
    %v463 = vld [vmem:[#allocation5 + $0xc40] sm:$0xff]
    %v464 = vld [vmem:[#allocation5 + $0xc48] sm:$0xff]
    %v465 = vld [vmem:[#allocation5 + $0xc50] sm:$0xff]
    %v466 = vld [vmem:[#allocation5 + $0xc58] sm:$0xff]
    %v467 = vld [vmem:[#allocation5 + $0xc60] sm:$0xff]
    %v468 = vld [vmem:[#allocation5 + $0xc68] sm:$0xff]
    %v469 = vld [vmem:[#allocation5 + $0xc70] sm:$0xff]
    %v470 = vld [vmem:[#allocation5 + $0xc78] sm:$0xff]
    %v471 = vld [vmem:[#allocation5 + $0xc80] sm:$0xff]
    %v472 = vld [vmem:[#allocation5 + $0xc88] sm:$0xff]
    %v473 = vld [vmem:[#allocation5 + $0xc90] sm:$0xff]
    %v474 = vld [vmem:[#allocation5 + $0xc98] sm:$0xff]
    %v475 = vld [vmem:[#allocation5 + $0xca0] sm:$0xff]
    %v476 = vld [vmem:[#allocation5 + $0xca8] sm:$0xff]
    %v477 = vld [vmem:[#allocation5 + $0xcb0] sm:$0xff]
    %v478 = vld [vmem:[#allocation5 + $0xcb8] sm:$0xff]
    %v479 = vld [vmem:[#allocation5 + $0xcc0] sm:$0xff]
    %v480 = vld [vmem:[#allocation5 + $0xcc8] sm:$0xff]
    %v481 = vld [vmem:[#allocation5 + $0xcd0] sm:$0xff]
    %v482 = vld [vmem:[#allocation5 + $0xcd8] sm:$0xff]
    %v483 = vld [vmem:[#allocation5 + $0xce0] sm:$0xff]
    %v484 = vld [vmem:[#allocation5 + $0xce8] sm:$0xff]
    %v485 = vld [vmem:[#allocation5 + $0xcf0] sm:$0xff]
    %v486 = vld [vmem:[#allocation5 + $0xcf8] sm:$0xff]
    %v487 = vld [vmem:[#allocation5 + $0xd00] sm:$0xff]
    %v488 = vld [vmem:[#allocation5 + $0xd08] sm:$0xff]
    %v489 = vld [vmem:[#allocation5 + $0xd10] sm:$0xff]
    %v490 = vld [vmem:[#allocation5 + $0xd18] sm:$0xff]
    %v491 = vld [vmem:[#allocation5 + $0xd20] sm:$0xff]
    %v492 = vld [vmem:[#allocation5 + $0xd28] sm:$0xff]
    %v493 = vld [vmem:[#allocation5 + $0xd30] sm:$0xff]
    %v494 = vld [vmem:[#allocation5 + $0xd38] sm:$0xff]
    %v495 = vld [vmem:[#allocation5 + $0xd40] sm:$0xff]
    %v496 = vld [vmem:[#allocation5 + $0xd48] sm:$0xff]
    %v497 = vld [vmem:[#allocation5 + $0xd50] sm:$0xff]
    %v498 = vld [vmem:[#allocation5 + $0xd58] sm:$0xff]
    %v499 = vld [vmem:[#allocation5 + $0xd60] sm:$0xff]
    %v500 = vld [vmem:[#allocation5 + $0xd68] sm:$0xff]
    %v501 = vld [vmem:[#allocation5 + $0xd70] sm:$0xff]
    %v502 = vld [vmem:[#allocation5 + $0xd78] sm:$0xff]
    %v503 = vld [vmem:[#allocation5 + $0xd80] sm:$0xff]
    %v504 = vld [vmem:[#allocation5 + $0xd88] sm:$0xff]
    %v505 = vld [vmem:[#allocation5 + $0xd90] sm:$0xff]
    %v506 = vld [vmem:[#allocation5 + $0xd98] sm:$0xff]
    %v507 = vld [vmem:[#allocation5 + $0xda0] sm:$0xff]
    %v508 = vld [vmem:[#allocation5 + $0xda8] sm:$0xff]
    %v509 = vld [vmem:[#allocation5 + $0xdb0] sm:$0xff]
    %v510 = vld [vmem:[#allocation5 + $0xdb8] sm:$0xff]
    %v511 = vld [vmem:[#allocation5 + $0xdc0] sm:$0xff]
    %v512 = vld [vmem:[#allocation5 + $0xdc8] sm:$0xff]
    %v513 = vld [vmem:[#allocation5 + $0xdd0] sm:$0xff]
    %v514 = vld [vmem:[#allocation5 + $0xdd8] sm:$0xff]
    %v515 = vld [vmem:[#allocation5 + $0xde0] sm:$0xff]
    %v516 = vld [vmem:[#allocation5 + $0xde8] sm:$0xff]
    %v517 = vld [vmem:[#allocation5 + $0xdf0] sm:$0xff]
    %v518 = vld [vmem:[#allocation5 + $0xdf8] sm:$0xff]
    %v519 = vld [vmem:[#allocation5 + $0xe00] sm:$0xff]
    %v520 = vld [vmem:[#allocation5 + $0xe08] sm:$0xff]
    %v521 = vld [vmem:[#allocation5 + $0xe10] sm:$0xff]
    %v522 = vld [vmem:[#allocation5 + $0xe18] sm:$0xff]
    %v523 = vld [vmem:[#allocation5 + $0xe20] sm:$0xff]
    %v524 = vld [vmem:[#allocation5 + $0xe28] sm:$0xff]
    %v525 = vld [vmem:[#allocation5 + $0xe30] sm:$0xff]
    %v526 = vld [vmem:[#allocation5 + $0xe38] sm:$0xff]
    %v527 = vld [vmem:[#allocation5 + $0xe40] sm:$0xff]
    %v528 = vld [vmem:[#allocation5 + $0xe48] sm:$0xff]
    %v529 = vld [vmem:[#allocation5 + $0xe50] sm:$0xff]
    %v530 = vld [vmem:[#allocation5 + $0xe58] sm:$0xff]
    %v531 = vld [vmem:[#allocation5 + $0xe60] sm:$0xff]
    %v532 = vld [vmem:[#allocation5 + $0xe68] sm:$0xff]
    %v533 = vld [vmem:[#allocation5 + $0xe70] sm:$0xff]
    %v534 = vld [vmem:[#allocation5 + $0xe78] sm:$0xff]
    %v535 = vld [vmem:[#allocation5 + $0xe80] sm:$0xff]
    %v536 = vld [vmem:[#allocation5 + $0xe88] sm:$0xff]
    %v537 = vld [vmem:[#allocation5 + $0xe90] sm:$0xff]
    %v538 = vld [vmem:[#allocation5 + $0xe98] sm:$0xff]
    %v539 = vld [vmem:[#allocation5 + $0xea0] sm:$0xff]
    %v540 = vld [vmem:[#allocation5 + $0xea8] sm:$0xff]
    %v541 = vld [vmem:[#allocation5 + $0xeb0] sm:$0xff]
    %v542 = vld [vmem:[#allocation5 + $0xeb8] sm:$0xff]
    %v543 = vld [vmem:[#allocation5 + $0xec0] sm:$0xff]
    %v544 = vld [vmem:[#allocation5 + $0xec8] sm:$0xff]
    %v545 = vld [vmem:[#allocation5 + $0xed0] sm:$0xff]
    %v546 = vld [vmem:[#allocation5 + $0xed8] sm:$0xff]
    %v547 = vld [vmem:[#allocation5 + $0xee0] sm:$0xff]
    %v548 = vld [vmem:[#allocation5 + $0xee8] sm:$0xff]
    %v549 = vld [vmem:[#allocation5 + $0xef0] sm:$0xff]
    %v550 = vld [vmem:[#allocation5 + $0xef8] sm:$0xff]
    %v551 = vld [vmem:[#allocation5 + $0xf00] sm:$0xff]
    %v552 = vld [vmem:[#allocation5 + $0xf08] sm:$0xff]
    %v553 = vld [vmem:[#allocation5 + $0xf10] sm:$0xff]
    %v554 = vld [vmem:[#allocation5 + $0xf18] sm:$0xff]
    %v555 = vld [vmem:[#allocation5 + $0xf20] sm:$0xff]
    %v556 = vld [vmem:[#allocation5 + $0xf28] sm:$0xff]
    %v557 = vld [vmem:[#allocation5 + $0xf30] sm:$0xff]
    %v558 = vld [vmem:[#allocation5 + $0xf38] sm:$0xff]
    %v559 = vld [vmem:[#allocation5 + $0xf40] sm:$0xff]
    %v560 = vld [vmem:[#allocation5 + $0xf48] sm:$0xff]
    %v561 = vld [vmem:[#allocation5 + $0xf50] sm:$0xff]
    %v562 = vld [vmem:[#allocation5 + $0xf58] sm:$0xff]
    %v563 = vld [vmem:[#allocation5 + $0xf60] sm:$0xff]
    %v564 = vld [vmem:[#allocation5 + $0xf68] sm:$0xff]
    %v565 = vld [vmem:[#allocation5 + $0xf70] sm:$0xff]
    %v566 = vld [vmem:[#allocation5 + $0xf78] sm:$0xff]
    %v567 = vld [vmem:[#allocation5 + $0xf80] sm:$0xff]
    %v568 = vld [vmem:[#allocation5 + $0xf88] sm:$0xff]
    %v569 = vld [vmem:[#allocation5 + $0xf90] sm:$0xff]
    %v570 = vld [vmem:[#allocation5 + $0xf98] sm:$0xff]
    %v571 = vld [vmem:[#allocation5 + $0xfa0] sm:$0xff]
    %v572 = vld [vmem:[#allocation5 + $0xfa8] sm:$0xff]
    %v573 = vld [vmem:[#allocation5 + $0xfb0] sm:$0xff]
    %v574 = vld [vmem:[#allocation5 + $0xfb8] sm:$0xff]
    %v575 = vld [vmem:[#allocation5 + $0xfc0] sm:$0xff]
    %v576 = vld [vmem:[#allocation5 + $0xfc8] sm:$0xff]
    %v577 = vld [vmem:[#allocation5 + $0xfd0] sm:$0xff]
    %v578 = vld [vmem:[#allocation5 + $0xfd8] sm:$0xff]
    %v579 = vld [vmem:[#allocation5 + $0xfe0] sm:$0xff]
    %v580 = vld [vmem:[#allocation5 + $0xfe8] sm:$0xff]
    %v581 = vld [vmem:[#allocation5 + $0xff0] sm:$0xff]
    %v582 = vld [vmem:[#allocation5 + $0xff8] sm:$0xff]
    %v583 = vld [vmem:[#allocation7] sm:$0xff]
    %v584 = vld [vmem:[#allocation7 + $0x8] sm:$0xff]
    %v585 = vld [vmem:[#allocation7 + $0x10] sm:$0xff]
    %v586 = vld [vmem:[#allocation7 + $0x18] sm:$0xff]
    %v587 = vld [vmem:[#allocation7 + $0x20] sm:$0xff]
    %v588 = vld [vmem:[#allocation7 + $0x28] sm:$0xff]
    %v589 = vld [vmem:[#allocation7 + $0x30] sm:$0xff]
    %v590 = vld [vmem:[#allocation7 + $0x38] sm:$0xff]
    %v591 = vld [vmem:[#allocation7 + $0x40] sm:$0xff]
    %v592 = vld [vmem:[#allocation7 + $0x48] sm:$0xff]
    %v593 = vld [vmem:[#allocation7 + $0x50] sm:$0xff]
    %v594 = vld [vmem:[#allocation7 + $0x58] sm:$0xff]
    %v595 = vld [vmem:[#allocation7 + $0x60] sm:$0xff]
    %v596 = vld [vmem:[#allocation7 + $0x68] sm:$0xff]
    %v597 = vld [vmem:[#allocation7 + $0x70] sm:$0xff]
    %v598 = vld [vmem:[#allocation7 + $0x78] sm:$0xff]
    %v599 = vld [vmem:[#allocation7 + $0x80] sm:$0xff]
    %v600 = vld [vmem:[#allocation7 + $0x88] sm:$0xff]
    %v601 = vld [vmem:[#allocation7 + $0x90] sm:$0xff]
    %v602 = vld [vmem:[#allocation7 + $0x98] sm:$0xff]
    %v603 = vld [vmem:[#allocation7 + $0xa0] sm:$0xff]
    %v604 = vld [vmem:[#allocation7 + $0xa8] sm:$0xff]
    %v605 = vld [vmem:[#allocation7 + $0xb0] sm:$0xff]
    %v606 = vld [vmem:[#allocation7 + $0xb8] sm:$0xff]
    %v607 = vld [vmem:[#allocation7 + $0xc0] sm:$0xff]
    %v608 = vld [vmem:[#allocation7 + $0xc8] sm:$0xff]
    %v609 = vld [vmem:[#allocation7 + $0xd0] sm:$0xff]
    %v610 = vld [vmem:[#allocation7 + $0xd8] sm:$0xff]
    %v611 = vld [vmem:[#allocation7 + $0xe0] sm:$0xff]
    %v612 = vld [vmem:[#allocation7 + $0xe8] sm:$0xff]
    %v613 = vld [vmem:[#allocation7 + $0xf0] sm:$0xff]
    %v614 = vld [vmem:[#allocation7 + $0xf8] sm:$0xff]
    %v615 = vld [vmem:[#allocation7 + $0x100] sm:$0xff]
    %v616 = vld [vmem:[#allocation7 + $0x108] sm:$0xff]
    %v617 = vld [vmem:[#allocation7 + $0x110] sm:$0xff]
    %v618 = vld [vmem:[#allocation7 + $0x118] sm:$0xff]
    %v619 = vld [vmem:[#allocation7 + $0x120] sm:$0xff]
    %v620 = vld [vmem:[#allocation7 + $0x128] sm:$0xff]
    %v621 = vld [vmem:[#allocation7 + $0x130] sm:$0xff]
    %v622 = vld [vmem:[#allocation7 + $0x138] sm:$0xff]
    %v623 = vld [vmem:[#allocation7 + $0x140] sm:$0xff]
    %v624 = vld [vmem:[#allocation7 + $0x148] sm:$0xff]
    %v625 = vld [vmem:[#allocation7 + $0x150] sm:$0xff]
    %v626 = vld [vmem:[#allocation7 + $0x158] sm:$0xff]
    %v627 = vld [vmem:[#allocation7 + $0x160] sm:$0xff]
    %v628 = vld [vmem:[#allocation7 + $0x168] sm:$0xff]
    %v629 = vld [vmem:[#allocation7 + $0x170] sm:$0xff]
    %v630 = vld [vmem:[#allocation7 + $0x178] sm:$0xff]
    %v631 = vld [vmem:[#allocation7 + $0x180] sm:$0xff]
    %v632 = vld [vmem:[#allocation7 + $0x188] sm:$0xff]
    %v633 = vld [vmem:[#allocation7 + $0x190] sm:$0xff]
    %v634 = vld [vmem:[#allocation7 + $0x198] sm:$0xff]
    %v635 = vld [vmem:[#allocation7 + $0x1a0] sm:$0xff]
    %v636 = vld [vmem:[#allocation7 + $0x1a8] sm:$0xff]
    %v637 = vld [vmem:[#allocation7 + $0x1b0] sm:$0xff]
    %v638 = vld [vmem:[#allocation7 + $0x1b8] sm:$0xff]
    %v639 = vld [vmem:[#allocation7 + $0x1c0] sm:$0xff]
    %v640 = vld [vmem:[#allocation7 + $0x1c8] sm:$0xff]
    %v641 = vld [vmem:[#allocation7 + $0x1d0] sm:$0xff]
    %v642 = vld [vmem:[#allocation7 + $0x1d8] sm:$0xff]
    %v643 = vld [vmem:[#allocation7 + $0x1e0] sm:$0xff]
    %v644 = vld [vmem:[#allocation7 + $0x1e8] sm:$0xff]
    %v645 = vld [vmem:[#allocation7 + $0x1f0] sm:$0xff]
    %v646 = vld [vmem:[#allocation7 + $0x1f8] sm:$0xff]
    %v647 = vld [vmem:[#allocation7 + $0x200] sm:$0xff]
    %v648 = vld [vmem:[#allocation7 + $0x208] sm:$0xff]
    %v649 = vld [vmem:[#allocation7 + $0x210] sm:$0xff]
    %v650 = vld [vmem:[#allocation7 + $0x218] sm:$0xff]
    %v651 = vld [vmem:[#allocation7 + $0x220] sm:$0xff]
    %v652 = vld [vmem:[#allocation7 + $0x228] sm:$0xff]
    %v653 = vld [vmem:[#allocation7 + $0x230] sm:$0xff]
    %v654 = vld [vmem:[#allocation7 + $0x238] sm:$0xff]
    %v655 = vld [vmem:[#allocation7 + $0x240] sm:$0xff]
    %v656 = vld [vmem:[#allocation7 + $0x248] sm:$0xff]
    %v657 = vld [vmem:[#allocation7 + $0x250] sm:$0xff]
    %v658 = vld [vmem:[#allocation7 + $0x258] sm:$0xff]
    %v659 = vld [vmem:[#allocation7 + $0x260] sm:$0xff]
    %v660 = vld [vmem:[#allocation7 + $0x268] sm:$0xff]
    %v661 = vld [vmem:[#allocation7 + $0x270] sm:$0xff]
    %v662 = vld [vmem:[#allocation7 + $0x278] sm:$0xff]
    %v663 = vld [vmem:[#allocation7 + $0x280] sm:$0xff]
    %v664 = vld [vmem:[#allocation7 + $0x288] sm:$0xff]
    %v665 = vld [vmem:[#allocation7 + $0x290] sm:$0xff]
    %v666 = vld [vmem:[#allocation7 + $0x298] sm:$0xff]
    %v667 = vld [vmem:[#allocation7 + $0x2a0] sm:$0xff]
    %v668 = vld [vmem:[#allocation7 + $0x2a8] sm:$0xff]
    %v669 = vld [vmem:[#allocation7 + $0x2b0] sm:$0xff]
    %v670 = vld [vmem:[#allocation7 + $0x2b8] sm:$0xff]
    %v671 = vld [vmem:[#allocation7 + $0x2c0] sm:$0xff]
    %v672 = vld [vmem:[#allocation7 + $0x2c8] sm:$0xff]
    %v673 = vld [vmem:[#allocation7 + $0x2d0] sm:$0xff]
    %v674 = vld [vmem:[#allocation7 + $0x2d8] sm:$0xff]
    %v675 = vld [vmem:[#allocation7 + $0x2e0] sm:$0xff]
    %v676 = vld [vmem:[#allocation7 + $0x2e8] sm:$0xff]
    %v677 = vld [vmem:[#allocation7 + $0x2f0] sm:$0xff]
    %v678 = vld [vmem:[#allocation7 + $0x2f8] sm:$0xff]
    %v679 = vld [vmem:[#allocation7 + $0x300] sm:$0xff]
    %v680 = vld [vmem:[#allocation7 + $0x308] sm:$0xff]
    %v681 = vld [vmem:[#allocation7 + $0x310] sm:$0xff]
    %v682 = vld [vmem:[#allocation7 + $0x318] sm:$0xff]
    %v683 = vld [vmem:[#allocation7 + $0x320] sm:$0xff]
    %v684 = vld [vmem:[#allocation7 + $0x328] sm:$0xff]
    %v685 = vld [vmem:[#allocation7 + $0x330] sm:$0xff]
    %v686 = vld [vmem:[#allocation7 + $0x338] sm:$0xff]
    %v687 = vld [vmem:[#allocation7 + $0x340] sm:$0xff]
    %v688 = vld [vmem:[#allocation7 + $0x348] sm:$0xff]
    %v689 = vld [vmem:[#allocation7 + $0x350] sm:$0xff]
    %v690 = vld [vmem:[#allocation7 + $0x358] sm:$0xff]
    %v691 = vld [vmem:[#allocation7 + $0x360] sm:$0xff]
    %v692 = vld [vmem:[#allocation7 + $0x368] sm:$0xff]
    %v693 = vld [vmem:[#allocation7 + $0x370] sm:$0xff]
    %v694 = vld [vmem:[#allocation7 + $0x378] sm:$0xff]
    %v695 = vld [vmem:[#allocation7 + $0x380] sm:$0xff]
    %v696 = vld [vmem:[#allocation7 + $0x388] sm:$0xff]
    %v697 = vld [vmem:[#allocation7 + $0x390] sm:$0xff]
    %v698 = vld [vmem:[#allocation7 + $0x398] sm:$0xff]
    %v699 = vld [vmem:[#allocation7 + $0x3a0] sm:$0xff]
    %v700 = vld [vmem:[#allocation7 + $0x3a8] sm:$0xff]
    %v701 = vld [vmem:[#allocation7 + $0x3b0] sm:$0xff]
    %v702 = vld [vmem:[#allocation7 + $0x3b8] sm:$0xff]
    %v703 = vld [vmem:[#allocation7 + $0x3c0] sm:$0xff]
    %v704 = vld [vmem:[#allocation7 + $0x3c8] sm:$0xff]
    %v705 = vld [vmem:[#allocation7 + $0x3d0] sm:$0xff]
    %v706 = vld [vmem:[#allocation7 + $0x3d8] sm:$0xff]
    %v707 = vld [vmem:[#allocation7 + $0x3e0] sm:$0xff]
    %v708 = vld [vmem:[#allocation7 + $0x3e8] sm:$0xff]
    %v709 = vld [vmem:[#allocation7 + $0x3f0] sm:$0xff]
    %v710 = vld [vmem:[#allocation7 + $0x3f8] sm:$0xff]
    %v711 = vld [vmem:[#allocation7 + $0x400] sm:$0xff]
    %v712 = vld [vmem:[#allocation7 + $0x408] sm:$0xff]
    %v713 = vld [vmem:[#allocation7 + $0x410] sm:$0xff]
    %v714 = vld [vmem:[#allocation7 + $0x418] sm:$0xff]
    %v715 = vld [vmem:[#allocation7 + $0x420] sm:$0xff]
    %v716 = vld [vmem:[#allocation7 + $0x428] sm:$0xff]
    %v717 = vld [vmem:[#allocation7 + $0x430] sm:$0xff]
    %v718 = vld [vmem:[#allocation7 + $0x438] sm:$0xff]
    %v719 = vld [vmem:[#allocation7 + $0x440] sm:$0xff]
    %v720 = vld [vmem:[#allocation7 + $0x448] sm:$0xff]
    %v721 = vld [vmem:[#allocation7 + $0x450] sm:$0xff]
    %v722 = vld [vmem:[#allocation7 + $0x458] sm:$0xff]
    %v723 = vld [vmem:[#allocation7 + $0x460] sm:$0xff]
    %v724 = vld [vmem:[#allocation7 + $0x468] sm:$0xff]
    %v725 = vld [vmem:[#allocation7 + $0x470] sm:$0xff]
    %v726 = vld [vmem:[#allocation7 + $0x478] sm:$0xff]
    %v727 = vld [vmem:[#allocation7 + $0x480] sm:$0xff]
    %v728 = vld [vmem:[#allocation7 + $0x488] sm:$0xff]
    %v729 = vld [vmem:[#allocation7 + $0x490] sm:$0xff]
    %v730 = vld [vmem:[#allocation7 + $0x498] sm:$0xff]
    %v731 = vld [vmem:[#allocation7 + $0x4a0] sm:$0xff]
    %v732 = vld [vmem:[#allocation7 + $0x4a8] sm:$0xff]
    %v733 = vld [vmem:[#allocation7 + $0x4b0] sm:$0xff]
    %v734 = vld [vmem:[#allocation7 + $0x4b8] sm:$0xff]
    %v735 = vld [vmem:[#allocation7 + $0x4c0] sm:$0xff]
    %v736 = vld [vmem:[#allocation7 + $0x4c8] sm:$0xff]
    %v737 = vld [vmem:[#allocation7 + $0x4d0] sm:$0xff]
    %v738 = vld [vmem:[#allocation7 + $0x4d8] sm:$0xff]
    %v739 = vld [vmem:[#allocation7 + $0x4e0] sm:$0xff]
    %v740 = vld [vmem:[#allocation7 + $0x4e8] sm:$0xff]
    %v741 = vld [vmem:[#allocation7 + $0x4f0] sm:$0xff]
    %v742 = vld [vmem:[#allocation7 + $0x4f8] sm:$0xff]
    %v743 = vld [vmem:[#allocation7 + $0x500] sm:$0xff]
    %v744 = vld [vmem:[#allocation7 + $0x508] sm:$0xff]
    %v745 = vld [vmem:[#allocation7 + $0x510] sm:$0xff]
    %v746 = vld [vmem:[#allocation7 + $0x518] sm:$0xff]
    %v747 = vld [vmem:[#allocation7 + $0x520] sm:$0xff]
    %v748 = vld [vmem:[#allocation7 + $0x528] sm:$0xff]
    %v749 = vld [vmem:[#allocation7 + $0x530] sm:$0xff]
    %v750 = vld [vmem:[#allocation7 + $0x538] sm:$0xff]
    %v751 = vld [vmem:[#allocation7 + $0x540] sm:$0xff]
    %v752 = vld [vmem:[#allocation7 + $0x548] sm:$0xff]
    %v753 = vld [vmem:[#allocation7 + $0x550] sm:$0xff]
    %v754 = vld [vmem:[#allocation7 + $0x558] sm:$0xff]
    %v755 = vld [vmem:[#allocation7 + $0x560] sm:$0xff]
    %v756 = vld [vmem:[#allocation7 + $0x568] sm:$0xff]
    %v757 = vld [vmem:[#allocation7 + $0x570] sm:$0xff]
    %v758 = vld [vmem:[#allocation7 + $0x578] sm:$0xff]
    %v759 = vld [vmem:[#allocation7 + $0x580] sm:$0xff]
    %v760 = vld [vmem:[#allocation7 + $0x588] sm:$0xff]
    %v761 = vld [vmem:[#allocation7 + $0x590] sm:$0xff]
    %v762 = vld [vmem:[#allocation7 + $0x598] sm:$0xff]
    %v763 = vld [vmem:[#allocation7 + $0x5a0] sm:$0xff]
    %v764 = vld [vmem:[#allocation7 + $0x5a8] sm:$0xff]
    %v765 = vld [vmem:[#allocation7 + $0x5b0] sm:$0xff]
    %v766 = vld [vmem:[#allocation7 + $0x5b8] sm:$0xff]
    %v767 = vld [vmem:[#allocation7 + $0x5c0] sm:$0xff]
    %v768 = vld [vmem:[#allocation7 + $0x5c8] sm:$0xff]
    %v769 = vld [vmem:[#allocation7 + $0x5d0] sm:$0xff]
    %v770 = vld [vmem:[#allocation7 + $0x5d8] sm:$0xff]
    %v771 = vld [vmem:[#allocation7 + $0x5e0] sm:$0xff]
    %v772 = vld [vmem:[#allocation7 + $0x5e8] sm:$0xff]
    %v773 = vld [vmem:[#allocation7 + $0x5f0] sm:$0xff]
    %v774 = vld [vmem:[#allocation7 + $0x5f8] sm:$0xff]
    %v775 = vld [vmem:[#allocation7 + $0x600] sm:$0xff]
    %v776 = vld [vmem:[#allocation7 + $0x608] sm:$0xff]
    %v777 = vld [vmem:[#allocation7 + $0x610] sm:$0xff]
    %v778 = vld [vmem:[#allocation7 + $0x618] sm:$0xff]
    %v779 = vld [vmem:[#allocation7 + $0x620] sm:$0xff]
    %v780 = vld [vmem:[#allocation7 + $0x628] sm:$0xff]
    %v781 = vld [vmem:[#allocation7 + $0x630] sm:$0xff]
    %v782 = vld [vmem:[#allocation7 + $0x638] sm:$0xff]
    %v783 = vld [vmem:[#allocation7 + $0x640] sm:$0xff]
    %v784 = vld [vmem:[#allocation7 + $0x648] sm:$0xff]
    %v785 = vld [vmem:[#allocation7 + $0x650] sm:$0xff]
    %v786 = vld [vmem:[#allocation7 + $0x658] sm:$0xff]
    %v787 = vld [vmem:[#allocation7 + $0x660] sm:$0xff]
    %v788 = vld [vmem:[#allocation7 + $0x668] sm:$0xff]
    %v789 = vld [vmem:[#allocation7 + $0x670] sm:$0xff]
    %v790 = vld [vmem:[#allocation7 + $0x678] sm:$0xff]
    %v791 = vld [vmem:[#allocation7 + $0x680] sm:$0xff]
    %v792 = vld [vmem:[#allocation7 + $0x688] sm:$0xff]
    %v793 = vld [vmem:[#allocation7 + $0x690] sm:$0xff]
    %v794 = vld [vmem:[#allocation7 + $0x698] sm:$0xff]
    %v795 = vld [vmem:[#allocation7 + $0x6a0] sm:$0xff]
    %v796 = vld [vmem:[#allocation7 + $0x6a8] sm:$0xff]
    %v797 = vld [vmem:[#allocation7 + $0x6b0] sm:$0xff]
    %v798 = vld [vmem:[#allocation7 + $0x6b8] sm:$0xff]
    %v799 = vld [vmem:[#allocation7 + $0x6c0] sm:$0xff]
    %v800 = vld [vmem:[#allocation7 + $0x6c8] sm:$0xff]
    %v801 = vld [vmem:[#allocation7 + $0x6d0] sm:$0xff]
    %v802 = vld [vmem:[#allocation7 + $0x6d8] sm:$0xff]
    %v803 = vld [vmem:[#allocation7 + $0x6e0] sm:$0xff]
    %v804 = vld [vmem:[#allocation7 + $0x6e8] sm:$0xff]
    %v805 = vld [vmem:[#allocation7 + $0x6f0] sm:$0xff]
    %v806 = vld [vmem:[#allocation7 + $0x6f8] sm:$0xff]
    %v807 = vld [vmem:[#allocation7 + $0x700] sm:$0xff]
    %v808 = vld [vmem:[#allocation7 + $0x708] sm:$0xff]
    %v809 = vld [vmem:[#allocation7 + $0x710] sm:$0xff]
    %v810 = vld [vmem:[#allocation7 + $0x718] sm:$0xff]
    %v811 = vld [vmem:[#allocation7 + $0x720] sm:$0xff]
    %v812 = vld [vmem:[#allocation7 + $0x728] sm:$0xff]
    %v813 = vld [vmem:[#allocation7 + $0x730] sm:$0xff]
    %v814 = vld [vmem:[#allocation7 + $0x738] sm:$0xff]
    %v815 = vld [vmem:[#allocation7 + $0x740] sm:$0xff]
    %v816 = vld [vmem:[#allocation7 + $0x748] sm:$0xff]
    %v817 = vld [vmem:[#allocation7 + $0x750] sm:$0xff]
    %v818 = vld [vmem:[#allocation7 + $0x758] sm:$0xff]
    %v819 = vld [vmem:[#allocation7 + $0x760] sm:$0xff]
    %v820 = vld [vmem:[#allocation7 + $0x768] sm:$0xff]
    %v821 = vld [vmem:[#allocation7 + $0x770] sm:$0xff]
    %v822 = vld [vmem:[#allocation7 + $0x778] sm:$0xff]
    %v823 = vld [vmem:[#allocation7 + $0x780] sm:$0xff]
    %v824 = vld [vmem:[#allocation7 + $0x788] sm:$0xff]
    %v825 = vld [vmem:[#allocation7 + $0x790] sm:$0xff]
    %v826 = vld [vmem:[#allocation7 + $0x798] sm:$0xff]
    %v827 = vld [vmem:[#allocation7 + $0x7a0] sm:$0xff]
    %v828 = vld [vmem:[#allocation7 + $0x7a8] sm:$0xff]
    %v829 = vld [vmem:[#allocation7 + $0x7b0] sm:$0xff]
    %v830 = vld [vmem:[#allocation7 + $0x7b8] sm:$0xff]
    %v831 = vld [vmem:[#allocation7 + $0x7c0] sm:$0xff]
    %v832 = vld [vmem:[#allocation7 + $0x7c8] sm:$0xff]
    %v833 = vld [vmem:[#allocation7 + $0x7d0] sm:$0xff]
    %v834 = vld [vmem:[#allocation7 + $0x7d8] sm:$0xff]
    %v835 = vld [vmem:[#allocation7 + $0x7e0] sm:$0xff]
    %v836 = vld [vmem:[#allocation7 + $0x7e8] sm:$0xff]
    %v837 = vld [vmem:[#allocation7 + $0x7f0] sm:$0xff]
    %v838 = vld [vmem:[#allocation7 + $0x7f8] sm:$0xff]
    %v839 = vld [vmem:[#allocation7 + $0x800] sm:$0xff]
    %v840 = vld [vmem:[#allocation7 + $0x808] sm:$0xff]
    %v841 = vld [vmem:[#allocation7 + $0x810] sm:$0xff]
    %v842 = vld [vmem:[#allocation7 + $0x818] sm:$0xff]
    %v843 = vld [vmem:[#allocation7 + $0x820] sm:$0xff]
    %v844 = vld [vmem:[#allocation7 + $0x828] sm:$0xff]
    %v845 = vld [vmem:[#allocation7 + $0x830] sm:$0xff]
    %v846 = vld [vmem:[#allocation7 + $0x838] sm:$0xff]
    %v847 = vld [vmem:[#allocation7 + $0x840] sm:$0xff]
    %v848 = vld [vmem:[#allocation7 + $0x848] sm:$0xff]
    %v849 = vld [vmem:[#allocation7 + $0x850] sm:$0xff]
    %v850 = vld [vmem:[#allocation7 + $0x858] sm:$0xff]
    %v851 = vld [vmem:[#allocation7 + $0x860] sm:$0xff]
    %v852 = vld [vmem:[#allocation7 + $0x868] sm:$0xff]
    %v853 = vld [vmem:[#allocation7 + $0x870] sm:$0xff]
    %v854 = vld [vmem:[#allocation7 + $0x878] sm:$0xff]
    %v855 = vld [vmem:[#allocation7 + $0x880] sm:$0xff]
    %v856 = vld [vmem:[#allocation7 + $0x888] sm:$0xff]
    %v857 = vld [vmem:[#allocation7 + $0x890] sm:$0xff]
    %v858 = vld [vmem:[#allocation7 + $0x898] sm:$0xff]
    %v859 = vld [vmem:[#allocation7 + $0x8a0] sm:$0xff]
    %v860 = vld [vmem:[#allocation7 + $0x8a8] sm:$0xff]
    %v861 = vld [vmem:[#allocation7 + $0x8b0] sm:$0xff]
    %v862 = vld [vmem:[#allocation7 + $0x8b8] sm:$0xff]
    %v863 = vld [vmem:[#allocation7 + $0x8c0] sm:$0xff]
    %v864 = vld [vmem:[#allocation7 + $0x8c8] sm:$0xff]
    %v865 = vld [vmem:[#allocation7 + $0x8d0] sm:$0xff]
    %v866 = vld [vmem:[#allocation7 + $0x8d8] sm:$0xff]
    %v867 = vld [vmem:[#allocation7 + $0x8e0] sm:$0xff]
    %v868 = vld [vmem:[#allocation7 + $0x8e8] sm:$0xff]
    %v869 = vld [vmem:[#allocation7 + $0x8f0] sm:$0xff]
    %v870 = vld [vmem:[#allocation7 + $0x8f8] sm:$0xff]
    %v871 = vld [vmem:[#allocation7 + $0x900] sm:$0xff]
    %v872 = vld [vmem:[#allocation7 + $0x908] sm:$0xff]
    %v873 = vld [vmem:[#allocation7 + $0x910] sm:$0xff]
    %v874 = vld [vmem:[#allocation7 + $0x918] sm:$0xff]
    %v875 = vld [vmem:[#allocation7 + $0x920] sm:$0xff]
    %v876 = vld [vmem:[#allocation7 + $0x928] sm:$0xff]
    %v877 = vld [vmem:[#allocation7 + $0x930] sm:$0xff]
    %v878 = vld [vmem:[#allocation7 + $0x938] sm:$0xff]
    %v879 = vld [vmem:[#allocation7 + $0x940] sm:$0xff]
    %v880 = vld [vmem:[#allocation7 + $0x948] sm:$0xff]
    %v881 = vld [vmem:[#allocation7 + $0x950] sm:$0xff]
    %v882 = vld [vmem:[#allocation7 + $0x958] sm:$0xff]
    %v883 = vld [vmem:[#allocation7 + $0x960] sm:$0xff]
    %v884 = vld [vmem:[#allocation7 + $0x968] sm:$0xff]
    %v885 = vld [vmem:[#allocation7 + $0x970] sm:$0xff]
    %v886 = vld [vmem:[#allocation7 + $0x978] sm:$0xff]
    %v887 = vld [vmem:[#allocation7 + $0x980] sm:$0xff]
    %v888 = vld [vmem:[#allocation7 + $0x988] sm:$0xff]
    %v889 = vld [vmem:[#allocation7 + $0x990] sm:$0xff]
    %v890 = vld [vmem:[#allocation7 + $0x998] sm:$0xff]
    %v891 = vld [vmem:[#allocation7 + $0x9a0] sm:$0xff]
    %v892 = vld [vmem:[#allocation7 + $0x9a8] sm:$0xff]
    %v893 = vld [vmem:[#allocation7 + $0x9b0] sm:$0xff]
    %v894 = vld [vmem:[#allocation7 + $0x9b8] sm:$0xff]
    %v895 = vld [vmem:[#allocation7 + $0x9c0] sm:$0xff]
    %v896 = vld [vmem:[#allocation7 + $0x9c8] sm:$0xff]
    %v897 = vld [vmem:[#allocation7 + $0x9d0] sm:$0xff]
    %v898 = vld [vmem:[#allocation7 + $0x9d8] sm:$0xff]
    %v899 = vld [vmem:[#allocation7 + $0x9e0] sm:$0xff]
    %v900 = vld [vmem:[#allocation7 + $0x9e8] sm:$0xff]
    %v901 = vld [vmem:[#allocation7 + $0x9f0] sm:$0xff]
    %v902 = vld [vmem:[#allocation7 + $0x9f8] sm:$0xff]
    %v903 = vld [vmem:[#allocation7 + $0xa00] sm:$0xff]
    %v904 = vld [vmem:[#allocation7 + $0xa08] sm:$0xff]
    %v905 = vld [vmem:[#allocation7 + $0xa10] sm:$0xff]
    %v906 = vld [vmem:[#allocation7 + $0xa18] sm:$0xff]
    %v907 = vld [vmem:[#allocation7 + $0xa20] sm:$0xff]
    %v908 = vld [vmem:[#allocation7 + $0xa28] sm:$0xff]
    %v909 = vld [vmem:[#allocation7 + $0xa30] sm:$0xff]
    %v910 = vld [vmem:[#allocation7 + $0xa38] sm:$0xff]
    %v911 = vld [vmem:[#allocation7 + $0xa40] sm:$0xff]
    %v912 = vld [vmem:[#allocation7 + $0xa48] sm:$0xff]
    %v913 = vld [vmem:[#allocation7 + $0xa50] sm:$0xff]
    %v914 = vld [vmem:[#allocation7 + $0xa58] sm:$0xff]
    %v915 = vld [vmem:[#allocation7 + $0xa60] sm:$0xff]
    %v916 = vld [vmem:[#allocation7 + $0xa68] sm:$0xff]
    %v917 = vld [vmem:[#allocation7 + $0xa70] sm:$0xff]
    %v918 = vld [vmem:[#allocation7 + $0xa78] sm:$0xff]
    %v919 = vld [vmem:[#allocation7 + $0xa80] sm:$0xff]
    %v920 = vld [vmem:[#allocation7 + $0xa88] sm:$0xff]
    %v921 = vld [vmem:[#allocation7 + $0xa90] sm:$0xff]
    %v922 = vld [vmem:[#allocation7 + $0xa98] sm:$0xff]
    %v923 = vld [vmem:[#allocation7 + $0xaa0] sm:$0xff]
    %v924 = vld [vmem:[#allocation7 + $0xaa8] sm:$0xff]
    %v925 = vld [vmem:[#allocation7 + $0xab0] sm:$0xff]
    %v926 = vld [vmem:[#allocation7 + $0xab8] sm:$0xff]
    %v927 = vld [vmem:[#allocation7 + $0xac0] sm:$0xff]
    %v928 = vld [vmem:[#allocation7 + $0xac8] sm:$0xff]
    %v929 = vld [vmem:[#allocation7 + $0xad0] sm:$0xff]
    %v930 = vld [vmem:[#allocation7 + $0xad8] sm:$0xff]
    %v931 = vld [vmem:[#allocation7 + $0xae0] sm:$0xff]
    %v932 = vld [vmem:[#allocation7 + $0xae8] sm:$0xff]
    %v933 = vld [vmem:[#allocation7 + $0xaf0] sm:$0xff]
    %v934 = vld [vmem:[#allocation7 + $0xaf8] sm:$0xff]
    %v935 = vld [vmem:[#allocation7 + $0xb00] sm:$0xff]
    %v936 = vld [vmem:[#allocation7 + $0xb08] sm:$0xff]
    %v937 = vld [vmem:[#allocation7 + $0xb10] sm:$0xff]
    %v938 = vld [vmem:[#allocation7 + $0xb18] sm:$0xff]
    %v939 = vld [vmem:[#allocation7 + $0xb20] sm:$0xff]
    %v940 = vld [vmem:[#allocation7 + $0xb28] sm:$0xff]
    %v941 = vld [vmem:[#allocation7 + $0xb30] sm:$0xff]
    %v942 = vld [vmem:[#allocation7 + $0xb38] sm:$0xff]
    %v943 = vld [vmem:[#allocation7 + $0xb40] sm:$0xff]
    %v944 = vld [vmem:[#allocation7 + $0xb48] sm:$0xff]
    %v945 = vld [vmem:[#allocation7 + $0xb50] sm:$0xff]
    %v946 = vld [vmem:[#allocation7 + $0xb58] sm:$0xff]
    %v947 = vld [vmem:[#allocation7 + $0xb60] sm:$0xff]
    %v948 = vld [vmem:[#allocation7 + $0xb68] sm:$0xff]
    %v949 = vld [vmem:[#allocation7 + $0xb70] sm:$0xff]
    %v950 = vld [vmem:[#allocation7 + $0xb78] sm:$0xff]
    %v951 = vld [vmem:[#allocation7 + $0xb80] sm:$0xff]
    %v952 = vld [vmem:[#allocation7 + $0xb88] sm:$0xff]
    %v953 = vld [vmem:[#allocation7 + $0xb90] sm:$0xff]
    %v954 = vld [vmem:[#allocation7 + $0xb98] sm:$0xff]
    %v955 = vld [vmem:[#allocation7 + $0xba0] sm:$0xff]
    %v956 = vld [vmem:[#allocation7 + $0xba8] sm:$0xff]
    %v957 = vld [vmem:[#allocation7 + $0xbb0] sm:$0xff]
    %v958 = vld [vmem:[#allocation7 + $0xbb8] sm:$0xff]
    %v959 = vld [vmem:[#allocation7 + $0xbc0] sm:$0xff]
    %v960 = vld [vmem:[#allocation7 + $0xbc8] sm:$0xff]
    %v961 = vld [vmem:[#allocation7 + $0xbd0] sm:$0xff]
    %v962 = vld [vmem:[#allocation7 + $0xbd8] sm:$0xff]
    %v963 = vld [vmem:[#allocation7 + $0xbe0] sm:$0xff]
    %v964 = vld [vmem:[#allocation7 + $0xbe8] sm:$0xff]
    %v965 = vld [vmem:[#allocation7 + $0xbf0] sm:$0xff]
    %v966 = vld [vmem:[#allocation7 + $0xbf8] sm:$0xff]
    %v967 = vld [vmem:[#allocation7 + $0xc00] sm:$0xff]
    %v968 = vld [vmem:[#allocation7 + $0xc08] sm:$0xff]
    %v969 = vld [vmem:[#allocation7 + $0xc10] sm:$0xff]
    %v970 = vld [vmem:[#allocation7 + $0xc18] sm:$0xff]
    %v971 = vld [vmem:[#allocation7 + $0xc20] sm:$0xff]
    %v972 = vld [vmem:[#allocation7 + $0xc28] sm:$0xff]
    %v973 = vld [vmem:[#allocation7 + $0xc30] sm:$0xff]
    %v974 = vld [vmem:[#allocation7 + $0xc38] sm:$0xff]
    %v975 = vld [vmem:[#allocation7 + $0xc40] sm:$0xff]
    %v976 = vld [vmem:[#allocation7 + $0xc48] sm:$0xff]
    %v977 = vld [vmem:[#allocation7 + $0xc50] sm:$0xff]
    %v978 = vld [vmem:[#allocation7 + $0xc58] sm:$0xff]
    %v979 = vld [vmem:[#allocation7 + $0xc60] sm:$0xff]
    %v980 = vld [vmem:[#allocation7 + $0xc68] sm:$0xff]
    %v981 = vld [vmem:[#allocation7 + $0xc70] sm:$0xff]
    %v982 = vld [vmem:[#allocation7 + $0xc78] sm:$0xff]
    %v983 = vld [vmem:[#allocation7 + $0xc80] sm:$0xff]
    %v984 = vld [vmem:[#allocation7 + $0xc88] sm:$0xff]
    %v985 = vld [vmem:[#allocation7 + $0xc90] sm:$0xff]
    %v986 = vld [vmem:[#allocation7 + $0xc98] sm:$0xff]
    %v987 = vld [vmem:[#allocation7 + $0xca0] sm:$0xff]
    %v988 = vld [vmem:[#allocation7 + $0xca8] sm:$0xff]
    %v989 = vld [vmem:[#allocation7 + $0xcb0] sm:$0xff]
    %v990 = vld [vmem:[#allocation7 + $0xcb8] sm:$0xff]
    %v991 = vld [vmem:[#allocation7 + $0xcc0] sm:$0xff]
    %v992 = vld [vmem:[#allocation7 + $0xcc8] sm:$0xff]
    %v993 = vld [vmem:[#allocation7 + $0xcd0] sm:$0xff]
    %v994 = vld [vmem:[#allocation7 + $0xcd8] sm:$0xff]
    %v995 = vld [vmem:[#allocation7 + $0xce0] sm:$0xff]
    %v996 = vld [vmem:[#allocation7 + $0xce8] sm:$0xff]
    %v997 = vld [vmem:[#allocation7 + $0xcf0] sm:$0xff]
    %v998 = vld [vmem:[#allocation7 + $0xcf8] sm:$0xff]
    %v999 = vld [vmem:[#allocation7 + $0xd00] sm:$0xff]
    %v1000 = vld [vmem:[#allocation7 + $0xd08] sm:$0xff]
    %v1001 = vld [vmem:[#allocation7 + $0xd10] sm:$0xff]
    %v1002 = vld [vmem:[#allocation7 + $0xd18] sm:$0xff]
    %v1003 = vld [vmem:[#allocation7 + $0xd20] sm:$0xff]
    %v1004 = vld [vmem:[#allocation7 + $0xd28] sm:$0xff]
    %v1005 = vld [vmem:[#allocation7 + $0xd30] sm:$0xff]
    %v1006 = vld [vmem:[#allocation7 + $0xd38] sm:$0xff]
    %v1007 = vld [vmem:[#allocation7 + $0xd40] sm:$0xff]
    %v1008 = vld [vmem:[#allocation7 + $0xd48] sm:$0xff]
    %v1009 = vld [vmem:[#allocation7 + $0xd50] sm:$0xff]
    %v1010 = vld [vmem:[#allocation7 + $0xd58] sm:$0xff]
    %v1011 = vld [vmem:[#allocation7 + $0xd60] sm:$0xff]
    %v1012 = vld [vmem:[#allocation7 + $0xd68] sm:$0xff]
    %v1013 = vld [vmem:[#allocation7 + $0xd70] sm:$0xff]
    %v1014 = vld [vmem:[#allocation7 + $0xd78] sm:$0xff]
    %v1015 = vld [vmem:[#allocation7 + $0xd80] sm:$0xff]
    %v1016 = vld [vmem:[#allocation7 + $0xd88] sm:$0xff]
    %v1017 = vld [vmem:[#allocation7 + $0xd90] sm:$0xff]
    %v1018 = vld [vmem:[#allocation7 + $0xd98] sm:$0xff]
    %v1019 = vld [vmem:[#allocation7 + $0xda0] sm:$0xff]
    %v1020 = vld [vmem:[#allocation7 + $0xda8] sm:$0xff]
    %v1021 = vld [vmem:[#allocation7 + $0xdb0] sm:$0xff]
    %v1022 = vld [vmem:[#allocation7 + $0xdb8] sm:$0xff]
    %v1023 = vld [vmem:[#allocation7 + $0xdc0] sm:$0xff]
    %v1024 = vld [vmem:[#allocation7 + $0xdc8] sm:$0xff]
    %v1025 = vld [vmem:[#allocation7 + $0xdd0] sm:$0xff]
    %v1026 = vld [vmem:[#allocation7 + $0xdd8] sm:$0xff]
    %v1027 = vld [vmem:[#allocation7 + $0xde0] sm:$0xff]
    %v1028 = vld [vmem:[#allocation7 + $0xde8] sm:$0xff]
    %v1029 = vld [vmem:[#allocation7 + $0xdf0] sm:$0xff]
    %v1030 = vld [vmem:[#allocation7 + $0xdf8] sm:$0xff]
    %v1031 = vld [vmem:[#allocation7 + $0xe00] sm:$0xff]
    %v1032 = vld [vmem:[#allocation7 + $0xe08] sm:$0xff]
    %v1033 = vld [vmem:[#allocation7 + $0xe10] sm:$0xff]
    %v1034 = vld [vmem:[#allocation7 + $0xe18] sm:$0xff]
    %v1035 = vld [vmem:[#allocation7 + $0xe20] sm:$0xff]
    %v1036 = vld [vmem:[#allocation7 + $0xe28] sm:$0xff]
    %v1037 = vld [vmem:[#allocation7 + $0xe30] sm:$0xff]
    %v1038 = vld [vmem:[#allocation7 + $0xe38] sm:$0xff]
    %v1039 = vld [vmem:[#allocation7 + $0xe40] sm:$0xff]
    %v1040 = vld [vmem:[#allocation7 + $0xe48] sm:$0xff]
    %v1041 = vld [vmem:[#allocation7 + $0xe50] sm:$0xff]
    %v1042 = vld [vmem:[#allocation7 + $0xe58] sm:$0xff]
    %v1043 = vld [vmem:[#allocation7 + $0xe60] sm:$0xff]
    %v1044 = vld [vmem:[#allocation7 + $0xe68] sm:$0xff]
    %v1045 = vld [vmem:[#allocation7 + $0xe70] sm:$0xff]
    %v1046 = vld [vmem:[#allocation7 + $0xe78] sm:$0xff]
    %v1047 = vld [vmem:[#allocation7 + $0xe80] sm:$0xff]
    %v1048 = vld [vmem:[#allocation7 + $0xe88] sm:$0xff]
    %v1049 = vld [vmem:[#allocation7 + $0xe90] sm:$0xff]
    %v1050 = vld [vmem:[#allocation7 + $0xe98] sm:$0xff]
    %v1051 = vld [vmem:[#allocation7 + $0xea0] sm:$0xff]
    %v1052 = vld [vmem:[#allocation7 + $0xea8] sm:$0xff]
    %v1053 = vld [vmem:[#allocation7 + $0xeb0] sm:$0xff]
    %v1054 = vld [vmem:[#allocation7 + $0xeb8] sm:$0xff]
    %v1055 = vld [vmem:[#allocation7 + $0xec0] sm:$0xff]
    %v1056 = vld [vmem:[#allocation7 + $0xec8] sm:$0xff]
    %v1057 = vld [vmem:[#allocation7 + $0xed0] sm:$0xff]
    %v1058 = vld [vmem:[#allocation7 + $0xed8] sm:$0xff]
    %v1059 = vld [vmem:[#allocation7 + $0xee0] sm:$0xff]
    %v1060 = vld [vmem:[#allocation7 + $0xee8] sm:$0xff]
    %v1061 = vld [vmem:[#allocation7 + $0xef0] sm:$0xff]
    %v1062 = vld [vmem:[#allocation7 + $0xef8] sm:$0xff]
    %v1063 = vld [vmem:[#allocation7 + $0xf00] sm:$0xff]
    %v1064 = vld [vmem:[#allocation7 + $0xf08] sm:$0xff]
    %v1065 = vld [vmem:[#allocation7 + $0xf10] sm:$0xff]
    %v1066 = vld [vmem:[#allocation7 + $0xf18] sm:$0xff]
    %v1067 = vld [vmem:[#allocation7 + $0xf20] sm:$0xff]
    %v1068 = vld [vmem:[#allocation7 + $0xf28] sm:$0xff]
    %v1069 = vld [vmem:[#allocation7 + $0xf30] sm:$0xff]
    %v1070 = vld [vmem:[#allocation7 + $0xf38] sm:$0xff]
    %v1071 = vld [vmem:[#allocation7 + $0xf40] sm:$0xff]
    %v1072 = vld [vmem:[#allocation7 + $0xf48] sm:$0xff]
    %v1073 = vld [vmem:[#allocation7 + $0xf50] sm:$0xff]
    %v1074 = vld [vmem:[#allocation7 + $0xf58] sm:$0xff]
    %v1075 = vld [vmem:[#allocation7 + $0xf60] sm:$0xff]
    %v1076 = vld [vmem:[#allocation7 + $0xf68] sm:$0xff]
    %v1077 = vld [vmem:[#allocation7 + $0xf70] sm:$0xff]
    %v1078 = vld [vmem:[#allocation7 + $0xf78] sm:$0xff]
    %v1079 = vld [vmem:[#allocation7 + $0xf80] sm:$0xff]
    %v1080 = vld [vmem:[#allocation7 + $0xf88] sm:$0xff]
    %v1081 = vld [vmem:[#allocation7 + $0xf90] sm:$0xff]
    %v1082 = vld [vmem:[#allocation7 + $0xf98] sm:$0xff]
    %v1083 = vld [vmem:[#allocation7 + $0xfa0] sm:$0xff]
    %v1084 = vld [vmem:[#allocation7 + $0xfa8] sm:$0xff]
    %v1085 = vld [vmem:[#allocation7 + $0xfb0] sm:$0xff]
    %v1086 = vld [vmem:[#allocation7 + $0xfb8] sm:$0xff]
    %v1087 = vld [vmem:[#allocation7 + $0xfc0] sm:$0xff]
    %v1088 = vld [vmem:[#allocation7 + $0xfc8] sm:$0xff]
    %v1089 = vld [vmem:[#allocation7 + $0xfd0] sm:$0xff]
    %v1090 = vld [vmem:[#allocation7 + $0xfd8] sm:$0xff]
    %v1091 = vld [vmem:[#allocation7 + $0xfe0] sm:$0xff]
    %v1092 = vld [vmem:[#allocation7 + $0xfe8] sm:$0xff]
    %v1093 = vld [vmem:[#allocation7 + $0xff0] sm:$0xff]
    %v1094 = vld [vmem:[#allocation7 + $0xff8] sm:$0xff]
    %v1095 = vld [vmem:[#allocation8] sm:$0xff]
    %v1096 = vld [vmem:[#allocation8 + $0x8] sm:$0xff]
    %v1097 = vld [vmem:[#allocation8 + $0x10] sm:$0xff]
    %v1098 = vld [vmem:[#allocation8 + $0x18] sm:$0xff]
    %v1101 = vcombine.high %v69, %v69
    %v1103 = vunpack.c.l.s4 1983009808
    %v1104 = vunpack.c.0.s8 %v1103
    %v1105 = vlaneseq
    %v1106 = vshrl.u32 %v1105, 7
    %v1107 = vsub.s32 %v1104, %v1106
    %v1108 = vrot.slane %v69, %v1107
    %v1110 = vunpack.c.l.s4 1983009808
    %v1111 = vunpack.c.0.s8 %v1110
    %v1112 = vlaneseq
    %v1113 = vshrl.u32 %v1112, 7
    %v1114 = vsub.s32 %v1111, %v1113
    %v1115 = vrot.slane %v1101, %v1114
    %v1116 = vcombine.high %v1108, %v1108
    %v1117 = vcombine.high %v1115, %v1115
    %v1118 = vcombine.high %v70, %v70
    %v1120 = vunpack.c.l.s4 1983009808
    %v1121 = vunpack.c.0.s8 %v1120
    %v1122 = vlaneseq
    %v1123 = vshrl.u32 %v1122, 7
    %v1124 = vsub.s32 %v1121, %v1123
    %v1125 = vrot.slane %v70, %v1124
    %v1127 = vunpack.c.l.s4 1983009808
    %v1128 = vunpack.c.0.s8 %v1127
    %v1129 = vlaneseq
    %v1130 = vshrl.u32 %v1129, 7
    %v1131 = vsub.s32 %v1128, %v1130
    %v1132 = vrot.slane %v1118, %v1131
    %v1133 = vcombine.high %v1125, %v1125
    %v1134 = vcombine.high %v1132, %v1132
    %v1143 = vpack.c.bf16 %v1108, %v1108
    %v1144 = vpack.c.bf16 %v1116, %v1116
    %v1145 = vpack.c.bf16 %v1115, %v1115
    %v1146 = vpack.c.bf16 %v1117, %v1117
    %v1147 = vpack.c.bf16 %v1125, %v1125
    %v1148 = vpack.c.bf16 %v1133, %v1133
    %v1149 = vpack.c.bf16 %v1132, %v1132
    %v1150 = vpack.c.bf16 %v1134, %v1134
    %v1663 = vunpack.c.l.b16 %v71
    %v1664 = vunpack.c.h.b16 %v71
    %v1665 = vunpack.c.l.b16 %v72
    %v1666 = vunpack.c.h.b16 %v72
    %v1667 = vunpack.c.l.b16 %v73
    %v1668 = vunpack.c.h.b16 %v73
    %v1669 = vunpack.c.l.b16 %v74
    %v1670 = vunpack.c.h.b16 %v74
    %v1671 = vunpack.c.l.b16 %v75
    %v1672 = vunpack.c.h.b16 %v75
    %v1673 = vunpack.c.l.b16 %v76
    %v1674 = vunpack.c.h.b16 %v76
    %v1675 = vunpack.c.l.b16 %v77
    %v1676 = vunpack.c.h.b16 %v77
    %v1677 = vunpack.c.l.b16 %v78
    %v1678 = vunpack.c.h.b16 %v78
    %v1679 = vunpack.c.l.b16 %v79
    %v1680 = vunpack.c.h.b16 %v79
    %v1681 = vunpack.c.l.b16 %v80
    %v1682 = vunpack.c.h.b16 %v80
    %v1683 = vunpack.c.l.b16 %v81
    %v1684 = vunpack.c.h.b16 %v81
    %v1685 = vunpack.c.l.b16 %v82
    %v1686 = vunpack.c.h.b16 %v82
    %v1687 = vunpack.c.l.b16 %v83
    %v1688 = vunpack.c.h.b16 %v83
    %v1689 = vunpack.c.l.b16 %v84
    %v1690 = vunpack.c.h.b16 %v84
    %v1691 = vunpack.c.l.b16 %v85
    %v1692 = vunpack.c.h.b16 %v85
    %v1693 = vunpack.c.l.b16 %v86
    %v1694 = vunpack.c.h.b16 %v86
    %v1695 = vunpack.c.l.b16 %v87
    %v1696 = vunpack.c.h.b16 %v87
    %v1697 = vunpack.c.l.b16 %v88
    %v1698 = vunpack.c.h.b16 %v88
    %v1699 = vunpack.c.l.b16 %v89
    %v1700 = vunpack.c.h.b16 %v89
    %v1701 = vunpack.c.l.b16 %v90
    %v1702 = vunpack.c.h.b16 %v90
    %v1703 = vunpack.c.l.b16 %v91
    %v1704 = vunpack.c.h.b16 %v91
    %v1705 = vunpack.c.l.b16 %v92
    %v1706 = vunpack.c.h.b16 %v92
    %v1707 = vunpack.c.l.b16 %v93
    %v1708 = vunpack.c.h.b16 %v93
    %v1709 = vunpack.c.l.b16 %v94
    %v1710 = vunpack.c.h.b16 %v94
    %v1711 = vunpack.c.l.b16 %v95
    %v1712 = vunpack.c.h.b16 %v95
    %v1713 = vunpack.c.l.b16 %v96
    %v1714 = vunpack.c.h.b16 %v96
    %v1715 = vunpack.c.l.b16 %v97
    %v1716 = vunpack.c.h.b16 %v97
    %v1717 = vunpack.c.l.b16 %v98
    %v1718 = vunpack.c.h.b16 %v98
    %v1719 = vunpack.c.l.b16 %v99
    %v1720 = vunpack.c.h.b16 %v99
    %v1721 = vunpack.c.l.b16 %v100
    %v1722 = vunpack.c.h.b16 %v100
    %v1723 = vunpack.c.l.b16 %v101
    %v1724 = vunpack.c.h.b16 %v101
    %v1725 = vunpack.c.l.b16 %v102
    %v1726 = vunpack.c.h.b16 %v102
    %v1727 = vunpack.c.l.b16 %v103
    %v1728 = vunpack.c.h.b16 %v103
    %v1729 = vunpack.c.l.b16 %v104
    %v1730 = vunpack.c.h.b16 %v104
    %v1731 = vunpack.c.l.b16 %v105
    %v1732 = vunpack.c.h.b16 %v105
    %v1733 = vunpack.c.l.b16 %v106
    %v1734 = vunpack.c.h.b16 %v106
    %v1735 = vunpack.c.l.b16 %v107
    %v1736 = vunpack.c.h.b16 %v107
    %v1737 = vunpack.c.l.b16 %v108
    %v1738 = vunpack.c.h.b16 %v108
    %v1739 = vunpack.c.l.b16 %v109
    %v1740 = vunpack.c.h.b16 %v109
    %v1741 = vunpack.c.l.b16 %v110
    %v1742 = vunpack.c.h.b16 %v110
    %v1743 = vunpack.c.l.b16 %v111
    %v1744 = vunpack.c.h.b16 %v111
    %v1745 = vunpack.c.l.b16 %v112
    %v1746 = vunpack.c.h.b16 %v112
    %v1747 = vunpack.c.l.b16 %v113
    %v1748 = vunpack.c.h.b16 %v113
    %v1749 = vunpack.c.l.b16 %v114
    %v1750 = vunpack.c.h.b16 %v114
    %v1751 = vunpack.c.l.b16 %v115
    %v1752 = vunpack.c.h.b16 %v115
    %v1753 = vunpack.c.l.b16 %v116
    %v1754 = vunpack.c.h.b16 %v116
    %v1755 = vunpack.c.l.b16 %v117
    %v1756 = vunpack.c.h.b16 %v117
    %v1757 = vunpack.c.l.b16 %v118
    %v1758 = vunpack.c.h.b16 %v118
    %v1759 = vunpack.c.l.b16 %v119
    %v1760 = vunpack.c.h.b16 %v119
    %v1761 = vunpack.c.l.b16 %v120
    %v1762 = vunpack.c.h.b16 %v120
    %v1763 = vunpack.c.l.b16 %v121
    %v1764 = vunpack.c.h.b16 %v121
    %v1765 = vunpack.c.l.b16 %v122
    %v1766 = vunpack.c.h.b16 %v122
    %v1767 = vunpack.c.l.b16 %v123
    %v1768 = vunpack.c.h.b16 %v123
    %v1769 = vunpack.c.l.b16 %v124
    %v1770 = vunpack.c.h.b16 %v124
    %v1771 = vunpack.c.l.b16 %v125
    %v1772 = vunpack.c.h.b16 %v125
    %v1773 = vunpack.c.l.b16 %v126
    %v1774 = vunpack.c.h.b16 %v126
    %v1775 = vunpack.c.l.b16 %v127
    %v1776 = vunpack.c.h.b16 %v127
    %v1777 = vunpack.c.l.b16 %v128
    %v1778 = vunpack.c.h.b16 %v128
    %v1779 = vunpack.c.l.b16 %v129
    %v1780 = vunpack.c.h.b16 %v129
    %v1781 = vunpack.c.l.b16 %v130
    %v1782 = vunpack.c.h.b16 %v130
    %v1783 = vunpack.c.l.b16 %v131
    %v1784 = vunpack.c.h.b16 %v131
    %v1785 = vunpack.c.l.b16 %v132
    %v1786 = vunpack.c.h.b16 %v132
    %v1787 = vunpack.c.l.b16 %v133
    %v1788 = vunpack.c.h.b16 %v133
    %v1789 = vunpack.c.l.b16 %v134
    %v1790 = vunpack.c.h.b16 %v134
    %v1791 = vunpack.c.l.b16 %v135
    %v1792 = vunpack.c.h.b16 %v135
    %v1793 = vunpack.c.l.b16 %v136
    %v1794 = vunpack.c.h.b16 %v136
    %v1795 = vunpack.c.l.b16 %v137
    %v1796 = vunpack.c.h.b16 %v137
    %v1797 = vunpack.c.l.b16 %v138
    %v1798 = vunpack.c.h.b16 %v138
    %v1799 = vunpack.c.l.b16 %v139
    %v1800 = vunpack.c.h.b16 %v139
    %v1801 = vunpack.c.l.b16 %v140
    %v1802 = vunpack.c.h.b16 %v140
    %v1803 = vunpack.c.l.b16 %v141
    %v1804 = vunpack.c.h.b16 %v141
    %v1805 = vunpack.c.l.b16 %v142
    %v1806 = vunpack.c.h.b16 %v142
    %v1807 = vunpack.c.l.b16 %v143
    %v1808 = vunpack.c.h.b16 %v143
    %v1809 = vunpack.c.l.b16 %v144
    %v1810 = vunpack.c.h.b16 %v144
    %v1811 = vunpack.c.l.b16 %v145
    %v1812 = vunpack.c.h.b16 %v145
    %v1813 = vunpack.c.l.b16 %v146
    %v1814 = vunpack.c.h.b16 %v146
    %v1815 = vunpack.c.l.b16 %v147
    %v1816 = vunpack.c.h.b16 %v147
    %v1817 = vunpack.c.l.b16 %v148
    %v1818 = vunpack.c.h.b16 %v148
    %v1819 = vunpack.c.l.b16 %v149
    %v1820 = vunpack.c.h.b16 %v149
    %v1821 = vunpack.c.l.b16 %v150
    %v1822 = vunpack.c.h.b16 %v150
    %v1823 = vunpack.c.l.b16 %v151
    %v1824 = vunpack.c.h.b16 %v151
    %v1825 = vunpack.c.l.b16 %v152
    %v1826 = vunpack.c.h.b16 %v152
    %v1827 = vunpack.c.l.b16 %v153
    %v1828 = vunpack.c.h.b16 %v153
    %v1829 = vunpack.c.l.b16 %v154
    %v1830 = vunpack.c.h.b16 %v154
    %v1831 = vunpack.c.l.b16 %v155
    %v1832 = vunpack.c.h.b16 %v155
    %v1833 = vunpack.c.l.b16 %v156
    %v1834 = vunpack.c.h.b16 %v156
    %v1835 = vunpack.c.l.b16 %v157
    %v1836 = vunpack.c.h.b16 %v157
    %v1837 = vunpack.c.l.b16 %v158
    %v1838 = vunpack.c.h.b16 %v158
    %v1839 = vunpack.c.l.b16 %v159
    %v1840 = vunpack.c.h.b16 %v159
    %v1841 = vunpack.c.l.b16 %v160
    %v1842 = vunpack.c.h.b16 %v160
    %v1843 = vunpack.c.l.b16 %v161
    %v1844 = vunpack.c.h.b16 %v161
    %v1845 = vunpack.c.l.b16 %v162
    %v1846 = vunpack.c.h.b16 %v162
    %v1847 = vunpack.c.l.b16 %v163
    %v1848 = vunpack.c.h.b16 %v163
    %v1849 = vunpack.c.l.b16 %v164
    %v1850 = vunpack.c.h.b16 %v164
    %v1851 = vunpack.c.l.b16 %v165
    %v1852 = vunpack.c.h.b16 %v165
    %v1853 = vunpack.c.l.b16 %v166
    %v1854 = vunpack.c.h.b16 %v166
    %v1855 = vunpack.c.l.b16 %v167
    %v1856 = vunpack.c.h.b16 %v167
    %v1857 = vunpack.c.l.b16 %v168
    %v1858 = vunpack.c.h.b16 %v168
    %v1859 = vunpack.c.l.b16 %v169
    %v1860 = vunpack.c.h.b16 %v169
    %v1861 = vunpack.c.l.b16 %v170
    %v1862 = vunpack.c.h.b16 %v170
    %v1863 = vunpack.c.l.b16 %v171
    %v1864 = vunpack.c.h.b16 %v171
    %v1865 = vunpack.c.l.b16 %v172
    %v1866 = vunpack.c.h.b16 %v172
    %v1867 = vunpack.c.l.b16 %v173
    %v1868 = vunpack.c.h.b16 %v173
    %v1869 = vunpack.c.l.b16 %v174
    %v1870 = vunpack.c.h.b16 %v174
    %v1871 = vunpack.c.l.b16 %v175
    %v1872 = vunpack.c.h.b16 %v175
    %v1873 = vunpack.c.l.b16 %v176
    %v1874 = vunpack.c.h.b16 %v176
    %v1875 = vunpack.c.l.b16 %v177
    %v1876 = vunpack.c.h.b16 %v177
    %v1877 = vunpack.c.l.b16 %v178
    %v1878 = vunpack.c.h.b16 %v178
    %v1879 = vunpack.c.l.b16 %v179
    %v1880 = vunpack.c.h.b16 %v179
    %v1881 = vunpack.c.l.b16 %v180
    %v1882 = vunpack.c.h.b16 %v180
    %v1883 = vunpack.c.l.b16 %v181
    %v1884 = vunpack.c.h.b16 %v181
    %v1885 = vunpack.c.l.b16 %v182
    %v1886 = vunpack.c.h.b16 %v182
    %v1887 = vunpack.c.l.b16 %v183
    %v1888 = vunpack.c.h.b16 %v183
    %v1889 = vunpack.c.l.b16 %v184
    %v1890 = vunpack.c.h.b16 %v184
    %v1891 = vunpack.c.l.b16 %v185
    %v1892 = vunpack.c.h.b16 %v185
    %v1893 = vunpack.c.l.b16 %v186
    %v1894 = vunpack.c.h.b16 %v186
    %v1895 = vunpack.c.l.b16 %v187
    %v1896 = vunpack.c.h.b16 %v187
    %v1897 = vunpack.c.l.b16 %v188
    %v1898 = vunpack.c.h.b16 %v188
    %v1899 = vunpack.c.l.b16 %v189
    %v1900 = vunpack.c.h.b16 %v189
    %v1901 = vunpack.c.l.b16 %v190
    %v1902 = vunpack.c.h.b16 %v190
    %v1903 = vunpack.c.l.b16 %v191
    %v1904 = vunpack.c.h.b16 %v191
    %v1905 = vunpack.c.l.b16 %v192
    %v1906 = vunpack.c.h.b16 %v192
    %v1907 = vunpack.c.l.b16 %v193
    %v1908 = vunpack.c.h.b16 %v193
    %v1909 = vunpack.c.l.b16 %v194
    %v1910 = vunpack.c.h.b16 %v194
    %v1911 = vunpack.c.l.b16 %v195
    %v1912 = vunpack.c.h.b16 %v195
    %v1913 = vunpack.c.l.b16 %v196
    %v1914 = vunpack.c.h.b16 %v196
    %v1915 = vunpack.c.l.b16 %v197
    %v1916 = vunpack.c.h.b16 %v197
    %v1917 = vunpack.c.l.b16 %v198
    %v1918 = vunpack.c.h.b16 %v198
    %v1919 = vunpack.c.l.b16 %v199
    %v1920 = vunpack.c.h.b16 %v199
    %v1921 = vunpack.c.l.b16 %v200
    %v1922 = vunpack.c.h.b16 %v200
    %v1923 = vunpack.c.l.b16 %v201
    %v1924 = vunpack.c.h.b16 %v201
    %v1925 = vunpack.c.l.b16 %v202
    %v1926 = vunpack.c.h.b16 %v202
    %v1927 = vunpack.c.l.b16 %v203
    %v1928 = vunpack.c.h.b16 %v203
    %v1929 = vunpack.c.l.b16 %v204
    %v1930 = vunpack.c.h.b16 %v204
    %v1931 = vunpack.c.l.b16 %v205
    %v1932 = vunpack.c.h.b16 %v205
    %v1933 = vunpack.c.l.b16 %v206
    %v1934 = vunpack.c.h.b16 %v206
    %v1935 = vunpack.c.l.b16 %v207
    %v1936 = vunpack.c.h.b16 %v207
    %v1937 = vunpack.c.l.b16 %v208
    %v1938 = vunpack.c.h.b16 %v208
    %v1939 = vunpack.c.l.b16 %v209
    %v1940 = vunpack.c.h.b16 %v209
    %v1941 = vunpack.c.l.b16 %v210
    %v1942 = vunpack.c.h.b16 %v210
    %v1943 = vunpack.c.l.b16 %v211
    %v1944 = vunpack.c.h.b16 %v211
    %v1945 = vunpack.c.l.b16 %v212
    %v1946 = vunpack.c.h.b16 %v212
    %v1947 = vunpack.c.l.b16 %v213
    %v1948 = vunpack.c.h.b16 %v213
    %v1949 = vunpack.c.l.b16 %v214
    %v1950 = vunpack.c.h.b16 %v214
    %v1951 = vunpack.c.l.b16 %v215
    %v1952 = vunpack.c.h.b16 %v215
    %v1953 = vunpack.c.l.b16 %v216
    %v1954 = vunpack.c.h.b16 %v216
    %v1955 = vunpack.c.l.b16 %v217
    %v1956 = vunpack.c.h.b16 %v217
    %v1957 = vunpack.c.l.b16 %v218
    %v1958 = vunpack.c.h.b16 %v218
    %v1959 = vunpack.c.l.b16 %v219
    %v1960 = vunpack.c.h.b16 %v219
    %v1961 = vunpack.c.l.b16 %v220
    %v1962 = vunpack.c.h.b16 %v220
    %v1963 = vunpack.c.l.b16 %v221
    %v1964 = vunpack.c.h.b16 %v221
    %v1965 = vunpack.c.l.b16 %v222
    %v1966 = vunpack.c.h.b16 %v222
    %v1967 = vunpack.c.l.b16 %v223
    %v1968 = vunpack.c.h.b16 %v223
    %v1969 = vunpack.c.l.b16 %v224
    %v1970 = vunpack.c.h.b16 %v224
    %v1971 = vunpack.c.l.b16 %v225
    %v1972 = vunpack.c.h.b16 %v225
    %v1973 = vunpack.c.l.b16 %v226
    %v1974 = vunpack.c.h.b16 %v226
    %v1975 = vunpack.c.l.b16 %v227
    %v1976 = vunpack.c.h.b16 %v227
    %v1977 = vunpack.c.l.b16 %v228
    %v1978 = vunpack.c.h.b16 %v228
    %v1979 = vunpack.c.l.b16 %v229
    %v1980 = vunpack.c.h.b16 %v229
    %v1981 = vunpack.c.l.b16 %v230
    %v1982 = vunpack.c.h.b16 %v230
    %v1983 = vunpack.c.l.b16 %v231
    %v1984 = vunpack.c.h.b16 %v231
    %v1985 = vunpack.c.l.b16 %v232
    %v1986 = vunpack.c.h.b16 %v232
    %v1987 = vunpack.c.l.b16 %v233
    %v1988 = vunpack.c.h.b16 %v233
    %v1989 = vunpack.c.l.b16 %v234
    %v1990 = vunpack.c.h.b16 %v234
    %v1991 = vunpack.c.l.b16 %v235
    %v1992 = vunpack.c.h.b16 %v235
    %v1993 = vunpack.c.l.b16 %v236
    %v1994 = vunpack.c.h.b16 %v236
    %v1995 = vunpack.c.l.b16 %v237
    %v1996 = vunpack.c.h.b16 %v237
    %v1997 = vunpack.c.l.b16 %v238
    %v1998 = vunpack.c.h.b16 %v238
    %v1999 = vunpack.c.l.b16 %v239
    %v2000 = vunpack.c.h.b16 %v239
    %v2001 = vunpack.c.l.b16 %v240
    %v2002 = vunpack.c.h.b16 %v240
    %v2003 = vunpack.c.l.b16 %v241
    %v2004 = vunpack.c.h.b16 %v241
    %v2005 = vunpack.c.l.b16 %v242
    %v2006 = vunpack.c.h.b16 %v242
    %v2007 = vunpack.c.l.b16 %v243
    %v2008 = vunpack.c.h.b16 %v243
    %v2009 = vunpack.c.l.b16 %v244
    %v2010 = vunpack.c.h.b16 %v244
    %v2011 = vunpack.c.l.b16 %v245
    %v2012 = vunpack.c.h.b16 %v245
    %v2013 = vunpack.c.l.b16 %v246
    %v2014 = vunpack.c.h.b16 %v246
    %v2015 = vunpack.c.l.b16 %v247
    %v2016 = vunpack.c.h.b16 %v247
    %v2017 = vunpack.c.l.b16 %v248
    %v2018 = vunpack.c.h.b16 %v248
    %v2019 = vunpack.c.l.b16 %v249
    %v2020 = vunpack.c.h.b16 %v249
    %v2021 = vunpack.c.l.b16 %v250
    %v2022 = vunpack.c.h.b16 %v250
    %v2023 = vunpack.c.l.b16 %v251
    %v2024 = vunpack.c.h.b16 %v251
    %v2025 = vunpack.c.l.b16 %v252
    %v2026 = vunpack.c.h.b16 %v252
    %v2027 = vunpack.c.l.b16 %v253
    %v2028 = vunpack.c.h.b16 %v253
    %v2029 = vunpack.c.l.b16 %v254
    %v2030 = vunpack.c.h.b16 %v254
    %v2031 = vunpack.c.l.b16 %v255
    %v2032 = vunpack.c.h.b16 %v255
    %v2033 = vunpack.c.l.b16 %v256
    %v2034 = vunpack.c.h.b16 %v256
    %v2035 = vunpack.c.l.b16 %v257
    %v2036 = vunpack.c.h.b16 %v257
    %v2037 = vunpack.c.l.b16 %v258
    %v2038 = vunpack.c.h.b16 %v258
    %v2039 = vunpack.c.l.b16 %v259
    %v2040 = vunpack.c.h.b16 %v259
    %v2041 = vunpack.c.l.b16 %v260
    %v2042 = vunpack.c.h.b16 %v260
    %v2043 = vunpack.c.l.b16 %v261
    %v2044 = vunpack.c.h.b16 %v261
    %v2045 = vunpack.c.l.b16 %v262
    %v2046 = vunpack.c.h.b16 %v262
    %v2047 = vunpack.c.l.b16 %v263
    %v2048 = vunpack.c.h.b16 %v263
    %v2049 = vunpack.c.l.b16 %v264
    %v2050 = vunpack.c.h.b16 %v264
    %v2051 = vunpack.c.l.b16 %v265
    %v2052 = vunpack.c.h.b16 %v265
    %v2053 = vunpack.c.l.b16 %v266
    %v2054 = vunpack.c.h.b16 %v266
    %v2055 = vunpack.c.l.b16 %v267
    %v2056 = vunpack.c.h.b16 %v267
    %v2057 = vunpack.c.l.b16 %v268
    %v2058 = vunpack.c.h.b16 %v268
    %v2059 = vunpack.c.l.b16 %v269
    %v2060 = vunpack.c.h.b16 %v269
    %v2061 = vunpack.c.l.b16 %v270
    %v2062 = vunpack.c.h.b16 %v270
    %v2063 = vunpack.c.l.b16 %v271
    %v2064 = vunpack.c.h.b16 %v271
    %v2065 = vunpack.c.l.b16 %v272
    %v2066 = vunpack.c.h.b16 %v272
    %v2067 = vunpack.c.l.b16 %v273
    %v2068 = vunpack.c.h.b16 %v273
    %v2069 = vunpack.c.l.b16 %v274
    %v2070 = vunpack.c.h.b16 %v274
    %v2071 = vunpack.c.l.b16 %v275
    %v2072 = vunpack.c.h.b16 %v275
    %v2073 = vunpack.c.l.b16 %v276
    %v2074 = vunpack.c.h.b16 %v276
    %v2075 = vunpack.c.l.b16 %v277
    %v2076 = vunpack.c.h.b16 %v277
    %v2077 = vunpack.c.l.b16 %v278
    %v2078 = vunpack.c.h.b16 %v278
    %v2079 = vunpack.c.l.b16 %v279
    %v2080 = vunpack.c.h.b16 %v279
    %v2081 = vunpack.c.l.b16 %v280
    %v2082 = vunpack.c.h.b16 %v280
    %v2083 = vunpack.c.l.b16 %v281
    %v2084 = vunpack.c.h.b16 %v281
    %v2085 = vunpack.c.l.b16 %v282
    %v2086 = vunpack.c.h.b16 %v282
    %v2087 = vunpack.c.l.b16 %v283
    %v2088 = vunpack.c.h.b16 %v283
    %v2089 = vunpack.c.l.b16 %v284
    %v2090 = vunpack.c.h.b16 %v284
    %v2091 = vunpack.c.l.b16 %v285
    %v2092 = vunpack.c.h.b16 %v285
    %v2093 = vunpack.c.l.b16 %v286
    %v2094 = vunpack.c.h.b16 %v286
    %v2095 = vunpack.c.l.b16 %v287
    %v2096 = vunpack.c.h.b16 %v287
    %v2097 = vunpack.c.l.b16 %v288
    %v2098 = vunpack.c.h.b16 %v288
    %v2099 = vunpack.c.l.b16 %v289
    %v2100 = vunpack.c.h.b16 %v289
    %v2101 = vunpack.c.l.b16 %v290
    %v2102 = vunpack.c.h.b16 %v290
    %v2103 = vunpack.c.l.b16 %v291
    %v2104 = vunpack.c.h.b16 %v291
    %v2105 = vunpack.c.l.b16 %v292
    %v2106 = vunpack.c.h.b16 %v292
    %v2107 = vunpack.c.l.b16 %v293
    %v2108 = vunpack.c.h.b16 %v293
    %v2109 = vunpack.c.l.b16 %v294
    %v2110 = vunpack.c.h.b16 %v294
    %v2111 = vunpack.c.l.b16 %v295
    %v2112 = vunpack.c.h.b16 %v295
    %v2113 = vunpack.c.l.b16 %v296
    %v2114 = vunpack.c.h.b16 %v296
    %v2115 = vunpack.c.l.b16 %v297
    %v2116 = vunpack.c.h.b16 %v297
    %v2117 = vunpack.c.l.b16 %v298
    %v2118 = vunpack.c.h.b16 %v298
    %v2119 = vunpack.c.l.b16 %v299
    %v2120 = vunpack.c.h.b16 %v299
    %v2121 = vunpack.c.l.b16 %v300
    %v2122 = vunpack.c.h.b16 %v300
    %v2123 = vunpack.c.l.b16 %v301
    %v2124 = vunpack.c.h.b16 %v301
    %v2125 = vunpack.c.l.b16 %v302
    %v2126 = vunpack.c.h.b16 %v302
    %v2127 = vunpack.c.l.b16 %v303
    %v2128 = vunpack.c.h.b16 %v303
    %v2129 = vunpack.c.l.b16 %v304
    %v2130 = vunpack.c.h.b16 %v304
    %v2131 = vunpack.c.l.b16 %v305
    %v2132 = vunpack.c.h.b16 %v305
    %v2133 = vunpack.c.l.b16 %v306
    %v2134 = vunpack.c.h.b16 %v306
    %v2135 = vunpack.c.l.b16 %v307
    %v2136 = vunpack.c.h.b16 %v307
    %v2137 = vunpack.c.l.b16 %v308
    %v2138 = vunpack.c.h.b16 %v308
    %v2139 = vunpack.c.l.b16 %v309
    %v2140 = vunpack.c.h.b16 %v309
    %v2141 = vunpack.c.l.b16 %v310
    %v2142 = vunpack.c.h.b16 %v310
    %v2143 = vunpack.c.l.b16 %v311
    %v2144 = vunpack.c.h.b16 %v311
    %v2145 = vunpack.c.l.b16 %v312
    %v2146 = vunpack.c.h.b16 %v312
    %v2147 = vunpack.c.l.b16 %v313
    %v2148 = vunpack.c.h.b16 %v313
    %v2149 = vunpack.c.l.b16 %v314
    %v2150 = vunpack.c.h.b16 %v314
    %v2151 = vunpack.c.l.b16 %v315
    %v2152 = vunpack.c.h.b16 %v315
    %v2153 = vunpack.c.l.b16 %v316
    %v2154 = vunpack.c.h.b16 %v316
    %v2155 = vunpack.c.l.b16 %v317
    %v2156 = vunpack.c.h.b16 %v317
    %v2157 = vunpack.c.l.b16 %v318
    %v2158 = vunpack.c.h.b16 %v318
    %v2159 = vunpack.c.l.b16 %v319
    %v2160 = vunpack.c.h.b16 %v319
    %v2161 = vunpack.c.l.b16 %v320
    %v2162 = vunpack.c.h.b16 %v320
    %v2163 = vunpack.c.l.b16 %v321
    %v2164 = vunpack.c.h.b16 %v321
    %v2165 = vunpack.c.l.b16 %v322
    %v2166 = vunpack.c.h.b16 %v322
    %v2167 = vunpack.c.l.b16 %v323
    %v2168 = vunpack.c.h.b16 %v323
    %v2169 = vunpack.c.l.b16 %v324
    %v2170 = vunpack.c.h.b16 %v324
    %v2171 = vunpack.c.l.b16 %v325
    %v2172 = vunpack.c.h.b16 %v325
    %v2173 = vunpack.c.l.b16 %v326
    %v2174 = vunpack.c.h.b16 %v326
    %v2175 = vunpack.c.l.b16 %v327
    %v2176 = vunpack.c.h.b16 %v327
    %v2177 = vunpack.c.l.b16 %v328
    %v2178 = vunpack.c.h.b16 %v328
    %v2179 = vunpack.c.l.b16 %v329
    %v2180 = vunpack.c.h.b16 %v329
    %v2181 = vunpack.c.l.b16 %v330
    %v2182 = vunpack.c.h.b16 %v330
    %v2183 = vunpack.c.l.b16 %v331
    %v2184 = vunpack.c.h.b16 %v331
    %v2185 = vunpack.c.l.b16 %v332
    %v2186 = vunpack.c.h.b16 %v332
    %v2187 = vunpack.c.l.b16 %v333
    %v2188 = vunpack.c.h.b16 %v333
    %v2189 = vunpack.c.l.b16 %v334
    %v2190 = vunpack.c.h.b16 %v334
    %v2191 = vunpack.c.l.b16 %v335
    %v2192 = vunpack.c.h.b16 %v335
    %v2193 = vunpack.c.l.b16 %v336
    %v2194 = vunpack.c.h.b16 %v336
    %v2195 = vunpack.c.l.b16 %v337
    %v2196 = vunpack.c.h.b16 %v337
    %v2197 = vunpack.c.l.b16 %v338
    %v2198 = vunpack.c.h.b16 %v338
    %v2199 = vunpack.c.l.b16 %v339
    %v2200 = vunpack.c.h.b16 %v339
    %v2201 = vunpack.c.l.b16 %v340
    %v2202 = vunpack.c.h.b16 %v340
    %v2203 = vunpack.c.l.b16 %v341
    %v2204 = vunpack.c.h.b16 %v341
    %v2205 = vunpack.c.l.b16 %v342
    %v2206 = vunpack.c.h.b16 %v342
    %v2207 = vunpack.c.l.b16 %v343
    %v2208 = vunpack.c.h.b16 %v343
    %v2209 = vunpack.c.l.b16 %v344
    %v2210 = vunpack.c.h.b16 %v344
    %v2211 = vunpack.c.l.b16 %v345
    %v2212 = vunpack.c.h.b16 %v345
    %v2213 = vunpack.c.l.b16 %v346
    %v2214 = vunpack.c.h.b16 %v346
    %v2215 = vunpack.c.l.b16 %v347
    %v2216 = vunpack.c.h.b16 %v347
    %v2217 = vunpack.c.l.b16 %v348
    %v2218 = vunpack.c.h.b16 %v348
    %v2219 = vunpack.c.l.b16 %v349
    %v2220 = vunpack.c.h.b16 %v349
    %v2221 = vunpack.c.l.b16 %v350
    %v2222 = vunpack.c.h.b16 %v350
    %v2223 = vunpack.c.l.b16 %v351
    %v2224 = vunpack.c.h.b16 %v351
    %v2225 = vunpack.c.l.b16 %v352
    %v2226 = vunpack.c.h.b16 %v352
    %v2227 = vunpack.c.l.b16 %v353
    %v2228 = vunpack.c.h.b16 %v353
    %v2229 = vunpack.c.l.b16 %v354
    %v2230 = vunpack.c.h.b16 %v354
    %v2231 = vunpack.c.l.b16 %v355
    %v2232 = vunpack.c.h.b16 %v355
    %v2233 = vunpack.c.l.b16 %v356
    %v2234 = vunpack.c.h.b16 %v356
    %v2235 = vunpack.c.l.b16 %v357
    %v2236 = vunpack.c.h.b16 %v357
    %v2237 = vunpack.c.l.b16 %v358
    %v2238 = vunpack.c.h.b16 %v358
    %v2239 = vunpack.c.l.b16 %v359
    %v2240 = vunpack.c.h.b16 %v359
    %v2241 = vunpack.c.l.b16 %v360
    %v2242 = vunpack.c.h.b16 %v360
    %v2243 = vunpack.c.l.b16 %v361
    %v2244 = vunpack.c.h.b16 %v361
    %v2245 = vunpack.c.l.b16 %v362
    %v2246 = vunpack.c.h.b16 %v362
    %v2247 = vunpack.c.l.b16 %v363
    %v2248 = vunpack.c.h.b16 %v363
    %v2249 = vunpack.c.l.b16 %v364
    %v2250 = vunpack.c.h.b16 %v364
    %v2251 = vunpack.c.l.b16 %v365
    %v2252 = vunpack.c.h.b16 %v365
    %v2253 = vunpack.c.l.b16 %v366
    %v2254 = vunpack.c.h.b16 %v366
    %v2255 = vunpack.c.l.b16 %v367
    %v2256 = vunpack.c.h.b16 %v367
    %v2257 = vunpack.c.l.b16 %v368
    %v2258 = vunpack.c.h.b16 %v368
    %v2259 = vunpack.c.l.b16 %v369
    %v2260 = vunpack.c.h.b16 %v369
    %v2261 = vunpack.c.l.b16 %v370
    %v2262 = vunpack.c.h.b16 %v370
    %v2263 = vunpack.c.l.b16 %v371
    %v2264 = vunpack.c.h.b16 %v371
    %v2265 = vunpack.c.l.b16 %v372
    %v2266 = vunpack.c.h.b16 %v372
    %v2267 = vunpack.c.l.b16 %v373
    %v2268 = vunpack.c.h.b16 %v373
    %v2269 = vunpack.c.l.b16 %v374
    %v2270 = vunpack.c.h.b16 %v374
    %v2271 = vunpack.c.l.b16 %v375
    %v2272 = vunpack.c.h.b16 %v375
    %v2273 = vunpack.c.l.b16 %v376
    %v2274 = vunpack.c.h.b16 %v376
    %v2275 = vunpack.c.l.b16 %v377
    %v2276 = vunpack.c.h.b16 %v377
    %v2277 = vunpack.c.l.b16 %v378
    %v2278 = vunpack.c.h.b16 %v378
    %v2279 = vunpack.c.l.b16 %v379
    %v2280 = vunpack.c.h.b16 %v379
    %v2281 = vunpack.c.l.b16 %v380
    %v2282 = vunpack.c.h.b16 %v380
    %v2283 = vunpack.c.l.b16 %v381
    %v2284 = vunpack.c.h.b16 %v381
    %v2285 = vunpack.c.l.b16 %v382
    %v2286 = vunpack.c.h.b16 %v382
    %v2287 = vunpack.c.l.b16 %v383
    %v2288 = vunpack.c.h.b16 %v383
    %v2289 = vunpack.c.l.b16 %v384
    %v2290 = vunpack.c.h.b16 %v384
    %v2291 = vunpack.c.l.b16 %v385
    %v2292 = vunpack.c.h.b16 %v385
    %v2293 = vunpack.c.l.b16 %v386
    %v2294 = vunpack.c.h.b16 %v386
    %v2295 = vunpack.c.l.b16 %v387
    %v2296 = vunpack.c.h.b16 %v387
    %v2297 = vunpack.c.l.b16 %v388
    %v2298 = vunpack.c.h.b16 %v388
    %v2299 = vunpack.c.l.b16 %v389
    %v2300 = vunpack.c.h.b16 %v389
    %v2301 = vunpack.c.l.b16 %v390
    %v2302 = vunpack.c.h.b16 %v390
    %v2303 = vunpack.c.l.b16 %v391
    %v2304 = vunpack.c.h.b16 %v391
    %v2305 = vunpack.c.l.b16 %v392
    %v2306 = vunpack.c.h.b16 %v392
    %v2307 = vunpack.c.l.b16 %v393
    %v2308 = vunpack.c.h.b16 %v393
    %v2309 = vunpack.c.l.b16 %v394
    %v2310 = vunpack.c.h.b16 %v394
    %v2311 = vunpack.c.l.b16 %v395
    %v2312 = vunpack.c.h.b16 %v395
    %v2313 = vunpack.c.l.b16 %v396
    %v2314 = vunpack.c.h.b16 %v396
    %v2315 = vunpack.c.l.b16 %v397
    %v2316 = vunpack.c.h.b16 %v397
    %v2317 = vunpack.c.l.b16 %v398
    %v2318 = vunpack.c.h.b16 %v398
    %v2319 = vunpack.c.l.b16 %v399
    %v2320 = vunpack.c.h.b16 %v399
    %v2321 = vunpack.c.l.b16 %v400
    %v2322 = vunpack.c.h.b16 %v400
    %v2323 = vunpack.c.l.b16 %v401
    %v2324 = vunpack.c.h.b16 %v401
    %v2325 = vunpack.c.l.b16 %v402
    %v2326 = vunpack.c.h.b16 %v402
    %v2327 = vunpack.c.l.b16 %v403
    %v2328 = vunpack.c.h.b16 %v403
    %v2329 = vunpack.c.l.b16 %v404
    %v2330 = vunpack.c.h.b16 %v404
    %v2331 = vunpack.c.l.b16 %v405
    %v2332 = vunpack.c.h.b16 %v405
    %v2333 = vunpack.c.l.b16 %v406
    %v2334 = vunpack.c.h.b16 %v406
    %v2335 = vunpack.c.l.b16 %v407
    %v2336 = vunpack.c.h.b16 %v407
    %v2337 = vunpack.c.l.b16 %v408
    %v2338 = vunpack.c.h.b16 %v408
    %v2339 = vunpack.c.l.b16 %v409
    %v2340 = vunpack.c.h.b16 %v409
    %v2341 = vunpack.c.l.b16 %v410
    %v2342 = vunpack.c.h.b16 %v410
    %v2343 = vunpack.c.l.b16 %v411
    %v2344 = vunpack.c.h.b16 %v411
    %v2345 = vunpack.c.l.b16 %v412
    %v2346 = vunpack.c.h.b16 %v412
    %v2347 = vunpack.c.l.b16 %v413
    %v2348 = vunpack.c.h.b16 %v413
    %v2349 = vunpack.c.l.b16 %v414
    %v2350 = vunpack.c.h.b16 %v414
    %v2351 = vunpack.c.l.b16 %v415
    %v2352 = vunpack.c.h.b16 %v415
    %v2353 = vunpack.c.l.b16 %v416
    %v2354 = vunpack.c.h.b16 %v416
    %v2355 = vunpack.c.l.b16 %v417
    %v2356 = vunpack.c.h.b16 %v417
    %v2357 = vunpack.c.l.b16 %v418
    %v2358 = vunpack.c.h.b16 %v418
    %v2359 = vunpack.c.l.b16 %v419
    %v2360 = vunpack.c.h.b16 %v419
    %v2361 = vunpack.c.l.b16 %v420
    %v2362 = vunpack.c.h.b16 %v420
    %v2363 = vunpack.c.l.b16 %v421
    %v2364 = vunpack.c.h.b16 %v421
    %v2365 = vunpack.c.l.b16 %v422
    %v2366 = vunpack.c.h.b16 %v422
    %v2367 = vunpack.c.l.b16 %v423
    %v2368 = vunpack.c.h.b16 %v423
    %v2369 = vunpack.c.l.b16 %v424
    %v2370 = vunpack.c.h.b16 %v424
    %v2371 = vunpack.c.l.b16 %v425
    %v2372 = vunpack.c.h.b16 %v425
    %v2373 = vunpack.c.l.b16 %v426
    %v2374 = vunpack.c.h.b16 %v426
    %v2375 = vunpack.c.l.b16 %v427
    %v2376 = vunpack.c.h.b16 %v427
    %v2377 = vunpack.c.l.b16 %v428
    %v2378 = vunpack.c.h.b16 %v428
    %v2379 = vunpack.c.l.b16 %v429
    %v2380 = vunpack.c.h.b16 %v429
    %v2381 = vunpack.c.l.b16 %v430
    %v2382 = vunpack.c.h.b16 %v430
    %v2383 = vunpack.c.l.b16 %v431
    %v2384 = vunpack.c.h.b16 %v431
    %v2385 = vunpack.c.l.b16 %v432
    %v2386 = vunpack.c.h.b16 %v432
    %v2387 = vunpack.c.l.b16 %v433
    %v2388 = vunpack.c.h.b16 %v433
    %v2389 = vunpack.c.l.b16 %v434
    %v2390 = vunpack.c.h.b16 %v434
    %v2391 = vunpack.c.l.b16 %v435
    %v2392 = vunpack.c.h.b16 %v435
    %v2393 = vunpack.c.l.b16 %v436
    %v2394 = vunpack.c.h.b16 %v436
    %v2395 = vunpack.c.l.b16 %v437
    %v2396 = vunpack.c.h.b16 %v437
    %v2397 = vunpack.c.l.b16 %v438
    %v2398 = vunpack.c.h.b16 %v438
    %v2399 = vunpack.c.l.b16 %v439
    %v2400 = vunpack.c.h.b16 %v439
    %v2401 = vunpack.c.l.b16 %v440
    %v2402 = vunpack.c.h.b16 %v440
    %v2403 = vunpack.c.l.b16 %v441
    %v2404 = vunpack.c.h.b16 %v441
    %v2405 = vunpack.c.l.b16 %v442
    %v2406 = vunpack.c.h.b16 %v442
    %v2407 = vunpack.c.l.b16 %v443
    %v2408 = vunpack.c.h.b16 %v443
    %v2409 = vunpack.c.l.b16 %v444
    %v2410 = vunpack.c.h.b16 %v444
    %v2411 = vunpack.c.l.b16 %v445
    %v2412 = vunpack.c.h.b16 %v445
    %v2413 = vunpack.c.l.b16 %v446
    %v2414 = vunpack.c.h.b16 %v446
    %v2415 = vunpack.c.l.b16 %v447
    %v2416 = vunpack.c.h.b16 %v447
    %v2417 = vunpack.c.l.b16 %v448
    %v2418 = vunpack.c.h.b16 %v448
    %v2419 = vunpack.c.l.b16 %v449
    %v2420 = vunpack.c.h.b16 %v449
    %v2421 = vunpack.c.l.b16 %v450
    %v2422 = vunpack.c.h.b16 %v450
    %v2423 = vunpack.c.l.b16 %v451
    %v2424 = vunpack.c.h.b16 %v451
    %v2425 = vunpack.c.l.b16 %v452
    %v2426 = vunpack.c.h.b16 %v452
    %v2427 = vunpack.c.l.b16 %v453
    %v2428 = vunpack.c.h.b16 %v453
    %v2429 = vunpack.c.l.b16 %v454
    %v2430 = vunpack.c.h.b16 %v454
    %v2431 = vunpack.c.l.b16 %v455
    %v2432 = vunpack.c.h.b16 %v455
    %v2433 = vunpack.c.l.b16 %v456
    %v2434 = vunpack.c.h.b16 %v456
    %v2435 = vunpack.c.l.b16 %v457
    %v2436 = vunpack.c.h.b16 %v457
    %v2437 = vunpack.c.l.b16 %v458
    %v2438 = vunpack.c.h.b16 %v458
    %v2439 = vunpack.c.l.b16 %v459
    %v2440 = vunpack.c.h.b16 %v459
    %v2441 = vunpack.c.l.b16 %v460
    %v2442 = vunpack.c.h.b16 %v460
    %v2443 = vunpack.c.l.b16 %v461
    %v2444 = vunpack.c.h.b16 %v461
    %v2445 = vunpack.c.l.b16 %v462
    %v2446 = vunpack.c.h.b16 %v462
    %v2447 = vunpack.c.l.b16 %v463
    %v2448 = vunpack.c.h.b16 %v463
    %v2449 = vunpack.c.l.b16 %v464
    %v2450 = vunpack.c.h.b16 %v464
    %v2451 = vunpack.c.l.b16 %v465
    %v2452 = vunpack.c.h.b16 %v465
    %v2453 = vunpack.c.l.b16 %v466
    %v2454 = vunpack.c.h.b16 %v466
    %v2455 = vunpack.c.l.b16 %v467
    %v2456 = vunpack.c.h.b16 %v467
    %v2457 = vunpack.c.l.b16 %v468
    %v2458 = vunpack.c.h.b16 %v468
    %v2459 = vunpack.c.l.b16 %v469
    %v2460 = vunpack.c.h.b16 %v469
    %v2461 = vunpack.c.l.b16 %v470
    %v2462 = vunpack.c.h.b16 %v470
    %v2463 = vunpack.c.l.b16 %v471
    %v2464 = vunpack.c.h.b16 %v471
    %v2465 = vunpack.c.l.b16 %v472
    %v2466 = vunpack.c.h.b16 %v472
    %v2467 = vunpack.c.l.b16 %v473
    %v2468 = vunpack.c.h.b16 %v473
    %v2469 = vunpack.c.l.b16 %v474
    %v2470 = vunpack.c.h.b16 %v474
    %v2471 = vunpack.c.l.b16 %v475
    %v2472 = vunpack.c.h.b16 %v475
    %v2473 = vunpack.c.l.b16 %v476
    %v2474 = vunpack.c.h.b16 %v476
    %v2475 = vunpack.c.l.b16 %v477
    %v2476 = vunpack.c.h.b16 %v477
    %v2477 = vunpack.c.l.b16 %v478
    %v2478 = vunpack.c.h.b16 %v478
    %v2479 = vunpack.c.l.b16 %v479
    %v2480 = vunpack.c.h.b16 %v479
    %v2481 = vunpack.c.l.b16 %v480
    %v2482 = vunpack.c.h.b16 %v480
    %v2483 = vunpack.c.l.b16 %v481
    %v2484 = vunpack.c.h.b16 %v481
    %v2485 = vunpack.c.l.b16 %v482
    %v2486 = vunpack.c.h.b16 %v482
    %v2487 = vunpack.c.l.b16 %v483
    %v2488 = vunpack.c.h.b16 %v483
    %v2489 = vunpack.c.l.b16 %v484
    %v2490 = vunpack.c.h.b16 %v484
    %v2491 = vunpack.c.l.b16 %v485
    %v2492 = vunpack.c.h.b16 %v485
    %v2493 = vunpack.c.l.b16 %v486
    %v2494 = vunpack.c.h.b16 %v486
    %v2495 = vunpack.c.l.b16 %v487
    %v2496 = vunpack.c.h.b16 %v487
    %v2497 = vunpack.c.l.b16 %v488
    %v2498 = vunpack.c.h.b16 %v488
    %v2499 = vunpack.c.l.b16 %v489
    %v2500 = vunpack.c.h.b16 %v489
    %v2501 = vunpack.c.l.b16 %v490
    %v2502 = vunpack.c.h.b16 %v490
    %v2503 = vunpack.c.l.b16 %v491
    %v2504 = vunpack.c.h.b16 %v491
    %v2505 = vunpack.c.l.b16 %v492
    %v2506 = vunpack.c.h.b16 %v492
    %v2507 = vunpack.c.l.b16 %v493
    %v2508 = vunpack.c.h.b16 %v493
    %v2509 = vunpack.c.l.b16 %v494
    %v2510 = vunpack.c.h.b16 %v494
    %v2511 = vunpack.c.l.b16 %v495
    %v2512 = vunpack.c.h.b16 %v495
    %v2513 = vunpack.c.l.b16 %v496
    %v2514 = vunpack.c.h.b16 %v496
    %v2515 = vunpack.c.l.b16 %v497
    %v2516 = vunpack.c.h.b16 %v497
    %v2517 = vunpack.c.l.b16 %v498
    %v2518 = vunpack.c.h.b16 %v498
    %v2519 = vunpack.c.l.b16 %v499
    %v2520 = vunpack.c.h.b16 %v499
    %v2521 = vunpack.c.l.b16 %v500
    %v2522 = vunpack.c.h.b16 %v500
    %v2523 = vunpack.c.l.b16 %v501
    %v2524 = vunpack.c.h.b16 %v501
    %v2525 = vunpack.c.l.b16 %v502
    %v2526 = vunpack.c.h.b16 %v502
    %v2527 = vunpack.c.l.b16 %v503
    %v2528 = vunpack.c.h.b16 %v503
    %v2529 = vunpack.c.l.b16 %v504
    %v2530 = vunpack.c.h.b16 %v504
    %v2531 = vunpack.c.l.b16 %v505
    %v2532 = vunpack.c.h.b16 %v505
    %v2533 = vunpack.c.l.b16 %v506
    %v2534 = vunpack.c.h.b16 %v506
    %v2535 = vunpack.c.l.b16 %v507
    %v2536 = vunpack.c.h.b16 %v507
    %v2537 = vunpack.c.l.b16 %v508
    %v2538 = vunpack.c.h.b16 %v508
    %v2539 = vunpack.c.l.b16 %v509
    %v2540 = vunpack.c.h.b16 %v509
    %v2541 = vunpack.c.l.b16 %v510
    %v2542 = vunpack.c.h.b16 %v510
    %v2543 = vunpack.c.l.b16 %v511
    %v2544 = vunpack.c.h.b16 %v511
    %v2545 = vunpack.c.l.b16 %v512
    %v2546 = vunpack.c.h.b16 %v512
    %v2547 = vunpack.c.l.b16 %v513
    %v2548 = vunpack.c.h.b16 %v513
    %v2549 = vunpack.c.l.b16 %v514
    %v2550 = vunpack.c.h.b16 %v514
    %v2551 = vunpack.c.l.b16 %v515
    %v2552 = vunpack.c.h.b16 %v515
    %v2553 = vunpack.c.l.b16 %v516
    %v2554 = vunpack.c.h.b16 %v516
    %v2555 = vunpack.c.l.b16 %v517
    %v2556 = vunpack.c.h.b16 %v517
    %v2557 = vunpack.c.l.b16 %v518
    %v2558 = vunpack.c.h.b16 %v518
    %v2559 = vunpack.c.l.b16 %v519
    %v2560 = vunpack.c.h.b16 %v519
    %v2561 = vunpack.c.l.b16 %v520
    %v2562 = vunpack.c.h.b16 %v520
    %v2563 = vunpack.c.l.b16 %v521
    %v2564 = vunpack.c.h.b16 %v521
    %v2565 = vunpack.c.l.b16 %v522
    %v2566 = vunpack.c.h.b16 %v522
    %v2567 = vunpack.c.l.b16 %v523
    %v2568 = vunpack.c.h.b16 %v523
    %v2569 = vunpack.c.l.b16 %v524
    %v2570 = vunpack.c.h.b16 %v524
    %v2571 = vunpack.c.l.b16 %v525
    %v2572 = vunpack.c.h.b16 %v525
    %v2573 = vunpack.c.l.b16 %v526
    %v2574 = vunpack.c.h.b16 %v526
    %v2575 = vunpack.c.l.b16 %v527
    %v2576 = vunpack.c.h.b16 %v527
    %v2577 = vunpack.c.l.b16 %v528
    %v2578 = vunpack.c.h.b16 %v528
    %v2579 = vunpack.c.l.b16 %v529
    %v2580 = vunpack.c.h.b16 %v529
    %v2581 = vunpack.c.l.b16 %v530
    %v2582 = vunpack.c.h.b16 %v530
    %v2583 = vunpack.c.l.b16 %v531
    %v2584 = vunpack.c.h.b16 %v531
    %v2585 = vunpack.c.l.b16 %v532
    %v2586 = vunpack.c.h.b16 %v532
    %v2587 = vunpack.c.l.b16 %v533
    %v2588 = vunpack.c.h.b16 %v533
    %v2589 = vunpack.c.l.b16 %v534
    %v2590 = vunpack.c.h.b16 %v534
    %v2591 = vunpack.c.l.b16 %v535
    %v2592 = vunpack.c.h.b16 %v535
    %v2593 = vunpack.c.l.b16 %v536
    %v2594 = vunpack.c.h.b16 %v536
    %v2595 = vunpack.c.l.b16 %v537
    %v2596 = vunpack.c.h.b16 %v537
    %v2597 = vunpack.c.l.b16 %v538
    %v2598 = vunpack.c.h.b16 %v538
    %v2599 = vunpack.c.l.b16 %v539
    %v2600 = vunpack.c.h.b16 %v539
    %v2601 = vunpack.c.l.b16 %v540
    %v2602 = vunpack.c.h.b16 %v540
    %v2603 = vunpack.c.l.b16 %v541
    %v2604 = vunpack.c.h.b16 %v541
    %v2605 = vunpack.c.l.b16 %v542
    %v2606 = vunpack.c.h.b16 %v542
    %v2607 = vunpack.c.l.b16 %v543
    %v2608 = vunpack.c.h.b16 %v543
    %v2609 = vunpack.c.l.b16 %v544
    %v2610 = vunpack.c.h.b16 %v544
    %v2611 = vunpack.c.l.b16 %v545
    %v2612 = vunpack.c.h.b16 %v545
    %v2613 = vunpack.c.l.b16 %v546
    %v2614 = vunpack.c.h.b16 %v546
    %v2615 = vunpack.c.l.b16 %v547
    %v2616 = vunpack.c.h.b16 %v547
    %v2617 = vunpack.c.l.b16 %v548
    %v2618 = vunpack.c.h.b16 %v548
    %v2619 = vunpack.c.l.b16 %v549
    %v2620 = vunpack.c.h.b16 %v549
    %v2621 = vunpack.c.l.b16 %v550
    %v2622 = vunpack.c.h.b16 %v550
    %v2623 = vunpack.c.l.b16 %v551
    %v2624 = vunpack.c.h.b16 %v551
    %v2625 = vunpack.c.l.b16 %v552
    %v2626 = vunpack.c.h.b16 %v552
    %v2627 = vunpack.c.l.b16 %v553
    %v2628 = vunpack.c.h.b16 %v553
    %v2629 = vunpack.c.l.b16 %v554
    %v2630 = vunpack.c.h.b16 %v554
    %v2631 = vunpack.c.l.b16 %v555
    %v2632 = vunpack.c.h.b16 %v555
    %v2633 = vunpack.c.l.b16 %v556
    %v2634 = vunpack.c.h.b16 %v556
    %v2635 = vunpack.c.l.b16 %v557
    %v2636 = vunpack.c.h.b16 %v557
    %v2637 = vunpack.c.l.b16 %v558
    %v2638 = vunpack.c.h.b16 %v558
    %v2639 = vunpack.c.l.b16 %v559
    %v2640 = vunpack.c.h.b16 %v559
    %v2641 = vunpack.c.l.b16 %v560
    %v2642 = vunpack.c.h.b16 %v560
    %v2643 = vunpack.c.l.b16 %v561
    %v2644 = vunpack.c.h.b16 %v561
    %v2645 = vunpack.c.l.b16 %v562
    %v2646 = vunpack.c.h.b16 %v562
    %v2647 = vunpack.c.l.b16 %v563
    %v2648 = vunpack.c.h.b16 %v563
    %v2649 = vunpack.c.l.b16 %v564
    %v2650 = vunpack.c.h.b16 %v564
    %v2651 = vunpack.c.l.b16 %v565
    %v2652 = vunpack.c.h.b16 %v565
    %v2653 = vunpack.c.l.b16 %v566
    %v2654 = vunpack.c.h.b16 %v566
    %v2655 = vunpack.c.l.b16 %v567
    %v2656 = vunpack.c.h.b16 %v567
    %v2657 = vunpack.c.l.b16 %v568
    %v2658 = vunpack.c.h.b16 %v568
    %v2659 = vunpack.c.l.b16 %v569
    %v2660 = vunpack.c.h.b16 %v569
    %v2661 = vunpack.c.l.b16 %v570
    %v2662 = vunpack.c.h.b16 %v570
    %v2663 = vunpack.c.l.b16 %v571
    %v2664 = vunpack.c.h.b16 %v571
    %v2665 = vunpack.c.l.b16 %v572
    %v2666 = vunpack.c.h.b16 %v572
    %v2667 = vunpack.c.l.b16 %v573
    %v2668 = vunpack.c.h.b16 %v573
    %v2669 = vunpack.c.l.b16 %v574
    %v2670 = vunpack.c.h.b16 %v574
    %v2671 = vunpack.c.l.b16 %v575
    %v2672 = vunpack.c.h.b16 %v575
    %v2673 = vunpack.c.l.b16 %v576
    %v2674 = vunpack.c.h.b16 %v576
    %v2675 = vunpack.c.l.b16 %v577
    %v2676 = vunpack.c.h.b16 %v577
    %v2677 = vunpack.c.l.b16 %v578
    %v2678 = vunpack.c.h.b16 %v578
    %v2679 = vunpack.c.l.b16 %v579
    %v2680 = vunpack.c.h.b16 %v579
    %v2681 = vunpack.c.l.b16 %v580
    %v2682 = vunpack.c.h.b16 %v580
    %v2683 = vunpack.c.l.b16 %v581
    %v2684 = vunpack.c.h.b16 %v581
    %v2685 = vunpack.c.l.b16 %v582
    %v2686 = vunpack.c.h.b16 %v582
    %v2687 = vpack.c.b16 %v1671, %v1663
    %v2688 = vpack.c.b16 %v1672, %v1664
    %v2689 = vpack.c.b16 %v1673, %v1665
    %v2690 = vpack.c.b16 %v1674, %v1666
    %v2691 = vpack.c.b16 %v1675, %v1667
    %v2692 = vpack.c.b16 %v1676, %v1668
    %v2693 = vpack.c.b16 %v1677, %v1669
    %v2694 = vpack.c.b16 %v1678, %v1670
    %v2695 = vpack.c.b16 %v1687, %v1679
    %v2696 = vpack.c.b16 %v1688, %v1680
    %v2697 = vpack.c.b16 %v1689, %v1681
    %v2698 = vpack.c.b16 %v1690, %v1682
    %v2699 = vpack.c.b16 %v1691, %v1683
    %v2700 = vpack.c.b16 %v1692, %v1684
    %v2701 = vpack.c.b16 %v1693, %v1685
    %v2702 = vpack.c.b16 %v1694, %v1686
    %v2703 = vpack.c.b16 %v1703, %v1695
    %v2704 = vpack.c.b16 %v1704, %v1696
    %v2705 = vpack.c.b16 %v1705, %v1697
    %v2706 = vpack.c.b16 %v1706, %v1698
    %v2707 = vpack.c.b16 %v1707, %v1699
    %v2708 = vpack.c.b16 %v1708, %v1700
    %v2709 = vpack.c.b16 %v1709, %v1701
    %v2710 = vpack.c.b16 %v1710, %v1702
    %v2711 = vpack.c.b16 %v1719, %v1711
    %v2712 = vpack.c.b16 %v1720, %v1712
    %v2713 = vpack.c.b16 %v1721, %v1713
    %v2714 = vpack.c.b16 %v1722, %v1714
    %v2715 = vpack.c.b16 %v1723, %v1715
    %v2716 = vpack.c.b16 %v1724, %v1716
    %v2717 = vpack.c.b16 %v1725, %v1717
    %v2718 = vpack.c.b16 %v1726, %v1718
    %v2719 = vpack.c.b16 %v1735, %v1727
    %v2720 = vpack.c.b16 %v1736, %v1728
    %v2721 = vpack.c.b16 %v1737, %v1729
    %v2722 = vpack.c.b16 %v1738, %v1730
    %v2723 = vpack.c.b16 %v1739, %v1731
    %v2724 = vpack.c.b16 %v1740, %v1732
    %v2725 = vpack.c.b16 %v1741, %v1733
    %v2726 = vpack.c.b16 %v1742, %v1734
    %v2727 = vpack.c.b16 %v1751, %v1743
    %v2728 = vpack.c.b16 %v1752, %v1744
    %v2729 = vpack.c.b16 %v1753, %v1745
    %v2730 = vpack.c.b16 %v1754, %v1746
    %v2731 = vpack.c.b16 %v1755, %v1747
    %v2732 = vpack.c.b16 %v1756, %v1748
    %v2733 = vpack.c.b16 %v1757, %v1749
    %v2734 = vpack.c.b16 %v1758, %v1750
    %v2735 = vpack.c.b16 %v1767, %v1759
    %v2736 = vpack.c.b16 %v1768, %v1760
    %v2737 = vpack.c.b16 %v1769, %v1761
    %v2738 = vpack.c.b16 %v1770, %v1762
    %v2739 = vpack.c.b16 %v1771, %v1763
    %v2740 = vpack.c.b16 %v1772, %v1764
    %v2741 = vpack.c.b16 %v1773, %v1765
    %v2742 = vpack.c.b16 %v1774, %v1766
    %v2743 = vpack.c.b16 %v1783, %v1775
    %v2744 = vpack.c.b16 %v1784, %v1776
    %v2745 = vpack.c.b16 %v1785, %v1777
    %v2746 = vpack.c.b16 %v1786, %v1778
    %v2747 = vpack.c.b16 %v1787, %v1779
    %v2748 = vpack.c.b16 %v1788, %v1780
    %v2749 = vpack.c.b16 %v1789, %v1781
    %v2750 = vpack.c.b16 %v1790, %v1782
    %v2751 = vpack.c.b16 %v1799, %v1791
    %v2752 = vpack.c.b16 %v1800, %v1792
    %v2753 = vpack.c.b16 %v1801, %v1793
    %v2754 = vpack.c.b16 %v1802, %v1794
    %v2755 = vpack.c.b16 %v1803, %v1795
    %v2756 = vpack.c.b16 %v1804, %v1796
    %v2757 = vpack.c.b16 %v1805, %v1797
    %v2758 = vpack.c.b16 %v1806, %v1798
    %v2759 = vpack.c.b16 %v1815, %v1807
    %v2760 = vpack.c.b16 %v1816, %v1808
    %v2761 = vpack.c.b16 %v1817, %v1809
    %v2762 = vpack.c.b16 %v1818, %v1810
    %v2763 = vpack.c.b16 %v1819, %v1811
    %v2764 = vpack.c.b16 %v1820, %v1812
    %v2765 = vpack.c.b16 %v1821, %v1813
    %v2766 = vpack.c.b16 %v1822, %v1814
    %v2767 = vpack.c.b16 %v1831, %v1823
    %v2768 = vpack.c.b16 %v1832, %v1824
    %v2769 = vpack.c.b16 %v1833, %v1825
    %v2770 = vpack.c.b16 %v1834, %v1826
    %v2771 = vpack.c.b16 %v1835, %v1827
    %v2772 = vpack.c.b16 %v1836, %v1828
    %v2773 = vpack.c.b16 %v1837, %v1829
    %v2774 = vpack.c.b16 %v1838, %v1830
    %v2775 = vpack.c.b16 %v1847, %v1839
    %v2776 = vpack.c.b16 %v1848, %v1840
    %v2777 = vpack.c.b16 %v1849, %v1841
    %v2778 = vpack.c.b16 %v1850, %v1842
    %v2779 = vpack.c.b16 %v1851, %v1843
    %v2780 = vpack.c.b16 %v1852, %v1844
    %v2781 = vpack.c.b16 %v1853, %v1845
    %v2782 = vpack.c.b16 %v1854, %v1846
    %v2783 = vpack.c.b16 %v1863, %v1855
    %v2784 = vpack.c.b16 %v1864, %v1856
    %v2785 = vpack.c.b16 %v1865, %v1857
    %v2786 = vpack.c.b16 %v1866, %v1858
    %v2787 = vpack.c.b16 %v1867, %v1859
    %v2788 = vpack.c.b16 %v1868, %v1860
    %v2789 = vpack.c.b16 %v1869, %v1861
    %v2790 = vpack.c.b16 %v1870, %v1862
    %v2791 = vpack.c.b16 %v1879, %v1871
    %v2792 = vpack.c.b16 %v1880, %v1872
    %v2793 = vpack.c.b16 %v1881, %v1873
    %v2794 = vpack.c.b16 %v1882, %v1874
    %v2795 = vpack.c.b16 %v1883, %v1875
    %v2796 = vpack.c.b16 %v1884, %v1876
    %v2797 = vpack.c.b16 %v1885, %v1877
    %v2798 = vpack.c.b16 %v1886, %v1878
    %v2799 = vpack.c.b16 %v1895, %v1887
    %v2800 = vpack.c.b16 %v1896, %v1888
    %v2801 = vpack.c.b16 %v1897, %v1889
    %v2802 = vpack.c.b16 %v1898, %v1890
    %v2803 = vpack.c.b16 %v1899, %v1891
    %v2804 = vpack.c.b16 %v1900, %v1892
    %v2805 = vpack.c.b16 %v1901, %v1893
    %v2806 = vpack.c.b16 %v1902, %v1894
    %v2807 = vpack.c.b16 %v1911, %v1903
    %v2808 = vpack.c.b16 %v1912, %v1904
    %v2809 = vpack.c.b16 %v1913, %v1905
    %v2810 = vpack.c.b16 %v1914, %v1906
    %v2811 = vpack.c.b16 %v1915, %v1907
    %v2812 = vpack.c.b16 %v1916, %v1908
    %v2813 = vpack.c.b16 %v1917, %v1909
    %v2814 = vpack.c.b16 %v1918, %v1910
    %v2815 = vpack.c.b16 %v1927, %v1919
    %v2816 = vpack.c.b16 %v1928, %v1920
    %v2817 = vpack.c.b16 %v1929, %v1921
    %v2818 = vpack.c.b16 %v1930, %v1922
    %v2819 = vpack.c.b16 %v1931, %v1923
    %v2820 = vpack.c.b16 %v1932, %v1924
    %v2821 = vpack.c.b16 %v1933, %v1925
    %v2822 = vpack.c.b16 %v1934, %v1926
    %v2823 = vpack.c.b16 %v1943, %v1935
    %v2824 = vpack.c.b16 %v1944, %v1936
    %v2825 = vpack.c.b16 %v1945, %v1937
    %v2826 = vpack.c.b16 %v1946, %v1938
    %v2827 = vpack.c.b16 %v1947, %v1939
    %v2828 = vpack.c.b16 %v1948, %v1940
    %v2829 = vpack.c.b16 %v1949, %v1941
    %v2830 = vpack.c.b16 %v1950, %v1942
    %v2831 = vpack.c.b16 %v1959, %v1951
    %v2832 = vpack.c.b16 %v1960, %v1952
    %v2833 = vpack.c.b16 %v1961, %v1953
    %v2834 = vpack.c.b16 %v1962, %v1954
    %v2835 = vpack.c.b16 %v1963, %v1955
    %v2836 = vpack.c.b16 %v1964, %v1956
    %v2837 = vpack.c.b16 %v1965, %v1957
    %v2838 = vpack.c.b16 %v1966, %v1958
    %v2839 = vpack.c.b16 %v1975, %v1967
    %v2840 = vpack.c.b16 %v1976, %v1968
    %v2841 = vpack.c.b16 %v1977, %v1969
    %v2842 = vpack.c.b16 %v1978, %v1970
    %v2843 = vpack.c.b16 %v1979, %v1971
    %v2844 = vpack.c.b16 %v1980, %v1972
    %v2845 = vpack.c.b16 %v1981, %v1973
    %v2846 = vpack.c.b16 %v1982, %v1974
    %v2847 = vpack.c.b16 %v1991, %v1983
    %v2848 = vpack.c.b16 %v1992, %v1984
    %v2849 = vpack.c.b16 %v1993, %v1985
    %v2850 = vpack.c.b16 %v1994, %v1986
    %v2851 = vpack.c.b16 %v1995, %v1987
    %v2852 = vpack.c.b16 %v1996, %v1988
    %v2853 = vpack.c.b16 %v1997, %v1989
    %v2854 = vpack.c.b16 %v1998, %v1990
    %v2855 = vpack.c.b16 %v2007, %v1999
    %v2856 = vpack.c.b16 %v2008, %v2000
    %v2857 = vpack.c.b16 %v2009, %v2001
    %v2858 = vpack.c.b16 %v2010, %v2002
    %v2859 = vpack.c.b16 %v2011, %v2003
    %v2860 = vpack.c.b16 %v2012, %v2004
    %v2861 = vpack.c.b16 %v2013, %v2005
    %v2862 = vpack.c.b16 %v2014, %v2006
    %v2863 = vpack.c.b16 %v2023, %v2015
    %v2864 = vpack.c.b16 %v2024, %v2016
    %v2865 = vpack.c.b16 %v2025, %v2017
    %v2866 = vpack.c.b16 %v2026, %v2018
    %v2867 = vpack.c.b16 %v2027, %v2019
    %v2868 = vpack.c.b16 %v2028, %v2020
    %v2869 = vpack.c.b16 %v2029, %v2021
    %v2870 = vpack.c.b16 %v2030, %v2022
    %v2871 = vpack.c.b16 %v2039, %v2031
    %v2872 = vpack.c.b16 %v2040, %v2032
    %v2873 = vpack.c.b16 %v2041, %v2033
    %v2874 = vpack.c.b16 %v2042, %v2034
    %v2875 = vpack.c.b16 %v2043, %v2035
    %v2876 = vpack.c.b16 %v2044, %v2036
    %v2877 = vpack.c.b16 %v2045, %v2037
    %v2878 = vpack.c.b16 %v2046, %v2038
    %v2879 = vpack.c.b16 %v2055, %v2047
    %v2880 = vpack.c.b16 %v2056, %v2048
    %v2881 = vpack.c.b16 %v2057, %v2049
    %v2882 = vpack.c.b16 %v2058, %v2050
    %v2883 = vpack.c.b16 %v2059, %v2051
    %v2884 = vpack.c.b16 %v2060, %v2052
    %v2885 = vpack.c.b16 %v2061, %v2053
    %v2886 = vpack.c.b16 %v2062, %v2054
    %v2887 = vpack.c.b16 %v2071, %v2063
    %v2888 = vpack.c.b16 %v2072, %v2064
    %v2889 = vpack.c.b16 %v2073, %v2065
    %v2890 = vpack.c.b16 %v2074, %v2066
    %v2891 = vpack.c.b16 %v2075, %v2067
    %v2892 = vpack.c.b16 %v2076, %v2068
    %v2893 = vpack.c.b16 %v2077, %v2069
    %v2894 = vpack.c.b16 %v2078, %v2070
    %v2895 = vpack.c.b16 %v2087, %v2079
    %v2896 = vpack.c.b16 %v2088, %v2080
    %v2897 = vpack.c.b16 %v2089, %v2081
    %v2898 = vpack.c.b16 %v2090, %v2082
    %v2899 = vpack.c.b16 %v2091, %v2083
    %v2900 = vpack.c.b16 %v2092, %v2084
    %v2901 = vpack.c.b16 %v2093, %v2085
    %v2902 = vpack.c.b16 %v2094, %v2086
    %v2903 = vpack.c.b16 %v2103, %v2095
    %v2904 = vpack.c.b16 %v2104, %v2096
    %v2905 = vpack.c.b16 %v2105, %v2097
    %v2906 = vpack.c.b16 %v2106, %v2098
    %v2907 = vpack.c.b16 %v2107, %v2099
    %v2908 = vpack.c.b16 %v2108, %v2100
    %v2909 = vpack.c.b16 %v2109, %v2101
    %v2910 = vpack.c.b16 %v2110, %v2102
    %v2911 = vpack.c.b16 %v2119, %v2111
    %v2912 = vpack.c.b16 %v2120, %v2112
    %v2913 = vpack.c.b16 %v2121, %v2113
    %v2914 = vpack.c.b16 %v2122, %v2114
    %v2915 = vpack.c.b16 %v2123, %v2115
    %v2916 = vpack.c.b16 %v2124, %v2116
    %v2917 = vpack.c.b16 %v2125, %v2117
    %v2918 = vpack.c.b16 %v2126, %v2118
    %v2919 = vpack.c.b16 %v2135, %v2127
    %v2920 = vpack.c.b16 %v2136, %v2128
    %v2921 = vpack.c.b16 %v2137, %v2129
    %v2922 = vpack.c.b16 %v2138, %v2130
    %v2923 = vpack.c.b16 %v2139, %v2131
    %v2924 = vpack.c.b16 %v2140, %v2132
    %v2925 = vpack.c.b16 %v2141, %v2133
    %v2926 = vpack.c.b16 %v2142, %v2134
    %v2927 = vpack.c.b16 %v2151, %v2143
    %v2928 = vpack.c.b16 %v2152, %v2144
    %v2929 = vpack.c.b16 %v2153, %v2145
    %v2930 = vpack.c.b16 %v2154, %v2146
    %v2931 = vpack.c.b16 %v2155, %v2147
    %v2932 = vpack.c.b16 %v2156, %v2148
    %v2933 = vpack.c.b16 %v2157, %v2149
    %v2934 = vpack.c.b16 %v2158, %v2150
    %v2935 = vpack.c.b16 %v2167, %v2159
    %v2936 = vpack.c.b16 %v2168, %v2160
    %v2937 = vpack.c.b16 %v2169, %v2161
    %v2938 = vpack.c.b16 %v2170, %v2162
    %v2939 = vpack.c.b16 %v2171, %v2163
    %v2940 = vpack.c.b16 %v2172, %v2164
    %v2941 = vpack.c.b16 %v2173, %v2165
    %v2942 = vpack.c.b16 %v2174, %v2166
    %v2943 = vpack.c.b16 %v2183, %v2175
    %v2944 = vpack.c.b16 %v2184, %v2176
    %v2945 = vpack.c.b16 %v2185, %v2177
    %v2946 = vpack.c.b16 %v2186, %v2178
    %v2947 = vpack.c.b16 %v2187, %v2179
    %v2948 = vpack.c.b16 %v2188, %v2180
    %v2949 = vpack.c.b16 %v2189, %v2181
    %v2950 = vpack.c.b16 %v2190, %v2182
    %v2951 = vpack.c.b16 %v2199, %v2191
    %v2952 = vpack.c.b16 %v2200, %v2192
    %v2953 = vpack.c.b16 %v2201, %v2193
    %v2954 = vpack.c.b16 %v2202, %v2194
    %v2955 = vpack.c.b16 %v2203, %v2195
    %v2956 = vpack.c.b16 %v2204, %v2196
    %v2957 = vpack.c.b16 %v2205, %v2197
    %v2958 = vpack.c.b16 %v2206, %v2198
    %v2959 = vpack.c.b16 %v2215, %v2207
    %v2960 = vpack.c.b16 %v2216, %v2208
    %v2961 = vpack.c.b16 %v2217, %v2209
    %v2962 = vpack.c.b16 %v2218, %v2210
    %v2963 = vpack.c.b16 %v2219, %v2211
    %v2964 = vpack.c.b16 %v2220, %v2212
    %v2965 = vpack.c.b16 %v2221, %v2213
    %v2966 = vpack.c.b16 %v2222, %v2214
    %v2967 = vpack.c.b16 %v2231, %v2223
    %v2968 = vpack.c.b16 %v2232, %v2224
    %v2969 = vpack.c.b16 %v2233, %v2225
    %v2970 = vpack.c.b16 %v2234, %v2226
    %v2971 = vpack.c.b16 %v2235, %v2227
    %v2972 = vpack.c.b16 %v2236, %v2228
    %v2973 = vpack.c.b16 %v2237, %v2229
    %v2974 = vpack.c.b16 %v2238, %v2230
    %v2975 = vpack.c.b16 %v2247, %v2239
    %v2976 = vpack.c.b16 %v2248, %v2240
    %v2977 = vpack.c.b16 %v2249, %v2241
    %v2978 = vpack.c.b16 %v2250, %v2242
    %v2979 = vpack.c.b16 %v2251, %v2243
    %v2980 = vpack.c.b16 %v2252, %v2244
    %v2981 = vpack.c.b16 %v2253, %v2245
    %v2982 = vpack.c.b16 %v2254, %v2246
    %v2983 = vpack.c.b16 %v2263, %v2255
    %v2984 = vpack.c.b16 %v2264, %v2256
    %v2985 = vpack.c.b16 %v2265, %v2257
    %v2986 = vpack.c.b16 %v2266, %v2258
    %v2987 = vpack.c.b16 %v2267, %v2259
    %v2988 = vpack.c.b16 %v2268, %v2260
    %v2989 = vpack.c.b16 %v2269, %v2261
    %v2990 = vpack.c.b16 %v2270, %v2262
    %v2991 = vpack.c.b16 %v2279, %v2271
    %v2992 = vpack.c.b16 %v2280, %v2272
    %v2993 = vpack.c.b16 %v2281, %v2273
    %v2994 = vpack.c.b16 %v2282, %v2274
    %v2995 = vpack.c.b16 %v2283, %v2275
    %v2996 = vpack.c.b16 %v2284, %v2276
    %v2997 = vpack.c.b16 %v2285, %v2277
    %v2998 = vpack.c.b16 %v2286, %v2278
    %v2999 = vpack.c.b16 %v2295, %v2287
    %v3000 = vpack.c.b16 %v2296, %v2288
    %v3001 = vpack.c.b16 %v2297, %v2289
    %v3002 = vpack.c.b16 %v2298, %v2290
    %v3003 = vpack.c.b16 %v2299, %v2291
    %v3004 = vpack.c.b16 %v2300, %v2292
    %v3005 = vpack.c.b16 %v2301, %v2293
    %v3006 = vpack.c.b16 %v2302, %v2294
    %v3007 = vpack.c.b16 %v2311, %v2303
    %v3008 = vpack.c.b16 %v2312, %v2304
    %v3009 = vpack.c.b16 %v2313, %v2305
    %v3010 = vpack.c.b16 %v2314, %v2306
    %v3011 = vpack.c.b16 %v2315, %v2307
    %v3012 = vpack.c.b16 %v2316, %v2308
    %v3013 = vpack.c.b16 %v2317, %v2309
    %v3014 = vpack.c.b16 %v2318, %v2310
    %v3015 = vpack.c.b16 %v2327, %v2319
    %v3016 = vpack.c.b16 %v2328, %v2320
    %v3017 = vpack.c.b16 %v2329, %v2321
    %v3018 = vpack.c.b16 %v2330, %v2322
    %v3019 = vpack.c.b16 %v2331, %v2323
    %v3020 = vpack.c.b16 %v2332, %v2324
    %v3021 = vpack.c.b16 %v2333, %v2325
    %v3022 = vpack.c.b16 %v2334, %v2326
    %v3023 = vpack.c.b16 %v2343, %v2335
    %v3024 = vpack.c.b16 %v2344, %v2336
    %v3025 = vpack.c.b16 %v2345, %v2337
    %v3026 = vpack.c.b16 %v2346, %v2338
    %v3027 = vpack.c.b16 %v2347, %v2339
    %v3028 = vpack.c.b16 %v2348, %v2340
    %v3029 = vpack.c.b16 %v2349, %v2341
    %v3030 = vpack.c.b16 %v2350, %v2342
    %v3031 = vpack.c.b16 %v2359, %v2351
    %v3032 = vpack.c.b16 %v2360, %v2352
    %v3033 = vpack.c.b16 %v2361, %v2353
    %v3034 = vpack.c.b16 %v2362, %v2354
    %v3035 = vpack.c.b16 %v2363, %v2355
    %v3036 = vpack.c.b16 %v2364, %v2356
    %v3037 = vpack.c.b16 %v2365, %v2357
    %v3038 = vpack.c.b16 %v2366, %v2358
    %v3039 = vpack.c.b16 %v2375, %v2367
    %v3040 = vpack.c.b16 %v2376, %v2368
    %v3041 = vpack.c.b16 %v2377, %v2369
    %v3042 = vpack.c.b16 %v2378, %v2370
    %v3043 = vpack.c.b16 %v2379, %v2371
    %v3044 = vpack.c.b16 %v2380, %v2372
    %v3045 = vpack.c.b16 %v2381, %v2373
    %v3046 = vpack.c.b16 %v2382, %v2374
    %v3047 = vpack.c.b16 %v2391, %v2383
    %v3048 = vpack.c.b16 %v2392, %v2384
    %v3049 = vpack.c.b16 %v2393, %v2385
    %v3050 = vpack.c.b16 %v2394, %v2386
    %v3051 = vpack.c.b16 %v2395, %v2387
    %v3052 = vpack.c.b16 %v2396, %v2388
    %v3053 = vpack.c.b16 %v2397, %v2389
    %v3054 = vpack.c.b16 %v2398, %v2390
    %v3055 = vpack.c.b16 %v2407, %v2399
    %v3056 = vpack.c.b16 %v2408, %v2400
    %v3057 = vpack.c.b16 %v2409, %v2401
    %v3058 = vpack.c.b16 %v2410, %v2402
    %v3059 = vpack.c.b16 %v2411, %v2403
    %v3060 = vpack.c.b16 %v2412, %v2404
    %v3061 = vpack.c.b16 %v2413, %v2405
    %v3062 = vpack.c.b16 %v2414, %v2406
    %v3063 = vpack.c.b16 %v2423, %v2415
    %v3064 = vpack.c.b16 %v2424, %v2416
    %v3065 = vpack.c.b16 %v2425, %v2417
    %v3066 = vpack.c.b16 %v2426, %v2418
    %v3067 = vpack.c.b16 %v2427, %v2419
    %v3068 = vpack.c.b16 %v2428, %v2420
    %v3069 = vpack.c.b16 %v2429, %v2421
    %v3070 = vpack.c.b16 %v2430, %v2422
    %v3071 = vpack.c.b16 %v2439, %v2431
    %v3072 = vpack.c.b16 %v2440, %v2432
    %v3073 = vpack.c.b16 %v2441, %v2433
    %v3074 = vpack.c.b16 %v2442, %v2434
    %v3075 = vpack.c.b16 %v2443, %v2435
    %v3076 = vpack.c.b16 %v2444, %v2436
    %v3077 = vpack.c.b16 %v2445, %v2437
    %v3078 = vpack.c.b16 %v2446, %v2438
    %v3079 = vpack.c.b16 %v2455, %v2447
    %v3080 = vpack.c.b16 %v2456, %v2448
    %v3081 = vpack.c.b16 %v2457, %v2449
    %v3082 = vpack.c.b16 %v2458, %v2450
    %v3083 = vpack.c.b16 %v2459, %v2451
    %v3084 = vpack.c.b16 %v2460, %v2452
    %v3085 = vpack.c.b16 %v2461, %v2453
    %v3086 = vpack.c.b16 %v2462, %v2454
    %v3087 = vpack.c.b16 %v2471, %v2463
    %v3088 = vpack.c.b16 %v2472, %v2464
    %v3089 = vpack.c.b16 %v2473, %v2465
    %v3090 = vpack.c.b16 %v2474, %v2466
    %v3091 = vpack.c.b16 %v2475, %v2467
    %v3092 = vpack.c.b16 %v2476, %v2468
    %v3093 = vpack.c.b16 %v2477, %v2469
    %v3094 = vpack.c.b16 %v2478, %v2470
    %v3095 = vpack.c.b16 %v2487, %v2479
    %v3096 = vpack.c.b16 %v2488, %v2480
    %v3097 = vpack.c.b16 %v2489, %v2481
    %v3098 = vpack.c.b16 %v2490, %v2482
    %v3099 = vpack.c.b16 %v2491, %v2483
    %v3100 = vpack.c.b16 %v2492, %v2484
    %v3101 = vpack.c.b16 %v2493, %v2485
    %v3102 = vpack.c.b16 %v2494, %v2486
    %v3103 = vpack.c.b16 %v2503, %v2495
    %v3104 = vpack.c.b16 %v2504, %v2496
    %v3105 = vpack.c.b16 %v2505, %v2497
    %v3106 = vpack.c.b16 %v2506, %v2498
    %v3107 = vpack.c.b16 %v2507, %v2499
    %v3108 = vpack.c.b16 %v2508, %v2500
    %v3109 = vpack.c.b16 %v2509, %v2501
    %v3110 = vpack.c.b16 %v2510, %v2502
    %v3111 = vpack.c.b16 %v2519, %v2511
    %v3112 = vpack.c.b16 %v2520, %v2512
    %v3113 = vpack.c.b16 %v2521, %v2513
    %v3114 = vpack.c.b16 %v2522, %v2514
    %v3115 = vpack.c.b16 %v2523, %v2515
    %v3116 = vpack.c.b16 %v2524, %v2516
    %v3117 = vpack.c.b16 %v2525, %v2517
    %v3118 = vpack.c.b16 %v2526, %v2518
    %v3119 = vpack.c.b16 %v2535, %v2527
    %v3120 = vpack.c.b16 %v2536, %v2528
    %v3121 = vpack.c.b16 %v2537, %v2529
    %v3122 = vpack.c.b16 %v2538, %v2530
    %v3123 = vpack.c.b16 %v2539, %v2531
    %v3124 = vpack.c.b16 %v2540, %v2532
    %v3125 = vpack.c.b16 %v2541, %v2533
    %v3126 = vpack.c.b16 %v2542, %v2534
    %v3127 = vpack.c.b16 %v2551, %v2543
    %v3128 = vpack.c.b16 %v2552, %v2544
    %v3129 = vpack.c.b16 %v2553, %v2545
    %v3130 = vpack.c.b16 %v2554, %v2546
    %v3131 = vpack.c.b16 %v2555, %v2547
    %v3132 = vpack.c.b16 %v2556, %v2548
    %v3133 = vpack.c.b16 %v2557, %v2549
    %v3134 = vpack.c.b16 %v2558, %v2550
    %v3135 = vpack.c.b16 %v2567, %v2559
    %v3136 = vpack.c.b16 %v2568, %v2560
    %v3137 = vpack.c.b16 %v2569, %v2561
    %v3138 = vpack.c.b16 %v2570, %v2562
    %v3139 = vpack.c.b16 %v2571, %v2563
    %v3140 = vpack.c.b16 %v2572, %v2564
    %v3141 = vpack.c.b16 %v2573, %v2565
    %v3142 = vpack.c.b16 %v2574, %v2566
    %v3143 = vpack.c.b16 %v2583, %v2575
    %v3144 = vpack.c.b16 %v2584, %v2576
    %v3145 = vpack.c.b16 %v2585, %v2577
    %v3146 = vpack.c.b16 %v2586, %v2578
    %v3147 = vpack.c.b16 %v2587, %v2579
    %v3148 = vpack.c.b16 %v2588, %v2580
    %v3149 = vpack.c.b16 %v2589, %v2581
    %v3150 = vpack.c.b16 %v2590, %v2582
    %v3151 = vpack.c.b16 %v2599, %v2591
    %v3152 = vpack.c.b16 %v2600, %v2592
    %v3153 = vpack.c.b16 %v2601, %v2593
    %v3154 = vpack.c.b16 %v2602, %v2594
    %v3155 = vpack.c.b16 %v2603, %v2595
    %v3156 = vpack.c.b16 %v2604, %v2596
    %v3157 = vpack.c.b16 %v2605, %v2597
    %v3158 = vpack.c.b16 %v2606, %v2598
    %v3159 = vpack.c.b16 %v2615, %v2607
    %v3160 = vpack.c.b16 %v2616, %v2608
    %v3161 = vpack.c.b16 %v2617, %v2609
    %v3162 = vpack.c.b16 %v2618, %v2610
    %v3163 = vpack.c.b16 %v2619, %v2611
    %v3164 = vpack.c.b16 %v2620, %v2612
    %v3165 = vpack.c.b16 %v2621, %v2613
    %v3166 = vpack.c.b16 %v2622, %v2614
    %v3167 = vpack.c.b16 %v2631, %v2623
    %v3168 = vpack.c.b16 %v2632, %v2624
    %v3169 = vpack.c.b16 %v2633, %v2625
    %v3170 = vpack.c.b16 %v2634, %v2626
    %v3171 = vpack.c.b16 %v2635, %v2627
    %v3172 = vpack.c.b16 %v2636, %v2628
    %v3173 = vpack.c.b16 %v2637, %v2629
    %v3174 = vpack.c.b16 %v2638, %v2630
    %v3175 = vpack.c.b16 %v2647, %v2639
    %v3176 = vpack.c.b16 %v2648, %v2640
    %v3177 = vpack.c.b16 %v2649, %v2641
    %v3178 = vpack.c.b16 %v2650, %v2642
    %v3179 = vpack.c.b16 %v2651, %v2643
    %v3180 = vpack.c.b16 %v2652, %v2644
    %v3181 = vpack.c.b16 %v2653, %v2645
    %v3182 = vpack.c.b16 %v2654, %v2646
    %v3183 = vpack.c.b16 %v2663, %v2655
    %v3184 = vpack.c.b16 %v2664, %v2656
    %v3185 = vpack.c.b16 %v2665, %v2657
    %v3186 = vpack.c.b16 %v2666, %v2658
    %v3187 = vpack.c.b16 %v2667, %v2659
    %v3188 = vpack.c.b16 %v2668, %v2660
    %v3189 = vpack.c.b16 %v2669, %v2661
    %v3190 = vpack.c.b16 %v2670, %v2662
    %v3191 = vpack.c.b16 %v2679, %v2671
    %v3192 = vpack.c.b16 %v2680, %v2672
    %v3193 = vpack.c.b16 %v2681, %v2673
    %v3194 = vpack.c.b16 %v2682, %v2674
    %v3195 = vpack.c.b16 %v2683, %v2675
    %v3196 = vpack.c.b16 %v2684, %v2676
    %v3197 = vpack.c.b16 %v2685, %v2677
    %v3198 = vpack.c.b16 %v2686, %v2678
    %3711 = vmatprep.subr.bf16.mxu0 %v2744
    %3712 = vmatpush1.bf16.msra.mxu0 %v2743
    %3713 = vmatprep.subr.bf16.mxu0 %v2736
    %3714 = vmatpush1.bf16.msra.mxu0 %v2735
    %3715 = vmatprep.subr.bf16.mxu0 %v2728
    %3716 = vmatpush1.bf16.msra.mxu0 %v2727
    %3717 = vmatprep.subr.bf16.mxu0 %v2720
    %3718 = vmatpush1.bf16.msra.mxu0 %v2719
    %3719 = vmatprep.subr.bf16.mxu0 %v2712
    %3720 = vmatpush1.bf16.msra.mxu0 %v2711
    %3721 = vmatprep.subr.bf16.mxu0 %v2704
    %3722 = vmatpush1.bf16.msra.mxu0 %v2703
    %3723 = vmatprep.subr.bf16.mxu0 %v2696
    %3724 = vmatpush1.bf16.msra.mxu0 %v2695
    %3725 = vmatprep.subr.bf16.mxu0 %v2688
    %3726 = vmatpush1.bf16.msra.mxu0 %v2687
    %3727 = vmatprep.subr.bf16.mxu0 %v2808
    %3728 = vmatpush2.bf16.msra.mxu0 %v2807
    %3729 = vmatprep.subr.bf16.mxu0 %v2800
    %3730 = vmatpush2.bf16.msra.mxu0 %v2799
    %3731 = vmatprep.subr.bf16.mxu0 %v2792
    %3732 = vmatpush2.bf16.msra.mxu0 %v2791
    %3733 = vmatprep.subr.bf16.mxu0 %v2784
    %3734 = vmatpush2.bf16.msra.mxu0 %v2783
    %3735 = vmatprep.subr.bf16.mxu0 %v2776
    %3736 = vmatpush2.bf16.msra.mxu0 %v2775
    %3737 = vmatprep.subr.bf16.mxu0 %v2768
    %3738 = vmatpush2.bf16.msra.mxu0 %v2767
    %3739 = vmatprep.subr.bf16.mxu0 %v2760
    %3740 = vmatpush2.bf16.msra.mxu0 %v2759
    %3741 = vmatprep.subr.bf16.mxu0 %v2752
    %3742 = vmatpush2.bf16.msra.mxu0 %v2751
    %3743 = vmatprep.mubr.bf16.mxu0 %v1144
    %3744 = vmatmul.mubr.bf16.gmra.mxu0 %v1143
    %v3745 = vpop.f32.mrf.mxu0
    %v3746 = vadd.f32 0.0, %v3745
    %v3747 = vpop.f32.mrf.mxu0
    %v3748 = vadd.f32 0.0, %v3747
    %v3749 = vpop.f32.mrf.mxu0
    %v3750 = vpop.f32.mrf.mxu0
    %3751 = vdwg.mxu0
    %3752 = vmatprep.subr.bf16.mxu0 %v2872
    %3753 = vmatpush1.bf16.msra.mxu0 %v2871
    %3754 = vmatprep.subr.bf16.mxu0 %v2864
    %3755 = vmatpush1.bf16.msra.mxu0 %v2863
    %3756 = vmatprep.subr.bf16.mxu0 %v2856
    %3757 = vmatpush1.bf16.msra.mxu0 %v2855
    %3758 = vmatprep.subr.bf16.mxu0 %v2848
    %3759 = vmatpush1.bf16.msra.mxu0 %v2847
    %3760 = vmatprep.subr.bf16.mxu0 %v2840
    %3761 = vmatpush1.bf16.msra.mxu0 %v2839
    %3762 = vmatprep.subr.bf16.mxu0 %v2832
    %3763 = vmatpush1.bf16.msra.mxu0 %v2831
    %3764 = vmatprep.subr.bf16.mxu0 %v2824
    %3765 = vmatpush1.bf16.msra.mxu0 %v2823
    %3766 = vmatprep.subr.bf16.mxu0 %v2816
    %3767 = vmatpush1.bf16.msra.mxu0 %v2815
    %3768 = vmatprep.subr.bf16.mxu0 %v2936
    %3769 = vmatpush2.bf16.msra.mxu0 %v2935
    %3770 = vmatprep.subr.bf16.mxu0 %v2928
    %3771 = vmatpush2.bf16.msra.mxu0 %v2927
    %3772 = vmatprep.subr.bf16.mxu0 %v2920
    %3773 = vmatpush2.bf16.msra.mxu0 %v2919
    %3774 = vmatprep.subr.bf16.mxu0 %v2912
    %3775 = vmatpush2.bf16.msra.mxu0 %v2911
    %3776 = vmatprep.subr.bf16.mxu0 %v2904
    %3777 = vmatpush2.bf16.msra.mxu0 %v2903
    %3778 = vmatprep.subr.bf16.mxu0 %v2896
    %3779 = vmatpush2.bf16.msra.mxu0 %v2895
    %3780 = vmatprep.subr.bf16.mxu0 %v2888
    %3781 = vmatpush2.bf16.msra.mxu0 %v2887
    %3782 = vmatprep.subr.bf16.mxu0 %v2880
    %3783 = vmatpush2.bf16.msra.mxu0 %v2879
    %3784 = vmatprep.mubr.bf16.mxu0 %v1146
    %3785 = vmatmul.mubr.bf16.gmra.mxu0 %v1145
    %v3786 = vpop.f32.mrf.mxu0
    %v3787 = vadd.f32 %v3746, %v3786
    %v3788 = vpop.f32.mrf.mxu0
    %v3789 = vadd.f32 %v3748, %v3788
    %v3790 = vpop.f32.mrf.mxu0
    %v3791 = vpop.f32.mrf.mxu0
    %3792 = vdwg.mxu0
    %3793 = vmatprep.subr.bf16.mxu0 %v3000
    %3794 = vmatpush1.bf16.msra.mxu0 %v2999
    %3795 = vmatprep.subr.bf16.mxu0 %v2992
    %3796 = vmatpush1.bf16.msra.mxu0 %v2991
    %3797 = vmatprep.subr.bf16.mxu0 %v2984
    %3798 = vmatpush1.bf16.msra.mxu0 %v2983
    %3799 = vmatprep.subr.bf16.mxu0 %v2976
    %3800 = vmatpush1.bf16.msra.mxu0 %v2975
    %3801 = vmatprep.subr.bf16.mxu0 %v2968
    %3802 = vmatpush1.bf16.msra.mxu0 %v2967
    %3803 = vmatprep.subr.bf16.mxu0 %v2960
    %3804 = vmatpush1.bf16.msra.mxu0 %v2959
    %3805 = vmatprep.subr.bf16.mxu0 %v2952
    %3806 = vmatpush1.bf16.msra.mxu0 %v2951
    %3807 = vmatprep.subr.bf16.mxu0 %v2944
    %3808 = vmatpush1.bf16.msra.mxu0 %v2943
    %3809 = vmatprep.subr.bf16.mxu0 %v3064
    %3810 = vmatpush2.bf16.msra.mxu0 %v3063
    %3811 = vmatprep.subr.bf16.mxu0 %v3056
    %3812 = vmatpush2.bf16.msra.mxu0 %v3055
    %3813 = vmatprep.subr.bf16.mxu0 %v3048
    %3814 = vmatpush2.bf16.msra.mxu0 %v3047
    %3815 = vmatprep.subr.bf16.mxu0 %v3040
    %3816 = vmatpush2.bf16.msra.mxu0 %v3039
    %3817 = vmatprep.subr.bf16.mxu0 %v3032
    %3818 = vmatpush2.bf16.msra.mxu0 %v3031
    %3819 = vmatprep.subr.bf16.mxu0 %v3024
    %3820 = vmatpush2.bf16.msra.mxu0 %v3023
    %3821 = vmatprep.subr.bf16.mxu0 %v3016
    %3822 = vmatpush2.bf16.msra.mxu0 %v3015
    %3823 = vmatprep.subr.bf16.mxu0 %v3008
    %3824 = vmatpush2.bf16.msra.mxu0 %v3007
    %3825 = vmatprep.mubr.bf16.mxu0 %v1148
    %3826 = vmatmul.mubr.bf16.gmra.mxu0 %v1147
    %v3827 = vpop.f32.mrf.mxu0
    %v3828 = vadd.f32 %v3787, %v3827
    %v3829 = vpop.f32.mrf.mxu0
    %v3830 = vadd.f32 %v3789, %v3829
    %v3831 = vpop.f32.mrf.mxu0
    %v3832 = vpop.f32.mrf.mxu0
    %3833 = vdwg.mxu0
    %3834 = vmatprep.subr.bf16.mxu0 %v3128
    %3835 = vmatpush1.bf16.msra.mxu0 %v3127
    %3836 = vmatprep.subr.bf16.mxu0 %v3120
    %3837 = vmatpush1.bf16.msra.mxu0 %v3119
    %3838 = vmatprep.subr.bf16.mxu0 %v3112
    %3839 = vmatpush1.bf16.msra.mxu0 %v3111
    %3840 = vmatprep.subr.bf16.mxu0 %v3104
    %3841 = vmatpush1.bf16.msra.mxu0 %v3103
    %3842 = vmatprep.subr.bf16.mxu0 %v3096
    %3843 = vmatpush1.bf16.msra.mxu0 %v3095
    %3844 = vmatprep.subr.bf16.mxu0 %v3088
    %3845 = vmatpush1.bf16.msra.mxu0 %v3087
    %3846 = vmatprep.subr.bf16.mxu0 %v3080
    %3847 = vmatpush1.bf16.msra.mxu0 %v3079
    %3848 = vmatprep.subr.bf16.mxu0 %v3072
    %3849 = vmatpush1.bf16.msra.mxu0 %v3071
    %3850 = vmatprep.subr.bf16.mxu0 %v3192
    %3851 = vmatpush2.bf16.msra.mxu0 %v3191
    %3852 = vmatprep.subr.bf16.mxu0 %v3184
    %3853 = vmatpush2.bf16.msra.mxu0 %v3183
    %3854 = vmatprep.subr.bf16.mxu0 %v3176
    %3855 = vmatpush2.bf16.msra.mxu0 %v3175
    %3856 = vmatprep.subr.bf16.mxu0 %v3168
    %3857 = vmatpush2.bf16.msra.mxu0 %v3167
    %3858 = vmatprep.subr.bf16.mxu0 %v3160
    %3859 = vmatpush2.bf16.msra.mxu0 %v3159
    %3860 = vmatprep.subr.bf16.mxu0 %v3152
    %3861 = vmatpush2.bf16.msra.mxu0 %v3151
    %3862 = vmatprep.subr.bf16.mxu0 %v3144
    %3863 = vmatpush2.bf16.msra.mxu0 %v3143
    %3864 = vmatprep.subr.bf16.mxu0 %v3136
    %3865 = vmatpush2.bf16.msra.mxu0 %v3135
    %3866 = vmatprep.mubr.bf16.mxu0 %v1150
    %3867 = vmatmul.mubr.bf16.gmra.mxu0 %v1149
    %v3868 = vpop.f32.mrf.mxu0
    %v3869 = vadd.f32 %v3828, %v3868
    %v3870 = vpop.f32.mrf.mxu0
    %v3871 = vadd.f32 %v3830, %v3870
    %v3872 = vpop.f32.mrf.mxu0
    %v3873 = vpop.f32.mrf.mxu0
    %3874 = vdwg.mxu0
    %3875 = vmatprep.subr.bf16.mxu0 %v2746
    %3876 = vmatpush1.bf16.msra.mxu0 %v2745
    %3877 = vmatprep.subr.bf16.mxu0 %v2738
    %3878 = vmatpush1.bf16.msra.mxu0 %v2737
    %3879 = vmatprep.subr.bf16.mxu0 %v2730
    %3880 = vmatpush1.bf16.msra.mxu0 %v2729
    %3881 = vmatprep.subr.bf16.mxu0 %v2722
    %3882 = vmatpush1.bf16.msra.mxu0 %v2721
    %3883 = vmatprep.subr.bf16.mxu0 %v2714
    %3884 = vmatpush1.bf16.msra.mxu0 %v2713
    %3885 = vmatprep.subr.bf16.mxu0 %v2706
    %3886 = vmatpush1.bf16.msra.mxu0 %v2705
    %3887 = vmatprep.subr.bf16.mxu0 %v2698
    %3888 = vmatpush1.bf16.msra.mxu0 %v2697
    %3889 = vmatprep.subr.bf16.mxu0 %v2690
    %3890 = vmatpush1.bf16.msra.mxu0 %v2689
    %3891 = vmatprep.subr.bf16.mxu0 %v2810
    %3892 = vmatpush2.bf16.msra.mxu0 %v2809
    %3893 = vmatprep.subr.bf16.mxu0 %v2802
    %3894 = vmatpush2.bf16.msra.mxu0 %v2801
    %3895 = vmatprep.subr.bf16.mxu0 %v2794
    %3896 = vmatpush2.bf16.msra.mxu0 %v2793
    %3897 = vmatprep.subr.bf16.mxu0 %v2786
    %3898 = vmatpush2.bf16.msra.mxu0 %v2785
    %3899 = vmatprep.subr.bf16.mxu0 %v2778
    %3900 = vmatpush2.bf16.msra.mxu0 %v2777
    %3901 = vmatprep.subr.bf16.mxu0 %v2770
    %3902 = vmatpush2.bf16.msra.mxu0 %v2769
    %3903 = vmatprep.subr.bf16.mxu0 %v2762
    %3904 = vmatpush2.bf16.msra.mxu0 %v2761
    %3905 = vmatprep.subr.bf16.mxu0 %v2754
    %3906 = vmatpush2.bf16.msra.mxu0 %v2753
    %3907 = vmatprep.mubr.bf16.mxu0 %v1144
    %3908 = vmatmul.mubr.bf16.gmra.mxu0 %v1143
    %v3909 = vpop.f32.mrf.mxu0
    %v3910 = vadd.f32 0.0, %v3909
    %v3911 = vpop.f32.mrf.mxu0
    %v3912 = vadd.f32 0.0, %v3911
    %v3913 = vpop.f32.mrf.mxu0
    %v3914 = vpop.f32.mrf.mxu0
    %3915 = vdwg.mxu0
    %3916 = vmatprep.subr.bf16.mxu0 %v2874
    %3917 = vmatpush1.bf16.msra.mxu0 %v2873
    %3918 = vmatprep.subr.bf16.mxu0 %v2866
    %3919 = vmatpush1.bf16.msra.mxu0 %v2865
    %3920 = vmatprep.subr.bf16.mxu0 %v2858
    %3921 = vmatpush1.bf16.msra.mxu0 %v2857
    %3922 = vmatprep.subr.bf16.mxu0 %v2850
    %3923 = vmatpush1.bf16.msra.mxu0 %v2849
    %3924 = vmatprep.subr.bf16.mxu0 %v2842
    %3925 = vmatpush1.bf16.msra.mxu0 %v2841
    %3926 = vmatprep.subr.bf16.mxu0 %v2834
    %3927 = vmatpush1.bf16.msra.mxu0 %v2833
    %3928 = vmatprep.subr.bf16.mxu0 %v2826
    %3929 = vmatpush1.bf16.msra.mxu0 %v2825
    %3930 = vmatprep.subr.bf16.mxu0 %v2818
    %3931 = vmatpush1.bf16.msra.mxu0 %v2817
    %3932 = vmatprep.subr.bf16.mxu0 %v2938
    %3933 = vmatpush2.bf16.msra.mxu0 %v2937
    %3934 = vmatprep.subr.bf16.mxu0 %v2930
    %3935 = vmatpush2.bf16.msra.mxu0 %v2929
    %3936 = vmatprep.subr.bf16.mxu0 %v2922
    %3937 = vmatpush2.bf16.msra.mxu0 %v2921
    %3938 = vmatprep.subr.bf16.mxu0 %v2914
    %3939 = vmatpush2.bf16.msra.mxu0 %v2913
    %3940 = vmatprep.subr.bf16.mxu0 %v2906
    %3941 = vmatpush2.bf16.msra.mxu0 %v2905
    %3942 = vmatprep.subr.bf16.mxu0 %v2898
    %3943 = vmatpush2.bf16.msra.mxu0 %v2897
    %3944 = vmatprep.subr.bf16.mxu0 %v2890
    %3945 = vmatpush2.bf16.msra.mxu0 %v2889
    %3946 = vmatprep.subr.bf16.mxu0 %v2882
    %3947 = vmatpush2.bf16.msra.mxu0 %v2881
    %3948 = vmatprep.mubr.bf16.mxu0 %v1146
    %3949 = vmatmul.mubr.bf16.gmra.mxu0 %v1145
    %v3950 = vpop.f32.mrf.mxu0
    %v3951 = vadd.f32 %v3910, %v3950
    %v3952 = vpop.f32.mrf.mxu0
    %v3953 = vadd.f32 %v3912, %v3952
    %v3954 = vpop.f32.mrf.mxu0
    %v3955 = vpop.f32.mrf.mxu0
    %3956 = vdwg.mxu0
    %3957 = vmatprep.subr.bf16.mxu0 %v3002
    %3958 = vmatpush1.bf16.msra.mxu0 %v3001
    %3959 = vmatprep.subr.bf16.mxu0 %v2994
    %3960 = vmatpush1.bf16.msra.mxu0 %v2993
    %3961 = vmatprep.subr.bf16.mxu0 %v2986
    %3962 = vmatpush1.bf16.msra.mxu0 %v2985
    %3963 = vmatprep.subr.bf16.mxu0 %v2978
    %3964 = vmatpush1.bf16.msra.mxu0 %v2977
    %3965 = vmatprep.subr.bf16.mxu0 %v2970
    %3966 = vmatpush1.bf16.msra.mxu0 %v2969
    %3967 = vmatprep.subr.bf16.mxu0 %v2962
    %3968 = vmatpush1.bf16.msra.mxu0 %v2961
    %3969 = vmatprep.subr.bf16.mxu0 %v2954
    %3970 = vmatpush1.bf16.msra.mxu0 %v2953
    %3971 = vmatprep.subr.bf16.mxu0 %v2946
    %3972 = vmatpush1.bf16.msra.mxu0 %v2945
    %3973 = vmatprep.subr.bf16.mxu0 %v3066
    %3974 = vmatpush2.bf16.msra.mxu0 %v3065
    %3975 = vmatprep.subr.bf16.mxu0 %v3058
    %3976 = vmatpush2.bf16.msra.mxu0 %v3057
    %3977 = vmatprep.subr.bf16.mxu0 %v3050
    %3978 = vmatpush2.bf16.msra.mxu0 %v3049
    %3979 = vmatprep.subr.bf16.mxu0 %v3042
    %3980 = vmatpush2.bf16.msra.mxu0 %v3041
    %3981 = vmatprep.subr.bf16.mxu0 %v3034
    %3982 = vmatpush2.bf16.msra.mxu0 %v3033
    %3983 = vmatprep.subr.bf16.mxu0 %v3026
    %3984 = vmatpush2.bf16.msra.mxu0 %v3025
    %3985 = vmatprep.subr.bf16.mxu0 %v3018
    %3986 = vmatpush2.bf16.msra.mxu0 %v3017
    %3987 = vmatprep.subr.bf16.mxu0 %v3010
    %3988 = vmatpush2.bf16.msra.mxu0 %v3009
    %3989 = vmatprep.mubr.bf16.mxu0 %v1148
    %3990 = vmatmul.mubr.bf16.gmra.mxu0 %v1147
    %v3991 = vpop.f32.mrf.mxu0
    %v3992 = vadd.f32 %v3951, %v3991
    %v3993 = vpop.f32.mrf.mxu0
    %v3994 = vadd.f32 %v3953, %v3993
    %v3995 = vpop.f32.mrf.mxu0
    %v3996 = vpop.f32.mrf.mxu0
    %3997 = vdwg.mxu0
    %3998 = vmatprep.subr.bf16.mxu0 %v3130
    %3999 = vmatpush1.bf16.msra.mxu0 %v3129
    %4000 = vmatprep.subr.bf16.mxu0 %v3122
    %4001 = vmatpush1.bf16.msra.mxu0 %v3121
    %4002 = vmatprep.subr.bf16.mxu0 %v3114
    %4003 = vmatpush1.bf16.msra.mxu0 %v3113
    %4004 = vmatprep.subr.bf16.mxu0 %v3106
    %4005 = vmatpush1.bf16.msra.mxu0 %v3105
    %4006 = vmatprep.subr.bf16.mxu0 %v3098
    %4007 = vmatpush1.bf16.msra.mxu0 %v3097
    %4008 = vmatprep.subr.bf16.mxu0 %v3090
    %4009 = vmatpush1.bf16.msra.mxu0 %v3089
    %4010 = vmatprep.subr.bf16.mxu0 %v3082
    %4011 = vmatpush1.bf16.msra.mxu0 %v3081
    %4012 = vmatprep.subr.bf16.mxu0 %v3074
    %4013 = vmatpush1.bf16.msra.mxu0 %v3073
    %4014 = vmatprep.subr.bf16.mxu0 %v3194
    %4015 = vmatpush2.bf16.msra.mxu0 %v3193
    %4016 = vmatprep.subr.bf16.mxu0 %v3186
    %4017 = vmatpush2.bf16.msra.mxu0 %v3185
    %4018 = vmatprep.subr.bf16.mxu0 %v3178
    %4019 = vmatpush2.bf16.msra.mxu0 %v3177
    %4020 = vmatprep.subr.bf16.mxu0 %v3170
    %4021 = vmatpush2.bf16.msra.mxu0 %v3169
    %4022 = vmatprep.subr.bf16.mxu0 %v3162
    %4023 = vmatpush2.bf16.msra.mxu0 %v3161
    %4024 = vmatprep.subr.bf16.mxu0 %v3154
    %4025 = vmatpush2.bf16.msra.mxu0 %v3153
    %4026 = vmatprep.subr.bf16.mxu0 %v3146
    %4027 = vmatpush2.bf16.msra.mxu0 %v3145
    %4028 = vmatprep.subr.bf16.mxu0 %v3138
    %4029 = vmatpush2.bf16.msra.mxu0 %v3137
    %4030 = vmatprep.mubr.bf16.mxu0 %v1150
    %4031 = vmatmul.mubr.bf16.gmra.mxu0 %v1149
    %v4032 = vpop.f32.mrf.mxu0
    %v4033 = vadd.f32 %v3992, %v4032
    %v4034 = vpop.f32.mrf.mxu0
    %v4035 = vadd.f32 %v3994, %v4034
    %v4036 = vpop.f32.mrf.mxu0
    %v4037 = vpop.f32.mrf.mxu0
    %4038 = vdwg.mxu0
    %4039 = vmatprep.subr.bf16.mxu0 %v2748
    %4040 = vmatpush1.bf16.msra.mxu0 %v2747
    %4041 = vmatprep.subr.bf16.mxu0 %v2740
    %4042 = vmatpush1.bf16.msra.mxu0 %v2739
    %4043 = vmatprep.subr.bf16.mxu0 %v2732
    %4044 = vmatpush1.bf16.msra.mxu0 %v2731
    %4045 = vmatprep.subr.bf16.mxu0 %v2724
    %4046 = vmatpush1.bf16.msra.mxu0 %v2723
    %4047 = vmatprep.subr.bf16.mxu0 %v2716
    %4048 = vmatpush1.bf16.msra.mxu0 %v2715
    %4049 = vmatprep.subr.bf16.mxu0 %v2708
    %4050 = vmatpush1.bf16.msra.mxu0 %v2707
    %4051 = vmatprep.subr.bf16.mxu0 %v2700
    %4052 = vmatpush1.bf16.msra.mxu0 %v2699
    %4053 = vmatprep.subr.bf16.mxu0 %v2692
    %4054 = vmatpush1.bf16.msra.mxu0 %v2691
    %4055 = vmatprep.subr.bf16.mxu0 %v2812
    %4056 = vmatpush2.bf16.msra.mxu0 %v2811
    %4057 = vmatprep.subr.bf16.mxu0 %v2804
    %4058 = vmatpush2.bf16.msra.mxu0 %v2803
    %4059 = vmatprep.subr.bf16.mxu0 %v2796
    %4060 = vmatpush2.bf16.msra.mxu0 %v2795
    %4061 = vmatprep.subr.bf16.mxu0 %v2788
    %4062 = vmatpush2.bf16.msra.mxu0 %v2787
    %4063 = vmatprep.subr.bf16.mxu0 %v2780
    %4064 = vmatpush2.bf16.msra.mxu0 %v2779
    %4065 = vmatprep.subr.bf16.mxu0 %v2772
    %4066 = vmatpush2.bf16.msra.mxu0 %v2771
    %4067 = vmatprep.subr.bf16.mxu0 %v2764
    %4068 = vmatpush2.bf16.msra.mxu0 %v2763
    %4069 = vmatprep.subr.bf16.mxu0 %v2756
    %4070 = vmatpush2.bf16.msra.mxu0 %v2755
    %4071 = vmatprep.mubr.bf16.mxu0 %v1144
    %4072 = vmatmul.mubr.bf16.gmra.mxu0 %v1143
    %v4073 = vpop.f32.mrf.mxu0
    %v4074 = vadd.f32 0.0, %v4073
    %v4075 = vpop.f32.mrf.mxu0
    %v4076 = vadd.f32 0.0, %v4075
    %v4077 = vpop.f32.mrf.mxu0
    %v4078 = vpop.f32.mrf.mxu0
    %4079 = vdwg.mxu0
    %4080 = vmatprep.subr.bf16.mxu0 %v2876
    %4081 = vmatpush1.bf16.msra.mxu0 %v2875
    %4082 = vmatprep.subr.bf16.mxu0 %v2868
    %4083 = vmatpush1.bf16.msra.mxu0 %v2867
    %4084 = vmatprep.subr.bf16.mxu0 %v2860
    %4085 = vmatpush1.bf16.msra.mxu0 %v2859
    %4086 = vmatprep.subr.bf16.mxu0 %v2852
    %4087 = vmatpush1.bf16.msra.mxu0 %v2851
    %4088 = vmatprep.subr.bf16.mxu0 %v2844
    %4089 = vmatpush1.bf16.msra.mxu0 %v2843
    %4090 = vmatprep.subr.bf16.mxu0 %v2836
    %4091 = vmatpush1.bf16.msra.mxu0 %v2835
    %4092 = vmatprep.subr.bf16.mxu0 %v2828
    %4093 = vmatpush1.bf16.msra.mxu0 %v2827
    %4094 = vmatprep.subr.bf16.mxu0 %v2820
    %4095 = vmatpush1.bf16.msra.mxu0 %v2819
    %4096 = vmatprep.subr.bf16.mxu0 %v2940
    %4097 = vmatpush2.bf16.msra.mxu0 %v2939
    %4098 = vmatprep.subr.bf16.mxu0 %v2932
    %4099 = vmatpush2.bf16.msra.mxu0 %v2931
    %4100 = vmatprep.subr.bf16.mxu0 %v2924
    %4101 = vmatpush2.bf16.msra.mxu0 %v2923
    %4102 = vmatprep.subr.bf16.mxu0 %v2916
    %4103 = vmatpush2.bf16.msra.mxu0 %v2915
    %4104 = vmatprep.subr.bf16.mxu0 %v2908
    %4105 = vmatpush2.bf16.msra.mxu0 %v2907
    %4106 = vmatprep.subr.bf16.mxu0 %v2900
    %4107 = vmatpush2.bf16.msra.mxu0 %v2899
    %4108 = vmatprep.subr.bf16.mxu0 %v2892
    %4109 = vmatpush2.bf16.msra.mxu0 %v2891
    %4110 = vmatprep.subr.bf16.mxu0 %v2884
    %4111 = vmatpush2.bf16.msra.mxu0 %v2883
    %4112 = vmatprep.mubr.bf16.mxu0 %v1146
    %4113 = vmatmul.mubr.bf16.gmra.mxu0 %v1145
    %v4114 = vpop.f32.mrf.mxu0
    %v4115 = vadd.f32 %v4074, %v4114
    %v4116 = vpop.f32.mrf.mxu0
    %v4117 = vadd.f32 %v4076, %v4116
    %v4118 = vpop.f32.mrf.mxu0
    %v4119 = vpop.f32.mrf.mxu0
    %4120 = vdwg.mxu0
    %4121 = vmatprep.subr.bf16.mxu0 %v3004
    %4122 = vmatpush1.bf16.msra.mxu0 %v3003
    %4123 = vmatprep.subr.bf16.mxu0 %v2996
    %4124 = vmatpush1.bf16.msra.mxu0 %v2995
    %4125 = vmatprep.subr.bf16.mxu0 %v2988
    %4126 = vmatpush1.bf16.msra.mxu0 %v2987
    %4127 = vmatprep.subr.bf16.mxu0 %v2980
    %4128 = vmatpush1.bf16.msra.mxu0 %v2979
    %4129 = vmatprep.subr.bf16.mxu0 %v2972
    %4130 = vmatpush1.bf16.msra.mxu0 %v2971
    %4131 = vmatprep.subr.bf16.mxu0 %v2964
    %4132 = vmatpush1.bf16.msra.mxu0 %v2963
    %4133 = vmatprep.subr.bf16.mxu0 %v2956
    %4134 = vmatpush1.bf16.msra.mxu0 %v2955
    %4135 = vmatprep.subr.bf16.mxu0 %v2948
    %4136 = vmatpush1.bf16.msra.mxu0 %v2947
    %4137 = vmatprep.subr.bf16.mxu0 %v3068
    %4138 = vmatpush2.bf16.msra.mxu0 %v3067
    %4139 = vmatprep.subr.bf16.mxu0 %v3060
    %4140 = vmatpush2.bf16.msra.mxu0 %v3059
    %4141 = vmatprep.subr.bf16.mxu0 %v3052
    %4142 = vmatpush2.bf16.msra.mxu0 %v3051
    %4143 = vmatprep.subr.bf16.mxu0 %v3044
    %4144 = vmatpush2.bf16.msra.mxu0 %v3043
    %4145 = vmatprep.subr.bf16.mxu0 %v3036
    %4146 = vmatpush2.bf16.msra.mxu0 %v3035
    %4147 = vmatprep.subr.bf16.mxu0 %v3028
    %4148 = vmatpush2.bf16.msra.mxu0 %v3027
    %4149 = vmatprep.subr.bf16.mxu0 %v3020
    %4150 = vmatpush2.bf16.msra.mxu0 %v3019
    %4151 = vmatprep.subr.bf16.mxu0 %v3012
    %4152 = vmatpush2.bf16.msra.mxu0 %v3011
    %4153 = vmatprep.mubr.bf16.mxu0 %v1148
    %4154 = vmatmul.mubr.bf16.gmra.mxu0 %v1147
    %v4155 = vpop.f32.mrf.mxu0
    %v4156 = vadd.f32 %v4115, %v4155
    %v4157 = vpop.f32.mrf.mxu0
    %v4158 = vadd.f32 %v4117, %v4157
    %v4159 = vpop.f32.mrf.mxu0
    %v4160 = vpop.f32.mrf.mxu0
    %4161 = vdwg.mxu0
    %4162 = vmatprep.subr.bf16.mxu0 %v3132
    %4163 = vmatpush1.bf16.msra.mxu0 %v3131
    %4164 = vmatprep.subr.bf16.mxu0 %v3124
    %4165 = vmatpush1.bf16.msra.mxu0 %v3123
    %4166 = vmatprep.subr.bf16.mxu0 %v3116
    %4167 = vmatpush1.bf16.msra.mxu0 %v3115
    %4168 = vmatprep.subr.bf16.mxu0 %v3108
    %4169 = vmatpush1.bf16.msra.mxu0 %v3107
    %4170 = vmatprep.subr.bf16.mxu0 %v3100
    %4171 = vmatpush1.bf16.msra.mxu0 %v3099
    %4172 = vmatprep.subr.bf16.mxu0 %v3092
    %4173 = vmatpush1.bf16.msra.mxu0 %v3091
    %4174 = vmatprep.subr.bf16.mxu0 %v3084
    %4175 = vmatpush1.bf16.msra.mxu0 %v3083
    %4176 = vmatprep.subr.bf16.mxu0 %v3076
    %4177 = vmatpush1.bf16.msra.mxu0 %v3075
    %4178 = vmatprep.subr.bf16.mxu0 %v3196
    %4179 = vmatpush2.bf16.msra.mxu0 %v3195
    %4180 = vmatprep.subr.bf16.mxu0 %v3188
    %4181 = vmatpush2.bf16.msra.mxu0 %v3187
    %4182 = vmatprep.subr.bf16.mxu0 %v3180
    %4183 = vmatpush2.bf16.msra.mxu0 %v3179
    %4184 = vmatprep.subr.bf16.mxu0 %v3172
    %4185 = vmatpush2.bf16.msra.mxu0 %v3171
    %4186 = vmatprep.subr.bf16.mxu0 %v3164
    %4187 = vmatpush2.bf16.msra.mxu0 %v3163
    %4188 = vmatprep.subr.bf16.mxu0 %v3156
    %4189 = vmatpush2.bf16.msra.mxu0 %v3155
    %4190 = vmatprep.subr.bf16.mxu0 %v3148
    %4191 = vmatpush2.bf16.msra.mxu0 %v3147
    %4192 = vmatprep.subr.bf16.mxu0 %v3140
    %4193 = vmatpush2.bf16.msra.mxu0 %v3139
    %4194 = vmatprep.mubr.bf16.mxu0 %v1150
    %4195 = vmatmul.mubr.bf16.gmra.mxu0 %v1149
    %v4196 = vpop.f32.mrf.mxu0
    %v4197 = vadd.f32 %v4156, %v4196
    %v4198 = vpop.f32.mrf.mxu0
    %v4199 = vadd.f32 %v4158, %v4198
    %v4200 = vpop.f32.mrf.mxu0
    %v4201 = vpop.f32.mrf.mxu0
    %4202 = vdwg.mxu0
    %4203 = vmatprep.subr.bf16.mxu0 %v2750
    %4204 = vmatpush1.bf16.msra.mxu0 %v2749
    %4205 = vmatprep.subr.bf16.mxu0 %v2742
    %4206 = vmatpush1.bf16.msra.mxu0 %v2741
    %4207 = vmatprep.subr.bf16.mxu0 %v2734
    %4208 = vmatpush1.bf16.msra.mxu0 %v2733
    %4209 = vmatprep.subr.bf16.mxu0 %v2726
    %4210 = vmatpush1.bf16.msra.mxu0 %v2725
    %4211 = vmatprep.subr.bf16.mxu0 %v2718
    %4212 = vmatpush1.bf16.msra.mxu0 %v2717
    %4213 = vmatprep.subr.bf16.mxu0 %v2710
    %4214 = vmatpush1.bf16.msra.mxu0 %v2709
    %4215 = vmatprep.subr.bf16.mxu0 %v2702
    %4216 = vmatpush1.bf16.msra.mxu0 %v2701
    %4217 = vmatprep.subr.bf16.mxu0 %v2694
    %4218 = vmatpush1.bf16.msra.mxu0 %v2693
    %4219 = vmatprep.subr.bf16.mxu0 %v2814
    %4220 = vmatpush2.bf16.msra.mxu0 %v2813
    %4221 = vmatprep.subr.bf16.mxu0 %v2806
    %4222 = vmatpush2.bf16.msra.mxu0 %v2805
    %4223 = vmatprep.subr.bf16.mxu0 %v2798
    %4224 = vmatpush2.bf16.msra.mxu0 %v2797
    %4225 = vmatprep.subr.bf16.mxu0 %v2790
    %4226 = vmatpush2.bf16.msra.mxu0 %v2789
    %4227 = vmatprep.subr.bf16.mxu0 %v2782
    %4228 = vmatpush2.bf16.msra.mxu0 %v2781
    %4229 = vmatprep.subr.bf16.mxu0 %v2774
    %4230 = vmatpush2.bf16.msra.mxu0 %v2773
    %4231 = vmatprep.subr.bf16.mxu0 %v2766
    %4232 = vmatpush2.bf16.msra.mxu0 %v2765
    %4233 = vmatprep.subr.bf16.mxu0 %v2758
    %4234 = vmatpush2.bf16.msra.mxu0 %v2757
    %4235 = vmatprep.mubr.bf16.mxu0 %v1144
    %4236 = vmatmul.mubr.bf16.gmra.mxu0 %v1143
    %v4237 = vpop.f32.mrf.mxu0
    %v4238 = vadd.f32 0.0, %v4237
    %v4239 = vpop.f32.mrf.mxu0
    %v4240 = vadd.f32 0.0, %v4239
    %v4241 = vpop.f32.mrf.mxu0
    %v4242 = vpop.f32.mrf.mxu0
    %4243 = vdwg.mxu0
    %4244 = vmatprep.subr.bf16.mxu0 %v2878
    %4245 = vmatpush1.bf16.msra.mxu0 %v2877
    %4246 = vmatprep.subr.bf16.mxu0 %v2870
    %4247 = vmatpush1.bf16.msra.mxu0 %v2869
    %4248 = vmatprep.subr.bf16.mxu0 %v2862
    %4249 = vmatpush1.bf16.msra.mxu0 %v2861
    %4250 = vmatprep.subr.bf16.mxu0 %v2854
    %4251 = vmatpush1.bf16.msra.mxu0 %v2853
    %4252 = vmatprep.subr.bf16.mxu0 %v2846
    %4253 = vmatpush1.bf16.msra.mxu0 %v2845
    %4254 = vmatprep.subr.bf16.mxu0 %v2838
    %4255 = vmatpush1.bf16.msra.mxu0 %v2837
    %4256 = vmatprep.subr.bf16.mxu0 %v2830
    %4257 = vmatpush1.bf16.msra.mxu0 %v2829
    %4258 = vmatprep.subr.bf16.mxu0 %v2822
    %4259 = vmatpush1.bf16.msra.mxu0 %v2821
    %4260 = vmatprep.subr.bf16.mxu0 %v2942
    %4261 = vmatpush2.bf16.msra.mxu0 %v2941
    %4262 = vmatprep.subr.bf16.mxu0 %v2934
    %4263 = vmatpush2.bf16.msra.mxu0 %v2933
    %4264 = vmatprep.subr.bf16.mxu0 %v2926
    %4265 = vmatpush2.bf16.msra.mxu0 %v2925
    %4266 = vmatprep.subr.bf16.mxu0 %v2918
    %4267 = vmatpush2.bf16.msra.mxu0 %v2917
    %4268 = vmatprep.subr.bf16.mxu0 %v2910
    %4269 = vmatpush2.bf16.msra.mxu0 %v2909
    %4270 = vmatprep.subr.bf16.mxu0 %v2902
    %4271 = vmatpush2.bf16.msra.mxu0 %v2901
    %4272 = vmatprep.subr.bf16.mxu0 %v2894
    %4273 = vmatpush2.bf16.msra.mxu0 %v2893
    %4274 = vmatprep.subr.bf16.mxu0 %v2886
    %4275 = vmatpush2.bf16.msra.mxu0 %v2885
    %4276 = vmatprep.mubr.bf16.mxu0 %v1146
    %4277 = vmatmul.mubr.bf16.gmra.mxu0 %v1145
    %v4278 = vpop.f32.mrf.mxu0
    %v4279 = vadd.f32 %v4238, %v4278
    %v4280 = vpop.f32.mrf.mxu0
    %v4281 = vadd.f32 %v4240, %v4280
    %v4282 = vpop.f32.mrf.mxu0
    %v4283 = vpop.f32.mrf.mxu0
    %4284 = vdwg.mxu0
    %4285 = vmatprep.subr.bf16.mxu0 %v3006
    %4286 = vmatpush1.bf16.msra.mxu0 %v3005
    %4287 = vmatprep.subr.bf16.mxu0 %v2998
    %4288 = vmatpush1.bf16.msra.mxu0 %v2997
    %4289 = vmatprep.subr.bf16.mxu0 %v2990
    %4290 = vmatpush1.bf16.msra.mxu0 %v2989
    %4291 = vmatprep.subr.bf16.mxu0 %v2982
    %4292 = vmatpush1.bf16.msra.mxu0 %v2981
    %4293 = vmatprep.subr.bf16.mxu0 %v2974
    %4294 = vmatpush1.bf16.msra.mxu0 %v2973
    %4295 = vmatprep.subr.bf16.mxu0 %v2966
    %4296 = vmatpush1.bf16.msra.mxu0 %v2965
    %4297 = vmatprep.subr.bf16.mxu0 %v2958
    %4298 = vmatpush1.bf16.msra.mxu0 %v2957
    %4299 = vmatprep.subr.bf16.mxu0 %v2950
    %4300 = vmatpush1.bf16.msra.mxu0 %v2949
    %4301 = vmatprep.subr.bf16.mxu0 %v3070
    %4302 = vmatpush2.bf16.msra.mxu0 %v3069
    %4303 = vmatprep.subr.bf16.mxu0 %v3062
    %4304 = vmatpush2.bf16.msra.mxu0 %v3061
    %4305 = vmatprep.subr.bf16.mxu0 %v3054
    %4306 = vmatpush2.bf16.msra.mxu0 %v3053
    %4307 = vmatprep.subr.bf16.mxu0 %v3046
    %4308 = vmatpush2.bf16.msra.mxu0 %v3045
    %4309 = vmatprep.subr.bf16.mxu0 %v3038
    %4310 = vmatpush2.bf16.msra.mxu0 %v3037
    %4311 = vmatprep.subr.bf16.mxu0 %v3030
    %4312 = vmatpush2.bf16.msra.mxu0 %v3029
    %4313 = vmatprep.subr.bf16.mxu0 %v3022
    %4314 = vmatpush2.bf16.msra.mxu0 %v3021
    %4315 = vmatprep.subr.bf16.mxu0 %v3014
    %4316 = vmatpush2.bf16.msra.mxu0 %v3013
    %4317 = vmatprep.mubr.bf16.mxu0 %v1148
    %4318 = vmatmul.mubr.bf16.gmra.mxu0 %v1147
    %v4319 = vpop.f32.mrf.mxu0
    %v4320 = vadd.f32 %v4279, %v4319
    %v4321 = vpop.f32.mrf.mxu0
    %v4322 = vadd.f32 %v4281, %v4321
    %v4323 = vpop.f32.mrf.mxu0
    %v4324 = vpop.f32.mrf.mxu0
    %4325 = vdwg.mxu0
    %4326 = vmatprep.subr.bf16.mxu0 %v3134
    %4327 = vmatpush1.bf16.msra.mxu0 %v3133
    %4328 = vmatprep.subr.bf16.mxu0 %v3126
    %4329 = vmatpush1.bf16.msra.mxu0 %v3125
    %4330 = vmatprep.subr.bf16.mxu0 %v3118
    %4331 = vmatpush1.bf16.msra.mxu0 %v3117
    %4332 = vmatprep.subr.bf16.mxu0 %v3110
    %4333 = vmatpush1.bf16.msra.mxu0 %v3109
    %4334 = vmatprep.subr.bf16.mxu0 %v3102
    %4335 = vmatpush1.bf16.msra.mxu0 %v3101
    %4336 = vmatprep.subr.bf16.mxu0 %v3094
    %4337 = vmatpush1.bf16.msra.mxu0 %v3093
    %4338 = vmatprep.subr.bf16.mxu0 %v3086
    %4339 = vmatpush1.bf16.msra.mxu0 %v3085
    %4340 = vmatprep.subr.bf16.mxu0 %v3078
    %4341 = vmatpush1.bf16.msra.mxu0 %v3077
    %4342 = vmatprep.subr.bf16.mxu0 %v3198
    %4343 = vmatpush2.bf16.msra.mxu0 %v3197
    %4344 = vmatprep.subr.bf16.mxu0 %v3190
    %4345 = vmatpush2.bf16.msra.mxu0 %v3189
    %4346 = vmatprep.subr.bf16.mxu0 %v3182
    %4347 = vmatpush2.bf16.msra.mxu0 %v3181
    %4348 = vmatprep.subr.bf16.mxu0 %v3174
    %4349 = vmatpush2.bf16.msra.mxu0 %v3173
    %4350 = vmatprep.subr.bf16.mxu0 %v3166
    %4351 = vmatpush2.bf16.msra.mxu0 %v3165
    %4352 = vmatprep.subr.bf16.mxu0 %v3158
    %4353 = vmatpush2.bf16.msra.mxu0 %v3157
    %4354 = vmatprep.subr.bf16.mxu0 %v3150
    %4355 = vmatpush2.bf16.msra.mxu0 %v3149
    %4356 = vmatprep.subr.bf16.mxu0 %v3142
    %4357 = vmatpush2.bf16.msra.mxu0 %v3141
    %4358 = vmatprep.mubr.bf16.mxu0 %v1150
    %4359 = vmatmul.mubr.bf16.gmra.mxu0 %v1149
    %v4360 = vpop.f32.mrf.mxu0
    %v4361 = vadd.f32 %v4320, %v4360
    %v4362 = vpop.f32.mrf.mxu0
    %v4363 = vadd.f32 %v4322, %v4362
    %v4364 = vpop.f32.mrf.mxu0
    %v4365 = vpop.f32.mrf.mxu0
    %4366 = vdwg.mxu0
    %vm4367 = vcmask 1041408
    %v4368 = vsel %vm4367, %v3869, 0.0
    %v4369 = vsel %vm4367, %v3871, 0.0
    %v4370 = vadd.f32 %v4368, %v4369
    %4371 = vadd.xlane.f32.xlu0 %v4370
    %v4372 = vpop.xlane.xlu0 %4371
    %v4373 = vrcp.pop 256.0
    %v4374 = vmul.f32 %v4372, %v4373
    %v4375 = vsub.f32 %v3869, %v4374
    %v4376 = vsub.f32 %v3871, %v4374
    %v4377 = vmul.f32 %v4375, %v4375
    %v4378 = vmul.f32 %v4376, %v4376
    %v4379 = vsel %vm4367, %v4377, 0.0
    %v4380 = vsel %vm4367, %v4378, 0.0
    %v4381 = vadd.f32 %v4379, %v4380
    %4382 = vadd.xlane.f32.xlu0 %v4381
    %v4383 = vpop.xlane.xlu0 %4382
    %v4384 = vmul.f32 %v4383, %v4373
    %v4385 = vadd.f32 %v4384, 1e-05
    %v4386 = vrsqrt.pop %v4385
    %v4387 = vmul.f32 %v4375, %v4386
    %v4388 = vmul.f32 %v4376, %v4386
    %v4389 = vsel %vm4367, %v4033, 0.0
    %v4390 = vsel %vm4367, %v4035, 0.0
    %v4391 = vadd.f32 %v4389, %v4390
    %4392 = vadd.xlane.f32.xlu0 %v4391
    %v4393 = vpop.xlane.xlu0 %4392
    %v4394 = vmul.f32 %v4393, %v4373
    %v4395 = vsub.f32 %v4033, %v4394
    %v4396 = vsub.f32 %v4035, %v4394
    %v4397 = vmul.f32 %v4395, %v4395
    %v4398 = vmul.f32 %v4396, %v4396
    %v4399 = vsel %vm4367, %v4397, 0.0
    %v4400 = vsel %vm4367, %v4398, 0.0
    %v4401 = vadd.f32 %v4399, %v4400
    %4402 = vadd.xlane.f32.xlu0 %v4401
    %v4403 = vpop.xlane.xlu0 %4402
    %v4404 = vmul.f32 %v4403, %v4373
    %v4405 = vadd.f32 %v4404, 1e-05
    %v4406 = vrsqrt.pop %v4405
    %v4407 = vmul.f32 %v4395, %v4406
    %v4408 = vmul.f32 %v4396, %v4406
    %v4409 = vsel %vm4367, %v4197, 0.0
    %v4410 = vsel %vm4367, %v4199, 0.0
    %v4411 = vadd.f32 %v4409, %v4410
    %4412 = vadd.xlane.f32.xlu0 %v4411
    %v4413 = vpop.xlane.xlu0 %4412
    %v4414 = vmul.f32 %v4413, %v4373
    %v4415 = vsub.f32 %v4197, %v4414
    %v4416 = vsub.f32 %v4199, %v4414
    %v4417 = vmul.f32 %v4415, %v4415
    %v4418 = vmul.f32 %v4416, %v4416
    %v4419 = vsel %vm4367, %v4417, 0.0
    %v4420 = vsel %vm4367, %v4418, 0.0
    %v4421 = vadd.f32 %v4419, %v4420
    %4422 = vadd.xlane.f32.xlu0 %v4421
    %v4423 = vpop.xlane.xlu0 %4422
    %v4424 = vmul.f32 %v4423, %v4373
    %v4425 = vadd.f32 %v4424, 1e-05
    %v4426 = vrsqrt.pop %v4425
    %v4427 = vmul.f32 %v4415, %v4426
    %v4428 = vmul.f32 %v4416, %v4426
    %v4429 = vsel %vm4367, %v4361, 0.0
    %v4430 = vsel %vm4367, %v4363, 0.0
    %v4431 = vadd.f32 %v4429, %v4430
    %4432 = vadd.xlane.f32.xlu0 %v4431
    %v4433 = vpop.xlane.xlu0 %4432
    %v4434 = vmul.f32 %v4433, %v4373
    %v4435 = vsub.f32 %v4361, %v4434
    %v4436 = vsub.f32 %v4363, %v4434
    %v4437 = vmul.f32 %v4435, %v4435
    %v4438 = vmul.f32 %v4436, %v4436
    %v4439 = vsel %vm4367, %v4437, 0.0
    %v4440 = vsel %vm4367, %v4438, 0.0
    %v4441 = vadd.f32 %v4439, %v4440
    %4442 = vadd.xlane.f32.xlu0 %v4441
    %v4443 = vpop.xlane.xlu0 %4442
    %v4444 = vmul.f32 %v4443, %v4373
    %v4445 = vadd.f32 %v4444, 1e-05
    %v4446 = vrsqrt.pop %v4445
    %v4447 = vmul.f32 %v4435, %v4446
    %v4448 = vmul.f32 %v4436, %v4446
    %v4450 = vlaneseq
    %v4451 = vshrl.u32 %v4450, 7
    %v4452 = vsub.s32 0, %v4451
    %v4453 = vrot.slane %v1095, %v4452
    %v4454 = vlaneseq
    %v4455 = vshrl.u32 %v4454, 7
    %v4456 = vsub.s32 1, %v4455
    %v4457 = vrot.slane %v1095, %v4456
    %v4458 = vlaneseq
    %v4459 = vshrl.u32 %v4458, 7
    %v4460 = vsub.s32 2, %v4459
    %v4461 = vrot.slane %v1095, %v4460
    %v4462 = vlaneseq
    %v4463 = vshrl.u32 %v4462, 7
    %v4464 = vsub.s32 3, %v4463
    %v4465 = vrot.slane %v1095, %v4464
    %v4466 = vlaneseq
    %v4467 = vshrl.u32 %v4466, 7
    %v4468 = vsub.s32 4, %v4467
    %v4469 = vrot.slane %v1095, %v4468
    %v4470 = vlaneseq
    %v4471 = vshrl.u32 %v4470, 7
    %v4472 = vsub.s32 5, %v4471
    %v4473 = vrot.slane %v1095, %v4472
    %v4474 = vlaneseq
    %v4475 = vshrl.u32 %v4474, 7
    %v4476 = vsub.s32 6, %v4475
    %v4477 = vrot.slane %v1095, %v4476
    %v4478 = vlaneseq
    %v4479 = vshrl.u32 %v4478, 7
    %v4480 = vsub.s32 7, %v4479
    %v4481 = vrot.slane %v1095, %v4480
    %v4490 = vmul.f32 %v4387, %v4453
    %v4491 = vmul.f32 %v4388, %v4457
    %v4492 = vmul.f32 %v4407, %v4461
    %v4493 = vmul.f32 %v4408, %v4465
    %v4494 = vmul.f32 %v4427, %v4469
    %v4495 = vmul.f32 %v4428, %v4473
    %v4496 = vmul.f32 %v4447, %v4477
    %v4497 = vmul.f32 %v4448, %v4481
    %v4499 = vlaneseq
    %v4500 = vshrl.u32 %v4499, 7
    %v4501 = vsub.s32 0, %v4500
    %v4502 = vrot.slane %v1096, %v4501
    %v4503 = vlaneseq
    %v4504 = vshrl.u32 %v4503, 7
    %v4505 = vsub.s32 1, %v4504
    %v4506 = vrot.slane %v1096, %v4505
    %v4507 = vlaneseq
    %v4508 = vshrl.u32 %v4507, 7
    %v4509 = vsub.s32 2, %v4508
    %v4510 = vrot.slane %v1096, %v4509
    %v4511 = vlaneseq
    %v4512 = vshrl.u32 %v4511, 7
    %v4513 = vsub.s32 3, %v4512
    %v4514 = vrot.slane %v1096, %v4513
    %v4515 = vlaneseq
    %v4516 = vshrl.u32 %v4515, 7
    %v4517 = vsub.s32 4, %v4516
    %v4518 = vrot.slane %v1096, %v4517
    %v4519 = vlaneseq
    %v4520 = vshrl.u32 %v4519, 7
    %v4521 = vsub.s32 5, %v4520
    %v4522 = vrot.slane %v1096, %v4521
    %v4523 = vlaneseq
    %v4524 = vshrl.u32 %v4523, 7
    %v4525 = vsub.s32 6, %v4524
    %v4526 = vrot.slane %v1096, %v4525
    %v4527 = vlaneseq
    %v4528 = vshrl.u32 %v4527, 7
    %v4529 = vsub.s32 7, %v4528
    %v4530 = vrot.slane %v1096, %v4529
    %v4539 = vadd.f32 %v4490, %v4502
    %v4540 = vadd.f32 %v4491, %v4506
    %v4541 = vadd.f32 %v4492, %v4510
    %v4542 = vadd.f32 %v4493, %v4514
    %v4543 = vadd.f32 %v4494, %v4518
    %v4544 = vadd.f32 %v4495, %v4522
    %v4545 = vadd.f32 %v4496, %v4526
    %v4546 = vadd.f32 %v4497, %v4530
    %v4547 = vsub.f32 0.0, %v4539
    %v4548 = vsub.f32 0.0, %v4540
    %v4549 = vsub.f32 0.0, %v4541
    %v4550 = vsub.f32 0.0, %v4542
    %v4551 = vsub.f32 0.0, %v4543
    %v4552 = vsub.f32 0.0, %v4544
    %v4553 = vsub.f32 0.0, %v4545
    %v4554 = vsub.f32 0.0, %v4546
    %v4555 = vmul.f32 %v4547, 1.442695
    %v4556 = vpow.pop %v4555
    %v4557 = vmul.f32 %v4548, 1.442695
    %v4558 = vpow.pop %v4557
    %v4559 = vmul.f32 %v4549, 1.442695
    %v4560 = vpow.pop %v4559
    %v4561 = vmul.f32 %v4550, 1.442695
    %v4562 = vpow.pop %v4561
    %v4563 = vmul.f32 %v4551, 1.442695
    %v4564 = vpow.pop %v4563
    %v4565 = vmul.f32 %v4552, 1.442695
    %v4566 = vpow.pop %v4565
    %v4567 = vmul.f32 %v4553, 1.442695
    %v4568 = vpow.pop %v4567
    %v4569 = vmul.f32 %v4554, 1.442695
    %v4570 = vpow.pop %v4569
    %v4571 = vadd.f32 %v4556, 1.0
    %v4572 = vadd.f32 %v4558, 1.0
    %v4573 = vadd.f32 %v4560, 1.0
    %v4574 = vadd.f32 %v4562, 1.0
    %v4575 = vadd.f32 %v4564, 1.0
    %v4576 = vadd.f32 %v4566, 1.0
    %v4577 = vadd.f32 %v4568, 1.0
    %v4578 = vadd.f32 %v4570, 1.0
    %v4579 = vrcp.pop %v4571
    %v4580 = vrcp.pop %v4572
    %v4581 = vrcp.pop %v4573
    %v4582 = vrcp.pop %v4574
    %v4583 = vrcp.pop %v4575
    %v4584 = vrcp.pop %v4576
    %v4585 = vrcp.pop %v4577
    %v4586 = vrcp.pop %v4578
    %v4587 = vmul.f32 %v4539, %v4579
    %v4588 = vmul.f32 %v4540, %v4580
    %v4589 = vmul.f32 %v4541, %v4581
    %v4590 = vmul.f32 %v4542, %v4582
    %v4591 = vmul.f32 %v4543, %v4583
    %v4592 = vmul.f32 %v4544, %v4584
    %v4593 = vmul.f32 %v4545, %v4585
    %v4594 = vmul.f32 %v4546, %v4586
    %v4595 = vpack.c.bf16 %v4587, %v4587
    %v4596 = vpack.c.bf16 %v4588, %v4588
    %v4597 = vpack.c.bf16 %v4589, %v4589
    %v4598 = vpack.c.bf16 %v4590, %v4590
    %v4599 = vpack.c.bf16 %v4591, %v4591
    %v4600 = vpack.c.bf16 %v4592, %v4592
    %v4601 = vpack.c.bf16 %v4593, %v4593
    %v4602 = vpack.c.bf16 %v4594, %v4594
    %v5115 = vunpack.c.l.b16 %v583
    %v5116 = vunpack.c.h.b16 %v583
    %v5117 = vunpack.c.l.b16 %v584
    %v5118 = vunpack.c.h.b16 %v584
    %v5119 = vunpack.c.l.b16 %v585
    %v5120 = vunpack.c.h.b16 %v585
    %v5121 = vunpack.c.l.b16 %v586
    %v5122 = vunpack.c.h.b16 %v586
    %v5123 = vunpack.c.l.b16 %v587
    %v5124 = vunpack.c.h.b16 %v587
    %v5125 = vunpack.c.l.b16 %v588
    %v5126 = vunpack.c.h.b16 %v588
    %v5127 = vunpack.c.l.b16 %v589
    %v5128 = vunpack.c.h.b16 %v589
    %v5129 = vunpack.c.l.b16 %v590
    %v5130 = vunpack.c.h.b16 %v590
    %v5131 = vunpack.c.l.b16 %v591
    %v5132 = vunpack.c.h.b16 %v591
    %v5133 = vunpack.c.l.b16 %v592
    %v5134 = vunpack.c.h.b16 %v592
    %v5135 = vunpack.c.l.b16 %v593
    %v5136 = vunpack.c.h.b16 %v593
    %v5137 = vunpack.c.l.b16 %v594
    %v5138 = vunpack.c.h.b16 %v594
    %v5139 = vunpack.c.l.b16 %v595
    %v5140 = vunpack.c.h.b16 %v595
    %v5141 = vunpack.c.l.b16 %v596
    %v5142 = vunpack.c.h.b16 %v596
    %v5143 = vunpack.c.l.b16 %v597
    %v5144 = vunpack.c.h.b16 %v597
    %v5145 = vunpack.c.l.b16 %v598
    %v5146 = vunpack.c.h.b16 %v598
    %v5147 = vunpack.c.l.b16 %v599
    %v5148 = vunpack.c.h.b16 %v599
    %v5149 = vunpack.c.l.b16 %v600
    %v5150 = vunpack.c.h.b16 %v600
    %v5151 = vunpack.c.l.b16 %v601
    %v5152 = vunpack.c.h.b16 %v601
    %v5153 = vunpack.c.l.b16 %v602
    %v5154 = vunpack.c.h.b16 %v602
    %v5155 = vunpack.c.l.b16 %v603
    %v5156 = vunpack.c.h.b16 %v603
    %v5157 = vunpack.c.l.b16 %v604
    %v5158 = vunpack.c.h.b16 %v604
    %v5159 = vunpack.c.l.b16 %v605
    %v5160 = vunpack.c.h.b16 %v605
    %v5161 = vunpack.c.l.b16 %v606
    %v5162 = vunpack.c.h.b16 %v606
    %v5163 = vunpack.c.l.b16 %v607
    %v5164 = vunpack.c.h.b16 %v607
    %v5165 = vunpack.c.l.b16 %v608
    %v5166 = vunpack.c.h.b16 %v608
    %v5167 = vunpack.c.l.b16 %v609
    %v5168 = vunpack.c.h.b16 %v609
    %v5169 = vunpack.c.l.b16 %v610
    %v5170 = vunpack.c.h.b16 %v610
    %v5171 = vunpack.c.l.b16 %v611
    %v5172 = vunpack.c.h.b16 %v611
    %v5173 = vunpack.c.l.b16 %v612
    %v5174 = vunpack.c.h.b16 %v612
    %v5175 = vunpack.c.l.b16 %v613
    %v5176 = vunpack.c.h.b16 %v613
    %v5177 = vunpack.c.l.b16 %v614
    %v5178 = vunpack.c.h.b16 %v614
    %v5179 = vunpack.c.l.b16 %v615
    %v5180 = vunpack.c.h.b16 %v615
    %v5181 = vunpack.c.l.b16 %v616
    %v5182 = vunpack.c.h.b16 %v616
    %v5183 = vunpack.c.l.b16 %v617
    %v5184 = vunpack.c.h.b16 %v617
    %v5185 = vunpack.c.l.b16 %v618
    %v5186 = vunpack.c.h.b16 %v618
    %v5187 = vunpack.c.l.b16 %v619
    %v5188 = vunpack.c.h.b16 %v619
    %v5189 = vunpack.c.l.b16 %v620
    %v5190 = vunpack.c.h.b16 %v620
    %v5191 = vunpack.c.l.b16 %v621
    %v5192 = vunpack.c.h.b16 %v621
    %v5193 = vunpack.c.l.b16 %v622
    %v5194 = vunpack.c.h.b16 %v622
    %v5195 = vunpack.c.l.b16 %v623
    %v5196 = vunpack.c.h.b16 %v623
    %v5197 = vunpack.c.l.b16 %v624
    %v5198 = vunpack.c.h.b16 %v624
    %v5199 = vunpack.c.l.b16 %v625
    %v5200 = vunpack.c.h.b16 %v625
    %v5201 = vunpack.c.l.b16 %v626
    %v5202 = vunpack.c.h.b16 %v626
    %v5203 = vunpack.c.l.b16 %v627
    %v5204 = vunpack.c.h.b16 %v627
    %v5205 = vunpack.c.l.b16 %v628
    %v5206 = vunpack.c.h.b16 %v628
    %v5207 = vunpack.c.l.b16 %v629
    %v5208 = vunpack.c.h.b16 %v629
    %v5209 = vunpack.c.l.b16 %v630
    %v5210 = vunpack.c.h.b16 %v630
    %v5211 = vunpack.c.l.b16 %v631
    %v5212 = vunpack.c.h.b16 %v631
    %v5213 = vunpack.c.l.b16 %v632
    %v5214 = vunpack.c.h.b16 %v632
    %v5215 = vunpack.c.l.b16 %v633
    %v5216 = vunpack.c.h.b16 %v633
    %v5217 = vunpack.c.l.b16 %v634
    %v5218 = vunpack.c.h.b16 %v634
    %v5219 = vunpack.c.l.b16 %v635
    %v5220 = vunpack.c.h.b16 %v635
    %v5221 = vunpack.c.l.b16 %v636
    %v5222 = vunpack.c.h.b16 %v636
    %v5223 = vunpack.c.l.b16 %v637
    %v5224 = vunpack.c.h.b16 %v637
    %v5225 = vunpack.c.l.b16 %v638
    %v5226 = vunpack.c.h.b16 %v638
    %v5227 = vunpack.c.l.b16 %v639
    %v5228 = vunpack.c.h.b16 %v639
    %v5229 = vunpack.c.l.b16 %v640
    %v5230 = vunpack.c.h.b16 %v640
    %v5231 = vunpack.c.l.b16 %v641
    %v5232 = vunpack.c.h.b16 %v641
    %v5233 = vunpack.c.l.b16 %v642
    %v5234 = vunpack.c.h.b16 %v642
    %v5235 = vunpack.c.l.b16 %v643
    %v5236 = vunpack.c.h.b16 %v643
    %v5237 = vunpack.c.l.b16 %v644
    %v5238 = vunpack.c.h.b16 %v644
    %v5239 = vunpack.c.l.b16 %v645
    %v5240 = vunpack.c.h.b16 %v645
    %v5241 = vunpack.c.l.b16 %v646
    %v5242 = vunpack.c.h.b16 %v646
    %v5243 = vunpack.c.l.b16 %v647
    %v5244 = vunpack.c.h.b16 %v647
    %v5245 = vunpack.c.l.b16 %v648
    %v5246 = vunpack.c.h.b16 %v648
    %v5247 = vunpack.c.l.b16 %v649
    %v5248 = vunpack.c.h.b16 %v649
    %v5249 = vunpack.c.l.b16 %v650
    %v5250 = vunpack.c.h.b16 %v650
    %v5251 = vunpack.c.l.b16 %v651
    %v5252 = vunpack.c.h.b16 %v651
    %v5253 = vunpack.c.l.b16 %v652
    %v5254 = vunpack.c.h.b16 %v652
    %v5255 = vunpack.c.l.b16 %v653
    %v5256 = vunpack.c.h.b16 %v653
    %v5257 = vunpack.c.l.b16 %v654
    %v5258 = vunpack.c.h.b16 %v654
    %v5259 = vunpack.c.l.b16 %v655
    %v5260 = vunpack.c.h.b16 %v655
    %v5261 = vunpack.c.l.b16 %v656
    %v5262 = vunpack.c.h.b16 %v656
    %v5263 = vunpack.c.l.b16 %v657
    %v5264 = vunpack.c.h.b16 %v657
    %v5265 = vunpack.c.l.b16 %v658
    %v5266 = vunpack.c.h.b16 %v658
    %v5267 = vunpack.c.l.b16 %v659
    %v5268 = vunpack.c.h.b16 %v659
    %v5269 = vunpack.c.l.b16 %v660
    %v5270 = vunpack.c.h.b16 %v660
    %v5271 = vunpack.c.l.b16 %v661
    %v5272 = vunpack.c.h.b16 %v661
    %v5273 = vunpack.c.l.b16 %v662
    %v5274 = vunpack.c.h.b16 %v662
    %v5275 = vunpack.c.l.b16 %v663
    %v5276 = vunpack.c.h.b16 %v663
    %v5277 = vunpack.c.l.b16 %v664
    %v5278 = vunpack.c.h.b16 %v664
    %v5279 = vunpack.c.l.b16 %v665
    %v5280 = vunpack.c.h.b16 %v665
    %v5281 = vunpack.c.l.b16 %v666
    %v5282 = vunpack.c.h.b16 %v666
    %v5283 = vunpack.c.l.b16 %v667
    %v5284 = vunpack.c.h.b16 %v667
    %v5285 = vunpack.c.l.b16 %v668
    %v5286 = vunpack.c.h.b16 %v668
    %v5287 = vunpack.c.l.b16 %v669
    %v5288 = vunpack.c.h.b16 %v669
    %v5289 = vunpack.c.l.b16 %v670
    %v5290 = vunpack.c.h.b16 %v670
    %v5291 = vunpack.c.l.b16 %v671
    %v5292 = vunpack.c.h.b16 %v671
    %v5293 = vunpack.c.l.b16 %v672
    %v5294 = vunpack.c.h.b16 %v672
    %v5295 = vunpack.c.l.b16 %v673
    %v5296 = vunpack.c.h.b16 %v673
    %v5297 = vunpack.c.l.b16 %v674
    %v5298 = vunpack.c.h.b16 %v674
    %v5299 = vunpack.c.l.b16 %v675
    %v5300 = vunpack.c.h.b16 %v675
    %v5301 = vunpack.c.l.b16 %v676
    %v5302 = vunpack.c.h.b16 %v676
    %v5303 = vunpack.c.l.b16 %v677
    %v5304 = vunpack.c.h.b16 %v677
    %v5305 = vunpack.c.l.b16 %v678
    %v5306 = vunpack.c.h.b16 %v678
    %v5307 = vunpack.c.l.b16 %v679
    %v5308 = vunpack.c.h.b16 %v679
    %v5309 = vunpack.c.l.b16 %v680
    %v5310 = vunpack.c.h.b16 %v680
    %v5311 = vunpack.c.l.b16 %v681
    %v5312 = vunpack.c.h.b16 %v681
    %v5313 = vunpack.c.l.b16 %v682
    %v5314 = vunpack.c.h.b16 %v682
    %v5315 = vunpack.c.l.b16 %v683
    %v5316 = vunpack.c.h.b16 %v683
    %v5317 = vunpack.c.l.b16 %v684
    %v5318 = vunpack.c.h.b16 %v684
    %v5319 = vunpack.c.l.b16 %v685
    %v5320 = vunpack.c.h.b16 %v685
    %v5321 = vunpack.c.l.b16 %v686
    %v5322 = vunpack.c.h.b16 %v686
    %v5323 = vunpack.c.l.b16 %v687
    %v5324 = vunpack.c.h.b16 %v687
    %v5325 = vunpack.c.l.b16 %v688
    %v5326 = vunpack.c.h.b16 %v688
    %v5327 = vunpack.c.l.b16 %v689
    %v5328 = vunpack.c.h.b16 %v689
    %v5329 = vunpack.c.l.b16 %v690
    %v5330 = vunpack.c.h.b16 %v690
    %v5331 = vunpack.c.l.b16 %v691
    %v5332 = vunpack.c.h.b16 %v691
    %v5333 = vunpack.c.l.b16 %v692
    %v5334 = vunpack.c.h.b16 %v692
    %v5335 = vunpack.c.l.b16 %v693
    %v5336 = vunpack.c.h.b16 %v693
    %v5337 = vunpack.c.l.b16 %v694
    %v5338 = vunpack.c.h.b16 %v694
    %v5339 = vunpack.c.l.b16 %v695
    %v5340 = vunpack.c.h.b16 %v695
    %v5341 = vunpack.c.l.b16 %v696
    %v5342 = vunpack.c.h.b16 %v696
    %v5343 = vunpack.c.l.b16 %v697
    %v5344 = vunpack.c.h.b16 %v697
    %v5345 = vunpack.c.l.b16 %v698
    %v5346 = vunpack.c.h.b16 %v698
    %v5347 = vunpack.c.l.b16 %v699
    %v5348 = vunpack.c.h.b16 %v699
    %v5349 = vunpack.c.l.b16 %v700
    %v5350 = vunpack.c.h.b16 %v700
    %v5351 = vunpack.c.l.b16 %v701
    %v5352 = vunpack.c.h.b16 %v701
    %v5353 = vunpack.c.l.b16 %v702
    %v5354 = vunpack.c.h.b16 %v702
    %v5355 = vunpack.c.l.b16 %v703
    %v5356 = vunpack.c.h.b16 %v703
    %v5357 = vunpack.c.l.b16 %v704
    %v5358 = vunpack.c.h.b16 %v704
    %v5359 = vunpack.c.l.b16 %v705
    %v5360 = vunpack.c.h.b16 %v705
    %v5361 = vunpack.c.l.b16 %v706
    %v5362 = vunpack.c.h.b16 %v706
    %v5363 = vunpack.c.l.b16 %v707
    %v5364 = vunpack.c.h.b16 %v707
    %v5365 = vunpack.c.l.b16 %v708
    %v5366 = vunpack.c.h.b16 %v708
    %v5367 = vunpack.c.l.b16 %v709
    %v5368 = vunpack.c.h.b16 %v709
    %v5369 = vunpack.c.l.b16 %v710
    %v5370 = vunpack.c.h.b16 %v710
    %v5371 = vunpack.c.l.b16 %v711
    %v5372 = vunpack.c.h.b16 %v711
    %v5373 = vunpack.c.l.b16 %v712
    %v5374 = vunpack.c.h.b16 %v712
    %v5375 = vunpack.c.l.b16 %v713
    %v5376 = vunpack.c.h.b16 %v713
    %v5377 = vunpack.c.l.b16 %v714
    %v5378 = vunpack.c.h.b16 %v714
    %v5379 = vunpack.c.l.b16 %v715
    %v5380 = vunpack.c.h.b16 %v715
    %v5381 = vunpack.c.l.b16 %v716
    %v5382 = vunpack.c.h.b16 %v716
    %v5383 = vunpack.c.l.b16 %v717
    %v5384 = vunpack.c.h.b16 %v717
    %v5385 = vunpack.c.l.b16 %v718
    %v5386 = vunpack.c.h.b16 %v718
    %v5387 = vunpack.c.l.b16 %v719
    %v5388 = vunpack.c.h.b16 %v719
    %v5389 = vunpack.c.l.b16 %v720
    %v5390 = vunpack.c.h.b16 %v720
    %v5391 = vunpack.c.l.b16 %v721
    %v5392 = vunpack.c.h.b16 %v721
    %v5393 = vunpack.c.l.b16 %v722
    %v5394 = vunpack.c.h.b16 %v722
    %v5395 = vunpack.c.l.b16 %v723
    %v5396 = vunpack.c.h.b16 %v723
    %v5397 = vunpack.c.l.b16 %v724
    %v5398 = vunpack.c.h.b16 %v724
    %v5399 = vunpack.c.l.b16 %v725
    %v5400 = vunpack.c.h.b16 %v725
    %v5401 = vunpack.c.l.b16 %v726
    %v5402 = vunpack.c.h.b16 %v726
    %v5403 = vunpack.c.l.b16 %v727
    %v5404 = vunpack.c.h.b16 %v727
    %v5405 = vunpack.c.l.b16 %v728
    %v5406 = vunpack.c.h.b16 %v728
    %v5407 = vunpack.c.l.b16 %v729
    %v5408 = vunpack.c.h.b16 %v729
    %v5409 = vunpack.c.l.b16 %v730
    %v5410 = vunpack.c.h.b16 %v730
    %v5411 = vunpack.c.l.b16 %v731
    %v5412 = vunpack.c.h.b16 %v731
    %v5413 = vunpack.c.l.b16 %v732
    %v5414 = vunpack.c.h.b16 %v732
    %v5415 = vunpack.c.l.b16 %v733
    %v5416 = vunpack.c.h.b16 %v733
    %v5417 = vunpack.c.l.b16 %v734
    %v5418 = vunpack.c.h.b16 %v734
    %v5419 = vunpack.c.l.b16 %v735
    %v5420 = vunpack.c.h.b16 %v735
    %v5421 = vunpack.c.l.b16 %v736
    %v5422 = vunpack.c.h.b16 %v736
    %v5423 = vunpack.c.l.b16 %v737
    %v5424 = vunpack.c.h.b16 %v737
    %v5425 = vunpack.c.l.b16 %v738
    %v5426 = vunpack.c.h.b16 %v738
    %v5427 = vunpack.c.l.b16 %v739
    %v5428 = vunpack.c.h.b16 %v739
    %v5429 = vunpack.c.l.b16 %v740
    %v5430 = vunpack.c.h.b16 %v740
    %v5431 = vunpack.c.l.b16 %v741
    %v5432 = vunpack.c.h.b16 %v741
    %v5433 = vunpack.c.l.b16 %v742
    %v5434 = vunpack.c.h.b16 %v742
    %v5435 = vunpack.c.l.b16 %v743
    %v5436 = vunpack.c.h.b16 %v743
    %v5437 = vunpack.c.l.b16 %v744
    %v5438 = vunpack.c.h.b16 %v744
    %v5439 = vunpack.c.l.b16 %v745
    %v5440 = vunpack.c.h.b16 %v745
    %v5441 = vunpack.c.l.b16 %v746
    %v5442 = vunpack.c.h.b16 %v746
    %v5443 = vunpack.c.l.b16 %v747
    %v5444 = vunpack.c.h.b16 %v747
    %v5445 = vunpack.c.l.b16 %v748
    %v5446 = vunpack.c.h.b16 %v748
    %v5447 = vunpack.c.l.b16 %v749
    %v5448 = vunpack.c.h.b16 %v749
    %v5449 = vunpack.c.l.b16 %v750
    %v5450 = vunpack.c.h.b16 %v750
    %v5451 = vunpack.c.l.b16 %v751
    %v5452 = vunpack.c.h.b16 %v751
    %v5453 = vunpack.c.l.b16 %v752
    %v5454 = vunpack.c.h.b16 %v752
    %v5455 = vunpack.c.l.b16 %v753
    %v5456 = vunpack.c.h.b16 %v753
    %v5457 = vunpack.c.l.b16 %v754
    %v5458 = vunpack.c.h.b16 %v754
    %v5459 = vunpack.c.l.b16 %v755
    %v5460 = vunpack.c.h.b16 %v755
    %v5461 = vunpack.c.l.b16 %v756
    %v5462 = vunpack.c.h.b16 %v756
    %v5463 = vunpack.c.l.b16 %v757
    %v5464 = vunpack.c.h.b16 %v757
    %v5465 = vunpack.c.l.b16 %v758
    %v5466 = vunpack.c.h.b16 %v758
    %v5467 = vunpack.c.l.b16 %v759
    %v5468 = vunpack.c.h.b16 %v759
    %v5469 = vunpack.c.l.b16 %v760
    %v5470 = vunpack.c.h.b16 %v760
    %v5471 = vunpack.c.l.b16 %v761
    %v5472 = vunpack.c.h.b16 %v761
    %v5473 = vunpack.c.l.b16 %v762
    %v5474 = vunpack.c.h.b16 %v762
    %v5475 = vunpack.c.l.b16 %v763
    %v5476 = vunpack.c.h.b16 %v763
    %v5477 = vunpack.c.l.b16 %v764
    %v5478 = vunpack.c.h.b16 %v764
    %v5479 = vunpack.c.l.b16 %v765
    %v5480 = vunpack.c.h.b16 %v765
    %v5481 = vunpack.c.l.b16 %v766
    %v5482 = vunpack.c.h.b16 %v766
    %v5483 = vunpack.c.l.b16 %v767
    %v5484 = vunpack.c.h.b16 %v767
    %v5485 = vunpack.c.l.b16 %v768
    %v5486 = vunpack.c.h.b16 %v768
    %v5487 = vunpack.c.l.b16 %v769
    %v5488 = vunpack.c.h.b16 %v769
    %v5489 = vunpack.c.l.b16 %v770
    %v5490 = vunpack.c.h.b16 %v770
    %v5491 = vunpack.c.l.b16 %v771
    %v5492 = vunpack.c.h.b16 %v771
    %v5493 = vunpack.c.l.b16 %v772
    %v5494 = vunpack.c.h.b16 %v772
    %v5495 = vunpack.c.l.b16 %v773
    %v5496 = vunpack.c.h.b16 %v773
    %v5497 = vunpack.c.l.b16 %v774
    %v5498 = vunpack.c.h.b16 %v774
    %v5499 = vunpack.c.l.b16 %v775
    %v5500 = vunpack.c.h.b16 %v775
    %v5501 = vunpack.c.l.b16 %v776
    %v5502 = vunpack.c.h.b16 %v776
    %v5503 = vunpack.c.l.b16 %v777
    %v5504 = vunpack.c.h.b16 %v777
    %v5505 = vunpack.c.l.b16 %v778
    %v5506 = vunpack.c.h.b16 %v778
    %v5507 = vunpack.c.l.b16 %v779
    %v5508 = vunpack.c.h.b16 %v779
    %v5509 = vunpack.c.l.b16 %v780
    %v5510 = vunpack.c.h.b16 %v780
    %v5511 = vunpack.c.l.b16 %v781
    %v5512 = vunpack.c.h.b16 %v781
    %v5513 = vunpack.c.l.b16 %v782
    %v5514 = vunpack.c.h.b16 %v782
    %v5515 = vunpack.c.l.b16 %v783
    %v5516 = vunpack.c.h.b16 %v783
    %v5517 = vunpack.c.l.b16 %v784
    %v5518 = vunpack.c.h.b16 %v784
    %v5519 = vunpack.c.l.b16 %v785
    %v5520 = vunpack.c.h.b16 %v785
    %v5521 = vunpack.c.l.b16 %v786
    %v5522 = vunpack.c.h.b16 %v786
    %v5523 = vunpack.c.l.b16 %v787
    %v5524 = vunpack.c.h.b16 %v787
    %v5525 = vunpack.c.l.b16 %v788
    %v5526 = vunpack.c.h.b16 %v788
    %v5527 = vunpack.c.l.b16 %v789
    %v5528 = vunpack.c.h.b16 %v789
    %v5529 = vunpack.c.l.b16 %v790
    %v5530 = vunpack.c.h.b16 %v790
    %v5531 = vunpack.c.l.b16 %v791
    %v5532 = vunpack.c.h.b16 %v791
    %v5533 = vunpack.c.l.b16 %v792
    %v5534 = vunpack.c.h.b16 %v792
    %v5535 = vunpack.c.l.b16 %v793
    %v5536 = vunpack.c.h.b16 %v793
    %v5537 = vunpack.c.l.b16 %v794
    %v5538 = vunpack.c.h.b16 %v794
    %v5539 = vunpack.c.l.b16 %v795
    %v5540 = vunpack.c.h.b16 %v795
    %v5541 = vunpack.c.l.b16 %v796
    %v5542 = vunpack.c.h.b16 %v796
    %v5543 = vunpack.c.l.b16 %v797
    %v5544 = vunpack.c.h.b16 %v797
    %v5545 = vunpack.c.l.b16 %v798
    %v5546 = vunpack.c.h.b16 %v798
    %v5547 = vunpack.c.l.b16 %v799
    %v5548 = vunpack.c.h.b16 %v799
    %v5549 = vunpack.c.l.b16 %v800
    %v5550 = vunpack.c.h.b16 %v800
    %v5551 = vunpack.c.l.b16 %v801
    %v5552 = vunpack.c.h.b16 %v801
    %v5553 = vunpack.c.l.b16 %v802
    %v5554 = vunpack.c.h.b16 %v802
    %v5555 = vunpack.c.l.b16 %v803
    %v5556 = vunpack.c.h.b16 %v803
    %v5557 = vunpack.c.l.b16 %v804
    %v5558 = vunpack.c.h.b16 %v804
    %v5559 = vunpack.c.l.b16 %v805
    %v5560 = vunpack.c.h.b16 %v805
    %v5561 = vunpack.c.l.b16 %v806
    %v5562 = vunpack.c.h.b16 %v806
    %v5563 = vunpack.c.l.b16 %v807
    %v5564 = vunpack.c.h.b16 %v807
    %v5565 = vunpack.c.l.b16 %v808
    %v5566 = vunpack.c.h.b16 %v808
    %v5567 = vunpack.c.l.b16 %v809
    %v5568 = vunpack.c.h.b16 %v809
    %v5569 = vunpack.c.l.b16 %v810
    %v5570 = vunpack.c.h.b16 %v810
    %v5571 = vunpack.c.l.b16 %v811
    %v5572 = vunpack.c.h.b16 %v811
    %v5573 = vunpack.c.l.b16 %v812
    %v5574 = vunpack.c.h.b16 %v812
    %v5575 = vunpack.c.l.b16 %v813
    %v5576 = vunpack.c.h.b16 %v813
    %v5577 = vunpack.c.l.b16 %v814
    %v5578 = vunpack.c.h.b16 %v814
    %v5579 = vunpack.c.l.b16 %v815
    %v5580 = vunpack.c.h.b16 %v815
    %v5581 = vunpack.c.l.b16 %v816
    %v5582 = vunpack.c.h.b16 %v816
    %v5583 = vunpack.c.l.b16 %v817
    %v5584 = vunpack.c.h.b16 %v817
    %v5585 = vunpack.c.l.b16 %v818
    %v5586 = vunpack.c.h.b16 %v818
    %v5587 = vunpack.c.l.b16 %v819
    %v5588 = vunpack.c.h.b16 %v819
    %v5589 = vunpack.c.l.b16 %v820
    %v5590 = vunpack.c.h.b16 %v820
    %v5591 = vunpack.c.l.b16 %v821
    %v5592 = vunpack.c.h.b16 %v821
    %v5593 = vunpack.c.l.b16 %v822
    %v5594 = vunpack.c.h.b16 %v822
    %v5595 = vunpack.c.l.b16 %v823
    %v5596 = vunpack.c.h.b16 %v823
    %v5597 = vunpack.c.l.b16 %v824
    %v5598 = vunpack.c.h.b16 %v824
    %v5599 = vunpack.c.l.b16 %v825
    %v5600 = vunpack.c.h.b16 %v825
    %v5601 = vunpack.c.l.b16 %v826
    %v5602 = vunpack.c.h.b16 %v826
    %v5603 = vunpack.c.l.b16 %v827
    %v5604 = vunpack.c.h.b16 %v827
    %v5605 = vunpack.c.l.b16 %v828
    %v5606 = vunpack.c.h.b16 %v828
    %v5607 = vunpack.c.l.b16 %v829
    %v5608 = vunpack.c.h.b16 %v829
    %v5609 = vunpack.c.l.b16 %v830
    %v5610 = vunpack.c.h.b16 %v830
    %v5611 = vunpack.c.l.b16 %v831
    %v5612 = vunpack.c.h.b16 %v831
    %v5613 = vunpack.c.l.b16 %v832
    %v5614 = vunpack.c.h.b16 %v832
    %v5615 = vunpack.c.l.b16 %v833
    %v5616 = vunpack.c.h.b16 %v833
    %v5617 = vunpack.c.l.b16 %v834
    %v5618 = vunpack.c.h.b16 %v834
    %v5619 = vunpack.c.l.b16 %v835
    %v5620 = vunpack.c.h.b16 %v835
    %v5621 = vunpack.c.l.b16 %v836
    %v5622 = vunpack.c.h.b16 %v836
    %v5623 = vunpack.c.l.b16 %v837
    %v5624 = vunpack.c.h.b16 %v837
    %v5625 = vunpack.c.l.b16 %v838
    %v5626 = vunpack.c.h.b16 %v838
    %v5627 = vunpack.c.l.b16 %v839
    %v5628 = vunpack.c.h.b16 %v839
    %v5629 = vunpack.c.l.b16 %v840
    %v5630 = vunpack.c.h.b16 %v840
    %v5631 = vunpack.c.l.b16 %v841
    %v5632 = vunpack.c.h.b16 %v841
    %v5633 = vunpack.c.l.b16 %v842
    %v5634 = vunpack.c.h.b16 %v842
    %v5635 = vunpack.c.l.b16 %v843
    %v5636 = vunpack.c.h.b16 %v843
    %v5637 = vunpack.c.l.b16 %v844
    %v5638 = vunpack.c.h.b16 %v844
    %v5639 = vunpack.c.l.b16 %v845
    %v5640 = vunpack.c.h.b16 %v845
    %v5641 = vunpack.c.l.b16 %v846
    %v5642 = vunpack.c.h.b16 %v846
    %v5643 = vunpack.c.l.b16 %v847
    %v5644 = vunpack.c.h.b16 %v847
    %v5645 = vunpack.c.l.b16 %v848
    %v5646 = vunpack.c.h.b16 %v848
    %v5647 = vunpack.c.l.b16 %v849
    %v5648 = vunpack.c.h.b16 %v849
    %v5649 = vunpack.c.l.b16 %v850
    %v5650 = vunpack.c.h.b16 %v850
    %v5651 = vunpack.c.l.b16 %v851
    %v5652 = vunpack.c.h.b16 %v851
    %v5653 = vunpack.c.l.b16 %v852
    %v5654 = vunpack.c.h.b16 %v852
    %v5655 = vunpack.c.l.b16 %v853
    %v5656 = vunpack.c.h.b16 %v853
    %v5657 = vunpack.c.l.b16 %v854
    %v5658 = vunpack.c.h.b16 %v854
    %v5659 = vunpack.c.l.b16 %v855
    %v5660 = vunpack.c.h.b16 %v855
    %v5661 = vunpack.c.l.b16 %v856
    %v5662 = vunpack.c.h.b16 %v856
    %v5663 = vunpack.c.l.b16 %v857
    %v5664 = vunpack.c.h.b16 %v857
    %v5665 = vunpack.c.l.b16 %v858
    %v5666 = vunpack.c.h.b16 %v858
    %v5667 = vunpack.c.l.b16 %v859
    %v5668 = vunpack.c.h.b16 %v859
    %v5669 = vunpack.c.l.b16 %v860
    %v5670 = vunpack.c.h.b16 %v860
    %v5671 = vunpack.c.l.b16 %v861
    %v5672 = vunpack.c.h.b16 %v861
    %v5673 = vunpack.c.l.b16 %v862
    %v5674 = vunpack.c.h.b16 %v862
    %v5675 = vunpack.c.l.b16 %v863
    %v5676 = vunpack.c.h.b16 %v863
    %v5677 = vunpack.c.l.b16 %v864
    %v5678 = vunpack.c.h.b16 %v864
    %v5679 = vunpack.c.l.b16 %v865
    %v5680 = vunpack.c.h.b16 %v865
    %v5681 = vunpack.c.l.b16 %v866
    %v5682 = vunpack.c.h.b16 %v866
    %v5683 = vunpack.c.l.b16 %v867
    %v5684 = vunpack.c.h.b16 %v867
    %v5685 = vunpack.c.l.b16 %v868
    %v5686 = vunpack.c.h.b16 %v868
    %v5687 = vunpack.c.l.b16 %v869
    %v5688 = vunpack.c.h.b16 %v869
    %v5689 = vunpack.c.l.b16 %v870
    %v5690 = vunpack.c.h.b16 %v870
    %v5691 = vunpack.c.l.b16 %v871
    %v5692 = vunpack.c.h.b16 %v871
    %v5693 = vunpack.c.l.b16 %v872
    %v5694 = vunpack.c.h.b16 %v872
    %v5695 = vunpack.c.l.b16 %v873
    %v5696 = vunpack.c.h.b16 %v873
    %v5697 = vunpack.c.l.b16 %v874
    %v5698 = vunpack.c.h.b16 %v874
    %v5699 = vunpack.c.l.b16 %v875
    %v5700 = vunpack.c.h.b16 %v875
    %v5701 = vunpack.c.l.b16 %v876
    %v5702 = vunpack.c.h.b16 %v876
    %v5703 = vunpack.c.l.b16 %v877
    %v5704 = vunpack.c.h.b16 %v877
    %v5705 = vunpack.c.l.b16 %v878
    %v5706 = vunpack.c.h.b16 %v878
    %v5707 = vunpack.c.l.b16 %v879
    %v5708 = vunpack.c.h.b16 %v879
    %v5709 = vunpack.c.l.b16 %v880
    %v5710 = vunpack.c.h.b16 %v880
    %v5711 = vunpack.c.l.b16 %v881
    %v5712 = vunpack.c.h.b16 %v881
    %v5713 = vunpack.c.l.b16 %v882
    %v5714 = vunpack.c.h.b16 %v882
    %v5715 = vunpack.c.l.b16 %v883
    %v5716 = vunpack.c.h.b16 %v883
    %v5717 = vunpack.c.l.b16 %v884
    %v5718 = vunpack.c.h.b16 %v884
    %v5719 = vunpack.c.l.b16 %v885
    %v5720 = vunpack.c.h.b16 %v885
    %v5721 = vunpack.c.l.b16 %v886
    %v5722 = vunpack.c.h.b16 %v886
    %v5723 = vunpack.c.l.b16 %v887
    %v5724 = vunpack.c.h.b16 %v887
    %v5725 = vunpack.c.l.b16 %v888
    %v5726 = vunpack.c.h.b16 %v888
    %v5727 = vunpack.c.l.b16 %v889
    %v5728 = vunpack.c.h.b16 %v889
    %v5729 = vunpack.c.l.b16 %v890
    %v5730 = vunpack.c.h.b16 %v890
    %v5731 = vunpack.c.l.b16 %v891
    %v5732 = vunpack.c.h.b16 %v891
    %v5733 = vunpack.c.l.b16 %v892
    %v5734 = vunpack.c.h.b16 %v892
    %v5735 = vunpack.c.l.b16 %v893
    %v5736 = vunpack.c.h.b16 %v893
    %v5737 = vunpack.c.l.b16 %v894
    %v5738 = vunpack.c.h.b16 %v894
    %v5739 = vunpack.c.l.b16 %v895
    %v5740 = vunpack.c.h.b16 %v895
    %v5741 = vunpack.c.l.b16 %v896
    %v5742 = vunpack.c.h.b16 %v896
    %v5743 = vunpack.c.l.b16 %v897
    %v5744 = vunpack.c.h.b16 %v897
    %v5745 = vunpack.c.l.b16 %v898
    %v5746 = vunpack.c.h.b16 %v898
    %v5747 = vunpack.c.l.b16 %v899
    %v5748 = vunpack.c.h.b16 %v899
    %v5749 = vunpack.c.l.b16 %v900
    %v5750 = vunpack.c.h.b16 %v900
    %v5751 = vunpack.c.l.b16 %v901
    %v5752 = vunpack.c.h.b16 %v901
    %v5753 = vunpack.c.l.b16 %v902
    %v5754 = vunpack.c.h.b16 %v902
    %v5755 = vunpack.c.l.b16 %v903
    %v5756 = vunpack.c.h.b16 %v903
    %v5757 = vunpack.c.l.b16 %v904
    %v5758 = vunpack.c.h.b16 %v904
    %v5759 = vunpack.c.l.b16 %v905
    %v5760 = vunpack.c.h.b16 %v905
    %v5761 = vunpack.c.l.b16 %v906
    %v5762 = vunpack.c.h.b16 %v906
    %v5763 = vunpack.c.l.b16 %v907
    %v5764 = vunpack.c.h.b16 %v907
    %v5765 = vunpack.c.l.b16 %v908
    %v5766 = vunpack.c.h.b16 %v908
    %v5767 = vunpack.c.l.b16 %v909
    %v5768 = vunpack.c.h.b16 %v909
    %v5769 = vunpack.c.l.b16 %v910
    %v5770 = vunpack.c.h.b16 %v910
    %v5771 = vunpack.c.l.b16 %v911
    %v5772 = vunpack.c.h.b16 %v911
    %v5773 = vunpack.c.l.b16 %v912
    %v5774 = vunpack.c.h.b16 %v912
    %v5775 = vunpack.c.l.b16 %v913
    %v5776 = vunpack.c.h.b16 %v913
    %v5777 = vunpack.c.l.b16 %v914
    %v5778 = vunpack.c.h.b16 %v914
    %v5779 = vunpack.c.l.b16 %v915
    %v5780 = vunpack.c.h.b16 %v915
    %v5781 = vunpack.c.l.b16 %v916
    %v5782 = vunpack.c.h.b16 %v916
    %v5783 = vunpack.c.l.b16 %v917
    %v5784 = vunpack.c.h.b16 %v917
    %v5785 = vunpack.c.l.b16 %v918
    %v5786 = vunpack.c.h.b16 %v918
    %v5787 = vunpack.c.l.b16 %v919
    %v5788 = vunpack.c.h.b16 %v919
    %v5789 = vunpack.c.l.b16 %v920
    %v5790 = vunpack.c.h.b16 %v920
    %v5791 = vunpack.c.l.b16 %v921
    %v5792 = vunpack.c.h.b16 %v921
    %v5793 = vunpack.c.l.b16 %v922
    %v5794 = vunpack.c.h.b16 %v922
    %v5795 = vunpack.c.l.b16 %v923
    %v5796 = vunpack.c.h.b16 %v923
    %v5797 = vunpack.c.l.b16 %v924
    %v5798 = vunpack.c.h.b16 %v924
    %v5799 = vunpack.c.l.b16 %v925
    %v5800 = vunpack.c.h.b16 %v925
    %v5801 = vunpack.c.l.b16 %v926
    %v5802 = vunpack.c.h.b16 %v926
    %v5803 = vunpack.c.l.b16 %v927
    %v5804 = vunpack.c.h.b16 %v927
    %v5805 = vunpack.c.l.b16 %v928
    %v5806 = vunpack.c.h.b16 %v928
    %v5807 = vunpack.c.l.b16 %v929
    %v5808 = vunpack.c.h.b16 %v929
    %v5809 = vunpack.c.l.b16 %v930
    %v5810 = vunpack.c.h.b16 %v930
    %v5811 = vunpack.c.l.b16 %v931
    %v5812 = vunpack.c.h.b16 %v931
    %v5813 = vunpack.c.l.b16 %v932
    %v5814 = vunpack.c.h.b16 %v932
    %v5815 = vunpack.c.l.b16 %v933
    %v5816 = vunpack.c.h.b16 %v933
    %v5817 = vunpack.c.l.b16 %v934
    %v5818 = vunpack.c.h.b16 %v934
    %v5819 = vunpack.c.l.b16 %v935
    %v5820 = vunpack.c.h.b16 %v935
    %v5821 = vunpack.c.l.b16 %v936
    %v5822 = vunpack.c.h.b16 %v936
    %v5823 = vunpack.c.l.b16 %v937
    %v5824 = vunpack.c.h.b16 %v937
    %v5825 = vunpack.c.l.b16 %v938
    %v5826 = vunpack.c.h.b16 %v938
    %v5827 = vunpack.c.l.b16 %v939
    %v5828 = vunpack.c.h.b16 %v939
    %v5829 = vunpack.c.l.b16 %v940
    %v5830 = vunpack.c.h.b16 %v940
    %v5831 = vunpack.c.l.b16 %v941
    %v5832 = vunpack.c.h.b16 %v941
    %v5833 = vunpack.c.l.b16 %v942
    %v5834 = vunpack.c.h.b16 %v942
    %v5835 = vunpack.c.l.b16 %v943
    %v5836 = vunpack.c.h.b16 %v943
    %v5837 = vunpack.c.l.b16 %v944
    %v5838 = vunpack.c.h.b16 %v944
    %v5839 = vunpack.c.l.b16 %v945
    %v5840 = vunpack.c.h.b16 %v945
    %v5841 = vunpack.c.l.b16 %v946
    %v5842 = vunpack.c.h.b16 %v946
    %v5843 = vunpack.c.l.b16 %v947
    %v5844 = vunpack.c.h.b16 %v947
    %v5845 = vunpack.c.l.b16 %v948
    %v5846 = vunpack.c.h.b16 %v948
    %v5847 = vunpack.c.l.b16 %v949
    %v5848 = vunpack.c.h.b16 %v949
    %v5849 = vunpack.c.l.b16 %v950
    %v5850 = vunpack.c.h.b16 %v950
    %v5851 = vunpack.c.l.b16 %v951
    %v5852 = vunpack.c.h.b16 %v951
    %v5853 = vunpack.c.l.b16 %v952
    %v5854 = vunpack.c.h.b16 %v952
    %v5855 = vunpack.c.l.b16 %v953
    %v5856 = vunpack.c.h.b16 %v953
    %v5857 = vunpack.c.l.b16 %v954
    %v5858 = vunpack.c.h.b16 %v954
    %v5859 = vunpack.c.l.b16 %v955
    %v5860 = vunpack.c.h.b16 %v955
    %v5861 = vunpack.c.l.b16 %v956
    %v5862 = vunpack.c.h.b16 %v956
    %v5863 = vunpack.c.l.b16 %v957
    %v5864 = vunpack.c.h.b16 %v957
    %v5865 = vunpack.c.l.b16 %v958
    %v5866 = vunpack.c.h.b16 %v958
    %v5867 = vunpack.c.l.b16 %v959
    %v5868 = vunpack.c.h.b16 %v959
    %v5869 = vunpack.c.l.b16 %v960
    %v5870 = vunpack.c.h.b16 %v960
    %v5871 = vunpack.c.l.b16 %v961
    %v5872 = vunpack.c.h.b16 %v961
    %v5873 = vunpack.c.l.b16 %v962
    %v5874 = vunpack.c.h.b16 %v962
    %v5875 = vunpack.c.l.b16 %v963
    %v5876 = vunpack.c.h.b16 %v963
    %v5877 = vunpack.c.l.b16 %v964
    %v5878 = vunpack.c.h.b16 %v964
    %v5879 = vunpack.c.l.b16 %v965
    %v5880 = vunpack.c.h.b16 %v965
    %v5881 = vunpack.c.l.b16 %v966
    %v5882 = vunpack.c.h.b16 %v966
    %v5883 = vunpack.c.l.b16 %v967
    %v5884 = vunpack.c.h.b16 %v967
    %v5885 = vunpack.c.l.b16 %v968
    %v5886 = vunpack.c.h.b16 %v968
    %v5887 = vunpack.c.l.b16 %v969
    %v5888 = vunpack.c.h.b16 %v969
    %v5889 = vunpack.c.l.b16 %v970
    %v5890 = vunpack.c.h.b16 %v970
    %v5891 = vunpack.c.l.b16 %v971
    %v5892 = vunpack.c.h.b16 %v971
    %v5893 = vunpack.c.l.b16 %v972
    %v5894 = vunpack.c.h.b16 %v972
    %v5895 = vunpack.c.l.b16 %v973
    %v5896 = vunpack.c.h.b16 %v973
    %v5897 = vunpack.c.l.b16 %v974
    %v5898 = vunpack.c.h.b16 %v974
    %v5899 = vunpack.c.l.b16 %v975
    %v5900 = vunpack.c.h.b16 %v975
    %v5901 = vunpack.c.l.b16 %v976
    %v5902 = vunpack.c.h.b16 %v976
    %v5903 = vunpack.c.l.b16 %v977
    %v5904 = vunpack.c.h.b16 %v977
    %v5905 = vunpack.c.l.b16 %v978
    %v5906 = vunpack.c.h.b16 %v978
    %v5907 = vunpack.c.l.b16 %v979
    %v5908 = vunpack.c.h.b16 %v979
    %v5909 = vunpack.c.l.b16 %v980
    %v5910 = vunpack.c.h.b16 %v980
    %v5911 = vunpack.c.l.b16 %v981
    %v5912 = vunpack.c.h.b16 %v981
    %v5913 = vunpack.c.l.b16 %v982
    %v5914 = vunpack.c.h.b16 %v982
    %v5915 = vunpack.c.l.b16 %v983
    %v5916 = vunpack.c.h.b16 %v983
    %v5917 = vunpack.c.l.b16 %v984
    %v5918 = vunpack.c.h.b16 %v984
    %v5919 = vunpack.c.l.b16 %v985
    %v5920 = vunpack.c.h.b16 %v985
    %v5921 = vunpack.c.l.b16 %v986
    %v5922 = vunpack.c.h.b16 %v986
    %v5923 = vunpack.c.l.b16 %v987
    %v5924 = vunpack.c.h.b16 %v987
    %v5925 = vunpack.c.l.b16 %v988
    %v5926 = vunpack.c.h.b16 %v988
    %v5927 = vunpack.c.l.b16 %v989
    %v5928 = vunpack.c.h.b16 %v989
    %v5929 = vunpack.c.l.b16 %v990
    %v5930 = vunpack.c.h.b16 %v990
    %v5931 = vunpack.c.l.b16 %v991
    %v5932 = vunpack.c.h.b16 %v991
    %v5933 = vunpack.c.l.b16 %v992
    %v5934 = vunpack.c.h.b16 %v992
    %v5935 = vunpack.c.l.b16 %v993
    %v5936 = vunpack.c.h.b16 %v993
    %v5937 = vunpack.c.l.b16 %v994
    %v5938 = vunpack.c.h.b16 %v994
    %v5939 = vunpack.c.l.b16 %v995
    %v5940 = vunpack.c.h.b16 %v995
    %v5941 = vunpack.c.l.b16 %v996
    %v5942 = vunpack.c.h.b16 %v996
    %v5943 = vunpack.c.l.b16 %v997
    %v5944 = vunpack.c.h.b16 %v997
    %v5945 = vunpack.c.l.b16 %v998
    %v5946 = vunpack.c.h.b16 %v998
    %v5947 = vunpack.c.l.b16 %v999
    %v5948 = vunpack.c.h.b16 %v999
    %v5949 = vunpack.c.l.b16 %v1000
    %v5950 = vunpack.c.h.b16 %v1000
    %v5951 = vunpack.c.l.b16 %v1001
    %v5952 = vunpack.c.h.b16 %v1001
    %v5953 = vunpack.c.l.b16 %v1002
    %v5954 = vunpack.c.h.b16 %v1002
    %v5955 = vunpack.c.l.b16 %v1003
    %v5956 = vunpack.c.h.b16 %v1003
    %v5957 = vunpack.c.l.b16 %v1004
    %v5958 = vunpack.c.h.b16 %v1004
    %v5959 = vunpack.c.l.b16 %v1005
    %v5960 = vunpack.c.h.b16 %v1005
    %v5961 = vunpack.c.l.b16 %v1006
    %v5962 = vunpack.c.h.b16 %v1006
    %v5963 = vunpack.c.l.b16 %v1007
    %v5964 = vunpack.c.h.b16 %v1007
    %v5965 = vunpack.c.l.b16 %v1008
    %v5966 = vunpack.c.h.b16 %v1008
    %v5967 = vunpack.c.l.b16 %v1009
    %v5968 = vunpack.c.h.b16 %v1009
    %v5969 = vunpack.c.l.b16 %v1010
    %v5970 = vunpack.c.h.b16 %v1010
    %v5971 = vunpack.c.l.b16 %v1011
    %v5972 = vunpack.c.h.b16 %v1011
    %v5973 = vunpack.c.l.b16 %v1012
    %v5974 = vunpack.c.h.b16 %v1012
    %v5975 = vunpack.c.l.b16 %v1013
    %v5976 = vunpack.c.h.b16 %v1013
    %v5977 = vunpack.c.l.b16 %v1014
    %v5978 = vunpack.c.h.b16 %v1014
    %v5979 = vunpack.c.l.b16 %v1015
    %v5980 = vunpack.c.h.b16 %v1015
    %v5981 = vunpack.c.l.b16 %v1016
    %v5982 = vunpack.c.h.b16 %v1016
    %v5983 = vunpack.c.l.b16 %v1017
    %v5984 = vunpack.c.h.b16 %v1017
    %v5985 = vunpack.c.l.b16 %v1018
    %v5986 = vunpack.c.h.b16 %v1018
    %v5987 = vunpack.c.l.b16 %v1019
    %v5988 = vunpack.c.h.b16 %v1019
    %v5989 = vunpack.c.l.b16 %v1020
    %v5990 = vunpack.c.h.b16 %v1020
    %v5991 = vunpack.c.l.b16 %v1021
    %v5992 = vunpack.c.h.b16 %v1021
    %v5993 = vunpack.c.l.b16 %v1022
    %v5994 = vunpack.c.h.b16 %v1022
    %v5995 = vunpack.c.l.b16 %v1023
    %v5996 = vunpack.c.h.b16 %v1023
    %v5997 = vunpack.c.l.b16 %v1024
    %v5998 = vunpack.c.h.b16 %v1024
    %v5999 = vunpack.c.l.b16 %v1025
    %v6000 = vunpack.c.h.b16 %v1025
    %v6001 = vunpack.c.l.b16 %v1026
    %v6002 = vunpack.c.h.b16 %v1026
    %v6003 = vunpack.c.l.b16 %v1027
    %v6004 = vunpack.c.h.b16 %v1027
    %v6005 = vunpack.c.l.b16 %v1028
    %v6006 = vunpack.c.h.b16 %v1028
    %v6007 = vunpack.c.l.b16 %v1029
    %v6008 = vunpack.c.h.b16 %v1029
    %v6009 = vunpack.c.l.b16 %v1030
    %v6010 = vunpack.c.h.b16 %v1030
    %v6011 = vunpack.c.l.b16 %v1031
    %v6012 = vunpack.c.h.b16 %v1031
    %v6013 = vunpack.c.l.b16 %v1032
    %v6014 = vunpack.c.h.b16 %v1032
    %v6015 = vunpack.c.l.b16 %v1033
    %v6016 = vunpack.c.h.b16 %v1033
    %v6017 = vunpack.c.l.b16 %v1034
    %v6018 = vunpack.c.h.b16 %v1034
    %v6019 = vunpack.c.l.b16 %v1035
    %v6020 = vunpack.c.h.b16 %v1035
    %v6021 = vunpack.c.l.b16 %v1036
    %v6022 = vunpack.c.h.b16 %v1036
    %v6023 = vunpack.c.l.b16 %v1037
    %v6024 = vunpack.c.h.b16 %v1037
    %v6025 = vunpack.c.l.b16 %v1038
    %v6026 = vunpack.c.h.b16 %v1038
    %v6027 = vunpack.c.l.b16 %v1039
    %v6028 = vunpack.c.h.b16 %v1039
    %v6029 = vunpack.c.l.b16 %v1040
    %v6030 = vunpack.c.h.b16 %v1040
    %v6031 = vunpack.c.l.b16 %v1041
    %v6032 = vunpack.c.h.b16 %v1041
    %v6033 = vunpack.c.l.b16 %v1042
    %v6034 = vunpack.c.h.b16 %v1042
    %v6035 = vunpack.c.l.b16 %v1043
    %v6036 = vunpack.c.h.b16 %v1043
    %v6037 = vunpack.c.l.b16 %v1044
    %v6038 = vunpack.c.h.b16 %v1044
    %v6039 = vunpack.c.l.b16 %v1045
    %v6040 = vunpack.c.h.b16 %v1045
    %v6041 = vunpack.c.l.b16 %v1046
    %v6042 = vunpack.c.h.b16 %v1046
    %v6043 = vunpack.c.l.b16 %v1047
    %v6044 = vunpack.c.h.b16 %v1047
    %v6045 = vunpack.c.l.b16 %v1048
    %v6046 = vunpack.c.h.b16 %v1048
    %v6047 = vunpack.c.l.b16 %v1049
    %v6048 = vunpack.c.h.b16 %v1049
    %v6049 = vunpack.c.l.b16 %v1050
    %v6050 = vunpack.c.h.b16 %v1050
    %v6051 = vunpack.c.l.b16 %v1051
    %v6052 = vunpack.c.h.b16 %v1051
    %v6053 = vunpack.c.l.b16 %v1052
    %v6054 = vunpack.c.h.b16 %v1052
    %v6055 = vunpack.c.l.b16 %v1053
    %v6056 = vunpack.c.h.b16 %v1053
    %v6057 = vunpack.c.l.b16 %v1054
    %v6058 = vunpack.c.h.b16 %v1054
    %v6059 = vunpack.c.l.b16 %v1055
    %v6060 = vunpack.c.h.b16 %v1055
    %v6061 = vunpack.c.l.b16 %v1056
    %v6062 = vunpack.c.h.b16 %v1056
    %v6063 = vunpack.c.l.b16 %v1057
    %v6064 = vunpack.c.h.b16 %v1057
    %v6065 = vunpack.c.l.b16 %v1058
    %v6066 = vunpack.c.h.b16 %v1058
    %v6067 = vunpack.c.l.b16 %v1059
    %v6068 = vunpack.c.h.b16 %v1059
    %v6069 = vunpack.c.l.b16 %v1060
    %v6070 = vunpack.c.h.b16 %v1060
    %v6071 = vunpack.c.l.b16 %v1061
    %v6072 = vunpack.c.h.b16 %v1061
    %v6073 = vunpack.c.l.b16 %v1062
    %v6074 = vunpack.c.h.b16 %v1062
    %v6075 = vunpack.c.l.b16 %v1063
    %v6076 = vunpack.c.h.b16 %v1063
    %v6077 = vunpack.c.l.b16 %v1064
    %v6078 = vunpack.c.h.b16 %v1064
    %v6079 = vunpack.c.l.b16 %v1065
    %v6080 = vunpack.c.h.b16 %v1065
    %v6081 = vunpack.c.l.b16 %v1066
    %v6082 = vunpack.c.h.b16 %v1066
    %v6083 = vunpack.c.l.b16 %v1067
    %v6084 = vunpack.c.h.b16 %v1067
    %v6085 = vunpack.c.l.b16 %v1068
    %v6086 = vunpack.c.h.b16 %v1068
    %v6087 = vunpack.c.l.b16 %v1069
    %v6088 = vunpack.c.h.b16 %v1069
    %v6089 = vunpack.c.l.b16 %v1070
    %v6090 = vunpack.c.h.b16 %v1070
    %v6091 = vunpack.c.l.b16 %v1071
    %v6092 = vunpack.c.h.b16 %v1071
    %v6093 = vunpack.c.l.b16 %v1072
    %v6094 = vunpack.c.h.b16 %v1072
    %v6095 = vunpack.c.l.b16 %v1073
    %v6096 = vunpack.c.h.b16 %v1073
    %v6097 = vunpack.c.l.b16 %v1074
    %v6098 = vunpack.c.h.b16 %v1074
    %v6099 = vunpack.c.l.b16 %v1075
    %v6100 = vunpack.c.h.b16 %v1075
    %v6101 = vunpack.c.l.b16 %v1076
    %v6102 = vunpack.c.h.b16 %v1076
    %v6103 = vunpack.c.l.b16 %v1077
    %v6104 = vunpack.c.h.b16 %v1077
    %v6105 = vunpack.c.l.b16 %v1078
    %v6106 = vunpack.c.h.b16 %v1078
    %v6107 = vunpack.c.l.b16 %v1079
    %v6108 = vunpack.c.h.b16 %v1079
    %v6109 = vunpack.c.l.b16 %v1080
    %v6110 = vunpack.c.h.b16 %v1080
    %v6111 = vunpack.c.l.b16 %v1081
    %v6112 = vunpack.c.h.b16 %v1081
    %v6113 = vunpack.c.l.b16 %v1082
    %v6114 = vunpack.c.h.b16 %v1082
    %v6115 = vunpack.c.l.b16 %v1083
    %v6116 = vunpack.c.h.b16 %v1083
    %v6117 = vunpack.c.l.b16 %v1084
    %v6118 = vunpack.c.h.b16 %v1084
    %v6119 = vunpack.c.l.b16 %v1085
    %v6120 = vunpack.c.h.b16 %v1085
    %v6121 = vunpack.c.l.b16 %v1086
    %v6122 = vunpack.c.h.b16 %v1086
    %v6123 = vunpack.c.l.b16 %v1087
    %v6124 = vunpack.c.h.b16 %v1087
    %v6125 = vunpack.c.l.b16 %v1088
    %v6126 = vunpack.c.h.b16 %v1088
    %v6127 = vunpack.c.l.b16 %v1089
    %v6128 = vunpack.c.h.b16 %v1089
    %v6129 = vunpack.c.l.b16 %v1090
    %v6130 = vunpack.c.h.b16 %v1090
    %v6131 = vunpack.c.l.b16 %v1091
    %v6132 = vunpack.c.h.b16 %v1091
    %v6133 = vunpack.c.l.b16 %v1092
    %v6134 = vunpack.c.h.b16 %v1092
    %v6135 = vunpack.c.l.b16 %v1093
    %v6136 = vunpack.c.h.b16 %v1093
    %v6137 = vunpack.c.l.b16 %v1094
    %v6138 = vunpack.c.h.b16 %v1094
    %v6139 = vpack.c.b16 %v5123, %v5115
    %v6140 = vpack.c.b16 %v5124, %v5116
    %v6141 = vpack.c.b16 %v5125, %v5117
    %v6142 = vpack.c.b16 %v5126, %v5118
    %v6143 = vpack.c.b16 %v5127, %v5119
    %v6144 = vpack.c.b16 %v5128, %v5120
    %v6145 = vpack.c.b16 %v5129, %v5121
    %v6146 = vpack.c.b16 %v5130, %v5122
    %v6147 = vpack.c.b16 %v5139, %v5131
    %v6148 = vpack.c.b16 %v5140, %v5132
    %v6149 = vpack.c.b16 %v5141, %v5133
    %v6150 = vpack.c.b16 %v5142, %v5134
    %v6151 = vpack.c.b16 %v5143, %v5135
    %v6152 = vpack.c.b16 %v5144, %v5136
    %v6153 = vpack.c.b16 %v5145, %v5137
    %v6154 = vpack.c.b16 %v5146, %v5138
    %v6155 = vpack.c.b16 %v5155, %v5147
    %v6156 = vpack.c.b16 %v5156, %v5148
    %v6157 = vpack.c.b16 %v5157, %v5149
    %v6158 = vpack.c.b16 %v5158, %v5150
    %v6159 = vpack.c.b16 %v5159, %v5151
    %v6160 = vpack.c.b16 %v5160, %v5152
    %v6161 = vpack.c.b16 %v5161, %v5153
    %v6162 = vpack.c.b16 %v5162, %v5154
    %v6163 = vpack.c.b16 %v5171, %v5163
    %v6164 = vpack.c.b16 %v5172, %v5164
    %v6165 = vpack.c.b16 %v5173, %v5165
    %v6166 = vpack.c.b16 %v5174, %v5166
    %v6167 = vpack.c.b16 %v5175, %v5167
    %v6168 = vpack.c.b16 %v5176, %v5168
    %v6169 = vpack.c.b16 %v5177, %v5169
    %v6170 = vpack.c.b16 %v5178, %v5170
    %v6171 = vpack.c.b16 %v5187, %v5179
    %v6172 = vpack.c.b16 %v5188, %v5180
    %v6173 = vpack.c.b16 %v5189, %v5181
    %v6174 = vpack.c.b16 %v5190, %v5182
    %v6175 = vpack.c.b16 %v5191, %v5183
    %v6176 = vpack.c.b16 %v5192, %v5184
    %v6177 = vpack.c.b16 %v5193, %v5185
    %v6178 = vpack.c.b16 %v5194, %v5186
    %v6179 = vpack.c.b16 %v5203, %v5195
    %v6180 = vpack.c.b16 %v5204, %v5196
    %v6181 = vpack.c.b16 %v5205, %v5197
    %v6182 = vpack.c.b16 %v5206, %v5198
    %v6183 = vpack.c.b16 %v5207, %v5199
    %v6184 = vpack.c.b16 %v5208, %v5200
    %v6185 = vpack.c.b16 %v5209, %v5201
    %v6186 = vpack.c.b16 %v5210, %v5202
    %v6187 = vpack.c.b16 %v5219, %v5211
    %v6188 = vpack.c.b16 %v5220, %v5212
    %v6189 = vpack.c.b16 %v5221, %v5213
    %v6190 = vpack.c.b16 %v5222, %v5214
    %v6191 = vpack.c.b16 %v5223, %v5215
    %v6192 = vpack.c.b16 %v5224, %v5216
    %v6193 = vpack.c.b16 %v5225, %v5217
    %v6194 = vpack.c.b16 %v5226, %v5218
    %v6195 = vpack.c.b16 %v5235, %v5227
    %v6196 = vpack.c.b16 %v5236, %v5228
    %v6197 = vpack.c.b16 %v5237, %v5229
    %v6198 = vpack.c.b16 %v5238, %v5230
    %v6199 = vpack.c.b16 %v5239, %v5231
    %v6200 = vpack.c.b16 %v5240, %v5232
    %v6201 = vpack.c.b16 %v5241, %v5233
    %v6202 = vpack.c.b16 %v5242, %v5234
    %v6203 = vpack.c.b16 %v5251, %v5243
    %v6204 = vpack.c.b16 %v5252, %v5244
    %v6205 = vpack.c.b16 %v5253, %v5245
    %v6206 = vpack.c.b16 %v5254, %v5246
    %v6207 = vpack.c.b16 %v5255, %v5247
    %v6208 = vpack.c.b16 %v5256, %v5248
    %v6209 = vpack.c.b16 %v5257, %v5249
    %v6210 = vpack.c.b16 %v5258, %v5250
    %v6211 = vpack.c.b16 %v5267, %v5259
    %v6212 = vpack.c.b16 %v5268, %v5260
    %v6213 = vpack.c.b16 %v5269, %v5261
    %v6214 = vpack.c.b16 %v5270, %v5262
    %v6215 = vpack.c.b16 %v5271, %v5263
    %v6216 = vpack.c.b16 %v5272, %v5264
    %v6217 = vpack.c.b16 %v5273, %v5265
    %v6218 = vpack.c.b16 %v5274, %v5266
    %v6219 = vpack.c.b16 %v5283, %v5275
    %v6220 = vpack.c.b16 %v5284, %v5276
    %v6221 = vpack.c.b16 %v5285, %v5277
    %v6222 = vpack.c.b16 %v5286, %v5278
    %v6223 = vpack.c.b16 %v5287, %v5279
    %v6224 = vpack.c.b16 %v5288, %v5280
    %v6225 = vpack.c.b16 %v5289, %v5281
    %v6226 = vpack.c.b16 %v5290, %v5282
    %v6227 = vpack.c.b16 %v5299, %v5291
    %v6228 = vpack.c.b16 %v5300, %v5292
    %v6229 = vpack.c.b16 %v5301, %v5293
    %v6230 = vpack.c.b16 %v5302, %v5294
    %v6231 = vpack.c.b16 %v5303, %v5295
    %v6232 = vpack.c.b16 %v5304, %v5296
    %v6233 = vpack.c.b16 %v5305, %v5297
    %v6234 = vpack.c.b16 %v5306, %v5298
    %v6235 = vpack.c.b16 %v5315, %v5307
    %v6236 = vpack.c.b16 %v5316, %v5308
    %v6237 = vpack.c.b16 %v5317, %v5309
    %v6238 = vpack.c.b16 %v5318, %v5310
    %v6239 = vpack.c.b16 %v5319, %v5311
    %v6240 = vpack.c.b16 %v5320, %v5312
    %v6241 = vpack.c.b16 %v5321, %v5313
    %v6242 = vpack.c.b16 %v5322, %v5314
    %v6243 = vpack.c.b16 %v5331, %v5323
    %v6244 = vpack.c.b16 %v5332, %v5324
    %v6245 = vpack.c.b16 %v5333, %v5325
    %v6246 = vpack.c.b16 %v5334, %v5326
    %v6247 = vpack.c.b16 %v5335, %v5327
    %v6248 = vpack.c.b16 %v5336, %v5328
    %v6249 = vpack.c.b16 %v5337, %v5329
    %v6250 = vpack.c.b16 %v5338, %v5330
    %v6251 = vpack.c.b16 %v5347, %v5339
    %v6252 = vpack.c.b16 %v5348, %v5340
    %v6253 = vpack.c.b16 %v5349, %v5341
    %v6254 = vpack.c.b16 %v5350, %v5342
    %v6255 = vpack.c.b16 %v5351, %v5343
    %v6256 = vpack.c.b16 %v5352, %v5344
    %v6257 = vpack.c.b16 %v5353, %v5345
    %v6258 = vpack.c.b16 %v5354, %v5346
    %v6259 = vpack.c.b16 %v5363, %v5355
    %v6260 = vpack.c.b16 %v5364, %v5356
    %v6261 = vpack.c.b16 %v5365, %v5357
    %v6262 = vpack.c.b16 %v5366, %v5358
    %v6263 = vpack.c.b16 %v5367, %v5359
    %v6264 = vpack.c.b16 %v5368, %v5360
    %v6265 = vpack.c.b16 %v5369, %v5361
    %v6266 = vpack.c.b16 %v5370, %v5362
    %v6267 = vpack.c.b16 %v5379, %v5371
    %v6268 = vpack.c.b16 %v5380, %v5372
    %v6269 = vpack.c.b16 %v5381, %v5373
    %v6270 = vpack.c.b16 %v5382, %v5374
    %v6271 = vpack.c.b16 %v5383, %v5375
    %v6272 = vpack.c.b16 %v5384, %v5376
    %v6273 = vpack.c.b16 %v5385, %v5377
    %v6274 = vpack.c.b16 %v5386, %v5378
    %v6275 = vpack.c.b16 %v5395, %v5387
    %v6276 = vpack.c.b16 %v5396, %v5388
    %v6277 = vpack.c.b16 %v5397, %v5389
    %v6278 = vpack.c.b16 %v5398, %v5390
    %v6279 = vpack.c.b16 %v5399, %v5391
    %v6280 = vpack.c.b16 %v5400, %v5392
    %v6281 = vpack.c.b16 %v5401, %v5393
    %v6282 = vpack.c.b16 %v5402, %v5394
    %v6283 = vpack.c.b16 %v5411, %v5403
    %v6284 = vpack.c.b16 %v5412, %v5404
    %v6285 = vpack.c.b16 %v5413, %v5405
    %v6286 = vpack.c.b16 %v5414, %v5406
    %v6287 = vpack.c.b16 %v5415, %v5407
    %v6288 = vpack.c.b16 %v5416, %v5408
    %v6289 = vpack.c.b16 %v5417, %v5409
    %v6290 = vpack.c.b16 %v5418, %v5410
    %v6291 = vpack.c.b16 %v5427, %v5419
    %v6292 = vpack.c.b16 %v5428, %v5420
    %v6293 = vpack.c.b16 %v5429, %v5421
    %v6294 = vpack.c.b16 %v5430, %v5422
    %v6295 = vpack.c.b16 %v5431, %v5423
    %v6296 = vpack.c.b16 %v5432, %v5424
    %v6297 = vpack.c.b16 %v5433, %v5425
    %v6298 = vpack.c.b16 %v5434, %v5426
    %v6299 = vpack.c.b16 %v5443, %v5435
    %v6300 = vpack.c.b16 %v5444, %v5436
    %v6301 = vpack.c.b16 %v5445, %v5437
    %v6302 = vpack.c.b16 %v5446, %v5438
    %v6303 = vpack.c.b16 %v5447, %v5439
    %v6304 = vpack.c.b16 %v5448, %v5440
    %v6305 = vpack.c.b16 %v5449, %v5441
    %v6306 = vpack.c.b16 %v5450, %v5442
    %v6307 = vpack.c.b16 %v5459, %v5451
    %v6308 = vpack.c.b16 %v5460, %v5452
    %v6309 = vpack.c.b16 %v5461, %v5453
    %v6310 = vpack.c.b16 %v5462, %v5454
    %v6311 = vpack.c.b16 %v5463, %v5455
    %v6312 = vpack.c.b16 %v5464, %v5456
    %v6313 = vpack.c.b16 %v5465, %v5457
    %v6314 = vpack.c.b16 %v5466, %v5458
    %v6315 = vpack.c.b16 %v5475, %v5467
    %v6316 = vpack.c.b16 %v5476, %v5468
    %v6317 = vpack.c.b16 %v5477, %v5469
    %v6318 = vpack.c.b16 %v5478, %v5470
    %v6319 = vpack.c.b16 %v5479, %v5471
    %v6320 = vpack.c.b16 %v5480, %v5472
    %v6321 = vpack.c.b16 %v5481, %v5473
    %v6322 = vpack.c.b16 %v5482, %v5474
    %v6323 = vpack.c.b16 %v5491, %v5483
    %v6324 = vpack.c.b16 %v5492, %v5484
    %v6325 = vpack.c.b16 %v5493, %v5485
    %v6326 = vpack.c.b16 %v5494, %v5486
    %v6327 = vpack.c.b16 %v5495, %v5487
    %v6328 = vpack.c.b16 %v5496, %v5488
    %v6329 = vpack.c.b16 %v5497, %v5489
    %v6330 = vpack.c.b16 %v5498, %v5490
    %v6331 = vpack.c.b16 %v5507, %v5499
    %v6332 = vpack.c.b16 %v5508, %v5500
    %v6333 = vpack.c.b16 %v5509, %v5501
    %v6334 = vpack.c.b16 %v5510, %v5502
    %v6335 = vpack.c.b16 %v5511, %v5503
    %v6336 = vpack.c.b16 %v5512, %v5504
    %v6337 = vpack.c.b16 %v5513, %v5505
    %v6338 = vpack.c.b16 %v5514, %v5506
    %v6339 = vpack.c.b16 %v5523, %v5515
    %v6340 = vpack.c.b16 %v5524, %v5516
    %v6341 = vpack.c.b16 %v5525, %v5517
    %v6342 = vpack.c.b16 %v5526, %v5518
    %v6343 = vpack.c.b16 %v5527, %v5519
    %v6344 = vpack.c.b16 %v5528, %v5520
    %v6345 = vpack.c.b16 %v5529, %v5521
    %v6346 = vpack.c.b16 %v5530, %v5522
    %v6347 = vpack.c.b16 %v5539, %v5531
    %v6348 = vpack.c.b16 %v5540, %v5532
    %v6349 = vpack.c.b16 %v5541, %v5533
    %v6350 = vpack.c.b16 %v5542, %v5534
    %v6351 = vpack.c.b16 %v5543, %v5535
    %v6352 = vpack.c.b16 %v5544, %v5536
    %v6353 = vpack.c.b16 %v5545, %v5537
    %v6354 = vpack.c.b16 %v5546, %v5538
    %v6355 = vpack.c.b16 %v5555, %v5547
    %v6356 = vpack.c.b16 %v5556, %v5548
    %v6357 = vpack.c.b16 %v5557, %v5549
    %v6358 = vpack.c.b16 %v5558, %v5550
    %v6359 = vpack.c.b16 %v5559, %v5551
    %v6360 = vpack.c.b16 %v5560, %v5552
    %v6361 = vpack.c.b16 %v5561, %v5553
    %v6362 = vpack.c.b16 %v5562, %v5554
    %v6363 = vpack.c.b16 %v5571, %v5563
    %v6364 = vpack.c.b16 %v5572, %v5564
    %v6365 = vpack.c.b16 %v5573, %v5565
    %v6366 = vpack.c.b16 %v5574, %v5566
    %v6367 = vpack.c.b16 %v5575, %v5567
    %v6368 = vpack.c.b16 %v5576, %v5568
    %v6369 = vpack.c.b16 %v5577, %v5569
    %v6370 = vpack.c.b16 %v5578, %v5570
    %v6371 = vpack.c.b16 %v5587, %v5579
    %v6372 = vpack.c.b16 %v5588, %v5580
    %v6373 = vpack.c.b16 %v5589, %v5581
    %v6374 = vpack.c.b16 %v5590, %v5582
    %v6375 = vpack.c.b16 %v5591, %v5583
    %v6376 = vpack.c.b16 %v5592, %v5584
    %v6377 = vpack.c.b16 %v5593, %v5585
    %v6378 = vpack.c.b16 %v5594, %v5586
    %v6379 = vpack.c.b16 %v5603, %v5595
    %v6380 = vpack.c.b16 %v5604, %v5596
    %v6381 = vpack.c.b16 %v5605, %v5597
    %v6382 = vpack.c.b16 %v5606, %v5598
    %v6383 = vpack.c.b16 %v5607, %v5599
    %v6384 = vpack.c.b16 %v5608, %v5600
    %v6385 = vpack.c.b16 %v5609, %v5601
    %v6386 = vpack.c.b16 %v5610, %v5602
    %v6387 = vpack.c.b16 %v5619, %v5611
    %v6388 = vpack.c.b16 %v5620, %v5612
    %v6389 = vpack.c.b16 %v5621, %v5613
    %v6390 = vpack.c.b16 %v5622, %v5614
    %v6391 = vpack.c.b16 %v5623, %v5615
    %v6392 = vpack.c.b16 %v5624, %v5616
    %v6393 = vpack.c.b16 %v5625, %v5617
    %v6394 = vpack.c.b16 %v5626, %v5618
    %v6395 = vpack.c.b16 %v5635, %v5627
    %v6396 = vpack.c.b16 %v5636, %v5628
    %v6397 = vpack.c.b16 %v5637, %v5629
    %v6398 = vpack.c.b16 %v5638, %v5630
    %v6399 = vpack.c.b16 %v5639, %v5631
    %v6400 = vpack.c.b16 %v5640, %v5632
    %v6401 = vpack.c.b16 %v5641, %v5633
    %v6402 = vpack.c.b16 %v5642, %v5634
    %v6403 = vpack.c.b16 %v5651, %v5643
    %v6404 = vpack.c.b16 %v5652, %v5644
    %v6405 = vpack.c.b16 %v5653, %v5645
    %v6406 = vpack.c.b16 %v5654, %v5646
    %v6407 = vpack.c.b16 %v5655, %v5647
    %v6408 = vpack.c.b16 %v5656, %v5648
    %v6409 = vpack.c.b16 %v5657, %v5649
    %v6410 = vpack.c.b16 %v5658, %v5650
    %v6411 = vpack.c.b16 %v5667, %v5659
    %v6412 = vpack.c.b16 %v5668, %v5660
    %v6413 = vpack.c.b16 %v5669, %v5661
    %v6414 = vpack.c.b16 %v5670, %v5662
    %v6415 = vpack.c.b16 %v5671, %v5663
    %v6416 = vpack.c.b16 %v5672, %v5664
    %v6417 = vpack.c.b16 %v5673, %v5665
    %v6418 = vpack.c.b16 %v5674, %v5666
    %v6419 = vpack.c.b16 %v5683, %v5675
    %v6420 = vpack.c.b16 %v5684, %v5676
    %v6421 = vpack.c.b16 %v5685, %v5677
    %v6422 = vpack.c.b16 %v5686, %v5678
    %v6423 = vpack.c.b16 %v5687, %v5679
    %v6424 = vpack.c.b16 %v5688, %v5680
    %v6425 = vpack.c.b16 %v5689, %v5681
    %v6426 = vpack.c.b16 %v5690, %v5682
    %v6427 = vpack.c.b16 %v5699, %v5691
    %v6428 = vpack.c.b16 %v5700, %v5692
    %v6429 = vpack.c.b16 %v5701, %v5693
    %v6430 = vpack.c.b16 %v5702, %v5694
    %v6431 = vpack.c.b16 %v5703, %v5695
    %v6432 = vpack.c.b16 %v5704, %v5696
    %v6433 = vpack.c.b16 %v5705, %v5697
    %v6434 = vpack.c.b16 %v5706, %v5698
    %v6435 = vpack.c.b16 %v5715, %v5707
    %v6436 = vpack.c.b16 %v5716, %v5708
    %v6437 = vpack.c.b16 %v5717, %v5709
    %v6438 = vpack.c.b16 %v5718, %v5710
    %v6439 = vpack.c.b16 %v5719, %v5711
    %v6440 = vpack.c.b16 %v5720, %v5712
    %v6441 = vpack.c.b16 %v5721, %v5713
    %v6442 = vpack.c.b16 %v5722, %v5714
    %v6443 = vpack.c.b16 %v5731, %v5723
    %v6444 = vpack.c.b16 %v5732, %v5724
    %v6445 = vpack.c.b16 %v5733, %v5725
    %v6446 = vpack.c.b16 %v5734, %v5726
    %v6447 = vpack.c.b16 %v5735, %v5727
    %v6448 = vpack.c.b16 %v5736, %v5728
    %v6449 = vpack.c.b16 %v5737, %v5729
    %v6450 = vpack.c.b16 %v5738, %v5730
    %v6451 = vpack.c.b16 %v5747, %v5739
    %v6452 = vpack.c.b16 %v5748, %v5740
    %v6453 = vpack.c.b16 %v5749, %v5741
    %v6454 = vpack.c.b16 %v5750, %v5742
    %v6455 = vpack.c.b16 %v5751, %v5743
    %v6456 = vpack.c.b16 %v5752, %v5744
    %v6457 = vpack.c.b16 %v5753, %v5745
    %v6458 = vpack.c.b16 %v5754, %v5746
    %v6459 = vpack.c.b16 %v5763, %v5755
    %v6460 = vpack.c.b16 %v5764, %v5756
    %v6461 = vpack.c.b16 %v5765, %v5757
    %v6462 = vpack.c.b16 %v5766, %v5758
    %v6463 = vpack.c.b16 %v5767, %v5759
    %v6464 = vpack.c.b16 %v5768, %v5760
    %v6465 = vpack.c.b16 %v5769, %v5761
    %v6466 = vpack.c.b16 %v5770, %v5762
    %v6467 = vpack.c.b16 %v5779, %v5771
    %v6468 = vpack.c.b16 %v5780, %v5772
    %v6469 = vpack.c.b16 %v5781, %v5773
    %v6470 = vpack.c.b16 %v5782, %v5774
    %v6471 = vpack.c.b16 %v5783, %v5775
    %v6472 = vpack.c.b16 %v5784, %v5776
    %v6473 = vpack.c.b16 %v5785, %v5777
    %v6474 = vpack.c.b16 %v5786, %v5778
    %v6475 = vpack.c.b16 %v5795, %v5787
    %v6476 = vpack.c.b16 %v5796, %v5788
    %v6477 = vpack.c.b16 %v5797, %v5789
    %v6478 = vpack.c.b16 %v5798, %v5790
    %v6479 = vpack.c.b16 %v5799, %v5791
    %v6480 = vpack.c.b16 %v5800, %v5792
    %v6481 = vpack.c.b16 %v5801, %v5793
    %v6482 = vpack.c.b16 %v5802, %v5794
    %v6483 = vpack.c.b16 %v5811, %v5803
    %v6484 = vpack.c.b16 %v5812, %v5804
    %v6485 = vpack.c.b16 %v5813, %v5805
    %v6486 = vpack.c.b16 %v5814, %v5806
    %v6487 = vpack.c.b16 %v5815, %v5807
    %v6488 = vpack.c.b16 %v5816, %v5808
    %v6489 = vpack.c.b16 %v5817, %v5809
    %v6490 = vpack.c.b16 %v5818, %v5810
    %v6491 = vpack.c.b16 %v5827, %v5819
    %v6492 = vpack.c.b16 %v5828, %v5820
    %v6493 = vpack.c.b16 %v5829, %v5821
    %v6494 = vpack.c.b16 %v5830, %v5822
    %v6495 = vpack.c.b16 %v5831, %v5823
    %v6496 = vpack.c.b16 %v5832, %v5824
    %v6497 = vpack.c.b16 %v5833, %v5825
    %v6498 = vpack.c.b16 %v5834, %v5826
    %v6499 = vpack.c.b16 %v5843, %v5835
    %v6500 = vpack.c.b16 %v5844, %v5836
    %v6501 = vpack.c.b16 %v5845, %v5837
    %v6502 = vpack.c.b16 %v5846, %v5838
    %v6503 = vpack.c.b16 %v5847, %v5839
    %v6504 = vpack.c.b16 %v5848, %v5840
    %v6505 = vpack.c.b16 %v5849, %v5841
    %v6506 = vpack.c.b16 %v5850, %v5842
    %v6507 = vpack.c.b16 %v5859, %v5851
    %v6508 = vpack.c.b16 %v5860, %v5852
    %v6509 = vpack.c.b16 %v5861, %v5853
    %v6510 = vpack.c.b16 %v5862, %v5854
    %v6511 = vpack.c.b16 %v5863, %v5855
    %v6512 = vpack.c.b16 %v5864, %v5856
    %v6513 = vpack.c.b16 %v5865, %v5857
    %v6514 = vpack.c.b16 %v5866, %v5858
    %v6515 = vpack.c.b16 %v5875, %v5867
    %v6516 = vpack.c.b16 %v5876, %v5868
    %v6517 = vpack.c.b16 %v5877, %v5869
    %v6518 = vpack.c.b16 %v5878, %v5870
    %v6519 = vpack.c.b16 %v5879, %v5871
    %v6520 = vpack.c.b16 %v5880, %v5872
    %v6521 = vpack.c.b16 %v5881, %v5873
    %v6522 = vpack.c.b16 %v5882, %v5874
    %v6523 = vpack.c.b16 %v5891, %v5883
    %v6524 = vpack.c.b16 %v5892, %v5884
    %v6525 = vpack.c.b16 %v5893, %v5885
    %v6526 = vpack.c.b16 %v5894, %v5886
    %v6527 = vpack.c.b16 %v5895, %v5887
    %v6528 = vpack.c.b16 %v5896, %v5888
    %v6529 = vpack.c.b16 %v5897, %v5889
    %v6530 = vpack.c.b16 %v5898, %v5890
    %v6531 = vpack.c.b16 %v5907, %v5899
    %v6532 = vpack.c.b16 %v5908, %v5900
    %v6533 = vpack.c.b16 %v5909, %v5901
    %v6534 = vpack.c.b16 %v5910, %v5902
    %v6535 = vpack.c.b16 %v5911, %v5903
    %v6536 = vpack.c.b16 %v5912, %v5904
    %v6537 = vpack.c.b16 %v5913, %v5905
    %v6538 = vpack.c.b16 %v5914, %v5906
    %v6539 = vpack.c.b16 %v5923, %v5915
    %v6540 = vpack.c.b16 %v5924, %v5916
    %v6541 = vpack.c.b16 %v5925, %v5917
    %v6542 = vpack.c.b16 %v5926, %v5918
    %v6543 = vpack.c.b16 %v5927, %v5919
    %v6544 = vpack.c.b16 %v5928, %v5920
    %v6545 = vpack.c.b16 %v5929, %v5921
    %v6546 = vpack.c.b16 %v5930, %v5922
    %v6547 = vpack.c.b16 %v5939, %v5931
    %v6548 = vpack.c.b16 %v5940, %v5932
    %v6549 = vpack.c.b16 %v5941, %v5933
    %v6550 = vpack.c.b16 %v5942, %v5934
    %v6551 = vpack.c.b16 %v5943, %v5935
    %v6552 = vpack.c.b16 %v5944, %v5936
    %v6553 = vpack.c.b16 %v5945, %v5937
    %v6554 = vpack.c.b16 %v5946, %v5938
    %v6555 = vpack.c.b16 %v5955, %v5947
    %v6556 = vpack.c.b16 %v5956, %v5948
    %v6557 = vpack.c.b16 %v5957, %v5949
    %v6558 = vpack.c.b16 %v5958, %v5950
    %v6559 = vpack.c.b16 %v5959, %v5951
    %v6560 = vpack.c.b16 %v5960, %v5952
    %v6561 = vpack.c.b16 %v5961, %v5953
    %v6562 = vpack.c.b16 %v5962, %v5954
    %v6563 = vpack.c.b16 %v5971, %v5963
    %v6564 = vpack.c.b16 %v5972, %v5964
    %v6565 = vpack.c.b16 %v5973, %v5965
    %v6566 = vpack.c.b16 %v5974, %v5966
    %v6567 = vpack.c.b16 %v5975, %v5967
    %v6568 = vpack.c.b16 %v5976, %v5968
    %v6569 = vpack.c.b16 %v5977, %v5969
    %v6570 = vpack.c.b16 %v5978, %v5970
    %v6571 = vpack.c.b16 %v5987, %v5979
    %v6572 = vpack.c.b16 %v5988, %v5980
    %v6573 = vpack.c.b16 %v5989, %v5981
    %v6574 = vpack.c.b16 %v5990, %v5982
    %v6575 = vpack.c.b16 %v5991, %v5983
    %v6576 = vpack.c.b16 %v5992, %v5984
    %v6577 = vpack.c.b16 %v5993, %v5985
    %v6578 = vpack.c.b16 %v5994, %v5986
    %v6579 = vpack.c.b16 %v6003, %v5995
    %v6580 = vpack.c.b16 %v6004, %v5996
    %v6581 = vpack.c.b16 %v6005, %v5997
    %v6582 = vpack.c.b16 %v6006, %v5998
    %v6583 = vpack.c.b16 %v6007, %v5999
    %v6584 = vpack.c.b16 %v6008, %v6000
    %v6585 = vpack.c.b16 %v6009, %v6001
    %v6586 = vpack.c.b16 %v6010, %v6002
    %v6587 = vpack.c.b16 %v6019, %v6011
    %v6588 = vpack.c.b16 %v6020, %v6012
    %v6589 = vpack.c.b16 %v6021, %v6013
    %v6590 = vpack.c.b16 %v6022, %v6014
    %v6591 = vpack.c.b16 %v6023, %v6015
    %v6592 = vpack.c.b16 %v6024, %v6016
    %v6593 = vpack.c.b16 %v6025, %v6017
    %v6594 = vpack.c.b16 %v6026, %v6018
    %v6595 = vpack.c.b16 %v6035, %v6027
    %v6596 = vpack.c.b16 %v6036, %v6028
    %v6597 = vpack.c.b16 %v6037, %v6029
    %v6598 = vpack.c.b16 %v6038, %v6030
    %v6599 = vpack.c.b16 %v6039, %v6031
    %v6600 = vpack.c.b16 %v6040, %v6032
    %v6601 = vpack.c.b16 %v6041, %v6033
    %v6602 = vpack.c.b16 %v6042, %v6034
    %v6603 = vpack.c.b16 %v6051, %v6043
    %v6604 = vpack.c.b16 %v6052, %v6044
    %v6605 = vpack.c.b16 %v6053, %v6045
    %v6606 = vpack.c.b16 %v6054, %v6046
    %v6607 = vpack.c.b16 %v6055, %v6047
    %v6608 = vpack.c.b16 %v6056, %v6048
    %v6609 = vpack.c.b16 %v6057, %v6049
    %v6610 = vpack.c.b16 %v6058, %v6050
    %v6611 = vpack.c.b16 %v6067, %v6059
    %v6612 = vpack.c.b16 %v6068, %v6060
    %v6613 = vpack.c.b16 %v6069, %v6061
    %v6614 = vpack.c.b16 %v6070, %v6062
    %v6615 = vpack.c.b16 %v6071, %v6063
    %v6616 = vpack.c.b16 %v6072, %v6064
    %v6617 = vpack.c.b16 %v6073, %v6065
    %v6618 = vpack.c.b16 %v6074, %v6066
    %v6619 = vpack.c.b16 %v6083, %v6075
    %v6620 = vpack.c.b16 %v6084, %v6076
    %v6621 = vpack.c.b16 %v6085, %v6077
    %v6622 = vpack.c.b16 %v6086, %v6078
    %v6623 = vpack.c.b16 %v6087, %v6079
    %v6624 = vpack.c.b16 %v6088, %v6080
    %v6625 = vpack.c.b16 %v6089, %v6081
    %v6626 = vpack.c.b16 %v6090, %v6082
    %v6627 = vpack.c.b16 %v6099, %v6091
    %v6628 = vpack.c.b16 %v6100, %v6092
    %v6629 = vpack.c.b16 %v6101, %v6093
    %v6630 = vpack.c.b16 %v6102, %v6094
    %v6631 = vpack.c.b16 %v6103, %v6095
    %v6632 = vpack.c.b16 %v6104, %v6096
    %v6633 = vpack.c.b16 %v6105, %v6097
    %v6634 = vpack.c.b16 %v6106, %v6098
    %v6635 = vpack.c.b16 %v6115, %v6107
    %v6636 = vpack.c.b16 %v6116, %v6108
    %v6637 = vpack.c.b16 %v6117, %v6109
    %v6638 = vpack.c.b16 %v6118, %v6110
    %v6639 = vpack.c.b16 %v6119, %v6111
    %v6640 = vpack.c.b16 %v6120, %v6112
    %v6641 = vpack.c.b16 %v6121, %v6113
    %v6642 = vpack.c.b16 %v6122, %v6114
    %v6643 = vpack.c.b16 %v6131, %v6123
    %v6644 = vpack.c.b16 %v6132, %v6124
    %v6645 = vpack.c.b16 %v6133, %v6125
    %v6646 = vpack.c.b16 %v6134, %v6126
    %v6647 = vpack.c.b16 %v6135, %v6127
    %v6648 = vpack.c.b16 %v6136, %v6128
    %v6649 = vpack.c.b16 %v6137, %v6129
    %v6650 = vpack.c.b16 %v6138, %v6130
    %7163 = vmatprep.subr.bf16.mxu0 %v6196
    %7164 = vmatpush1.bf16.msra.mxu0 %v6195
    %7165 = vmatprep.subr.bf16.mxu0 %v6188
    %7166 = vmatpush1.bf16.msra.mxu0 %v6187
    %7167 = vmatprep.subr.bf16.mxu0 %v6180
    %7168 = vmatpush1.bf16.msra.mxu0 %v6179
    %7169 = vmatprep.subr.bf16.mxu0 %v6172
    %7170 = vmatpush1.bf16.msra.mxu0 %v6171
    %7171 = vmatprep.subr.bf16.mxu0 %v6164
    %7172 = vmatpush1.bf16.msra.mxu0 %v6163
    %7173 = vmatprep.subr.bf16.mxu0 %v6156
    %7174 = vmatpush1.bf16.msra.mxu0 %v6155
    %7175 = vmatprep.subr.bf16.mxu0 %v6148
    %7176 = vmatpush1.bf16.msra.mxu0 %v6147
    %7177 = vmatprep.subr.bf16.mxu0 %v6140
    %7178 = vmatpush1.bf16.msra.mxu0 %v6139
    %7179 = vmatprep.subr.bf16.mxu0 %v6260
    %7180 = vmatpush2.bf16.msra.mxu0 %v6259
    %7181 = vmatprep.subr.bf16.mxu0 %v6252
    %7182 = vmatpush2.bf16.msra.mxu0 %v6251
    %7183 = vmatprep.subr.bf16.mxu0 %v6244
    %7184 = vmatpush2.bf16.msra.mxu0 %v6243
    %7185 = vmatprep.subr.bf16.mxu0 %v6236
    %7186 = vmatpush2.bf16.msra.mxu0 %v6235
    %7187 = vmatprep.subr.bf16.mxu0 %v6228
    %7188 = vmatpush2.bf16.msra.mxu0 %v6227
    %7189 = vmatprep.subr.bf16.mxu0 %v6220
    %7190 = vmatpush2.bf16.msra.mxu0 %v6219
    %7191 = vmatprep.subr.bf16.mxu0 %v6212
    %7192 = vmatpush2.bf16.msra.mxu0 %v6211
    %7193 = vmatprep.subr.bf16.mxu0 %v6204
    %7194 = vmatpush2.bf16.msra.mxu0 %v6203
    %7195 = vmatprep.mubr.bf16.mxu0 %v4596
    %7196 = vmatmul.mubr.bf16.gmra.mxu0 %v4595
    %v7197 = vpop.f32.mrf.mxu0
    %v7198 = vadd.f32 0.0, %v7197
    %v7199 = vpop.f32.mrf.mxu0
    %v7200 = vadd.f32 0.0, %v7199
    %v7201 = vpop.f32.mrf.mxu0
    %v7202 = vpop.f32.mrf.mxu0
    %7203 = vdwg.mxu0
    %7204 = vmatprep.subr.bf16.mxu0 %v6324
    %7205 = vmatpush1.bf16.msra.mxu0 %v6323
    %7206 = vmatprep.subr.bf16.mxu0 %v6316
    %7207 = vmatpush1.bf16.msra.mxu0 %v6315
    %7208 = vmatprep.subr.bf16.mxu0 %v6308
    %7209 = vmatpush1.bf16.msra.mxu0 %v6307
    %7210 = vmatprep.subr.bf16.mxu0 %v6300
    %7211 = vmatpush1.bf16.msra.mxu0 %v6299
    %7212 = vmatprep.subr.bf16.mxu0 %v6292
    %7213 = vmatpush1.bf16.msra.mxu0 %v6291
    %7214 = vmatprep.subr.bf16.mxu0 %v6284
    %7215 = vmatpush1.bf16.msra.mxu0 %v6283
    %7216 = vmatprep.subr.bf16.mxu0 %v6276
    %7217 = vmatpush1.bf16.msra.mxu0 %v6275
    %7218 = vmatprep.subr.bf16.mxu0 %v6268
    %7219 = vmatpush1.bf16.msra.mxu0 %v6267
    %7220 = vmatprep.subr.bf16.mxu0 %v6388
    %7221 = vmatpush2.bf16.msra.mxu0 %v6387
    %7222 = vmatprep.subr.bf16.mxu0 %v6380
    %7223 = vmatpush2.bf16.msra.mxu0 %v6379
    %7224 = vmatprep.subr.bf16.mxu0 %v6372
    %7225 = vmatpush2.bf16.msra.mxu0 %v6371
    %7226 = vmatprep.subr.bf16.mxu0 %v6364
    %7227 = vmatpush2.bf16.msra.mxu0 %v6363
    %7228 = vmatprep.subr.bf16.mxu0 %v6356
    %7229 = vmatpush2.bf16.msra.mxu0 %v6355
    %7230 = vmatprep.subr.bf16.mxu0 %v6348
    %7231 = vmatpush2.bf16.msra.mxu0 %v6347
    %7232 = vmatprep.subr.bf16.mxu0 %v6340
    %7233 = vmatpush2.bf16.msra.mxu0 %v6339
    %7234 = vmatprep.subr.bf16.mxu0 %v6332
    %7235 = vmatpush2.bf16.msra.mxu0 %v6331
    %7236 = vmatprep.mubr.bf16.mxu0 %v4598
    %7237 = vmatmul.mubr.bf16.gmra.mxu0 %v4597
    %v7238 = vpop.f32.mrf.mxu0
    %v7239 = vadd.f32 %v7198, %v7238
    %v7240 = vpop.f32.mrf.mxu0
    %v7241 = vadd.f32 %v7200, %v7240
    %v7242 = vpop.f32.mrf.mxu0
    %v7243 = vpop.f32.mrf.mxu0
    %7244 = vdwg.mxu0
    %7245 = vmatprep.subr.bf16.mxu0 %v6452
    %7246 = vmatpush1.bf16.msra.mxu0 %v6451
    %7247 = vmatprep.subr.bf16.mxu0 %v6444
    %7248 = vmatpush1.bf16.msra.mxu0 %v6443
    %7249 = vmatprep.subr.bf16.mxu0 %v6436
    %7250 = vmatpush1.bf16.msra.mxu0 %v6435
    %7251 = vmatprep.subr.bf16.mxu0 %v6428
    %7252 = vmatpush1.bf16.msra.mxu0 %v6427
    %7253 = vmatprep.subr.bf16.mxu0 %v6420
    %7254 = vmatpush1.bf16.msra.mxu0 %v6419
    %7255 = vmatprep.subr.bf16.mxu0 %v6412
    %7256 = vmatpush1.bf16.msra.mxu0 %v6411
    %7257 = vmatprep.subr.bf16.mxu0 %v6404
    %7258 = vmatpush1.bf16.msra.mxu0 %v6403
    %7259 = vmatprep.subr.bf16.mxu0 %v6396
    %7260 = vmatpush1.bf16.msra.mxu0 %v6395
    %7261 = vmatprep.subr.bf16.mxu0 %v6516
    %7262 = vmatpush2.bf16.msra.mxu0 %v6515
    %7263 = vmatprep.subr.bf16.mxu0 %v6508
    %7264 = vmatpush2.bf16.msra.mxu0 %v6507
    %7265 = vmatprep.subr.bf16.mxu0 %v6500
    %7266 = vmatpush2.bf16.msra.mxu0 %v6499
    %7267 = vmatprep.subr.bf16.mxu0 %v6492
    %7268 = vmatpush2.bf16.msra.mxu0 %v6491
    %7269 = vmatprep.subr.bf16.mxu0 %v6484
    %7270 = vmatpush2.bf16.msra.mxu0 %v6483
    %7271 = vmatprep.subr.bf16.mxu0 %v6476
    %7272 = vmatpush2.bf16.msra.mxu0 %v6475
    %7273 = vmatprep.subr.bf16.mxu0 %v6468
    %7274 = vmatpush2.bf16.msra.mxu0 %v6467
    %7275 = vmatprep.subr.bf16.mxu0 %v6460
    %7276 = vmatpush2.bf16.msra.mxu0 %v6459
    %7277 = vmatprep.mubr.bf16.mxu0 %v4600
    %7278 = vmatmul.mubr.bf16.gmra.mxu0 %v4599
    %v7279 = vpop.f32.mrf.mxu0
    %v7280 = vadd.f32 %v7239, %v7279
    %v7281 = vpop.f32.mrf.mxu0
    %v7282 = vadd.f32 %v7241, %v7281
    %v7283 = vpop.f32.mrf.mxu0
    %v7284 = vpop.f32.mrf.mxu0
    %7285 = vdwg.mxu0
    %7286 = vmatprep.subr.bf16.mxu0 %v6580
    %7287 = vmatpush1.bf16.msra.mxu0 %v6579
    %7288 = vmatprep.subr.bf16.mxu0 %v6572
    %7289 = vmatpush1.bf16.msra.mxu0 %v6571
    %7290 = vmatprep.subr.bf16.mxu0 %v6564
    %7291 = vmatpush1.bf16.msra.mxu0 %v6563
    %7292 = vmatprep.subr.bf16.mxu0 %v6556
    %7293 = vmatpush1.bf16.msra.mxu0 %v6555
    %7294 = vmatprep.subr.bf16.mxu0 %v6548
    %7295 = vmatpush1.bf16.msra.mxu0 %v6547
    %7296 = vmatprep.subr.bf16.mxu0 %v6540
    %7297 = vmatpush1.bf16.msra.mxu0 %v6539
    %7298 = vmatprep.subr.bf16.mxu0 %v6532
    %7299 = vmatpush1.bf16.msra.mxu0 %v6531
    %7300 = vmatprep.subr.bf16.mxu0 %v6524
    %7301 = vmatpush1.bf16.msra.mxu0 %v6523
    %7302 = vmatprep.subr.bf16.mxu0 %v6644
    %7303 = vmatpush2.bf16.msra.mxu0 %v6643
    %7304 = vmatprep.subr.bf16.mxu0 %v6636
    %7305 = vmatpush2.bf16.msra.mxu0 %v6635
    %7306 = vmatprep.subr.bf16.mxu0 %v6628
    %7307 = vmatpush2.bf16.msra.mxu0 %v6627
    %7308 = vmatprep.subr.bf16.mxu0 %v6620
    %7309 = vmatpush2.bf16.msra.mxu0 %v6619
    %7310 = vmatprep.subr.bf16.mxu0 %v6612
    %7311 = vmatpush2.bf16.msra.mxu0 %v6611
    %7312 = vmatprep.subr.bf16.mxu0 %v6604
    %7313 = vmatpush2.bf16.msra.mxu0 %v6603
    %7314 = vmatprep.subr.bf16.mxu0 %v6596
    %7315 = vmatpush2.bf16.msra.mxu0 %v6595
    %7316 = vmatprep.subr.bf16.mxu0 %v6588
    %7317 = vmatpush2.bf16.msra.mxu0 %v6587
    %7318 = vmatprep.mubr.bf16.mxu0 %v4602
    %7319 = vmatmul.mubr.bf16.gmra.mxu0 %v4601
    %v7320 = vpop.f32.mrf.mxu0
    %v7321 = vadd.f32 %v7280, %v7320
    %v7322 = vpop.f32.mrf.mxu0
    %v7323 = vadd.f32 %v7282, %v7322
    %v7324 = vpop.f32.mrf.mxu0
    %v7325 = vpop.f32.mrf.mxu0
    %7326 = vdwg.mxu0
    %7327 = vmatprep.subr.bf16.mxu0 %v6198
    %7328 = vmatpush1.bf16.msra.mxu0 %v6197
    %7329 = vmatprep.subr.bf16.mxu0 %v6190
    %7330 = vmatpush1.bf16.msra.mxu0 %v6189
    %7331 = vmatprep.subr.bf16.mxu0 %v6182
    %7332 = vmatpush1.bf16.msra.mxu0 %v6181
    %7333 = vmatprep.subr.bf16.mxu0 %v6174
    %7334 = vmatpush1.bf16.msra.mxu0 %v6173
    %7335 = vmatprep.subr.bf16.mxu0 %v6166
    %7336 = vmatpush1.bf16.msra.mxu0 %v6165
    %7337 = vmatprep.subr.bf16.mxu0 %v6158
    %7338 = vmatpush1.bf16.msra.mxu0 %v6157
    %7339 = vmatprep.subr.bf16.mxu0 %v6150
    %7340 = vmatpush1.bf16.msra.mxu0 %v6149
    %7341 = vmatprep.subr.bf16.mxu0 %v6142
    %7342 = vmatpush1.bf16.msra.mxu0 %v6141
    %7343 = vmatprep.subr.bf16.mxu0 %v6262
    %7344 = vmatpush2.bf16.msra.mxu0 %v6261
    %7345 = vmatprep.subr.bf16.mxu0 %v6254
    %7346 = vmatpush2.bf16.msra.mxu0 %v6253
    %7347 = vmatprep.subr.bf16.mxu0 %v6246
    %7348 = vmatpush2.bf16.msra.mxu0 %v6245
    %7349 = vmatprep.subr.bf16.mxu0 %v6238
    %7350 = vmatpush2.bf16.msra.mxu0 %v6237
    %7351 = vmatprep.subr.bf16.mxu0 %v6230
    %7352 = vmatpush2.bf16.msra.mxu0 %v6229
    %7353 = vmatprep.subr.bf16.mxu0 %v6222
    %7354 = vmatpush2.bf16.msra.mxu0 %v6221
    %7355 = vmatprep.subr.bf16.mxu0 %v6214
    %7356 = vmatpush2.bf16.msra.mxu0 %v6213
    %7357 = vmatprep.subr.bf16.mxu0 %v6206
    %7358 = vmatpush2.bf16.msra.mxu0 %v6205
    %7359 = vmatprep.mubr.bf16.mxu0 %v4596
    %7360 = vmatmul.mubr.bf16.gmra.mxu0 %v4595
    %v7361 = vpop.f32.mrf.mxu0
    %v7362 = vadd.f32 0.0, %v7361
    %v7363 = vpop.f32.mrf.mxu0
    %v7364 = vadd.f32 0.0, %v7363
    %v7365 = vpop.f32.mrf.mxu0
    %v7366 = vpop.f32.mrf.mxu0
    %7367 = vdwg.mxu0
    %7368 = vmatprep.subr.bf16.mxu0 %v6326
    %7369 = vmatpush1.bf16.msra.mxu0 %v6325
    %7370 = vmatprep.subr.bf16.mxu0 %v6318
    %7371 = vmatpush1.bf16.msra.mxu0 %v6317
    %7372 = vmatprep.subr.bf16.mxu0 %v6310
    %7373 = vmatpush1.bf16.msra.mxu0 %v6309
    %7374 = vmatprep.subr.bf16.mxu0 %v6302
    %7375 = vmatpush1.bf16.msra.mxu0 %v6301
    %7376 = vmatprep.subr.bf16.mxu0 %v6294
    %7377 = vmatpush1.bf16.msra.mxu0 %v6293
    %7378 = vmatprep.subr.bf16.mxu0 %v6286
    %7379 = vmatpush1.bf16.msra.mxu0 %v6285
    %7380 = vmatprep.subr.bf16.mxu0 %v6278
    %7381 = vmatpush1.bf16.msra.mxu0 %v6277
    %7382 = vmatprep.subr.bf16.mxu0 %v6270
    %7383 = vmatpush1.bf16.msra.mxu0 %v6269
    %7384 = vmatprep.subr.bf16.mxu0 %v6390
    %7385 = vmatpush2.bf16.msra.mxu0 %v6389
    %7386 = vmatprep.subr.bf16.mxu0 %v6382
    %7387 = vmatpush2.bf16.msra.mxu0 %v6381
    %7388 = vmatprep.subr.bf16.mxu0 %v6374
    %7389 = vmatpush2.bf16.msra.mxu0 %v6373
    %7390 = vmatprep.subr.bf16.mxu0 %v6366
    %7391 = vmatpush2.bf16.msra.mxu0 %v6365
    %7392 = vmatprep.subr.bf16.mxu0 %v6358
    %7393 = vmatpush2.bf16.msra.mxu0 %v6357
    %7394 = vmatprep.subr.bf16.mxu0 %v6350
    %7395 = vmatpush2.bf16.msra.mxu0 %v6349
    %7396 = vmatprep.subr.bf16.mxu0 %v6342
    %7397 = vmatpush2.bf16.msra.mxu0 %v6341
    %7398 = vmatprep.subr.bf16.mxu0 %v6334
    %7399 = vmatpush2.bf16.msra.mxu0 %v6333
    %7400 = vmatprep.mubr.bf16.mxu0 %v4598
    %7401 = vmatmul.mubr.bf16.gmra.mxu0 %v4597
    %v7402 = vpop.f32.mrf.mxu0
    %v7403 = vadd.f32 %v7362, %v7402
    %v7404 = vpop.f32.mrf.mxu0
    %v7405 = vadd.f32 %v7364, %v7404
    %v7406 = vpop.f32.mrf.mxu0
    %v7407 = vpop.f32.mrf.mxu0
    %7408 = vdwg.mxu0
    %7409 = vmatprep.subr.bf16.mxu0 %v6454
    %7410 = vmatpush1.bf16.msra.mxu0 %v6453
    %7411 = vmatprep.subr.bf16.mxu0 %v6446
    %7412 = vmatpush1.bf16.msra.mxu0 %v6445
    %7413 = vmatprep.subr.bf16.mxu0 %v6438
    %7414 = vmatpush1.bf16.msra.mxu0 %v6437
    %7415 = vmatprep.subr.bf16.mxu0 %v6430
    %7416 = vmatpush1.bf16.msra.mxu0 %v6429
    %7417 = vmatprep.subr.bf16.mxu0 %v6422
    %7418 = vmatpush1.bf16.msra.mxu0 %v6421
    %7419 = vmatprep.subr.bf16.mxu0 %v6414
    %7420 = vmatpush1.bf16.msra.mxu0 %v6413
    %7421 = vmatprep.subr.bf16.mxu0 %v6406
    %7422 = vmatpush1.bf16.msra.mxu0 %v6405
    %7423 = vmatprep.subr.bf16.mxu0 %v6398
    %7424 = vmatpush1.bf16.msra.mxu0 %v6397
    %7425 = vmatprep.subr.bf16.mxu0 %v6518
    %7426 = vmatpush2.bf16.msra.mxu0 %v6517
    %7427 = vmatprep.subr.bf16.mxu0 %v6510
    %7428 = vmatpush2.bf16.msra.mxu0 %v6509
    %7429 = vmatprep.subr.bf16.mxu0 %v6502
    %7430 = vmatpush2.bf16.msra.mxu0 %v6501
    %7431 = vmatprep.subr.bf16.mxu0 %v6494
    %7432 = vmatpush2.bf16.msra.mxu0 %v6493
    %7433 = vmatprep.subr.bf16.mxu0 %v6486
    %7434 = vmatpush2.bf16.msra.mxu0 %v6485
    %7435 = vmatprep.subr.bf16.mxu0 %v6478
    %7436 = vmatpush2.bf16.msra.mxu0 %v6477
    %7437 = vmatprep.subr.bf16.mxu0 %v6470
    %7438 = vmatpush2.bf16.msra.mxu0 %v6469
    %7439 = vmatprep.subr.bf16.mxu0 %v6462
    %7440 = vmatpush2.bf16.msra.mxu0 %v6461
    %7441 = vmatprep.mubr.bf16.mxu0 %v4600
    %7442 = vmatmul.mubr.bf16.gmra.mxu0 %v4599
    %v7443 = vpop.f32.mrf.mxu0
    %v7444 = vadd.f32 %v7403, %v7443
    %v7445 = vpop.f32.mrf.mxu0
    %v7446 = vadd.f32 %v7405, %v7445
    %v7447 = vpop.f32.mrf.mxu0
    %v7448 = vpop.f32.mrf.mxu0
    %7449 = vdwg.mxu0
    %7450 = vmatprep.subr.bf16.mxu0 %v6582
    %7451 = vmatpush1.bf16.msra.mxu0 %v6581
    %7452 = vmatprep.subr.bf16.mxu0 %v6574
    %7453 = vmatpush1.bf16.msra.mxu0 %v6573
    %7454 = vmatprep.subr.bf16.mxu0 %v6566
    %7455 = vmatpush1.bf16.msra.mxu0 %v6565
    %7456 = vmatprep.subr.bf16.mxu0 %v6558
    %7457 = vmatpush1.bf16.msra.mxu0 %v6557
    %7458 = vmatprep.subr.bf16.mxu0 %v6550
    %7459 = vmatpush1.bf16.msra.mxu0 %v6549
    %7460 = vmatprep.subr.bf16.mxu0 %v6542
    %7461 = vmatpush1.bf16.msra.mxu0 %v6541
    %7462 = vmatprep.subr.bf16.mxu0 %v6534
    %7463 = vmatpush1.bf16.msra.mxu0 %v6533
    %7464 = vmatprep.subr.bf16.mxu0 %v6526
    %7465 = vmatpush1.bf16.msra.mxu0 %v6525
    %7466 = vmatprep.subr.bf16.mxu0 %v6646
    %7467 = vmatpush2.bf16.msra.mxu0 %v6645
    %7468 = vmatprep.subr.bf16.mxu0 %v6638
    %7469 = vmatpush2.bf16.msra.mxu0 %v6637
    %7470 = vmatprep.subr.bf16.mxu0 %v6630
    %7471 = vmatpush2.bf16.msra.mxu0 %v6629
    %7472 = vmatprep.subr.bf16.mxu0 %v6622
    %7473 = vmatpush2.bf16.msra.mxu0 %v6621
    %7474 = vmatprep.subr.bf16.mxu0 %v6614
    %7475 = vmatpush2.bf16.msra.mxu0 %v6613
    %7476 = vmatprep.subr.bf16.mxu0 %v6606
    %7477 = vmatpush2.bf16.msra.mxu0 %v6605
    %7478 = vmatprep.subr.bf16.mxu0 %v6598
    %7479 = vmatpush2.bf16.msra.mxu0 %v6597
    %7480 = vmatprep.subr.bf16.mxu0 %v6590
    %7481 = vmatpush2.bf16.msra.mxu0 %v6589
    %7482 = vmatprep.mubr.bf16.mxu0 %v4602
    %7483 = vmatmul.mubr.bf16.gmra.mxu0 %v4601
    %v7484 = vpop.f32.mrf.mxu0
    %v7485 = vadd.f32 %v7444, %v7484
    %v7486 = vpop.f32.mrf.mxu0
    %v7487 = vadd.f32 %v7446, %v7486
    %v7488 = vpop.f32.mrf.mxu0
    %v7489 = vpop.f32.mrf.mxu0
    %7490 = vdwg.mxu0
    %7491 = vmatprep.subr.bf16.mxu0 %v6200
    %7492 = vmatpush1.bf16.msra.mxu0 %v6199
    %7493 = vmatprep.subr.bf16.mxu0 %v6192
    %7494 = vmatpush1.bf16.msra.mxu0 %v6191
    %7495 = vmatprep.subr.bf16.mxu0 %v6184
    %7496 = vmatpush1.bf16.msra.mxu0 %v6183
    %7497 = vmatprep.subr.bf16.mxu0 %v6176
    %7498 = vmatpush1.bf16.msra.mxu0 %v6175
    %7499 = vmatprep.subr.bf16.mxu0 %v6168
    %7500 = vmatpush1.bf16.msra.mxu0 %v6167
    %7501 = vmatprep.subr.bf16.mxu0 %v6160
    %7502 = vmatpush1.bf16.msra.mxu0 %v6159
    %7503 = vmatprep.subr.bf16.mxu0 %v6152
    %7504 = vmatpush1.bf16.msra.mxu0 %v6151
    %7505 = vmatprep.subr.bf16.mxu0 %v6144
    %7506 = vmatpush1.bf16.msra.mxu0 %v6143
    %7507 = vmatprep.subr.bf16.mxu0 %v6264
    %7508 = vmatpush2.bf16.msra.mxu0 %v6263
    %7509 = vmatprep.subr.bf16.mxu0 %v6256
    %7510 = vmatpush2.bf16.msra.mxu0 %v6255
    %7511 = vmatprep.subr.bf16.mxu0 %v6248
    %7512 = vmatpush2.bf16.msra.mxu0 %v6247
    %7513 = vmatprep.subr.bf16.mxu0 %v6240
    %7514 = vmatpush2.bf16.msra.mxu0 %v6239
    %7515 = vmatprep.subr.bf16.mxu0 %v6232
    %7516 = vmatpush2.bf16.msra.mxu0 %v6231
    %7517 = vmatprep.subr.bf16.mxu0 %v6224
    %7518 = vmatpush2.bf16.msra.mxu0 %v6223
    %7519 = vmatprep.subr.bf16.mxu0 %v6216
    %7520 = vmatpush2.bf16.msra.mxu0 %v6215
    %7521 = vmatprep.subr.bf16.mxu0 %v6208
    %7522 = vmatpush2.bf16.msra.mxu0 %v6207
    %7523 = vmatprep.mubr.bf16.mxu0 %v4596
    %7524 = vmatmul.mubr.bf16.gmra.mxu0 %v4595
    %v7525 = vpop.f32.mrf.mxu0
    %v7526 = vadd.f32 0.0, %v7525
    %v7527 = vpop.f32.mrf.mxu0
    %v7528 = vadd.f32 0.0, %v7527
    %v7529 = vpop.f32.mrf.mxu0
    %v7530 = vpop.f32.mrf.mxu0
    %7531 = vdwg.mxu0
    %7532 = vmatprep.subr.bf16.mxu0 %v6328
    %7533 = vmatpush1.bf16.msra.mxu0 %v6327
    %7534 = vmatprep.subr.bf16.mxu0 %v6320
    %7535 = vmatpush1.bf16.msra.mxu0 %v6319
    %7536 = vmatprep.subr.bf16.mxu0 %v6312
    %7537 = vmatpush1.bf16.msra.mxu0 %v6311
    %7538 = vmatprep.subr.bf16.mxu0 %v6304
    %7539 = vmatpush1.bf16.msra.mxu0 %v6303
    %7540 = vmatprep.subr.bf16.mxu0 %v6296
    %7541 = vmatpush1.bf16.msra.mxu0 %v6295
    %7542 = vmatprep.subr.bf16.mxu0 %v6288
    %7543 = vmatpush1.bf16.msra.mxu0 %v6287
    %7544 = vmatprep.subr.bf16.mxu0 %v6280
    %7545 = vmatpush1.bf16.msra.mxu0 %v6279
    %7546 = vmatprep.subr.bf16.mxu0 %v6272
    %7547 = vmatpush1.bf16.msra.mxu0 %v6271
    %7548 = vmatprep.subr.bf16.mxu0 %v6392
    %7549 = vmatpush2.bf16.msra.mxu0 %v6391
    %7550 = vmatprep.subr.bf16.mxu0 %v6384
    %7551 = vmatpush2.bf16.msra.mxu0 %v6383
    %7552 = vmatprep.subr.bf16.mxu0 %v6376
    %7553 = vmatpush2.bf16.msra.mxu0 %v6375
    %7554 = vmatprep.subr.bf16.mxu0 %v6368
    %7555 = vmatpush2.bf16.msra.mxu0 %v6367
    %7556 = vmatprep.subr.bf16.mxu0 %v6360
    %7557 = vmatpush2.bf16.msra.mxu0 %v6359
    %7558 = vmatprep.subr.bf16.mxu0 %v6352
    %7559 = vmatpush2.bf16.msra.mxu0 %v6351
    %7560 = vmatprep.subr.bf16.mxu0 %v6344
    %7561 = vmatpush2.bf16.msra.mxu0 %v6343
    %7562 = vmatprep.subr.bf16.mxu0 %v6336
    %7563 = vmatpush2.bf16.msra.mxu0 %v6335
    %7564 = vmatprep.mubr.bf16.mxu0 %v4598
    %7565 = vmatmul.mubr.bf16.gmra.mxu0 %v4597
    %v7566 = vpop.f32.mrf.mxu0
    %v7567 = vadd.f32 %v7526, %v7566
    %v7568 = vpop.f32.mrf.mxu0
    %v7569 = vadd.f32 %v7528, %v7568
    %v7570 = vpop.f32.mrf.mxu0
    %v7571 = vpop.f32.mrf.mxu0
    %7572 = vdwg.mxu0
    %7573 = vmatprep.subr.bf16.mxu0 %v6456
    %7574 = vmatpush1.bf16.msra.mxu0 %v6455
    %7575 = vmatprep.subr.bf16.mxu0 %v6448
    %7576 = vmatpush1.bf16.msra.mxu0 %v6447
    %7577 = vmatprep.subr.bf16.mxu0 %v6440
    %7578 = vmatpush1.bf16.msra.mxu0 %v6439
    %7579 = vmatprep.subr.bf16.mxu0 %v6432
    %7580 = vmatpush1.bf16.msra.mxu0 %v6431
    %7581 = vmatprep.subr.bf16.mxu0 %v6424
    %7582 = vmatpush1.bf16.msra.mxu0 %v6423
    %7583 = vmatprep.subr.bf16.mxu0 %v6416
    %7584 = vmatpush1.bf16.msra.mxu0 %v6415
    %7585 = vmatprep.subr.bf16.mxu0 %v6408
    %7586 = vmatpush1.bf16.msra.mxu0 %v6407
    %7587 = vmatprep.subr.bf16.mxu0 %v6400
    %7588 = vmatpush1.bf16.msra.mxu0 %v6399
    %7589 = vmatprep.subr.bf16.mxu0 %v6520
    %7590 = vmatpush2.bf16.msra.mxu0 %v6519
    %7591 = vmatprep.subr.bf16.mxu0 %v6512
    %7592 = vmatpush2.bf16.msra.mxu0 %v6511
    %7593 = vmatprep.subr.bf16.mxu0 %v6504
    %7594 = vmatpush2.bf16.msra.mxu0 %v6503
    %7595 = vmatprep.subr.bf16.mxu0 %v6496
    %7596 = vmatpush2.bf16.msra.mxu0 %v6495
    %7597 = vmatprep.subr.bf16.mxu0 %v6488
    %7598 = vmatpush2.bf16.msra.mxu0 %v6487
    %7599 = vmatprep.subr.bf16.mxu0 %v6480
    %7600 = vmatpush2.bf16.msra.mxu0 %v6479
    %7601 = vmatprep.subr.bf16.mxu0 %v6472
    %7602 = vmatpush2.bf16.msra.mxu0 %v6471
    %7603 = vmatprep.subr.bf16.mxu0 %v6464
    %7604 = vmatpush2.bf16.msra.mxu0 %v6463
    %7605 = vmatprep.mubr.bf16.mxu0 %v4600
    %7606 = vmatmul.mubr.bf16.gmra.mxu0 %v4599
    %v7607 = vpop.f32.mrf.mxu0
    %v7608 = vadd.f32 %v7567, %v7607
    %v7609 = vpop.f32.mrf.mxu0
    %v7610 = vadd.f32 %v7569, %v7609
    %v7611 = vpop.f32.mrf.mxu0
    %v7612 = vpop.f32.mrf.mxu0
    %7613 = vdwg.mxu0
    %7614 = vmatprep.subr.bf16.mxu0 %v6584
    %7615 = vmatpush1.bf16.msra.mxu0 %v6583
    %7616 = vmatprep.subr.bf16.mxu0 %v6576
    %7617 = vmatpush1.bf16.msra.mxu0 %v6575
    %7618 = vmatprep.subr.bf16.mxu0 %v6568
    %7619 = vmatpush1.bf16.msra.mxu0 %v6567
    %7620 = vmatprep.subr.bf16.mxu0 %v6560
    %7621 = vmatpush1.bf16.msra.mxu0 %v6559
    %7622 = vmatprep.subr.bf16.mxu0 %v6552
    %7623 = vmatpush1.bf16.msra.mxu0 %v6551
    %7624 = vmatprep.subr.bf16.mxu0 %v6544
    %7625 = vmatpush1.bf16.msra.mxu0 %v6543
    %7626 = vmatprep.subr.bf16.mxu0 %v6536
    %7627 = vmatpush1.bf16.msra.mxu0 %v6535
    %7628 = vmatprep.subr.bf16.mxu0 %v6528
    %7629 = vmatpush1.bf16.msra.mxu0 %v6527
    %7630 = vmatprep.subr.bf16.mxu0 %v6648
    %7631 = vmatpush2.bf16.msra.mxu0 %v6647
    %7632 = vmatprep.subr.bf16.mxu0 %v6640
    %7633 = vmatpush2.bf16.msra.mxu0 %v6639
    %7634 = vmatprep.subr.bf16.mxu0 %v6632
    %7635 = vmatpush2.bf16.msra.mxu0 %v6631
    %7636 = vmatprep.subr.bf16.mxu0 %v6624
    %7637 = vmatpush2.bf16.msra.mxu0 %v6623
    %7638 = vmatprep.subr.bf16.mxu0 %v6616
    %7639 = vmatpush2.bf16.msra.mxu0 %v6615
    %7640 = vmatprep.subr.bf16.mxu0 %v6608
    %7641 = vmatpush2.bf16.msra.mxu0 %v6607
    %7642 = vmatprep.subr.bf16.mxu0 %v6600
    %7643 = vmatpush2.bf16.msra.mxu0 %v6599
    %7644 = vmatprep.subr.bf16.mxu0 %v6592
    %7645 = vmatpush2.bf16.msra.mxu0 %v6591
    %7646 = vmatprep.mubr.bf16.mxu0 %v4602
    %7647 = vmatmul.mubr.bf16.gmra.mxu0 %v4601
    %v7648 = vpop.f32.mrf.mxu0
    %v7649 = vadd.f32 %v7608, %v7648
    %v7650 = vpop.f32.mrf.mxu0
    %v7651 = vadd.f32 %v7610, %v7650
    %v7652 = vpop.f32.mrf.mxu0
    %v7653 = vpop.f32.mrf.mxu0
    %7654 = vdwg.mxu0
    %7655 = vmatprep.subr.bf16.mxu0 %v6202
    %7656 = vmatpush1.bf16.msra.mxu0 %v6201
    %7657 = vmatprep.subr.bf16.mxu0 %v6194
    %7658 = vmatpush1.bf16.msra.mxu0 %v6193
    %7659 = vmatprep.subr.bf16.mxu0 %v6186
    %7660 = vmatpush1.bf16.msra.mxu0 %v6185
    %7661 = vmatprep.subr.bf16.mxu0 %v6178
    %7662 = vmatpush1.bf16.msra.mxu0 %v6177
    %7663 = vmatprep.subr.bf16.mxu0 %v6170
    %7664 = vmatpush1.bf16.msra.mxu0 %v6169
    %7665 = vmatprep.subr.bf16.mxu0 %v6162
    %7666 = vmatpush1.bf16.msra.mxu0 %v6161
    %7667 = vmatprep.subr.bf16.mxu0 %v6154
    %7668 = vmatpush1.bf16.msra.mxu0 %v6153
    %7669 = vmatprep.subr.bf16.mxu0 %v6146
    %7670 = vmatpush1.bf16.msra.mxu0 %v6145
    %7671 = vmatprep.subr.bf16.mxu0 %v6266
    %7672 = vmatpush2.bf16.msra.mxu0 %v6265
    %7673 = vmatprep.subr.bf16.mxu0 %v6258
    %7674 = vmatpush2.bf16.msra.mxu0 %v6257
    %7675 = vmatprep.subr.bf16.mxu0 %v6250
    %7676 = vmatpush2.bf16.msra.mxu0 %v6249
    %7677 = vmatprep.subr.bf16.mxu0 %v6242
    %7678 = vmatpush2.bf16.msra.mxu0 %v6241
    %7679 = vmatprep.subr.bf16.mxu0 %v6234
    %7680 = vmatpush2.bf16.msra.mxu0 %v6233
    %7681 = vmatprep.subr.bf16.mxu0 %v6226
    %7682 = vmatpush2.bf16.msra.mxu0 %v6225
    %7683 = vmatprep.subr.bf16.mxu0 %v6218
    %7684 = vmatpush2.bf16.msra.mxu0 %v6217
    %7685 = vmatprep.subr.bf16.mxu0 %v6210
    %7686 = vmatpush2.bf16.msra.mxu0 %v6209
    %7687 = vmatprep.mubr.bf16.mxu0 %v4596
    %7688 = vmatmul.mubr.bf16.gmra.mxu0 %v4595
    %v7689 = vpop.f32.mrf.mxu0
    %v7690 = vadd.f32 0.0, %v7689
    %v7691 = vpop.f32.mrf.mxu0
    %v7692 = vadd.f32 0.0, %v7691
    %v7693 = vpop.f32.mrf.mxu0
    %v7694 = vpop.f32.mrf.mxu0
    %7695 = vdwg.mxu0
    %7696 = vmatprep.subr.bf16.mxu0 %v6330
    %7697 = vmatpush1.bf16.msra.mxu0 %v6329
    %7698 = vmatprep.subr.bf16.mxu0 %v6322
    %7699 = vmatpush1.bf16.msra.mxu0 %v6321
    %7700 = vmatprep.subr.bf16.mxu0 %v6314
    %7701 = vmatpush1.bf16.msra.mxu0 %v6313
    %7702 = vmatprep.subr.bf16.mxu0 %v6306
    %7703 = vmatpush1.bf16.msra.mxu0 %v6305
    %7704 = vmatprep.subr.bf16.mxu0 %v6298
    %7705 = vmatpush1.bf16.msra.mxu0 %v6297
    %7706 = vmatprep.subr.bf16.mxu0 %v6290
    %7707 = vmatpush1.bf16.msra.mxu0 %v6289
    %7708 = vmatprep.subr.bf16.mxu0 %v6282
    %7709 = vmatpush1.bf16.msra.mxu0 %v6281
    %7710 = vmatprep.subr.bf16.mxu0 %v6274
    %7711 = vmatpush1.bf16.msra.mxu0 %v6273
    %7712 = vmatprep.subr.bf16.mxu0 %v6394
    %7713 = vmatpush2.bf16.msra.mxu0 %v6393
    %7714 = vmatprep.subr.bf16.mxu0 %v6386
    %7715 = vmatpush2.bf16.msra.mxu0 %v6385
    %7716 = vmatprep.subr.bf16.mxu0 %v6378
    %7717 = vmatpush2.bf16.msra.mxu0 %v6377
    %7718 = vmatprep.subr.bf16.mxu0 %v6370
    %7719 = vmatpush2.bf16.msra.mxu0 %v6369
    %7720 = vmatprep.subr.bf16.mxu0 %v6362
    %7721 = vmatpush2.bf16.msra.mxu0 %v6361
    %7722 = vmatprep.subr.bf16.mxu0 %v6354
    %7723 = vmatpush2.bf16.msra.mxu0 %v6353
    %7724 = vmatprep.subr.bf16.mxu0 %v6346
    %7725 = vmatpush2.bf16.msra.mxu0 %v6345
    %7726 = vmatprep.subr.bf16.mxu0 %v6338
    %7727 = vmatpush2.bf16.msra.mxu0 %v6337
    %7728 = vmatprep.mubr.bf16.mxu0 %v4598
    %7729 = vmatmul.mubr.bf16.gmra.mxu0 %v4597
    %v7730 = vpop.f32.mrf.mxu0
    %v7731 = vadd.f32 %v7690, %v7730
    %v7732 = vpop.f32.mrf.mxu0
    %v7733 = vadd.f32 %v7692, %v7732
    %v7734 = vpop.f32.mrf.mxu0
    %v7735 = vpop.f32.mrf.mxu0
    %7736 = vdwg.mxu0
    %7737 = vmatprep.subr.bf16.mxu0 %v6458
    %7738 = vmatpush1.bf16.msra.mxu0 %v6457
    %7739 = vmatprep.subr.bf16.mxu0 %v6450
    %7740 = vmatpush1.bf16.msra.mxu0 %v6449
    %7741 = vmatprep.subr.bf16.mxu0 %v6442
    %7742 = vmatpush1.bf16.msra.mxu0 %v6441
    %7743 = vmatprep.subr.bf16.mxu0 %v6434
    %7744 = vmatpush1.bf16.msra.mxu0 %v6433
    %7745 = vmatprep.subr.bf16.mxu0 %v6426
    %7746 = vmatpush1.bf16.msra.mxu0 %v6425
    %7747 = vmatprep.subr.bf16.mxu0 %v6418
    %7748 = vmatpush1.bf16.msra.mxu0 %v6417
    %7749 = vmatprep.subr.bf16.mxu0 %v6410
    %7750 = vmatpush1.bf16.msra.mxu0 %v6409
    %7751 = vmatprep.subr.bf16.mxu0 %v6402
    %7752 = vmatpush1.bf16.msra.mxu0 %v6401
    %7753 = vmatprep.subr.bf16.mxu0 %v6522
    %7754 = vmatpush2.bf16.msra.mxu0 %v6521
    %7755 = vmatprep.subr.bf16.mxu0 %v6514
    %7756 = vmatpush2.bf16.msra.mxu0 %v6513
    %7757 = vmatprep.subr.bf16.mxu0 %v6506
    %7758 = vmatpush2.bf16.msra.mxu0 %v6505
    %7759 = vmatprep.subr.bf16.mxu0 %v6498
    %7760 = vmatpush2.bf16.msra.mxu0 %v6497
    %7761 = vmatprep.subr.bf16.mxu0 %v6490
    %7762 = vmatpush2.bf16.msra.mxu0 %v6489
    %7763 = vmatprep.subr.bf16.mxu0 %v6482
    %7764 = vmatpush2.bf16.msra.mxu0 %v6481
    %7765 = vmatprep.subr.bf16.mxu0 %v6474
    %7766 = vmatpush2.bf16.msra.mxu0 %v6473
    %7767 = vmatprep.subr.bf16.mxu0 %v6466
    %7768 = vmatpush2.bf16.msra.mxu0 %v6465
    %7769 = vmatprep.mubr.bf16.mxu0 %v4600
    %7770 = vmatmul.mubr.bf16.gmra.mxu0 %v4599
    %v7771 = vpop.f32.mrf.mxu0
    %v7772 = vadd.f32 %v7731, %v7771
    %v7773 = vpop.f32.mrf.mxu0
    %v7774 = vadd.f32 %v7733, %v7773
    %v7775 = vpop.f32.mrf.mxu0
    %v7776 = vpop.f32.mrf.mxu0
    %7777 = vdwg.mxu0
    %7778 = vmatprep.subr.bf16.mxu0 %v6586
    %7779 = vmatpush1.bf16.msra.mxu0 %v6585
    %7780 = vmatprep.subr.bf16.mxu0 %v6578
    %7781 = vmatpush1.bf16.msra.mxu0 %v6577
    %7782 = vmatprep.subr.bf16.mxu0 %v6570
    %7783 = vmatpush1.bf16.msra.mxu0 %v6569
    %7784 = vmatprep.subr.bf16.mxu0 %v6562
    %7785 = vmatpush1.bf16.msra.mxu0 %v6561
    %7786 = vmatprep.subr.bf16.mxu0 %v6554
    %7787 = vmatpush1.bf16.msra.mxu0 %v6553
    %7788 = vmatprep.subr.bf16.mxu0 %v6546
    %7789 = vmatpush1.bf16.msra.mxu0 %v6545
    %7790 = vmatprep.subr.bf16.mxu0 %v6538
    %7791 = vmatpush1.bf16.msra.mxu0 %v6537
    %7792 = vmatprep.subr.bf16.mxu0 %v6530
    %7793 = vmatpush1.bf16.msra.mxu0 %v6529
    %7794 = vmatprep.subr.bf16.mxu0 %v6650
    %7795 = vmatpush2.bf16.msra.mxu0 %v6649
    %7796 = vmatprep.subr.bf16.mxu0 %v6642
    %7797 = vmatpush2.bf16.msra.mxu0 %v6641
    %7798 = vmatprep.subr.bf16.mxu0 %v6634
    %7799 = vmatpush2.bf16.msra.mxu0 %v6633
    %7800 = vmatprep.subr.bf16.mxu0 %v6626
    %7801 = vmatpush2.bf16.msra.mxu0 %v6625
    %7802 = vmatprep.subr.bf16.mxu0 %v6618
    %7803 = vmatpush2.bf16.msra.mxu0 %v6617
    %7804 = vmatprep.subr.bf16.mxu0 %v6610
    %7805 = vmatpush2.bf16.msra.mxu0 %v6609
    %7806 = vmatprep.subr.bf16.mxu0 %v6602
    %7807 = vmatpush2.bf16.msra.mxu0 %v6601
    %7808 = vmatprep.subr.bf16.mxu0 %v6594
    %7809 = vmatpush2.bf16.msra.mxu0 %v6593
    %7810 = vmatprep.mubr.bf16.mxu0 %v4602
    %7811 = vmatmul.mubr.bf16.gmra.mxu0 %v4601
    %v7812 = vpop.f32.mrf.mxu0
    %v7813 = vadd.f32 %v7772, %v7812
    %v7814 = vpop.f32.mrf.mxu0
    %v7815 = vadd.f32 %v7774, %v7814
    %v7816 = vpop.f32.mrf.mxu0
    %v7817 = vpop.f32.mrf.mxu0
    %7818 = vdwg.mxu0
    %v7819 = vsel %vm4367, %v7321, 0.0
    %v7820 = vsel %vm4367, %v7323, 0.0
    %v7821 = vadd.f32 %v7819, %v7820
    %7822 = vadd.xlane.f32.xlu0 %v7821
    %v7823 = vpop.xlane.xlu0 %7822
    %v7824 = vmul.f32 %v7823, %v4373
    %v7825 = vsub.f32 %v7321, %v7824
    %v7826 = vsub.f32 %v7323, %v7824
    %v7827 = vmul.f32 %v7825, %v7825
    %v7828 = vmul.f32 %v7826, %v7826
    %v7829 = vsel %vm4367, %v7827, 0.0
    %v7830 = vsel %vm4367, %v7828, 0.0
    %v7831 = vadd.f32 %v7829, %v7830
    %7832 = vadd.xlane.f32.xlu0 %v7831
    %v7833 = vpop.xlane.xlu0 %7832
    %v7834 = vmul.f32 %v7833, %v4373
    %v7835 = vadd.f32 %v7834, 1e-05
    %v7836 = vrsqrt.pop %v7835
    %v7837 = vmul.f32 %v7825, %v7836
    %v7838 = vmul.f32 %v7826, %v7836
    %v7839 = vsel %vm4367, %v7485, 0.0
    %v7840 = vsel %vm4367, %v7487, 0.0
    %v7841 = vadd.f32 %v7839, %v7840
    %7842 = vadd.xlane.f32.xlu0 %v7841
    %v7843 = vpop.xlane.xlu0 %7842
    %v7844 = vmul.f32 %v7843, %v4373
    %v7845 = vsub.f32 %v7485, %v7844
    %v7846 = vsub.f32 %v7487, %v7844
    %v7847 = vmul.f32 %v7845, %v7845
    %v7848 = vmul.f32 %v7846, %v7846
    %v7849 = vsel %vm4367, %v7847, 0.0
    %v7850 = vsel %vm4367, %v7848, 0.0
    %v7851 = vadd.f32 %v7849, %v7850
    %7852 = vadd.xlane.f32.xlu0 %v7851
    %v7853 = vpop.xlane.xlu0 %7852
    %v7854 = vmul.f32 %v7853, %v4373
    %v7855 = vadd.f32 %v7854, 1e-05
    %v7856 = vrsqrt.pop %v7855
    %v7857 = vmul.f32 %v7845, %v7856
    %v7858 = vmul.f32 %v7846, %v7856
    %v7859 = vsel %vm4367, %v7649, 0.0
    %v7860 = vsel %vm4367, %v7651, 0.0
    %v7861 = vadd.f32 %v7859, %v7860
    %7862 = vadd.xlane.f32.xlu0 %v7861
    %v7863 = vpop.xlane.xlu0 %7862
    %v7864 = vmul.f32 %v7863, %v4373
    %v7865 = vsub.f32 %v7649, %v7864
    %v7866 = vsub.f32 %v7651, %v7864
    %v7867 = vmul.f32 %v7865, %v7865
    %v7868 = vmul.f32 %v7866, %v7866
    %v7869 = vsel %vm4367, %v7867, 0.0
    %v7870 = vsel %vm4367, %v7868, 0.0
    %v7871 = vadd.f32 %v7869, %v7870
    %7872 = vadd.xlane.f32.xlu0 %v7871
    %v7873 = vpop.xlane.xlu0 %7872
    %v7874 = vmul.f32 %v7873, %v4373
    %v7875 = vadd.f32 %v7874, 1e-05
    %v7876 = vrsqrt.pop %v7875
    %v7877 = vmul.f32 %v7865, %v7876
    %v7878 = vmul.f32 %v7866, %v7876
    %v7879 = vsel %vm4367, %v7813, 0.0
    %v7880 = vsel %vm4367, %v7815, 0.0
    %v7881 = vadd.f32 %v7879, %v7880
    %7882 = vadd.xlane.f32.xlu0 %v7881
    %v7883 = vpop.xlane.xlu0 %7882
    %v7884 = vmul.f32 %v7883, %v4373
    %v7885 = vsub.f32 %v7813, %v7884
    %v7886 = vsub.f32 %v7815, %v7884
    %v7887 = vmul.f32 %v7885, %v7885
    %v7888 = vmul.f32 %v7886, %v7886
    %v7889 = vsel %vm4367, %v7887, 0.0
    %v7890 = vsel %vm4367, %v7888, 0.0
    %v7891 = vadd.f32 %v7889, %v7890
    %7892 = vadd.xlane.f32.xlu0 %v7891
    %v7893 = vpop.xlane.xlu0 %7892
    %v7894 = vmul.f32 %v7893, %v4373
    %v7895 = vadd.f32 %v7894, 1e-05
    %v7896 = vrsqrt.pop %v7895
    %v7897 = vmul.f32 %v7885, %v7896
    %v7898 = vmul.f32 %v7886, %v7896
    %v7900 = vlaneseq
    %v7901 = vshrl.u32 %v7900, 7
    %v7902 = vsub.s32 0, %v7901
    %v7903 = vrot.slane %v1097, %v7902
    %v7904 = vlaneseq
    %v7905 = vshrl.u32 %v7904, 7
    %v7906 = vsub.s32 1, %v7905
    %v7907 = vrot.slane %v1097, %v7906
    %v7908 = vlaneseq
    %v7909 = vshrl.u32 %v7908, 7
    %v7910 = vsub.s32 2, %v7909
    %v7911 = vrot.slane %v1097, %v7910
    %v7912 = vlaneseq
    %v7913 = vshrl.u32 %v7912, 7
    %v7914 = vsub.s32 3, %v7913
    %v7915 = vrot.slane %v1097, %v7914
    %v7916 = vlaneseq
    %v7917 = vshrl.u32 %v7916, 7
    %v7918 = vsub.s32 4, %v7917
    %v7919 = vrot.slane %v1097, %v7918
    %v7920 = vlaneseq
    %v7921 = vshrl.u32 %v7920, 7
    %v7922 = vsub.s32 5, %v7921
    %v7923 = vrot.slane %v1097, %v7922
    %v7924 = vlaneseq
    %v7925 = vshrl.u32 %v7924, 7
    %v7926 = vsub.s32 6, %v7925
    %v7927 = vrot.slane %v1097, %v7926
    %v7928 = vlaneseq
    %v7929 = vshrl.u32 %v7928, 7
    %v7930 = vsub.s32 7, %v7929
    %v7931 = vrot.slane %v1097, %v7930
    %v7940 = vmul.f32 %v7837, %v7903
    %v7941 = vmul.f32 %v7838, %v7907
    %v7942 = vmul.f32 %v7857, %v7911
    %v7943 = vmul.f32 %v7858, %v7915
    %v7944 = vmul.f32 %v7877, %v7919
    %v7945 = vmul.f32 %v7878, %v7923
    %v7946 = vmul.f32 %v7897, %v7927
    %v7947 = vmul.f32 %v7898, %v7931
    %v7949 = vlaneseq
    %v7950 = vshrl.u32 %v7949, 7
    %v7951 = vsub.s32 0, %v7950
    %v7952 = vrot.slane %v1098, %v7951
    %v7953 = vlaneseq
    %v7954 = vshrl.u32 %v7953, 7
    %v7955 = vsub.s32 1, %v7954
    %v7956 = vrot.slane %v1098, %v7955
    %v7957 = vlaneseq
    %v7958 = vshrl.u32 %v7957, 7
    %v7959 = vsub.s32 2, %v7958
    %v7960 = vrot.slane %v1098, %v7959
    %v7961 = vlaneseq
    %v7962 = vshrl.u32 %v7961, 7
    %v7963 = vsub.s32 3, %v7962
    %v7964 = vrot.slane %v1098, %v7963
    %v7965 = vlaneseq
    %v7966 = vshrl.u32 %v7965, 7
    %v7967 = vsub.s32 4, %v7966
    %v7968 = vrot.slane %v1098, %v7967
    %v7969 = vlaneseq
    %v7970 = vshrl.u32 %v7969, 7
    %v7971 = vsub.s32 5, %v7970
    %v7972 = vrot.slane %v1098, %v7971
    %v7973 = vlaneseq
    %v7974 = vshrl.u32 %v7973, 7
    %v7975 = vsub.s32 6, %v7974
    %v7976 = vrot.slane %v1098, %v7975
    %v7977 = vlaneseq
    %v7978 = vshrl.u32 %v7977, 7
    %v7979 = vsub.s32 7, %v7978
    %v7980 = vrot.slane %v1098, %v7979
    %v7989 = vadd.f32 %v7940, %v7952
    %v7990 = vadd.f32 %v7941, %v7956
    %v7991 = vadd.f32 %v7942, %v7960
    %v7992 = vadd.f32 %v7943, %v7964
    %v7993 = vadd.f32 %v7944, %v7968
    %v7994 = vadd.f32 %v7945, %v7972
    %v7995 = vadd.f32 %v7946, %v7976
    %v7996 = vadd.f32 %v7947, %v7980
    %v7997 = vsub.f32 0.0, %v7989
    %v7998 = vsub.f32 0.0, %v7990
    %v7999 = vsub.f32 0.0, %v7991
    %v8000 = vsub.f32 0.0, %v7992
    %v8001 = vsub.f32 0.0, %v7993
    %v8002 = vsub.f32 0.0, %v7994
    %v8003 = vsub.f32 0.0, %v7995
    %v8004 = vsub.f32 0.0, %v7996
    %v8005 = vmul.f32 %v7997, 1.442695
    %v8006 = vpow.pop %v8005
    %v8007 = vmul.f32 %v7998, 1.442695
    %v8008 = vpow.pop %v8007
    %v8009 = vmul.f32 %v7999, 1.442695
    %v8010 = vpow.pop %v8009
    %v8011 = vmul.f32 %v8000, 1.442695
    %v8012 = vpow.pop %v8011
    %v8013 = vmul.f32 %v8001, 1.442695
    %v8014 = vpow.pop %v8013
    %v8015 = vmul.f32 %v8002, 1.442695
    %v8016 = vpow.pop %v8015
    %v8017 = vmul.f32 %v8003, 1.442695
    %v8018 = vpow.pop %v8017
    %v8019 = vmul.f32 %v8004, 1.442695
    %v8020 = vpow.pop %v8019
    %v8021 = vadd.f32 %v8006, 1.0
    %v8022 = vadd.f32 %v8008, 1.0
    %v8023 = vadd.f32 %v8010, 1.0
    %v8024 = vadd.f32 %v8012, 1.0
    %v8025 = vadd.f32 %v8014, 1.0
    %v8026 = vadd.f32 %v8016, 1.0
    %v8027 = vadd.f32 %v8018, 1.0
    %v8028 = vadd.f32 %v8020, 1.0
    %v8029 = vrcp.pop %v8021
    %v8030 = vrcp.pop %v8022
    %v8031 = vrcp.pop %v8023
    %v8032 = vrcp.pop %v8024
    %v8033 = vrcp.pop %v8025
    %v8034 = vrcp.pop %v8026
    %v8035 = vrcp.pop %v8027
    %v8036 = vrcp.pop %v8028
    %v8037 = vmul.f32 %v7989, %v8029
    %v8038 = vmul.f32 %v7990, %v8030
    %v8039 = vmul.f32 %v7991, %v8031
    %v8040 = vmul.f32 %v7992, %v8032
    %v8041 = vmul.f32 %v7993, %v8033
    %v8042 = vmul.f32 %v7994, %v8034
    %v8043 = vmul.f32 %v7995, %v8035
    %v8044 = vmul.f32 %v7996, %v8036
    %v8045 = vadd.f32 %v8037, %v1108
    %v8046 = vadd.f32 %v8038, %v1116
    %v8047 = vadd.f32 %v8039, %v1115
    %v8048 = vadd.f32 %v8040, %v1117
    %v8049 = vadd.f32 %v8041, %v1125
    %v8050 = vadd.f32 %v8042, %v1133
    %v8051 = vadd.f32 %v8043, %v1132
    %v8052 = vadd.f32 %v8044, %v1134
    %v8053 = vsub.f32 0.0, %v8045
    %v8054 = vsub.f32 0.0, %v8046
    %v8055 = vsub.f32 0.0, %v8047
    %v8056 = vsub.f32 0.0, %v8048
    %v8057 = vsub.f32 0.0, %v8049
    %v8058 = vsub.f32 0.0, %v8050
    %v8059 = vsub.f32 0.0, %v8051
    %v8060 = vsub.f32 0.0, %v8052
    %v8061 = vmul.f32 %v8053, 1.442695
    %v8062 = vpow.pop %v8061
    %v8063 = vmul.f32 %v8054, 1.442695
    %v8064 = vpow.pop %v8063
    %v8065 = vmul.f32 %v8055, 1.442695
    %v8066 = vpow.pop %v8065
    %v8067 = vmul.f32 %v8056, 1.442695
    %v8068 = vpow.pop %v8067
    %v8069 = vmul.f32 %v8057, 1.442695
    %v8070 = vpow.pop %v8069
    %v8071 = vmul.f32 %v8058, 1.442695
    %v8072 = vpow.pop %v8071
    %v8073 = vmul.f32 %v8059, 1.442695
    %v8074 = vpow.pop %v8073
    %v8075 = vmul.f32 %v8060, 1.442695
    %v8076 = vpow.pop %v8075
    %v8077 = vadd.f32 %v8062, 1.0
    %v8078 = vadd.f32 %v8064, 1.0
    %v8079 = vadd.f32 %v8066, 1.0
    %v8080 = vadd.f32 %v8068, 1.0
    %v8081 = vadd.f32 %v8070, 1.0
    %v8082 = vadd.f32 %v8072, 1.0
    %v8083 = vadd.f32 %v8074, 1.0
    %v8084 = vadd.f32 %v8076, 1.0
    %v8085 = vrcp.pop %v8077
    %v8086 = vrcp.pop %v8078
    %v8087 = vrcp.pop %v8079
    %v8088 = vrcp.pop %v8080
    %v8089 = vrcp.pop %v8081
    %v8090 = vrcp.pop %v8082
    %v8091 = vrcp.pop %v8083
    %v8092 = vrcp.pop %v8084
    %v8093 = vmul.f32 %v8045, %v8085
    %v8094 = vmul.f32 %v8046, %v8086
    %v8095 = vmul.f32 %v8047, %v8087
    %v8096 = vmul.f32 %v8048, %v8088
    %v8097 = vmul.f32 %v8049, %v8089
    %v8098 = vmul.f32 %v8050, %v8090
    %v8099 = vmul.f32 %v8051, %v8091
    %v8100 = vmul.f32 %v8052, %v8092
    %v8109 = vcombine.low %v8093, %v8094
    %v8110 = vcombine.low %v8095, %v8096
    %v8112 = vunpack.c.l.s4 1983009808
    %v8113 = vunpack.c.0.s8 %v8112
    %v8114 = vlaneseq
    %v8115 = vshrl.u32 %v8114, 7
    %v8116 = vsub.s32 %v8113, %v8115
    %v8117 = vrot.slane %v8109, %v8116
    %v8119 = vunpack.c.l.s4 1983009808
    %v8120 = vunpack.c.0.s8 %v8119
    %v8121 = vlaneseq
    %v8122 = vshrl.u32 %v8121, 7
    %v8123 = vsub.s32 %v8120, %v8122
    %v8124 = vrot.slane %v8110, %v8123
    %v8125 = vcombine.low %v8117, %v8124
    %v8126 = vcombine.low %v8097, %v8098
    %v8127 = vcombine.low %v8099, %v8100
    %v8129 = vunpack.c.l.s4 1983009808
    %v8130 = vunpack.c.0.s8 %v8129
    %v8131 = vlaneseq
    %v8132 = vshrl.u32 %v8131, 7
    %v8133 = vsub.s32 %v8130, %v8132
    %v8134 = vrot.slane %v8126, %v8133
    %v8136 = vunpack.c.l.s4 1983009808
    %v8137 = vunpack.c.0.s8 %v8136
    %v8138 = vlaneseq
    %v8139 = vshrl.u32 %v8138, 7
    %v8140 = vsub.s32 %v8137, %v8139
    %v8141 = vrot.slane %v8127, %v8140
    %v8142 = vcombine.low %v8134, %v8141
    %8145 = vst [vmem:[#allocation10] sm:$0xff] %v8125
    %8146 = vst [vmem:[#allocation10 + $0x8] sm:$0xff] %v8142
    // Predicated region
    $region34: #{tpu_custom_call.1} parent=1 // pred_check
      _
    $region35: #{tpu_custom_call.1} parent=1 // pred_check_branch
      %8148 = sbr.rel (0) target = $region37
    $region36: #{tpu_custom_call.1} parent=1 // pred_region
      %s8150 = ssub.s32 256, 256
      %8151 = vsyncadd [#allocation4], %s8150
      %s8153 = sshll.u32 [#allocation10], 4
      %s8154 = int_to_ptr.vmem [resolvable:$true] %s8153
      %8156 = dma.vmem_to_hbm [thread:$0]  %s8154, 256, %s4, [#allocation4]
    $region37: #{tpu_custom_call.1} parent=1 // pred_fallthru
      _
    // Predicated region
    $region38: #{tpu_custom_call.1} parent=1 // pred_check
      _
    $region39: #{tpu_custom_call.1} parent=1 // pred_check_branch
      %8158 = sbr.rel (0) target = $region41
    $region40: #{tpu_custom_call.1} parent=1 // pred_region
      %8159 = dma.done [#allocation4], 256
    $region41: #{tpu_custom_call.1} parent=1 // pred_fallthru
      _
    %8160 = vsyncpa [#allocation3], 1
    %8161 = vsyncpa [#allocation6], 1
    %8162 = vsyncpa [#allocation9], 1
    %8163 = vsyncpa [#allocation4], 1

</llo_original>
